<compile_context>
chip_gen: v5e
topology: v5e:2x2
jax: 0.10.0
libtpu: 0.0.40
codegen_flags: <defaults>
</compile_context>

<pallas_src>
import functools

import jax
import jax.numpy as jnp
from jax import lax
from jax.experimental import pallas as pl
from jax.experimental.pallas import tpu as pltpu


def _round_up(x, m):
    return (x + m - 1) // m * m


# ----------------------------------------------------------------------------
# In-kernel 3x3 "SAME" conv read from a zero-haloed bf16 VMEM scratch buffer.
# ----------------------------------------------------------------------------
def _conv3x3(pad_ref, w_ref, b_ref, H, W, col0):
    """3x3 / stride-1 conv over the zero-haloed scratch.

    pad_ref: (H+2, Wpad, C) bf16 scratch.  Valid pixels at
             [1:H+1, col0:col0+W, :]; row 0, row H+1, column col0-1 and column
             col0+W hold zeros (the SAME-padding halo).
    w_ref:   (3, C, 3*C) bf16 with w_ref[dx][:, dy*C:(dy+1)*C] == w_hwio[dy, dx].
    b_ref:   (1, C) f32.
    Returns  (H*W, C) f32.
    """
    C = pad_ref.shape[-1]
    acc = jnp.zeros((H * W, C), jnp.float32)
    for dx in range(3):
        # One sublane-offset slice per column offset (3 per conv); with
        # col0 = 16 the dx = 1 slice is fully bf16-aligned.
        col = col0 - 1 + dx
        a = pad_ref[:, col:col + W, :].reshape((H + 2) * W, C)  # W % 16 == 0
        # One wide MXU dot per dx (K = C, N = 3*C): the three dy tap matrices
        # are stacked along the output axis, replacing nine (H*W,C)x(C,C)
        # dots per conv with three wide ones.
        p = jnp.dot(a, w_ref[dx], preferred_element_type=jnp.float32)
        for dy in range(3):
            # Row window = dy-shifted pixels (sublane offsets dy*W are
            # 8-aligned since W % 16 == 0); channel block = matching tap.
            acc = acc + p[dy * W:(dy + H) * W, dy * C:(dy + 1) * C]
    return acc + b_ref[...]


# ----------------------------------------------------------------------------
# Fused RRDB block kernel:  lrelu(conv1) -> lrelu(conv2) -> conv3 + residual.
# One grid step processes one image of the batch; intermediates stay in VMEM.
# ----------------------------------------------------------------------------
def _make_rrdb_kernel(H, W, C, col0, wpad):
    def lrelu(v):
        return jnp.where(v >= 0, v, 0.2 * v)

    def kernel(x_ref, w1_ref, b1_ref, w2_ref, b2_ref, w3_ref, b3_ref,
               o_ref, pad_ref):
        # Zero ONLY the 1-pixel SAME-padding halo (rows 0 / H+1 plus a
        # 2-column, packed-word-aligned sliver on each side of the valid
        # columns).  The interior is fully overwritten before every read, so
        # no full-buffer memset is needed.  Done every grid step so it is
        # megacore-safe under "parallel" semantics.
        zrow = jnp.zeros((1, wpad, C), jnp.bfloat16)
        pad_ref[0:1, :, :] = zrow
        pad_ref[H + 1:H + 2, :, :] = zrow
        zcol = jnp.zeros((H + 2, 2, C), jnp.bfloat16)
        pad_ref[:, col0 - 2:col0, :] = zcol              # covers halo col col0-1
        pad_ref[:, col0 + W:col0 + W + 2, :] = zcol      # covers halo col col0+W

        # conv1 + LeakyReLU(0.2): x goes straight into the bf16 scratch.
        pad_ref[1:H + 1, col0:col0 + W, :] = x_ref[0]
        h = lrelu(_conv3x3(pad_ref, w1_ref, b1_ref, H, W, col0))

        # conv2 + LeakyReLU(0.2)
        pad_ref[1:H + 1, col0:col0 + W, :] = h.reshape(H, W, C).astype(jnp.bfloat16)
        h = lrelu(_conv3x3(pad_ref, w2_ref, b2_ref, H, W, col0))

        # conv3 (no activation)
        pad_ref[1:H + 1, col0:col0 + W, :] = h.reshape(H, W, C).astype(jnp.bfloat16)
        h = _conv3x3(pad_ref, w3_ref, b3_ref, H, W, col0)

        # Residual: re-read x lazily here instead of keeping an f32 copy of
        # the whole image live across all three convs.
        out = x_ref[0].astype(jnp.float32) + h.reshape(H, W, C)
        o_ref[0] = out.astype(o_ref.dtype)

    return kernel


def rrdb_block(x_nhwc, w1, b1, w2, b2, w3, b3):
    """One RRDB block: x + conv3(lrelu(conv2(lrelu(conv1(x))))).

    x_nhwc: (N, H, W, C) bf16; w*: (3, C, 3*C) bf16 (dy-stacked, see _prep_w);
    b*: (1, C) f32.
    """
    N, H, W, C = x_nhwc.shape
    # W % 16 == 0 keeps every bf16 reshape / interior store layout-free
    # (review correctness note: the bf16 sublane pack is 16, not 8).
    assert W % 16 == 0, f"W must be a multiple of 16 (got {W})"
    assert w1.shape == (3, C, 3 * C), w1.shape

    col0 = 16                                  # bf16-aligned valid-column start
    wpad = _round_up(col0 + W + 1, 16)

    img_spec = pl.BlockSpec((1, H, W, C), lambda n: (n, 0, 0, 0))
    w_spec = pl.BlockSpec((3, C, 3 * C), lambda n: (0, 0, 0))
    b_spec = pl.BlockSpec((1, C), lambda n: (0, 0))

    # Advisory cost hint so XLA schedules the surrounding lax.conv ops around
    # the five sequential pallas_calls.
    flops = 2 * N * 3 * H * W * (9 * C) * C
    bytes_accessed = (2 * N * H * W * C * 2          # x in + out (bf16)
                      + 3 * 3 * C * 3 * C * 2        # dy-stacked weights (bf16)
                      + 3 * C * 4)                   # biases (f32)

    # Scoped-VMEM budget for this block size: bf16 halo scratch +
    # double-buffered in/out image blocks + weights + f32 matmul results.
    est_vmem = ((H + 2) * wpad * C * 2
                + 4 * H * W * C * 2
                + 3 * 3 * C * 3 * C * 2
                + 2 * (H + 2) * W * 3 * C * 4)
    vmem_limit = int(min(64 * 2 ** 20, max(32 * 2 ** 20, 2 * est_vmem)))

    return pl.pallas_call(
        _make_rrdb_kernel(H, W, C, col0, wpad),
        out_shape=jax.ShapeDtypeStruct((N, H, W, C), x_nhwc.dtype),
        grid=(N,),
        in_specs=[img_spec, w_spec, b_spec, w_spec, b_spec, w_spec, b_spec],
        out_specs=img_spec,
        scratch_shapes=[pltpu.VMEM((H + 2, wpad, C), jnp.bfloat16)],
        # The residual source is also the output: reuse its HBM buffer.  Safe
        # because per-image blocks are disjoint; must be dropped if an H-tile
        # axis with an input halo is added (review correctness note).
        input_output_aliases={0: 0},
        compiler_params=pltpu.CompilerParams(
            dimension_semantics=("parallel",),
            vmem_limit_bytes=vmem_limit),
        cost_estimate=pl.CostEstimate(
            flops=flops, transcendentals=0, bytes_accessed=bytes_accessed),
    )(x_nhwc, w1, b1, w2, b2, w3, b3)


# ----------------------------------------------------------------------------
# Tiny-channel convs (3->64 / 64->3) stay with XLA, per the perf review.
# ----------------------------------------------------------------------------
def _conv3x3_xla(x_nhwc, w_hwio, b):
    y = lax.conv_general_dilated(
        x_nhwc, w_hwio, window_strides=(1, 1), padding="SAME",
        dimension_numbers=("NHWC", "HWIO", "NHWC"))
    return y + b[None, None, None, :]


def _prep_w(w_hwio):
    """HWIO (3, 3, Cin, Cout) -> (3, Cin, 3*Cout) bf16.

    out[dx, :, dy*Cout:(dy+1)*Cout] == w_hwio[dy, dx]: the three dy taps of a
    given column offset dx are stacked along the output axis so the kernel
    applies them with a single wide MXU dot per dx.
    """
    kh, kw, cin, cout = w_hwio.shape
    w = jnp.transpose(w_hwio, (1, 2, 0, 3))        # (kx, cin, ky, cout)
    return w.reshape(kw, cin, kh * cout).astype(jnp.bfloat16)


def _prep_b(b):
    return b.reshape(1, -1).astype(jnp.float32)


# ----------------------------------------------------------------------------
# Generator: initial conv -> num_rrdb fused RRDB kernels -> final conv.
# ----------------------------------------------------------------------------
def init_params(num_rrdb=5, channels=64, dtype=jnp.float32):
    """Deterministic parameter init (HWIO weight layout, f32)."""
    key = jax.random.PRNGKey(0)

    def conv_init(key, cin, cout):
        kw, kb = jax.random.split(key)
        w = jax.random.normal(kw, (3, 3, cin, cout), dtype) * 0.05
        b = jax.random.normal(kb, (cout,), dtype) * 0.01
        return w, b

    keys = jax.random.split(key, 2 + 3 * num_rrdb)
    params = {}
    params["initial_w"], params["initial_b"] = conv_init(keys[0], 3, channels)
    params["final_w"], params["final_b"] = conv_init(keys[1], channels, 3)
    params["rrdbs"] = []
    for i in range(num_rrdb):
        blk = {}
        for j, name in enumerate(("1", "2", "3")):
            w, b = conv_init(keys[2 + 3 * i + j], channels, channels)
            blk["w" + name] = w
            blk["b" + name] = b
        params["rrdbs"].append(blk)
    return params


def generator_forward(x_nchw, params):
    """Matches Generator.forward semantics: NCHW f32 in, NCHW f32 out."""
    x = jnp.transpose(x_nchw, (0, 2, 3, 1))                  # -> NHWC
    feat = _conv3x3_xla(x, params["initial_w"], params["initial_b"])
    out = feat.astype(jnp.bfloat16)                          # bf16 activations
    for blk in params["rrdbs"]:
        out = rrdb_block(out,
                         _prep_w(blk["w1"]), _prep_b(blk["b1"]),
                         _prep_w(blk["w2"]), _prep_b(blk["b2"]),
                         _prep_w(blk["w3"]), _prep_b(blk["b3"]))
    y = _conv3x3_xla(out.astype(jnp.float32),
                     params["final_w"], params["final_b"])
    return jnp.transpose(y, (0, 3, 1, 2))                    # -> NCHW


# ----------------------------------------------------------------------------
# Pure-JAX reference with the *same* precision policy as the kernel
# (bf16 matmul operands / block boundaries, f32 accumulation + epilogue).
# With the bf16 casts removed it is exactly the f32 PyTorch-module semantics.
# ----------------------------------------------------------------------------
def _conv3x3_bf16_ref(x_f32, w_f32, b_f32):
    y = lax.conv_general_dilated(
        x_f32.astype(jnp.bfloat16), w_f32.astype(jnp.bfloat16),
        window_strides=(1, 1), padding="SAME",
        dimension_numbers=("NHWC", "HWIO", "NHWC"),
        preferred_element_type=jnp.float32)
    return y + b_f32[None, None, None, :]


def _generator_ref(x_nchw, params):
    x = jnp.transpose(x_nchw, (0, 2, 3, 1))

    def lrelu(v):
        return jnp.where(v >= 0, v, 0.2 * v)

    feat = _conv3x3_xla(x, params["initial_w"], params["initial_b"])
    out = feat.astype(jnp.bfloat16)
    for blk in params["rrdbs"]:
        xf = out.astype(jnp.float32)
        h = lrelu(_conv3x3_bf16_ref(xf, blk["w1"], blk["b1"]))
        h = lrelu(_conv3x3_bf16_ref(h, blk["w2"], blk["b2"]))
        h = _conv3x3_bf16_ref(h, blk["w3"], blk["b3"])
        out = (xf + h).astype(jnp.bfloat16)
    y = _conv3x3_xla(out.astype(jnp.float32),
                     params["final_w"], params["final_b"])
    return jnp.transpose(y, (0, 3, 1, 2))


if __name__ == "__main__":
    # Small deterministic input, PyTorch-style NCHW: (batch=2, C=3, H=16, W=16)
    key = jax.random.PRNGKey(0)
    x = jax.random.normal(key, (2, 3, 16, 16), jnp.float32)

    params = init_params(num_rrdb=5, channels=64)

    fwd = jax.jit(functools.partial(generator_forward, params=params))
    y = fwd(x)
    jax.block_until_ready(y)
    assert y.shape == (2, 3, 16, 16), y.shape

    y_ref = _generator_ref(x, params)
    jax.block_until_ready(y_ref)
    max_err = float(jnp.max(jnp.abs(y - y_ref)))
    assert max_err < 5e-2, f"mismatch vs matched-precision reference: {max_err}"

    print("KERNEL_OK")
</pallas_src>

<mosaic_0001>
module attributes {stable_mosaic.version = 11 : i64} {
  func.func @kernel(%arg0: i32, %arg1: memref<1x16x16x64xbf16, #tpu.memory_space<vmem>>, %arg2: memref<3x64x192xbf16, #tpu.memory_space<vmem>>, %arg3: memref<1x64xf32, #tpu.memory_space<vmem>>, %arg4: memref<3x64x192xbf16, #tpu.memory_space<vmem>>, %arg5: memref<1x64xf32, #tpu.memory_space<vmem>>, %arg6: memref<3x64x192xbf16, #tpu.memory_space<vmem>>, %arg7: memref<1x64xf32, #tpu.memory_space<vmem>>, %arg8: memref<1x16x16x64xbf16, #tpu.memory_space<vmem>>, %arg9: memref<18x48x64xbf16, #tpu.memory_space<vmem>>) attributes {dimension_semantics = [#tpu.dimension_semantics<parallel>], iteration_bounds = array<i64: 2>, scalar_prefetch = 0 : i64, scratch_operands = 1 : i64, tpu.core_type = #tpu.core_type<tc>, window_params = [{transform_indices = @transform_0, window_bounds = array<i64: 1, 16, 16, 64>}, {pipeline_mode = #tpu.pipeline_mode<synchronous>, transform_indices = @transform_1, window_bounds = array<i64: 3, 64, 192>}, {pipeline_mode = #tpu.pipeline_mode<synchronous>, transform_indices = @transform_2, window_bounds = array<i64: 1, 64>}, {pipeline_mode = #tpu.pipeline_mode<synchronous>, transform_indices = @transform_3, window_bounds = array<i64: 3, 64, 192>}, {pipeline_mode = #tpu.pipeline_mode<synchronous>, transform_indices = @transform_4, window_bounds = array<i64: 1, 64>}, {pipeline_mode = #tpu.pipeline_mode<synchronous>, transform_indices = @transform_5, window_bounds = array<i64: 3, 64, 192>}, {pipeline_mode = #tpu.pipeline_mode<synchronous>, transform_indices = @transform_6, window_bounds = array<i64: 1, 64>}, {transform_indices = @transform_7, window_bounds = array<i64: 1, 16, 16, 64>}]} {
    %cst = arith.constant 0.000000e+00 : bf16
    %0 = vector.broadcast %cst : bf16 to vector<1x48x64xbf16>
    %c0 = arith.constant 0 : index
    %c0_0 = arith.constant 0 : index
    %c0_1 = arith.constant 0 : index
    %1 = vector.load %arg9[%c0, %c0_0, %c0_1] : memref<18x48x64xbf16, #tpu.memory_space<vmem>>, vector<1x48x64xbf16>
    tpu.vector_store %arg9[%c0, %c0_0, %c0_1], %0 {strides = array<i32>} : memref<18x48x64xbf16, #tpu.memory_space<vmem>>, vector<1x48x64xbf16>,
    %c17 = arith.constant 17 : index
    %c0_2 = arith.constant 0 : index
    %c0_3 = arith.constant 0 : index
    %2 = vector.load %arg9[%c17, %c0_2, %c0_3] : memref<18x48x64xbf16, #tpu.memory_space<vmem>>, vector<1x48x64xbf16>
    tpu.vector_store %arg9[%c17, %c0_2, %c0_3], %0 {strides = array<i32>} : memref<18x48x64xbf16, #tpu.memory_space<vmem>>, vector<1x48x64xbf16>,
    %cst_4 = arith.constant 0.000000e+00 : bf16
    %3 = vector.broadcast %cst_4 : bf16 to vector<18x2x64xbf16>
    %c0_5 = arith.constant 0 : index
    %c14 = arith.constant 14 : index
    %c0_6 = arith.constant 0 : index
    %4 = vector.load %arg9[%c0_5, %c14, %c0_6] : memref<18x48x64xbf16, #tpu.memory_space<vmem>>, vector<18x2x64xbf16>
    tpu.vector_store %arg9[%c0_5, %c14, %c0_6], %3 {strides = array<i32>} : memref<18x48x64xbf16, #tpu.memory_space<vmem>>, vector<18x2x64xbf16>,
    %c0_7 = arith.constant 0 : index
    %c32 = arith.constant 32 : index
    %c0_8 = arith.constant 0 : index
    %5 = vector.load %arg9[%c0_7, %c32, %c0_8] : memref<18x48x64xbf16, #tpu.memory_space<vmem>>, vector<18x2x64xbf16>
    tpu.vector_store %arg9[%c0_7, %c32, %c0_8], %3 {strides = array<i32>} : memref<18x48x64xbf16, #tpu.memory_space<vmem>>, vector<18x2x64xbf16>,
    %c0_9 = arith.constant 0 : index
    %c0_10 = arith.constant 0 : index
    %c0_11 = arith.constant 0 : index
    %c0_12 = arith.constant 0 : index
    %6 = vector.load %arg1[%c0_9, %c0_10, %c0_11, %c0_12] : memref<1x16x16x64xbf16, #tpu.memory_space<vmem>>, vector<1x16x16x64xbf16>
    %7 = vector.shape_cast %6 : vector<1x16x16x64xbf16> to vector<16x16x64xbf16>
    %c1 = arith.constant 1 : index
    %c16 = arith.constant 16 : index
    %c0_13 = arith.constant 0 : index
    %8 = vector.load %arg9[%c1, %c16, %c0_13] : memref<18x48x64xbf16, #tpu.memory_space<vmem>>, vector<16x16x64xbf16>
    tpu.vector_store %arg9[%c1, %c16, %c0_13], %7 {strides = array<i32>} : memref<18x48x64xbf16, #tpu.memory_space<vmem>>, vector<16x16x64xbf16>,
    %cst_14 = arith.constant 0.000000e+00 : f32
    %9 = vector.broadcast %cst_14 : f32 to vector<256x64xf32>
    %c0_15 = arith.constant 0 : index
    %c15 = arith.constant 15 : index
    %c0_16 = arith.constant 0 : index
    %10 = vector.load %arg9[%c0_15, %c15, %c0_16] : memref<18x48x64xbf16, #tpu.memory_space<vmem>>, vector<18x16x64xbf16>
    %11 = vector.shape_cast %10 : vector<18x16x64xbf16> to vector<288x64xbf16>
    %c0_17 = arith.constant 0 : index
    %c0_18 = arith.constant 0 : index
    %c0_19 = arith.constant 0 : index
    %12 = vector.load %arg2[%c0_17, %c0_18, %c0_19] : memref<3x64x192xbf16, #tpu.memory_space<vmem>>, vector<1x64x192xbf16>
    %13 = vector.shape_cast %12 : vector<1x64x192xbf16> to vector<64x192xbf16>
    %cst_20 = arith.constant dense<0.000000e+00> : vector<288x192xf32>
    %14 = tpu.matmul %11, %13, %cst_20 {dimension_numbers = #tpu.dot_dimension_numbers<[1], [0], [0], [1], [0, 0, 1, 1], [], []>} : vector<288x64xbf16>, vector<64x192xbf16>, vector<288x192xf32> -> vector<288x192xf32>
    %15 = vector.extract_strided_slice %14 {offsets = [0, 0], sizes = [256, 64], strides = [1, 1]} : vector<288x192xf32> to vector<256x64xf32>
    %16 = arith.addf %9, %15 : vector<256x64xf32>
    %17 = vector.extract_strided_slice %14 {offsets = [16, 64], sizes = [256, 64], strides = [1, 1]} : vector<288x192xf32> to vector<256x64xf32>
    %18 = arith.addf %16, %17 : vector<256x64xf32>
    %19 = vector.extract_strided_slice %14 {offsets = [32, 128], sizes = [256, 64], strides = [1, 1]} : vector<288x192xf32> to vector<256x64xf32>
    %20 = arith.addf %18, %19 : vector<256x64xf32>
    %c0_21 = arith.constant 0 : index
    %c16_22 = arith.constant 16 : index
    %c0_23 = arith.constant 0 : index
    %21 = vector.load %arg9[%c0_21, %c16_22, %c0_23] : memref<18x48x64xbf16, #tpu.memory_space<vmem>>, vector<18x16x64xbf16>
    %22 = vector.shape_cast %21 : vector<18x16x64xbf16> to vector<288x64xbf16>
    %c1_24 = arith.constant 1 : index
    %c0_25 = arith.constant 0 : index
    %c0_26 = arith.constant 0 : index
    %23 = vector.load %arg2[%c1_24, %c0_25, %c0_26] : memref<3x64x192xbf16, #tpu.memory_space<vmem>>, vector<1x64x192xbf16>
    %24 = vector.shape_cast %23 : vector<1x64x192xbf16> to vector<64x192xbf16>
    %cst_27 = arith.constant dense<0.000000e+00> : vector<288x192xf32>
    %25 = tpu.matmul %22, %24, %cst_27 {dimension_numbers = #tpu.dot_dimension_numbers<[1], [0], [0], [1], [0, 0, 1, 1], [], []>} : vector<288x64xbf16>, vector<64x192xbf16>, vector<288x192xf32> -> vector<288x192xf32>
    %26 = vector.extract_strided_slice %25 {offsets = [0, 0], sizes = [256, 64], strides = [1, 1]} : vector<288x192xf32> to vector<256x64xf32>
    %27 = arith.addf %20, %26 : vector<256x64xf32>
    %28 = vector.extract_strided_slice %25 {offsets = [16, 64], sizes = [256, 64], strides = [1, 1]} : vector<288x192xf32> to vector<256x64xf32>
    %29 = arith.addf %27, %28 : vector<256x64xf32>
    %30 = vector.extract_strided_slice %25 {offsets = [32, 128], sizes = [256, 64], strides = [1, 1]} : vector<288x192xf32> to vector<256x64xf32>
    %31 = arith.addf %29, %30 : vector<256x64xf32>
    %c0_28 = arith.constant 0 : index
    %c17_29 = arith.constant 17 : index
    %c0_30 = arith.constant 0 : index
    %32 = vector.load %arg9[%c0_28, %c17_29, %c0_30] : memref<18x48x64xbf16, #tpu.memory_space<vmem>>, vector<18x16x64xbf16>
    %33 = vector.shape_cast %32 : vector<18x16x64xbf16> to vector<288x64xbf16>
    %c2 = arith.constant 2 : index
    %c0_31 = arith.constant 0 : index
    %c0_32 = arith.constant 0 : index
    %34 = vector.load %arg2[%c2, %c0_31, %c0_32] : memref<3x64x192xbf16, #tpu.memory_space<vmem>>, vector<1x64x192xbf16>
    %35 = vector.shape_cast %34 : vector<1x64x192xbf16> to vector<64x192xbf16>
    %cst_33 = arith.constant dense<0.000000e+00> : vector<288x192xf32>
    %36 = tpu.matmul %33, %35, %cst_33 {dimension_numbers = #tpu.dot_dimension_numbers<[1], [0], [0], [1], [0, 0, 1, 1], [], []>} : vector<288x64xbf16>, vector<64x192xbf16>, vector<288x192xf32> -> vector<288x192xf32>
    %37 = vector.extract_strided_slice %36 {offsets = [0, 0], sizes = [256, 64], strides = [1, 1]} : vector<288x192xf32> to vector<256x64xf32>
    %38 = arith.addf %31, %37 : vector<256x64xf32>
    %39 = vector.extract_strided_slice %36 {offsets = [16, 64], sizes = [256, 64], strides = [1, 1]} : vector<288x192xf32> to vector<256x64xf32>
    %40 = arith.addf %38, %39 : vector<256x64xf32>
    %41 = vector.extract_strided_slice %36 {offsets = [32, 128], sizes = [256, 64], strides = [1, 1]} : vector<288x192xf32> to vector<256x64xf32>
    %42 = arith.addf %40, %41 : vector<256x64xf32>
    %c0_34 = arith.constant 0 : index
    %c0_35 = arith.constant 0 : index
    %43 = vector.load %arg3[%c0_34, %c0_35] : memref<1x64xf32, #tpu.memory_space<vmem>>, vector<1x64xf32>
    %44 = vector.broadcast %43 : vector<1x64xf32> to vector<256x64xf32>
    %45 = arith.addf %42, %44 : vector<256x64xf32>
    %cst_36 = arith.constant 0.000000e+00 : f32
    %46 = vector.broadcast %cst_36 : f32 to vector<256x64xf32>
    %47 = arith.cmpf oge, %45, %46 : vector<256x64xf32>
    %cst_37 = arith.constant 2.000000e-01 : f32
    %48 = vector.broadcast %cst_37 : f32 to vector<256x64xf32>
    %49 = arith.mulf %48, %45 : vector<256x64xf32>
    %50 = arith.select %47, %45, %49 : vector<256x64xi1>, vector<256x64xf32>
    %51 = vector.shape_cast %50 : vector<256x64xf32> to vector<16x16x64xf32>
    %52 = arith.truncf %51 : vector<16x16x64xf32> to vector<16x16x64xbf16>
    %c1_38 = arith.constant 1 : index
    %c16_39 = arith.constant 16 : index
    %c0_40 = arith.constant 0 : index
    %53 = vector.load %arg9[%c1_38, %c16_39, %c0_40] : memref<18x48x64xbf16, #tpu.memory_space<vmem>>, vector<16x16x64xbf16>
    tpu.vector_store %arg9[%c1_38, %c16_39, %c0_40], %52 {strides = array<i32>} : memref<18x48x64xbf16, #tpu.memory_space<vmem>>, vector<16x16x64xbf16>,
    %cst_41 = arith.constant 0.000000e+00 : f32
    %54 = vector.broadcast %cst_41 : f32 to vector<256x64xf32>
    %c0_42 = arith.constant 0 : index
    %c15_43 = arith.constant 15 : index
    %c0_44 = arith.constant 0 : index
    %55 = vector.load %arg9[%c0_42, %c15_43, %c0_44] : memref<18x48x64xbf16, #tpu.memory_space<vmem>>, vector<18x16x64xbf16>
    %56 = vector.shape_cast %55 : vector<18x16x64xbf16> to vector<288x64xbf16>
    %c0_45 = arith.constant 0 : index
    %c0_46 = arith.constant 0 : index
    %c0_47 = arith.constant 0 : index
    %57 = vector.load %arg4[%c0_45, %c0_46, %c0_47] : memref<3x64x192xbf16, #tpu.memory_space<vmem>>, vector<1x64x192xbf16>
    %58 = vector.shape_cast %57 : vector<1x64x192xbf16> to vector<64x192xbf16>
    %cst_48 = arith.constant dense<0.000000e+00> : vector<288x192xf32>
    %59 = tpu.matmul %56, %58, %cst_48 {dimension_numbers = #tpu.dot_dimension_numbers<[1], [0], [0], [1], [0, 0, 1, 1], [], []>} : vector<288x64xbf16>, vector<64x192xbf16>, vector<288x192xf32> -> vector<288x192xf32>
    %60 = vector.extract_strided_slice %59 {offsets = [0, 0], sizes = [256, 64], strides = [1, 1]} : vector<288x192xf32> to vector<256x64xf32>
    %61 = arith.addf %54, %60 : vector<256x64xf32>
    %62 = vector.extract_strided_slice %59 {offsets = [16, 64], sizes = [256, 64], strides = [1, 1]} : vector<288x192xf32> to vector<256x64xf32>
    %63 = arith.addf %61, %62 : vector<256x64xf32>
    %64 = vector.extract_strided_slice %59 {offsets = [32, 128], sizes = [256, 64], strides = [1, 1]} : vector<288x192xf32> to vector<256x64xf32>
    %65 = arith.addf %63, %64 : vector<256x64xf32>
    %c0_49 = arith.constant 0 : index
    %c16_50 = arith.constant 16 : index
    %c0_51 = arith.constant 0 : index
    %66 = vector.load %arg9[%c0_49, %c16_50, %c0_51] : memref<18x48x64xbf16, #tpu.memory_space<vmem>>, vector<18x16x64xbf16>
    %67 = vector.shape_cast %66 : vector<18x16x64xbf16> to vector<288x64xbf16>
    %c1_52 = arith.constant 1 : index
    %c0_53 = arith.constant 0 : index
    %c0_54 = arith.constant 0 : index
    %68 = vector.load %arg4[%c1_52, %c0_53, %c0_54] : memref<3x64x192xbf16, #tpu.memory_space<vmem>>, vector<1x64x192xbf16>
    %69 = vector.shape_cast %68 : vector<1x64x192xbf16> to vector<64x192xbf16>
    %cst_55 = arith.constant dense<0.000000e+00> : vector<288x192xf32>
    %70 = tpu.matmul %67, %69, %cst_55 {dimension_numbers = #tpu.dot_dimension_numbers<[1], [0], [0], [1], [0, 0, 1, 1], [], []>} : vector<288x64xbf16>, vector<64x192xbf16>, vector<288x192xf32> -> vector<288x192xf32>
    %71 = vector.extract_strided_slice %70 {offsets = [0, 0], sizes = [256, 64], strides = [1, 1]} : vector<288x192xf32> to vector<256x64xf32>
    %72 = arith.addf %65, %71 : vector<256x64xf32>
    %73 = vector.extract_strided_slice %70 {offsets = [16, 64], sizes = [256, 64], strides = [1, 1]} : vector<288x192xf32> to vector<256x64xf32>
    %74 = arith.addf %72, %73 : vector<256x64xf32>
    %75 = vector.extract_strided_slice %70 {offsets = [32, 128], sizes = [256, 64], strides = [1, 1]} : vector<288x192xf32> to vector<256x64xf32>
    %76 = arith.addf %74, %75 : vector<256x64xf32>
    %c0_56 = arith.constant 0 : index
    %c17_57 = arith.constant 17 : index
    %c0_58 = arith.constant 0 : index
    %77 = vector.load %arg9[%c0_56, %c17_57, %c0_58] : memref<18x48x64xbf16, #tpu.memory_space<vmem>>, vector<18x16x64xbf16>
    %78 = vector.shape_cast %77 : vector<18x16x64xbf16> to vector<288x64xbf16>
    %c2_59 = arith.constant 2 : index
    %c0_60 = arith.constant 0 : index
    %c0_61 = arith.constant 0 : index
    %79 = vector.load %arg4[%c2_59, %c0_60, %c0_61] : memref<3x64x192xbf16, #tpu.memory_space<vmem>>, vector<1x64x192xbf16>
    %80 = vector.shape_cast %79 : vector<1x64x192xbf16> to vector<64x192xbf16>
    %cst_62 = arith.constant dense<0.000000e+00> : vector<288x192xf32>
    %81 = tpu.matmul %78, %80, %cst_62 {dimension_numbers = #tpu.dot_dimension_numbers<[1], [0], [0], [1], [0, 0, 1, 1], [], []>} : vector<288x64xbf16>, vector<64x192xbf16>, vector<288x192xf32> -> vector<288x192xf32>
    %82 = vector.extract_strided_slice %81 {offsets = [0, 0], sizes = [256, 64], strides = [1, 1]} : vector<288x192xf32> to vector<256x64xf32>
    %83 = arith.addf %76, %82 : vector<256x64xf32>
    %84 = vector.extract_strided_slice %81 {offsets = [16, 64], sizes = [256, 64], strides = [1, 1]} : vector<288x192xf32> to vector<256x64xf32>
    %85 = arith.addf %83, %84 : vector<256x64xf32>
    %86 = vector.extract_strided_slice %81 {offsets = [32, 128], sizes = [256, 64], strides = [1, 1]} : vector<288x192xf32> to vector<256x64xf32>
    %87 = arith.addf %85, %86 : vector<256x64xf32>
    %c0_63 = arith.constant 0 : index
    %c0_64 = arith.constant 0 : index
    %88 = vector.load %arg5[%c0_63, %c0_64] : memref<1x64xf32, #tpu.memory_space<vmem>>, vector<1x64xf32>
    %89 = vector.broadcast %88 : vector<1x64xf32> to vector<256x64xf32>
    %90 = arith.addf %87, %89 : vector<256x64xf32>
    %cst_65 = arith.constant 0.000000e+00 : f32
    %91 = vector.broadcast %cst_65 : f32 to vector<256x64xf32>
    %92 = arith.cmpf oge, %90, %91 : vector<256x64xf32>
    %cst_66 = arith.constant 2.000000e-01 : f32
    %93 = vector.broadcast %cst_66 : f32 to vector<256x64xf32>
    %94 = arith.mulf %93, %90 : vector<256x64xf32>
    %95 = arith.select %92, %90, %94 : vector<256x64xi1>, vector<256x64xf32>
    %96 = vector.shape_cast %95 : vector<256x64xf32> to vector<16x16x64xf32>
    %97 = arith.truncf %96 : vector<16x16x64xf32> to vector<16x16x64xbf16>
    %c1_67 = arith.constant 1 : index
    %c16_68 = arith.constant 16 : index
    %c0_69 = arith.constant 0 : index
    %98 = vector.load %arg9[%c1_67, %c16_68, %c0_69] : memref<18x48x64xbf16, #tpu.memory_space<vmem>>, vector<16x16x64xbf16>
    tpu.vector_store %arg9[%c1_67, %c16_68, %c0_69], %97 {strides = array<i32>} : memref<18x48x64xbf16, #tpu.memory_space<vmem>>, vector<16x16x64xbf16>,
    %cst_70 = arith.constant 0.000000e+00 : f32
    %99 = vector.broadcast %cst_70 : f32 to vector<256x64xf32>
    %c0_71 = arith.constant 0 : index
    %c15_72 = arith.constant 15 : index
    %c0_73 = arith.constant 0 : index
    %100 = vector.load %arg9[%c0_71, %c15_72, %c0_73] : memref<18x48x64xbf16, #tpu.memory_space<vmem>>, vector<18x16x64xbf16>
    %101 = vector.shape_cast %100 : vector<18x16x64xbf16> to vector<288x64xbf16>
    %c0_74 = arith.constant 0 : index
    %c0_75 = arith.constant 0 : index
    %c0_76 = arith.constant 0 : index
    %102 = vector.load %arg6[%c0_74, %c0_75, %c0_76] : memref<3x64x192xbf16, #tpu.memory_space<vmem>>, vector<1x64x192xbf16>
    %103 = vector.shape_cast %102 : vector<1x64x192xbf16> to vector<64x192xbf16>
    %cst_77 = arith.constant dense<0.000000e+00> : vector<288x192xf32>
    %104 = tpu.matmul %101, %103, %cst_77 {dimension_numbers = #tpu.dot_dimension_numbers<[1], [0], [0], [1], [0, 0, 1, 1], [], []>} : vector<288x64xbf16>, vector<64x192xbf16>, vector<288x192xf32> -> vector<288x192xf32>
    %105 = vector.extract_strided_slice %104 {offsets = [0, 0], sizes = [256, 64], strides = [1, 1]} : vector<288x192xf32> to vector<256x64xf32>
    %106 = arith.addf %99, %105 : vector<256x64xf32>
    %107 = vector.extract_strided_slice %104 {offsets = [16, 64], sizes = [256, 64], strides = [1, 1]} : vector<288x192xf32> to vector<256x64xf32>
    %108 = arith.addf %106, %107 : vector<256x64xf32>
    %109 = vector.extract_strided_slice %104 {offsets = [32, 128], sizes = [256, 64], strides = [1, 1]} : vector<288x192xf32> to vector<256x64xf32>
    %110 = arith.addf %108, %109 : vector<256x64xf32>
    %c0_78 = arith.constant 0 : index
    %c16_79 = arith.constant 16 : index
    %c0_80 = arith.constant 0 : index
    %111 = vector.load %arg9[%c0_78, %c16_79, %c0_80] : memref<18x48x64xbf16, #tpu.memory_space<vmem>>, vector<18x16x64xbf16>
    %112 = vector.shape_cast %111 : vector<18x16x64xbf16> to vector<288x64xbf16>
    %c1_81 = arith.constant 1 : index
    %c0_82 = arith.constant 0 : index
    %c0_83 = arith.constant 0 : index
    %113 = vector.load %arg6[%c1_81, %c0_82, %c0_83] : memref<3x64x192xbf16, #tpu.memory_space<vmem>>, vector<1x64x192xbf16>
    %114 = vector.shape_cast %113 : vector<1x64x192xbf16> to vector<64x192xbf16>
    %cst_84 = arith.constant dense<0.000000e+00> : vector<288x192xf32>
    %115 = tpu.matmul %112, %114, %cst_84 {dimension_numbers = #tpu.dot_dimension_numbers<[1], [0], [0], [1], [0, 0, 1, 1], [], []>} : vector<288x64xbf16>, vector<64x192xbf16>, vector<288x192xf32> -> vector<288x192xf32>
    %116 = vector.extract_strided_slice %115 {offsets = [0, 0], sizes = [256, 64], strides = [1, 1]} : vector<288x192xf32> to vector<256x64xf32>
    %117 = arith.addf %110, %116 : vector<256x64xf32>
    %118 = vector.extract_strided_slice %115 {offsets = [16, 64], sizes = [256, 64], strides = [1, 1]} : vector<288x192xf32> to vector<256x64xf32>
    %119 = arith.addf %117, %118 : vector<256x64xf32>
    %120 = vector.extract_strided_slice %115 {offsets = [32, 128], sizes = [256, 64], strides = [1, 1]} : vector<288x192xf32> to vector<256x64xf32>
    %121 = arith.addf %119, %120 : vector<256x64xf32>
    %c0_85 = arith.constant 0 : index
    %c17_86 = arith.constant 17 : index
    %c0_87 = arith.constant 0 : index
    %122 = vector.load %arg9[%c0_85, %c17_86, %c0_87] : memref<18x48x64xbf16, #tpu.memory_space<vmem>>, vector<18x16x64xbf16>
    %123 = vector.shape_cast %122 : vector<18x16x64xbf16> to vector<288x64xbf16>
    %c2_88 = arith.constant 2 : index
    %c0_89 = arith.constant 0 : index
    %c0_90 = arith.constant 0 : index
    %124 = vector.load %arg6[%c2_88, %c0_89, %c0_90] : memref<3x64x192xbf16, #tpu.memory_space<vmem>>, vector<1x64x192xbf16>
    %125 = vector.shape_cast %124 : vector<1x64x192xbf16> to vector<64x192xbf16>
    %cst_91 = arith.constant dense<0.000000e+00> : vector<288x192xf32>
    %126 = tpu.matmul %123, %125, %cst_91 {dimension_numbers = #tpu.dot_dimension_numbers<[1], [0], [0], [1], [0, 0, 1, 1], [], []>} : vector<288x64xbf16>, vector<64x192xbf16>, vector<288x192xf32> -> vector<288x192xf32>
    %127 = vector.extract_strided_slice %126 {offsets = [0, 0], sizes = [256, 64], strides = [1, 1]} : vector<288x192xf32> to vector<256x64xf32>
    %128 = arith.addf %121, %127 : vector<256x64xf32>
    %129 = vector.extract_strided_slice %126 {offsets = [16, 64], sizes = [256, 64], strides = [1, 1]} : vector<288x192xf32> to vector<256x64xf32>
    %130 = arith.addf %128, %129 : vector<256x64xf32>
    %131 = vector.extract_strided_slice %126 {offsets = [32, 128], sizes = [256, 64], strides = [1, 1]} : vector<288x192xf32> to vector<256x64xf32>
    %132 = arith.addf %130, %131 : vector<256x64xf32>
    %c0_92 = arith.constant 0 : index
    %c0_93 = arith.constant 0 : index
    %133 = vector.load %arg7[%c0_92, %c0_93] : memref<1x64xf32, #tpu.memory_space<vmem>>, vector<1x64xf32>
    %134 = vector.broadcast %133 : vector<1x64xf32> to vector<256x64xf32>
    %135 = arith.addf %132, %134 : vector<256x64xf32>
    %c0_94 = arith.constant 0 : index
    %c0_95 = arith.constant 0 : index
    %c0_96 = arith.constant 0 : index
    %c0_97 = arith.constant 0 : index
    %136 = vector.load %arg1[%c0_94, %c0_95, %c0_96, %c0_97] : memref<1x16x16x64xbf16, #tpu.memory_space<vmem>>, vector<1x16x16x64xbf16>
    %137 = vector.shape_cast %136 : vector<1x16x16x64xbf16> to vector<16x16x64xbf16>
    %138 = arith.extf %137 : vector<16x16x64xbf16> to vector<16x16x64xf32>
    %139 = vector.shape_cast %135 : vector<256x64xf32> to vector<16x16x64xf32>
    %140 = arith.addf %138, %139 : vector<16x16x64xf32>
    %141 = arith.truncf %140 : vector<16x16x64xf32> to vector<16x16x64xbf16>
    %c0_98 = arith.constant 0 : index
    %c0_99 = arith.constant 0 : index
    %c0_100 = arith.constant 0 : index
    %c0_101 = arith.constant 0 : index
    %142 = vector.load %arg8[%c0_98, %c0_99, %c0_100, %c0_101] : memref<1x16x16x64xbf16, #tpu.memory_space<vmem>>, vector<1x16x16x64xbf16>
    %143 = vector.shape_cast %142 : vector<1x16x16x64xbf16> to vector<16x16x64xbf16>
    %144 = vector.shape_cast %141 : vector<16x16x64xbf16> to vector<1x16x16x64xbf16>
    tpu.vector_store %arg8[%c0_98, %c0_99, %c0_100, %c0_101], %144 {strides = array<i32>} : memref<1x16x16x64xbf16, #tpu.memory_space<vmem>>, vector<1x16x16x64xbf16>,
    return
  }
  func.func @transform_0(%arg0: i32) -> (i32, i32, i32, i32) {
    %c0_i32 = arith.constant 0 : i32
    %c0_i32_0 = arith.constant 0 : i32
    %c0_i32_1 = arith.constant 0 : i32
    %c0_i32_2 = arith.constant 0 : i32
    return %arg0, %c0_i32, %c0_i32_0, %c0_i32_1 : i32, i32, i32, i32
  }
  func.func @transform_1(%arg0: i32) -> (i32, i32, i32) {
    %c0_i32 = arith.constant 0 : i32
    %c0_i32_0 = arith.constant 0 : i32
    %c0_i32_1 = arith.constant 0 : i32
    %c0_i32_2 = arith.constant 0 : i32
    return %c0_i32, %c0_i32_0, %c0_i32_1 : i32, i32, i32
  }
  func.func @transform_2(%arg0: i32) -> (i32, i32) {
    %c0_i32 = arith.constant 0 : i32
    %c0_i32_0 = arith.constant 0 : i32
    %c0_i32_1 = arith.constant 0 : i32
    return %c0_i32, %c0_i32_0 : i32, i32
  }
  func.func @transform_3(%arg0: i32) -> (i32, i32, i32) {
    %c0_i32 = arith.constant 0 : i32
    %c0_i32_0 = arith.constant 0 : i32
    %c0_i32_1 = arith.constant 0 : i32
    %c0_i32_2 = arith.constant 0 : i32
    return %c0_i32, %c0_i32_0, %c0_i32_1 : i32, i32, i32
  }
  func.func @transform_4(%arg0: i32) -> (i32, i32) {
    %c0_i32 = arith.constant 0 : i32
    %c0_i32_0 = arith.constant 0 : i32
    %c0_i32_1 = arith.constant 0 : i32
    return %c0_i32, %c0_i32_0 : i32, i32
  }
  func.func @transform_5(%arg0: i32) -> (i32, i32, i32) {
    %c0_i32 = arith.constant 0 : i32
    %c0_i32_0 = arith.constant 0 : i32
    %c0_i32_1 = arith.constant 0 : i32
    %c0_i32_2 = arith.constant 0 : i32
    return %c0_i32, %c0_i32_0, %c0_i32_1 : i32, i32, i32
  }
  func.func @transform_6(%arg0: i32) -> (i32, i32) {
    %c0_i32 = arith.constant 0 : i32
    %c0_i32_0 = arith.constant 0 : i32
    %c0_i32_1 = arith.constant 0 : i32
    return %c0_i32, %c0_i32_0 : i32, i32
  }
  func.func @transform_7(%arg0: i32) -> (i32, i32, i32, i32) {
    %c0_i32 = arith.constant 0 : i32
    %c0_i32_0 = arith.constant 0 : i32
    %c0_i32_1 = arith.constant 0 : i32
    %c0_i32_2 = arith.constant 0 : i32
    return %arg0, %c0_i32, %c0_i32_0, %c0_i32_1 : i32, i32, i32, i32
  }
}

</mosaic_0001>

<llo_original>
// kernel: generator_forward.5
$region0: #{generator_forward.5}
  #allocation0 [shape = 'u32[]', space=smem, size = 0x4, offset = 0x4, fixed_abs, tag = 'smem constant byte address 0x4 - core index']
  #allocation1 [shape = 'u32[72,128]{1,0:T(1,128)}', space=vmem, size = 0x9000, scoped, tag = 'internal scratch']
  #allocation2 [shape = 'bf16[18,48,64]{2,1,0:T(8,128)(2,1)}', space=vmem, size = 0x36000, scoped, tag = 'scratch operand']
  %s0 = inlined_call_operand.vmem [shape: bf16[2,16,16,64], index: 0, kind: input, shape index: {}, may-alias: {0,7}]
  %s1 = inlined_call_operand.vmem [shape: bf16[3,64,192], index: 1, kind: input, shape index: {}]
  %s2 = inlined_call_operand.vmem [shape: f32[1,64], index: 2, kind: input, shape index: {}]
  %s3 = inlined_call_operand.vmem [shape: bf16[3,64,192], index: 3, kind: input, shape index: {}]
  %s4 = inlined_call_operand.vmem [shape: f32[1,64], index: 4, kind: input, shape index: {}]
  %s5 = inlined_call_operand.vmem [shape: bf16[3,64,192], index: 5, kind: input, shape index: {}]
  %s6 = inlined_call_operand.vmem [shape: f32[1,64], index: 6, kind: input, shape index: {}]
  %s7 = inlined_call_operand.vmem [shape: bf16[2,16,16,64], index: 7, kind: output, shape index: {}, may-alias: {0,7}]
  %s8 = sld [smem:[#allocation0]]
  $region61: #{generator_forward.5} parent=0
    _
  %s10 = ssub.s32 1, %s8
  %s11 = scalar_select 0, %s10, %s8
  loop: start=0, step=1, limit=4
  $region2: #{generator_forward.5} parent=0 // loop_pre_header
    _
  $region3: #{generator_forward.5} parent=0 // loop_header
    %s13 = sphi 0, %s17
    %p14 = scmp.ge.s32.totalorder %s13, 4
    %s23 = sphi 0, %s25
    %s26 = sphi 0, %s23
    %s27 = sphi 0, %s26
    %s43 = sphi 0, %s27
    %s47 = sphi 0, %s47
    %s49 = sphi 0, %s47
    %s50 = sphi 0, %s49
    %s64 = sphi 0, %s50
    %s68 = sphi 0, %s68
    %s70 = sphi 0, %s68
    %s71 = sphi 0, %s70
    %s85 = sphi 0, %s71
    %s89 = sphi 0, %s89
    %s91 = sphi 0, %s89
    %s92 = sphi 0, %s91
    %s106 = sphi 0, %s92
    %s110 = sphi 0, %s110
    %s112 = sphi 0, %s110
    %s113 = sphi 0, %s112
    %s127 = sphi 0, %s113
    %s131 = sphi 0, %s131
    %s133 = sphi 0, %s131
    %s134 = sphi 0, %s133
    %s148 = sphi 0, %s134
    %s152 = sphi 0, %s152
    %s154 = sphi 0, %s152
    %s155 = sphi 0, %s154
    %s169 = sphi 0, %s155
    %s175 = sphi 0, %s177
    %s178 = sphi 0, %s175
    %s179 = sphi 0, %s178
    %s195 = sphi 0, %s179
  $region4: #{generator_forward.5} parent=0 // loop_header_branch
    %16 = sbr.rel (%p14) target = $region8
  $region5: #{generator_forward.5} parent=0 // loop_body
    %s18 = ssub.s32 %s13, 1
    %s19 = ssub.s32 %s13, 2
    %s20 = sadd.s32 %s13, 1
    %s21 = ssub.s32 %s13, %s20
    %p22 = scmp.eq.s32.totalorder %s21, 0
    %s24 = sadd.s32 %s23, 1
    %s25 = scalar_select %p22, %s23, %s24
    %p28 = pneg %p22
    %p29 = scmp.eq.s32.totalorder %s13, 1
    %p30 = por %p28, %p29
    %p31 = scmp.ne.s32.totalorder %s23, %s26
    %p32 = scmp.eq.s32.totalorder %s13, 0
    %p33 = por %p31, %p32
    %p34 = scmp.ne.s32.totalorder %s23, %s26
    %p35 = scmp.eq.s32.totalorder %s18, 1
    %p36 = por %p34, %p35
    %p37 = scmp.ne.s32.totalorder %s26, %s27
    %p38 = scmp.eq.s32.totalorder %s18, 0
    %p39 = por %p37, %p38
    %p40 = scmp.ne.s32.totalorder %s26, %s27
    %p41 = scmp.eq.s32.totalorder %s19, 1
    %p42 = por %p40, %p41
    %p44 = scmp.ne.s32.totalorder %s27, %s43
    %p45 = scmp.eq.s32.totalorder %s19, 0
    %p46 = por %p44, %p45
    %s48 = sadd.s32 %s47, 1
    %p51 = scmp.eq.s32.totalorder %s13, 1
    %p52 = scmp.ne.s32.totalorder %s47, %s49
    %p53 = scmp.eq.s32.totalorder %s13, 0
    %p54 = por %p52, %p53
    %p55 = scmp.ne.s32.totalorder %s47, %s49
    %p56 = scmp.eq.s32.totalorder %s18, 1
    %p57 = por %p55, %p56
    %p58 = scmp.ne.s32.totalorder %s49, %s50
    %p59 = scmp.eq.s32.totalorder %s18, 0
    %p60 = por %p58, %p59
    %p61 = scmp.ne.s32.totalorder %s49, %s50
    %p62 = scmp.eq.s32.totalorder %s19, 1
    %p63 = por %p61, %p62
    %p65 = scmp.ne.s32.totalorder %s50, %s64
    %p66 = scmp.eq.s32.totalorder %s19, 0
    %p67 = por %p65, %p66
    %s69 = sadd.s32 %s68, 1
    %p72 = scmp.eq.s32.totalorder %s13, 1
    %p73 = scmp.ne.s32.totalorder %s68, %s70
    %p74 = scmp.eq.s32.totalorder %s13, 0
    %p75 = por %p73, %p74
    %p76 = scmp.ne.s32.totalorder %s68, %s70
    %p77 = scmp.eq.s32.totalorder %s18, 1
    %p78 = por %p76, %p77
    %p79 = scmp.ne.s32.totalorder %s70, %s71
    %p80 = scmp.eq.s32.totalorder %s18, 0
    %p81 = por %p79, %p80
    %p82 = scmp.ne.s32.totalorder %s70, %s71
    %p83 = scmp.eq.s32.totalorder %s19, 1
    %p84 = por %p82, %p83
    %p86 = scmp.ne.s32.totalorder %s71, %s85
    %p87 = scmp.eq.s32.totalorder %s19, 0
    %p88 = por %p86, %p87
    %s90 = sadd.s32 %s89, 1
    %p93 = scmp.eq.s32.totalorder %s13, 1
    %p94 = scmp.ne.s32.totalorder %s89, %s91
    %p95 = scmp.eq.s32.totalorder %s13, 0
    %p96 = por %p94, %p95
    %p97 = scmp.ne.s32.totalorder %s89, %s91
    %p98 = scmp.eq.s32.totalorder %s18, 1
    %p99 = por %p97, %p98
    %p100 = scmp.ne.s32.totalorder %s91, %s92
    %p101 = scmp.eq.s32.totalorder %s18, 0
    %p102 = por %p100, %p101
    %p103 = scmp.ne.s32.totalorder %s91, %s92
    %p104 = scmp.eq.s32.totalorder %s19, 1
    %p105 = por %p103, %p104
    %p107 = scmp.ne.s32.totalorder %s92, %s106
    %p108 = scmp.eq.s32.totalorder %s19, 0
    %p109 = por %p107, %p108
    %s111 = sadd.s32 %s110, 1
    %p114 = scmp.eq.s32.totalorder %s13, 1
    %p115 = scmp.ne.s32.totalorder %s110, %s112
    %p116 = scmp.eq.s32.totalorder %s13, 0
    %p117 = por %p115, %p116
    %p118 = scmp.ne.s32.totalorder %s110, %s112
    %p119 = scmp.eq.s32.totalorder %s18, 1
    %p120 = por %p118, %p119
    %p121 = scmp.ne.s32.totalorder %s112, %s113
    %p122 = scmp.eq.s32.totalorder %s18, 0
    %p123 = por %p121, %p122
    %p124 = scmp.ne.s32.totalorder %s112, %s113
    %p125 = scmp.eq.s32.totalorder %s19, 1
    %p126 = por %p124, %p125
    %p128 = scmp.ne.s32.totalorder %s113, %s127
    %p129 = scmp.eq.s32.totalorder %s19, 0
    %p130 = por %p128, %p129
    %s132 = sadd.s32 %s131, 1
    %p135 = scmp.eq.s32.totalorder %s13, 1
    %p136 = scmp.ne.s32.totalorder %s131, %s133
    %p137 = scmp.eq.s32.totalorder %s13, 0
    %p138 = por %p136, %p137
    %p139 = scmp.ne.s32.totalorder %s131, %s133
    %p140 = scmp.eq.s32.totalorder %s18, 1
    %p141 = por %p139, %p140
    %p142 = scmp.ne.s32.totalorder %s133, %s134
    %p143 = scmp.eq.s32.totalorder %s18, 0
    %p144 = por %p142, %p143
    %p145 = scmp.ne.s32.totalorder %s133, %s134
    %p146 = scmp.eq.s32.totalorder %s19, 1
    %p147 = por %p145, %p146
    %p149 = scmp.ne.s32.totalorder %s134, %s148
    %p150 = scmp.eq.s32.totalorder %s19, 0
    %p151 = por %p149, %p150
    %s153 = sadd.s32 %s152, 1
    %p156 = scmp.eq.s32.totalorder %s13, 1
    %p157 = scmp.ne.s32.totalorder %s152, %s154
    %p158 = scmp.eq.s32.totalorder %s13, 0
    %p159 = por %p157, %p158
    %p160 = scmp.ne.s32.totalorder %s152, %s154
    %p161 = scmp.eq.s32.totalorder %s18, 1
    %p162 = por %p160, %p161
    %p163 = scmp.ne.s32.totalorder %s154, %s155
    %p164 = scmp.eq.s32.totalorder %s18, 0
    %p165 = por %p163, %p164
    %p166 = scmp.ne.s32.totalorder %s154, %s155
    %p167 = scmp.eq.s32.totalorder %s19, 1
    %p168 = por %p166, %p167
    %p170 = scmp.ne.s32.totalorder %s155, %s169
    %p171 = scmp.eq.s32.totalorder %s19, 0
    %p172 = por %p170, %p171
    %s173 = ssub.s32 %s13, %s20
    %p174 = scmp.eq.s32.totalorder %s173, 0
    %s176 = sadd.s32 %s175, 1
    %s177 = scalar_select %p174, %s175, %s176
    %p180 = pneg %p174
    %p181 = scmp.eq.s32.totalorder %s13, 1
    %p182 = por %p180, %p181
    %p183 = scmp.ne.s32.totalorder %s175, %s178
    %p184 = scmp.eq.s32.totalorder %s13, 0
    %p185 = por %p183, %p184
    %p186 = scmp.ne.s32.totalorder %s175, %s178
    %p187 = scmp.eq.s32.totalorder %s18, 1
    %p188 = por %p186, %p187
    %p189 = scmp.ne.s32.totalorder %s178, %s179
    %p190 = scmp.eq.s32.totalorder %s18, 0
    %p191 = por %p189, %p190
    %p192 = scmp.ne.s32.totalorder %s178, %s179
    %p193 = scmp.eq.s32.totalorder %s19, 1
    %p194 = por %p192, %p193
    %p196 = scmp.ne.s32.totalorder %s179, %s195
    %p197 = scmp.eq.s32.totalorder %s19, 0
    %p198 = por %p196, %p197
    %p199 = scmp.le.s32.totalorder 1, %s13
    %p200 = scmp.lt.s32.totalorder %s13, 3
    %p201 = pnand %p199, %p200
    %p202 = pneg %p201
    // Predicated region
    $region9: #{generator_forward.5} parent=5 // pred_check
      _
    $region10: #{generator_forward.5} parent=5 // pred_check_branch
      %204 = sbr.rel (%p201) target = $region12
    $region11: #{generator_forward.5} parent=5 // pred_region
      %s205 = ssub.s32 %s13, 1
      // Predicated region
      $region13: #{generator_forward.5} parent=11 // pred_check
        %p206 = pneg %p60
      $region14: #{generator_forward.5} parent=11 // pred_check_branch
        %208 = sbr.rel (%p206) target = $region16
      $region15: #{generator_forward.5} parent=11 // pred_region
        _
      $region16: #{generator_forward.5} parent=11 // pred_fallthru
        _
      // Predicated region
      $region17: #{generator_forward.5} parent=11 // pred_check
        %p209 = pneg %p81
      $region18: #{generator_forward.5} parent=11 // pred_check_branch
        %211 = sbr.rel (%p209) target = $region20
      $region19: #{generator_forward.5} parent=11 // pred_region
        _
      $region20: #{generator_forward.5} parent=11 // pred_fallthru
        _
      // Predicated region
      $region21: #{generator_forward.5} parent=11 // pred_check
        %p212 = pneg %p102
      $region22: #{generator_forward.5} parent=11 // pred_check_branch
        %214 = sbr.rel (%p212) target = $region24
      $region23: #{generator_forward.5} parent=11 // pred_region
        _
      $region24: #{generator_forward.5} parent=11 // pred_fallthru
        _
      // Predicated region
      $region25: #{generator_forward.5} parent=11 // pred_check
        %p215 = pneg %p123
      $region26: #{generator_forward.5} parent=11 // pred_check_branch
        %217 = sbr.rel (%p215) target = $region28
      $region27: #{generator_forward.5} parent=11 // pred_region
        _
      $region28: #{generator_forward.5} parent=11 // pred_fallthru
        _
      // Predicated region
      $region29: #{generator_forward.5} parent=11 // pred_check
        %p218 = pneg %p144
      $region30: #{generator_forward.5} parent=11 // pred_check_branch
        %220 = sbr.rel (%p218) target = $region32
      $region31: #{generator_forward.5} parent=11 // pred_region
        _
      $region32: #{generator_forward.5} parent=11 // pred_fallthru
        _
      // Predicated region
      $region33: #{generator_forward.5} parent=11 // pred_check
        %p221 = pneg %p165
      $region34: #{generator_forward.5} parent=11 // pred_check_branch
        %223 = sbr.rel (%p221) target = $region36
      $region35: #{generator_forward.5} parent=11 // pred_region
        _
      $region36: #{generator_forward.5} parent=11 // pred_fallthru
        _
    $region12: #{generator_forward.5} parent=5 // pred_fallthru
      _
    %p224 = scmp.lt.s32.totalorder %s13, 2
    // Predicated region
    $region37: #{generator_forward.5} parent=5 // pred_check
      %p225 = pneg %p224
    $region38: #{generator_forward.5} parent=5 // pred_check_branch
      %227 = sbr.rel (%p225) target = $region40
    $region39: #{generator_forward.5} parent=5 // pred_region
      // Predicated region
      $region41: #{generator_forward.5} parent=39 // pred_check
        %p228 = pneg %p33
      $region42: #{generator_forward.5} parent=39 // pred_check_branch
        %230 = sbr.rel (%p228) target = $region44
      $region43: #{generator_forward.5} parent=39 // pred_region
        %p231 = scmp.lt.s32.totalorder %s13, 1
        %s232 = scalar_select %p231, %s13, 1
        %s233 = smul.addr %s232, 32
        %s234 = smul.addr %s233, 4
        %s235 = scalar_lea.vmem %s0, %s234
      $region44: #{generator_forward.5} parent=39 // pred_fallthru
        _
    $region40: #{generator_forward.5} parent=5 // pred_fallthru
      _
    %p236 = scmp.le.s32.totalorder 1, %s13
    %p237 = scmp.lt.s32.totalorder %s13, 3
    %p238 = pnand %p236, %p237
    %p239 = pneg %p238
    // Predicated region
    $region45: #{generator_forward.5} parent=5 // pred_check
      _
    $region46: #{generator_forward.5} parent=5 // pred_check_branch
      %241 = sbr.rel (%p238) target = $region48
    $region47: #{generator_forward.5} parent=5 // pred_region
      %s242 = ssub.s32 %s13, 1
      %p243 = scmp.lt.s32.totalorder %s18, 1
      %s244 = scalar_select %p243, %s18, 1
      %s245 = smul.addr %s244, 32
      %s246 = smul.addr %s245, 4
      %s247 = scalar_lea.vmem %s0, %s246
      %p248 = pneg %p39
      %p249 = pneg %p36
      %p250 = pneg %p60
      %p251 = pneg %p57
      %p252 = pneg %p81
      %p253 = pneg %p78
      %p254 = pneg %p102
      %p255 = pneg %p99
      %p256 = pneg %p123
      %p257 = pneg %p120
      %p258 = pneg %p144
      %p259 = pneg %p141
      %p260 = pneg %p165
      %p261 = pneg %p162
      %p262 = pneg %p191
      %p263 = pneg %p188
      %p264 = scmp.lt.s32.totalorder %s18, 1
      %s265 = scalar_select %p264, %s18, 1
      %s266 = smul.addr %s265, 32
      %s267 = smul.addr %s266, 4
      %s268 = scalar_lea.vmem %s7, %s267
      %p269 = scmp.lt.s32.totalorder %s18, 1
      %s270 = scalar_select %p269, %s18, 1
      %s271 = smul.addr %s270, 32
      %s272 = smul.addr %s271, 4
      %s273 = scalar_lea.vmem %s0, %s272
      %p274 = scmp.lt.s32.totalorder %s18, 1
      %s275 = scalar_select %p274, %s18, 1
      %s276 = smul.addr %s275, 32
      %s277 = smul.addr %s276, 4
      %s278 = scalar_lea.vmem %s7, %s277
      %vm280 = vcmask 519168
      %281 = vst.msk [vmem:[#allocation2] sm:$0xf] %vm280, 0
      %282 = vst.msk [vmem:[#allocation2 + $0x4] sm:$0xf] %vm280, 0
      %283 = vst.msk [vmem:[#allocation2 + $0x8] sm:$0xf] %vm280, 0
      %284 = vst.msk [vmem:[#allocation2 + $0xc] sm:$0xf] %vm280, 0
      %285 = vst.msk [vmem:[#allocation2 + $0x10] sm:$0xf] %vm280, 0
      %286 = vst.msk [vmem:[#allocation2 + $0x14] sm:$0xf] %vm280, 0
      %s287 = scalar_lea.vmem [#allocation2], 408
      %288 = vst.msk [vmem:[%s287] sm:$0xf] %vm280, 0
      %289 = vst.msk [vmem:[%s287 + $0x4] sm:$0xf] %vm280, 0
      %290 = vst.msk [vmem:[%s287 + $0x8] sm:$0xf] %vm280, 0
      %291 = vst.msk [vmem:[%s287 + $0xc] sm:$0xf] %vm280, 0
      %292 = vst.msk [vmem:[%s287 + $0x10] sm:$0xf] %vm280, 0
      %293 = vst.msk [vmem:[%s287 + $0x14] sm:$0xf] %vm280, 0
      %vm294 = vcmask 519171
      %295 = vst.msk [vmem:[#allocation2 + $0x4] sm:$0x8] %vm294, 0
      %296 = vst.msk [vmem:[#allocation2 + $0x1c] sm:$0x8] %vm294, 0
      %297 = vst.msk [vmem:[#allocation2 + $0x34] sm:$0x8] %vm294, 0
      %298 = vst.msk [vmem:[#allocation2 + $0x4c] sm:$0x8] %vm294, 0
      %299 = vst.msk [vmem:[#allocation2 + $0x64] sm:$0x8] %vm294, 0
      %300 = vst.msk [vmem:[#allocation2 + $0x7c] sm:$0x8] %vm294, 0
      %301 = vst.msk [vmem:[#allocation2 + $0x94] sm:$0x8] %vm294, 0
      %302 = vst.msk [vmem:[#allocation2 + $0xac] sm:$0x8] %vm294, 0
      %303 = vst.msk [vmem:[#allocation2 + $0xc4] sm:$0x8] %vm294, 0
      %304 = vst.msk [vmem:[#allocation2 + $0xdc] sm:$0x8] %vm294, 0
      %305 = vst.msk [vmem:[#allocation2 + $0xf4] sm:$0x8] %vm294, 0
      %306 = vst.msk [vmem:[#allocation2 + $0x10c] sm:$0x8] %vm294, 0
      %307 = vst.msk [vmem:[#allocation2 + $0x124] sm:$0x8] %vm294, 0
      %308 = vst.msk [vmem:[#allocation2 + $0x13c] sm:$0x8] %vm294, 0
      %309 = vst.msk [vmem:[#allocation2 + $0x154] sm:$0x8] %vm294, 0
      %310 = vst.msk [vmem:[#allocation2 + $0x16c] sm:$0x8] %vm294, 0
      %311 = vst.msk [vmem:[#allocation2 + $0x184] sm:$0x8] %vm294, 0
      %312 = vst.msk [vmem:[#allocation2 + $0x19c] sm:$0x8] %vm294, 0
      %vm313 = vcmask 516096
      %314 = vst.msk [vmem:[#allocation2 + $0x10] sm:$0x1] %vm313, 0
      %315 = vst.msk [vmem:[#allocation2 + $0x28] sm:$0x1] %vm313, 0
      %316 = vst.msk [vmem:[#allocation2 + $0x40] sm:$0x1] %vm313, 0
      %317 = vst.msk [vmem:[#allocation2 + $0x58] sm:$0x1] %vm313, 0
      %318 = vst.msk [vmem:[#allocation2 + $0x70] sm:$0x1] %vm313, 0
      %319 = vst.msk [vmem:[#allocation2 + $0x88] sm:$0x1] %vm313, 0
      %320 = vst.msk [vmem:[#allocation2 + $0xa0] sm:$0x1] %vm313, 0
      %321 = vst.msk [vmem:[#allocation2 + $0xb8] sm:$0x1] %vm313, 0
      %322 = vst.msk [vmem:[#allocation2 + $0xd0] sm:$0x1] %vm313, 0
      %323 = vst.msk [vmem:[#allocation2 + $0xe8] sm:$0x1] %vm313, 0
      %324 = vst.msk [vmem:[#allocation2 + $0x100] sm:$0x1] %vm313, 0
      %325 = vst.msk [vmem:[#allocation2 + $0x118] sm:$0x1] %vm313, 0
      %326 = vst.msk [vmem:[#allocation2 + $0x130] sm:$0x1] %vm313, 0
      %327 = vst.msk [vmem:[#allocation2 + $0x148] sm:$0x1] %vm313, 0
      %328 = vst.msk [vmem:[#allocation2 + $0x160] sm:$0x1] %vm313, 0
      %329 = vst.msk [vmem:[#allocation2 + $0x178] sm:$0x1] %vm313, 0
      %330 = vst.msk [vmem:[#allocation2 + $0x190] sm:$0x1] %vm313, 0
      %331 = vst.msk [vmem:[#allocation2 + $0x1a8] sm:$0x1] %vm313, 0
      %v332 = vld [vmem:[%s273] sm:$0xf]
      %v333 = vld [vmem:[%s273 + $0x4] sm:$0xf]
      %v334 = vld [vmem:[%s273 + $0x8] sm:$0xf]
      %v335 = vld [vmem:[%s273 + $0xc] sm:$0xf]
      %v336 = vld [vmem:[%s273 + $0x10] sm:$0xf]
      %v337 = vld [vmem:[%s273 + $0x14] sm:$0xf]
      %v338 = vld [vmem:[%s273 + $0x18] sm:$0xf]
      %v339 = vld [vmem:[%s273 + $0x1c] sm:$0xf]
      %v340 = vld [vmem:[%s273 + $0x20] sm:$0xf]
      %v341 = vld [vmem:[%s273 + $0x24] sm:$0xf]
      %v342 = vld [vmem:[%s273 + $0x28] sm:$0xf]
      %v343 = vld [vmem:[%s273 + $0x2c] sm:$0xf]
      %v344 = vld [vmem:[%s273 + $0x30] sm:$0xf]
      %v345 = vld [vmem:[%s273 + $0x34] sm:$0xf]
      %v346 = vld [vmem:[%s273 + $0x38] sm:$0xf]
      %v347 = vld [vmem:[%s273 + $0x3c] sm:$0xf]
      %v348 = vld [vmem:[%s273 + $0x40] sm:$0xf]
      %v349 = vld [vmem:[%s273 + $0x44] sm:$0xf]
      %v350 = vld [vmem:[%s273 + $0x48] sm:$0xf]
      %v351 = vld [vmem:[%s273 + $0x4c] sm:$0xf]
      %v352 = vld [vmem:[%s273 + $0x50] sm:$0xf]
      %v353 = vld [vmem:[%s273 + $0x54] sm:$0xf]
      %v354 = vld [vmem:[%s273 + $0x58] sm:$0xf]
      %v355 = vld [vmem:[%s273 + $0x5c] sm:$0xf]
      %v356 = vld [vmem:[%s273 + $0x60] sm:$0xf]
      %v357 = vld [vmem:[%s273 + $0x64] sm:$0xf]
      %v358 = vld [vmem:[%s273 + $0x68] sm:$0xf]
      %v359 = vld [vmem:[%s273 + $0x6c] sm:$0xf]
      %v360 = vld [vmem:[%s273 + $0x70] sm:$0xf]
      %v361 = vld [vmem:[%s273 + $0x74] sm:$0xf]
      %v362 = vld [vmem:[%s273 + $0x78] sm:$0xf]
      %v363 = vld [vmem:[%s273 + $0x7c] sm:$0xf]
      %s364 = scalar_lea.vmem [#allocation2], 24
      %365 = vst.msk [vmem:[%s364 + $0x8] sm:$0xf] %vm280, %v332
      %366 = vst.msk [vmem:[%s364 + $0xc] sm:$0xf] %vm280, %v333
      %367 = vst.msk [vmem:[%s364 + $0x20] sm:$0xf] %vm280, %v334
      %368 = vst.msk [vmem:[%s364 + $0x24] sm:$0xf] %vm280, %v335
      %369 = vst.msk [vmem:[%s364 + $0x38] sm:$0xf] %vm280, %v336
      %370 = vst.msk [vmem:[%s364 + $0x3c] sm:$0xf] %vm280, %v337
      %371 = vst.msk [vmem:[%s364 + $0x50] sm:$0xf] %vm280, %v338
      %372 = vst.msk [vmem:[%s364 + $0x54] sm:$0xf] %vm280, %v339
      %373 = vst.msk [vmem:[%s364 + $0x68] sm:$0xf] %vm280, %v340
      %374 = vst.msk [vmem:[%s364 + $0x6c] sm:$0xf] %vm280, %v341
      %375 = vst.msk [vmem:[%s364 + $0x80] sm:$0xf] %vm280, %v342
      %376 = vst.msk [vmem:[%s364 + $0x84] sm:$0xf] %vm280, %v343
      %377 = vst.msk [vmem:[%s364 + $0x98] sm:$0xf] %vm280, %v344
      %378 = vst.msk [vmem:[%s364 + $0x9c] sm:$0xf] %vm280, %v345
      %379 = vst.msk [vmem:[%s364 + $0xb0] sm:$0xf] %vm280, %v346
      %380 = vst.msk [vmem:[%s364 + $0xb4] sm:$0xf] %vm280, %v347
      %381 = vst.msk [vmem:[%s364 + $0xc8] sm:$0xf] %vm280, %v348
      %382 = vst.msk [vmem:[%s364 + $0xcc] sm:$0xf] %vm280, %v349
      %383 = vst.msk [vmem:[%s364 + $0xe0] sm:$0xf] %vm280, %v350
      %384 = vst.msk [vmem:[%s364 + $0xe4] sm:$0xf] %vm280, %v351
      %385 = vst.msk [vmem:[%s364 + $0xf8] sm:$0xf] %vm280, %v352
      %386 = vst.msk [vmem:[%s364 + $0xfc] sm:$0xf] %vm280, %v353
      %387 = vst.msk [vmem:[%s364 + $0x110] sm:$0xf] %vm280, %v354
      %388 = vst.msk [vmem:[%s364 + $0x114] sm:$0xf] %vm280, %v355
      %389 = vst.msk [vmem:[%s364 + $0x128] sm:$0xf] %vm280, %v356
      %390 = vst.msk [vmem:[%s364 + $0x12c] sm:$0xf] %vm280, %v357
      %391 = vst.msk [vmem:[%s364 + $0x140] sm:$0xf] %vm280, %v358
      %392 = vst.msk [vmem:[%s364 + $0x144] sm:$0xf] %vm280, %v359
      %393 = vst.msk [vmem:[%s364 + $0x158] sm:$0xf] %vm280, %v360
      %394 = vst.msk [vmem:[%s364 + $0x15c] sm:$0xf] %vm280, %v361
      %395 = vst.msk [vmem:[%s364 + $0x170] sm:$0xf] %vm280, %v362
      %396 = vst.msk [vmem:[%s364 + $0x174] sm:$0xf] %vm280, %v363
      %v397 = vld [vmem:[#allocation2 + $0x4] sm:$0x8]
      %v398 = vld [vmem:[#allocation2 + $0x8] sm:$0xf]
      %v399 = vld [vmem:[#allocation2 + $0xc] sm:$0xf]
      %v400 = vld [vmem:[#allocation2 + $0x1c] sm:$0x8]
      %v401 = vld [vmem:[#allocation2 + $0x20] sm:$0xf]
      %v402 = vld [vmem:[#allocation2 + $0x24] sm:$0xf]
      %v403 = vld [vmem:[#allocation2 + $0x34] sm:$0x8]
      %v404 = vld [vmem:[#allocation2 + $0x38] sm:$0xf]
      %v405 = vld [vmem:[#allocation2 + $0x3c] sm:$0xf]
      %v406 = vld [vmem:[#allocation2 + $0x4c] sm:$0x8]
      %v407 = vld [vmem:[#allocation2 + $0x50] sm:$0xf]
      %v408 = vld [vmem:[#allocation2 + $0x54] sm:$0xf]
      %v409 = vld [vmem:[#allocation2 + $0x64] sm:$0x8]
      %v410 = vld [vmem:[#allocation2 + $0x68] sm:$0xf]
      %v411 = vld [vmem:[#allocation2 + $0x6c] sm:$0xf]
      %v412 = vld [vmem:[#allocation2 + $0x7c] sm:$0x8]
      %v413 = vld [vmem:[#allocation2 + $0x80] sm:$0xf]
      %v414 = vld [vmem:[#allocation2 + $0x84] sm:$0xf]
      %v415 = vld [vmem:[#allocation2 + $0x94] sm:$0x8]
      %v416 = vld [vmem:[#allocation2 + $0x98] sm:$0xf]
      %v417 = vld [vmem:[#allocation2 + $0x9c] sm:$0xf]
      %v418 = vld [vmem:[#allocation2 + $0xac] sm:$0x8]
      %v419 = vld [vmem:[#allocation2 + $0xb0] sm:$0xf]
      %v420 = vld [vmem:[#allocation2 + $0xb4] sm:$0xf]
      %v421 = vld [vmem:[#allocation2 + $0xc4] sm:$0x8]
      %v422 = vld [vmem:[#allocation2 + $0xc8] sm:$0xf]
      %v423 = vld [vmem:[#allocation2 + $0xcc] sm:$0xf]
      %v424 = vld [vmem:[#allocation2 + $0xdc] sm:$0x8]
      %v425 = vld [vmem:[#allocation2 + $0xe0] sm:$0xf]
      %v426 = vld [vmem:[#allocation2 + $0xe4] sm:$0xf]
      %v427 = vld [vmem:[#allocation2 + $0xf4] sm:$0x8]
      %v428 = vld [vmem:[#allocation2 + $0xf8] sm:$0xf]
      %v429 = vld [vmem:[#allocation2 + $0xfc] sm:$0xf]
      %v430 = vld [vmem:[#allocation2 + $0x10c] sm:$0x8]
      %v431 = vld [vmem:[#allocation2 + $0x110] sm:$0xf]
      %v432 = vld [vmem:[#allocation2 + $0x114] sm:$0xf]
      %v433 = vld [vmem:[#allocation2 + $0x124] sm:$0x8]
      %v434 = vld [vmem:[#allocation2 + $0x128] sm:$0xf]
      %v435 = vld [vmem:[#allocation2 + $0x12c] sm:$0xf]
      %v436 = vld [vmem:[#allocation2 + $0x13c] sm:$0x8]
      %v437 = vld [vmem:[#allocation2 + $0x140] sm:$0xf]
      %v438 = vld [vmem:[#allocation2 + $0x144] sm:$0xf]
      %v439 = vld [vmem:[#allocation2 + $0x154] sm:$0x8]
      %v440 = vld [vmem:[#allocation2 + $0x158] sm:$0xf]
      %v441 = vld [vmem:[#allocation2 + $0x15c] sm:$0xf]
      %v442 = vld [vmem:[#allocation2 + $0x16c] sm:$0x8]
      %v443 = vld [vmem:[#allocation2 + $0x170] sm:$0xf]
      %v444 = vld [vmem:[#allocation2 + $0x174] sm:$0xf]
      %v445 = vld [vmem:[#allocation2 + $0x184] sm:$0x8]
      %v446 = vld [vmem:[#allocation2 + $0x188] sm:$0xf]
      %v447 = vld [vmem:[#allocation2 + $0x18c] sm:$0xf]
      %v448 = vld [vmem:[#allocation2 + $0x19c] sm:$0x8]
      %v449 = vld [vmem:[#allocation2 + $0x1a0] sm:$0xf]
      %v450 = vld [vmem:[#allocation2 + $0x1a4] sm:$0xf]
      %vm451 = vsmask.f32 256
      %vm452 = vsmask.f32 4368
      %vm453 = vmor %vm451, %vm452
      %v455 = vshrl.u32 %v397, 16
      %v457 = vrot.slane %v455, 7
      %v458 = vrot.slane %v457, 4
      %v460 = vshrl.u32 %v398, 16
      %v462 = vrot.slane %v460, 7
      %v463 = vshll.u32 %v398, 16
      %v465 = vor.u32 %v462, %v463
      %v466 = vsel %vm453, %v458, %v465
      %v467 = vrot.slane %v462, 4
      %v469 = vshrl.u32 %v399, 16
      %v471 = vrot.slane %v469, 7
      %v472 = vshll.u32 %v399, 16
      %v474 = vor.u32 %v471, %v472
      %v475 = vsel %vm453, %v467, %v474
      %v477 = vshrl.u32 %v400, 16
      %v479 = vrot.slane %v477, 7
      %v480 = vrot.slane %v479, 4
      %v482 = vshrl.u32 %v401, 16
      %v484 = vrot.slane %v482, 7
      %v485 = vshll.u32 %v401, 16
      %v487 = vor.u32 %v484, %v485
      %v488 = vsel %vm453, %v480, %v487
      %v489 = vrot.slane %v484, 4
      %v491 = vshrl.u32 %v402, 16
      %v493 = vrot.slane %v491, 7
      %v494 = vshll.u32 %v402, 16
      %v496 = vor.u32 %v493, %v494
      %v497 = vsel %vm453, %v489, %v496
      %v499 = vshrl.u32 %v403, 16
      %v501 = vrot.slane %v499, 7
      %v502 = vrot.slane %v501, 4
      %v504 = vshrl.u32 %v404, 16
      %v506 = vrot.slane %v504, 7
      %v507 = vshll.u32 %v404, 16
      %v509 = vor.u32 %v506, %v507
      %v510 = vsel %vm453, %v502, %v509
      %v511 = vrot.slane %v506, 4
      %v513 = vshrl.u32 %v405, 16
      %v515 = vrot.slane %v513, 7
      %v516 = vshll.u32 %v405, 16
      %v518 = vor.u32 %v515, %v516
      %v519 = vsel %vm453, %v511, %v518
      %v521 = vshrl.u32 %v406, 16
      %v523 = vrot.slane %v521, 7
      %v524 = vrot.slane %v523, 4
      %v526 = vshrl.u32 %v407, 16
      %v528 = vrot.slane %v526, 7
      %v529 = vshll.u32 %v407, 16
      %v531 = vor.u32 %v528, %v529
      %v532 = vsel %vm453, %v524, %v531
      %v533 = vrot.slane %v528, 4
      %v535 = vshrl.u32 %v408, 16
      %v537 = vrot.slane %v535, 7
      %v538 = vshll.u32 %v408, 16
      %v540 = vor.u32 %v537, %v538
      %v541 = vsel %vm453, %v533, %v540
      %v543 = vshrl.u32 %v409, 16
      %v545 = vrot.slane %v543, 7
      %v546 = vrot.slane %v545, 4
      %v548 = vshrl.u32 %v410, 16
      %v550 = vrot.slane %v548, 7
      %v551 = vshll.u32 %v410, 16
      %v553 = vor.u32 %v550, %v551
      %v554 = vsel %vm453, %v546, %v553
      %v555 = vrot.slane %v550, 4
      %v557 = vshrl.u32 %v411, 16
      %v559 = vrot.slane %v557, 7
      %v560 = vshll.u32 %v411, 16
      %v562 = vor.u32 %v559, %v560
      %v563 = vsel %vm453, %v555, %v562
      %v565 = vshrl.u32 %v412, 16
      %v567 = vrot.slane %v565, 7
      %v568 = vrot.slane %v567, 4
      %v570 = vshrl.u32 %v413, 16
      %v572 = vrot.slane %v570, 7
      %v573 = vshll.u32 %v413, 16
      %v575 = vor.u32 %v572, %v573
      %v576 = vsel %vm453, %v568, %v575
      %v577 = vrot.slane %v572, 4
      %v579 = vshrl.u32 %v414, 16
      %v581 = vrot.slane %v579, 7
      %v582 = vshll.u32 %v414, 16
      %v584 = vor.u32 %v581, %v582
      %v585 = vsel %vm453, %v577, %v584
      %v587 = vshrl.u32 %v415, 16
      %v589 = vrot.slane %v587, 7
      %v590 = vrot.slane %v589, 4
      %v592 = vshrl.u32 %v416, 16
      %v594 = vrot.slane %v592, 7
      %v595 = vshll.u32 %v416, 16
      %v597 = vor.u32 %v594, %v595
      %v598 = vsel %vm453, %v590, %v597
      %v599 = vrot.slane %v594, 4
      %v601 = vshrl.u32 %v417, 16
      %v603 = vrot.slane %v601, 7
      %v604 = vshll.u32 %v417, 16
      %v606 = vor.u32 %v603, %v604
      %v607 = vsel %vm453, %v599, %v606
      %v609 = vshrl.u32 %v418, 16
      %v611 = vrot.slane %v609, 7
      %v612 = vrot.slane %v611, 4
      %v614 = vshrl.u32 %v419, 16
      %v616 = vrot.slane %v614, 7
      %v617 = vshll.u32 %v419, 16
      %v619 = vor.u32 %v616, %v617
      %v620 = vsel %vm453, %v612, %v619
      %v621 = vrot.slane %v616, 4
      %v623 = vshrl.u32 %v420, 16
      %v625 = vrot.slane %v623, 7
      %v626 = vshll.u32 %v420, 16
      %v628 = vor.u32 %v625, %v626
      %v629 = vsel %vm453, %v621, %v628
      %v631 = vshrl.u32 %v421, 16
      %v633 = vrot.slane %v631, 7
      %v634 = vrot.slane %v633, 4
      %v636 = vshrl.u32 %v422, 16
      %v638 = vrot.slane %v636, 7
      %v639 = vshll.u32 %v422, 16
      %v641 = vor.u32 %v638, %v639
      %v642 = vsel %vm453, %v634, %v641
      %v643 = vrot.slane %v638, 4
      %v645 = vshrl.u32 %v423, 16
      %v647 = vrot.slane %v645, 7
      %v648 = vshll.u32 %v423, 16
      %v650 = vor.u32 %v647, %v648
      %v651 = vsel %vm453, %v643, %v650
      %v653 = vshrl.u32 %v424, 16
      %v655 = vrot.slane %v653, 7
      %v656 = vrot.slane %v655, 4
      %v658 = vshrl.u32 %v425, 16
      %v660 = vrot.slane %v658, 7
      %v661 = vshll.u32 %v425, 16
      %v663 = vor.u32 %v660, %v661
      %v664 = vsel %vm453, %v656, %v663
      %v665 = vrot.slane %v660, 4
      %v667 = vshrl.u32 %v426, 16
      %v669 = vrot.slane %v667, 7
      %v670 = vshll.u32 %v426, 16
      %v672 = vor.u32 %v669, %v670
      %v673 = vsel %vm453, %v665, %v672
      %v675 = vshrl.u32 %v427, 16
      %v677 = vrot.slane %v675, 7
      %v678 = vrot.slane %v677, 4
      %v680 = vshrl.u32 %v428, 16
      %v682 = vrot.slane %v680, 7
      %v683 = vshll.u32 %v428, 16
      %v685 = vor.u32 %v682, %v683
      %v686 = vsel %vm453, %v678, %v685
      %v687 = vrot.slane %v682, 4
      %v689 = vshrl.u32 %v429, 16
      %v691 = vrot.slane %v689, 7
      %v692 = vshll.u32 %v429, 16
      %v694 = vor.u32 %v691, %v692
      %v695 = vsel %vm453, %v687, %v694
      %v697 = vshrl.u32 %v430, 16
      %v699 = vrot.slane %v697, 7
      %v700 = vrot.slane %v699, 4
      %v702 = vshrl.u32 %v431, 16
      %v704 = vrot.slane %v702, 7
      %v705 = vshll.u32 %v431, 16
      %v707 = vor.u32 %v704, %v705
      %v708 = vsel %vm453, %v700, %v707
      %v709 = vrot.slane %v704, 4
      %v711 = vshrl.u32 %v432, 16
      %v713 = vrot.slane %v711, 7
      %v714 = vshll.u32 %v432, 16
      %v716 = vor.u32 %v713, %v714
      %v717 = vsel %vm453, %v709, %v716
      %v719 = vshrl.u32 %v433, 16
      %v721 = vrot.slane %v719, 7
      %v722 = vrot.slane %v721, 4
      %v724 = vshrl.u32 %v434, 16
      %v726 = vrot.slane %v724, 7
      %v727 = vshll.u32 %v434, 16
      %v729 = vor.u32 %v726, %v727
      %v730 = vsel %vm453, %v722, %v729
      %v731 = vrot.slane %v726, 4
      %v733 = vshrl.u32 %v435, 16
      %v735 = vrot.slane %v733, 7
      %v736 = vshll.u32 %v435, 16
      %v738 = vor.u32 %v735, %v736
      %v739 = vsel %vm453, %v731, %v738
      %v741 = vshrl.u32 %v436, 16
      %v743 = vrot.slane %v741, 7
      %v744 = vrot.slane %v743, 4
      %v746 = vshrl.u32 %v437, 16
      %v748 = vrot.slane %v746, 7
      %v749 = vshll.u32 %v437, 16
      %v751 = vor.u32 %v748, %v749
      %v752 = vsel %vm453, %v744, %v751
      %v753 = vrot.slane %v748, 4
      %v755 = vshrl.u32 %v438, 16
      %v757 = vrot.slane %v755, 7
      %v758 = vshll.u32 %v438, 16
      %v760 = vor.u32 %v757, %v758
      %v761 = vsel %vm453, %v753, %v760
      %v763 = vshrl.u32 %v439, 16
      %v765 = vrot.slane %v763, 7
      %v766 = vrot.slane %v765, 4
      %v768 = vshrl.u32 %v440, 16
      %v770 = vrot.slane %v768, 7
      %v771 = vshll.u32 %v440, 16
      %v773 = vor.u32 %v770, %v771
      %v774 = vsel %vm453, %v766, %v773
      %v775 = vrot.slane %v770, 4
      %v777 = vshrl.u32 %v441, 16
      %v779 = vrot.slane %v777, 7
      %v780 = vshll.u32 %v441, 16
      %v782 = vor.u32 %v779, %v780
      %v783 = vsel %vm453, %v775, %v782
      %v785 = vshrl.u32 %v442, 16
      %v787 = vrot.slane %v785, 7
      %v788 = vrot.slane %v787, 4
      %v790 = vshrl.u32 %v443, 16
      %v792 = vrot.slane %v790, 7
      %v793 = vshll.u32 %v443, 16
      %v795 = vor.u32 %v792, %v793
      %v796 = vsel %vm453, %v788, %v795
      %v797 = vrot.slane %v792, 4
      %v799 = vshrl.u32 %v444, 16
      %v801 = vrot.slane %v799, 7
      %v802 = vshll.u32 %v444, 16
      %v804 = vor.u32 %v801, %v802
      %v805 = vsel %vm453, %v797, %v804
      %v807 = vshrl.u32 %v445, 16
      %v809 = vrot.slane %v807, 7
      %v810 = vrot.slane %v809, 4
      %v812 = vshrl.u32 %v446, 16
      %v814 = vrot.slane %v812, 7
      %v815 = vshll.u32 %v446, 16
      %v817 = vor.u32 %v814, %v815
      %v818 = vsel %vm453, %v810, %v817
      %v819 = vrot.slane %v814, 4
      %v821 = vshrl.u32 %v447, 16
      %v823 = vrot.slane %v821, 7
      %v824 = vshll.u32 %v447, 16
      %v826 = vor.u32 %v823, %v824
      %v827 = vsel %vm453, %v819, %v826
      %v829 = vshrl.u32 %v448, 16
      %v831 = vrot.slane %v829, 7
      %v832 = vrot.slane %v831, 4
      %v834 = vshrl.u32 %v449, 16
      %v836 = vrot.slane %v834, 7
      %v837 = vshll.u32 %v449, 16
      %v839 = vor.u32 %v836, %v837
      %v840 = vsel %vm453, %v832, %v839
      %v841 = vrot.slane %v836, 4
      %v843 = vshrl.u32 %v450, 16
      %v845 = vrot.slane %v843, 7
      %v846 = vshll.u32 %v450, 16
      %v848 = vor.u32 %v845, %v846
      %v849 = vsel %vm453, %v841, %v848
      %v850 = vld [vmem:[%s1] sm:$0xff]
      %v851 = vld [vmem:[%s1 + $0x8] sm:$0xff]
      %v852 = vld [vmem:[%s1 + $0x10] sm:$0xff]
      %v853 = vld [vmem:[%s1 + $0x18] sm:$0xff]
      %v854 = vld [vmem:[%s1 + $0x20] sm:$0xff]
      %v855 = vld [vmem:[%s1 + $0x28] sm:$0xff]
      %v856 = vld [vmem:[%s1 + $0x30] sm:$0xff]
      %v857 = vld [vmem:[%s1 + $0x38] sm:$0xff]
      %v858 = vunpack.c.l.b16 %v466
      %v859 = vunpack.c.l.b16 %v475
      %v860 = vunpack.c.l.b16 %v488
      %v861 = vunpack.c.l.b16 %v497
      %v862 = vunpack.c.l.b16 %v510
      %v863 = vunpack.c.l.b16 %v519
      %v864 = vunpack.c.l.b16 %v532
      %v865 = vunpack.c.l.b16 %v541
      %v866 = vunpack.c.l.b16 %v554
      %v867 = vunpack.c.l.b16 %v563
      %v868 = vunpack.c.l.b16 %v576
      %v869 = vunpack.c.l.b16 %v585
      %v870 = vunpack.c.l.b16 %v598
      %v871 = vunpack.c.l.b16 %v607
      %v872 = vunpack.c.l.b16 %v620
      %v873 = vunpack.c.l.b16 %v629
      %v874 = vunpack.c.l.b16 %v642
      %v875 = vunpack.c.l.b16 %v651
      %v876 = vunpack.c.l.b16 %v664
      %v877 = vunpack.c.l.b16 %v673
      %v878 = vunpack.c.l.b16 %v686
      %v879 = vunpack.c.l.b16 %v695
      %v880 = vunpack.c.l.b16 %v708
      %v881 = vunpack.c.l.b16 %v717
      %v882 = vunpack.c.l.b16 %v730
      %v883 = vunpack.c.l.b16 %v739
      %v884 = vunpack.c.l.b16 %v752
      %v885 = vunpack.c.l.b16 %v761
      %v886 = vunpack.c.l.b16 %v774
      %v887 = vunpack.c.l.b16 %v783
      %v888 = vunpack.c.l.b16 %v796
      %v889 = vunpack.c.l.b16 %v805
      %v890 = vunpack.c.l.b16 %v818
      %v891 = vunpack.c.l.b16 %v827
      %v892 = vunpack.c.l.b16 %v840
      %v893 = vunpack.c.l.b16 %v849
      %v894 = vpack.c.b16 %v859, %v858
      %v895 = vpack.c.b16 %v861, %v860
      %v896 = vpack.c.b16 %v863, %v862
      %v897 = vpack.c.b16 %v865, %v864
      %v898 = vpack.c.b16 %v867, %v866
      %v899 = vpack.c.b16 %v869, %v868
      %v900 = vpack.c.b16 %v871, %v870
      %v901 = vpack.c.b16 %v873, %v872
      %v902 = vpack.c.b16 %v875, %v874
      %v903 = vpack.c.b16 %v877, %v876
      %v904 = vpack.c.b16 %v879, %v878
      %v905 = vpack.c.b16 %v881, %v880
      %v906 = vpack.c.b16 %v883, %v882
      %v907 = vpack.c.b16 %v885, %v884
      %v908 = vpack.c.b16 %v887, %v886
      %v909 = vpack.c.b16 %v889, %v888
      %v910 = vpack.c.b16 %v891, %v890
      %v911 = vpack.c.b16 %v893, %v892
      %v920 = vunpack.c.l.b16 %v850
      %v921 = vunpack.c.h.b16 %v850
      %v922 = vunpack.c.l.b16 %v851
      %v923 = vunpack.c.h.b16 %v851
      %v924 = vunpack.c.l.b16 %v852
      %v925 = vunpack.c.h.b16 %v852
      %v926 = vunpack.c.l.b16 %v853
      %v927 = vunpack.c.h.b16 %v853
      %v928 = vunpack.c.l.b16 %v854
      %v929 = vunpack.c.h.b16 %v854
      %v930 = vunpack.c.l.b16 %v855
      %v931 = vunpack.c.h.b16 %v855
      %v932 = vunpack.c.l.b16 %v856
      %v933 = vunpack.c.h.b16 %v856
      %v934 = vunpack.c.l.b16 %v857
      %v935 = vunpack.c.h.b16 %v857
      %v936 = vpack.c.b16 %v922, %v920
      %v937 = vpack.c.b16 %v923, %v921
      %v938 = vpack.c.b16 %v926, %v924
      %v939 = vpack.c.b16 %v927, %v925
      %v940 = vpack.c.b16 %v930, %v928
      %v941 = vpack.c.b16 %v931, %v929
      %v942 = vpack.c.b16 %v934, %v932
      %v943 = vpack.c.b16 %v935, %v933
      %vm952 = vcmask 523264
      %v954 = vsel %vm952, %v894, 0
      %v957 = vsel %vm952, %v895, 0
      %v960 = vsel %vm952, %v896, 0
      %v963 = vsel %vm952, %v897, 0
      %v966 = vsel %vm952, %v898, 0
      %v969 = vsel %vm952, %v899, 0
      %v972 = vsel %vm952, %v900, 0
      %v975 = vsel %vm952, %v901, 0
      %v978 = vsel %vm952, %v902, 0
      %v981 = vsel %vm952, %v903, 0
      %v984 = vsel %vm952, %v904, 0
      %v987 = vsel %vm952, %v905, 0
      %v990 = vsel %vm952, %v906, 0
      %v993 = vsel %vm952, %v907, 0
      %v996 = vsel %vm952, %v908, 0
      %v999 = vsel %vm952, %v909, 0
      %v1002 = vsel %vm952, %v910, 0
      %v1005 = vsel %vm952, %v911, 0
      %1007 = vmatpush.bf16.msra.mxu0 0
      %1008 = vmatpush.bf16.msra.mxu0 0
      %1009 = vmatpush.bf16.msra.mxu0 0
      %1010 = vmatpush.bf16.msra.mxu0 0
      %1011 = vmatpush.bf16.msra.mxu0 %v942
      %1012 = vmatpush.bf16.msra.mxu0 %v940
      %1013 = vmatpush.bf16.msra.mxu0 %v938
      %1014 = vmatpush.bf16.msra.mxu0 %v936
      %1015 = vmatmul.bf16.gmra.mxu0 %v954
      %v1016 = vpop.f32.mrf.mxu0
      %v1017 = vadd.f32 0.0, %v1016
      %v1018 = vpop.f32.mrf.mxu0
      %v1019 = vadd.f32 0.0, %v1018
      %1020 = vmatmul.bf16.gmra.mxu0 %v957
      %v1021 = vpop.f32.mrf.mxu0
      %v1022 = vadd.f32 0.0, %v1021
      %v1023 = vpop.f32.mrf.mxu0
      %v1024 = vadd.f32 0.0, %v1023
      %1025 = vmatmul.bf16.gmra.mxu0 %v960
      %v1026 = vpop.f32.mrf.mxu0
      %v1027 = vadd.f32 0.0, %v1026
      %v1028 = vpop.f32.mrf.mxu0
      %v1029 = vadd.f32 0.0, %v1028
      %1030 = vmatmul.bf16.gmra.mxu0 %v963
      %v1031 = vpop.f32.mrf.mxu0
      %v1032 = vadd.f32 0.0, %v1031
      %v1033 = vpop.f32.mrf.mxu0
      %v1034 = vadd.f32 0.0, %v1033
      %1035 = vmatmul.bf16.gmra.mxu0 %v966
      %v1036 = vpop.f32.mrf.mxu0
      %v1037 = vadd.f32 0.0, %v1036
      %v1038 = vpop.f32.mrf.mxu0
      %v1039 = vadd.f32 0.0, %v1038
      %1040 = vmatmul.bf16.gmra.mxu0 %v969
      %v1041 = vpop.f32.mrf.mxu0
      %v1042 = vadd.f32 0.0, %v1041
      %v1043 = vpop.f32.mrf.mxu0
      %v1044 = vadd.f32 0.0, %v1043
      %1045 = vmatmul.bf16.gmra.mxu0 %v972
      %v1046 = vpop.f32.mrf.mxu0
      %v1047 = vadd.f32 0.0, %v1046
      %v1048 = vpop.f32.mrf.mxu0
      %v1049 = vadd.f32 0.0, %v1048
      %1050 = vmatmul.bf16.gmra.mxu0 %v975
      %v1051 = vpop.f32.mrf.mxu0
      %v1052 = vadd.f32 0.0, %v1051
      %v1053 = vpop.f32.mrf.mxu0
      %v1054 = vadd.f32 0.0, %v1053
      %1055 = vmatmul.bf16.gmra.mxu0 %v978
      %v1056 = vpop.f32.mrf.mxu0
      %v1057 = vadd.f32 0.0, %v1056
      %v1058 = vpop.f32.mrf.mxu0
      %v1059 = vadd.f32 0.0, %v1058
      %1060 = vmatmul.bf16.gmra.mxu0 %v981
      %v1061 = vpop.f32.mrf.mxu0
      %v1062 = vadd.f32 0.0, %v1061
      %v1063 = vpop.f32.mrf.mxu0
      %v1064 = vadd.f32 0.0, %v1063
      %1065 = vmatmul.bf16.gmra.mxu0 %v984
      %v1066 = vpop.f32.mrf.mxu0
      %v1067 = vadd.f32 0.0, %v1066
      %v1068 = vpop.f32.mrf.mxu0
      %v1069 = vadd.f32 0.0, %v1068
      %1070 = vmatmul.bf16.gmra.mxu0 %v987
      %v1071 = vpop.f32.mrf.mxu0
      %v1072 = vadd.f32 0.0, %v1071
      %v1073 = vpop.f32.mrf.mxu0
      %v1074 = vadd.f32 0.0, %v1073
      %1075 = vmatmul.bf16.gmra.mxu0 %v990
      %v1076 = vpop.f32.mrf.mxu0
      %v1077 = vadd.f32 0.0, %v1076
      %v1078 = vpop.f32.mrf.mxu0
      %v1079 = vadd.f32 0.0, %v1078
      %1080 = vmatmul.bf16.gmra.mxu0 %v993
      %v1081 = vpop.f32.mrf.mxu0
      %v1082 = vadd.f32 0.0, %v1081
      %v1083 = vpop.f32.mrf.mxu0
      %v1084 = vadd.f32 0.0, %v1083
      %1085 = vmatmul.bf16.gmra.mxu0 %v996
      %v1086 = vpop.f32.mrf.mxu0
      %v1087 = vadd.f32 0.0, %v1086
      %v1088 = vpop.f32.mrf.mxu0
      %v1089 = vadd.f32 0.0, %v1088
      %1090 = vmatmul.bf16.gmra.mxu0 %v999
      %v1091 = vpop.f32.mrf.mxu0
      %v1092 = vadd.f32 0.0, %v1091
      %v1093 = vpop.f32.mrf.mxu0
      %v1094 = vadd.f32 0.0, %v1093
      %1095 = vmatmul.bf16.gmra.mxu0 %v1002
      %v1096 = vpop.f32.mrf.mxu0
      %v1097 = vadd.f32 0.0, %v1096
      %v1098 = vpop.f32.mrf.mxu0
      %v1099 = vadd.f32 0.0, %v1098
      %1100 = vmatmul.bf16.gmra.mxu0 %v1005
      %v1101 = vpop.f32.mrf.mxu0
      %v1102 = vpop.f32.mrf.mxu0
      %1103 = vdwg.mxu0
      %1104 = vmatpush.bf16.msra.mxu0 0
      %1105 = vmatpush.bf16.msra.mxu0 0
      %1106 = vmatpush.bf16.msra.mxu0 0
      %1107 = vmatpush.bf16.msra.mxu0 0
      %1108 = vmatpush.bf16.msra.mxu0 %v943
      %1109 = vmatpush.bf16.msra.mxu0 %v941
      %1110 = vmatpush.bf16.msra.mxu0 %v939
      %1111 = vmatpush.bf16.msra.mxu0 %v937
      %1112 = vmatmul.bf16.gmra.mxu0 %v954
      %v1113 = vpop.f32.mrf.mxu0
      %v1114 = vpop.f32.mrf.mxu0
      %1115 = vmatmul.bf16.gmra.mxu0 %v957
      %v1116 = vpop.f32.mrf.mxu0
      %v1117 = vpop.f32.mrf.mxu0
      %1118 = vmatmul.bf16.gmra.mxu0 %v960
      %v1119 = vpop.f32.mrf.mxu0
      %v1120 = vadd.f32 0.0, %v1119
      %v1121 = vpop.f32.mrf.mxu0
      %v1122 = vadd.f32 0.0, %v1121
      %1123 = vmatmul.bf16.gmra.mxu0 %v963
      %v1124 = vpop.f32.mrf.mxu0
      %v1125 = vadd.f32 0.0, %v1124
      %v1126 = vpop.f32.mrf.mxu0
      %v1127 = vadd.f32 0.0, %v1126
      %1128 = vmatmul.bf16.gmra.mxu0 %v966
      %v1129 = vpop.f32.mrf.mxu0
      %v1130 = vadd.f32 0.0, %v1129
      %v1131 = vpop.f32.mrf.mxu0
      %v1132 = vadd.f32 0.0, %v1131
      %1133 = vmatmul.bf16.gmra.mxu0 %v969
      %v1134 = vpop.f32.mrf.mxu0
      %v1135 = vadd.f32 0.0, %v1134
      %v1136 = vpop.f32.mrf.mxu0
      %v1137 = vadd.f32 0.0, %v1136
      %1138 = vmatmul.bf16.gmra.mxu0 %v972
      %v1139 = vpop.f32.mrf.mxu0
      %v1140 = vadd.f32 0.0, %v1139
      %v1141 = vpop.f32.mrf.mxu0
      %v1142 = vadd.f32 0.0, %v1141
      %1143 = vmatmul.bf16.gmra.mxu0 %v975
      %v1144 = vpop.f32.mrf.mxu0
      %v1145 = vadd.f32 0.0, %v1144
      %v1146 = vpop.f32.mrf.mxu0
      %v1147 = vadd.f32 0.0, %v1146
      %1148 = vmatmul.bf16.gmra.mxu0 %v978
      %v1149 = vpop.f32.mrf.mxu0
      %v1150 = vadd.f32 0.0, %v1149
      %v1151 = vpop.f32.mrf.mxu0
      %v1152 = vadd.f32 0.0, %v1151
      %1153 = vmatmul.bf16.gmra.mxu0 %v981
      %v1154 = vpop.f32.mrf.mxu0
      %v1155 = vadd.f32 0.0, %v1154
      %v1156 = vpop.f32.mrf.mxu0
      %v1157 = vadd.f32 0.0, %v1156
      %1158 = vmatmul.bf16.gmra.mxu0 %v984
      %v1159 = vpop.f32.mrf.mxu0
      %v1160 = vadd.f32 0.0, %v1159
      %v1161 = vpop.f32.mrf.mxu0
      %v1162 = vadd.f32 0.0, %v1161
      %1163 = vmatmul.bf16.gmra.mxu0 %v987
      %v1164 = vpop.f32.mrf.mxu0
      %v1165 = vadd.f32 0.0, %v1164
      %v1166 = vpop.f32.mrf.mxu0
      %v1167 = vadd.f32 0.0, %v1166
      %1168 = vmatmul.bf16.gmra.mxu0 %v990
      %v1169 = vpop.f32.mrf.mxu0
      %v1170 = vadd.f32 0.0, %v1169
      %v1171 = vpop.f32.mrf.mxu0
      %v1172 = vadd.f32 0.0, %v1171
      %1173 = vmatmul.bf16.gmra.mxu0 %v993
      %v1174 = vpop.f32.mrf.mxu0
      %v1175 = vadd.f32 0.0, %v1174
      %v1176 = vpop.f32.mrf.mxu0
      %v1177 = vadd.f32 0.0, %v1176
      %1178 = vmatmul.bf16.gmra.mxu0 %v996
      %v1179 = vpop.f32.mrf.mxu0
      %v1180 = vadd.f32 0.0, %v1179
      %v1181 = vpop.f32.mrf.mxu0
      %v1182 = vadd.f32 0.0, %v1181
      %1183 = vmatmul.bf16.gmra.mxu0 %v999
      %v1184 = vpop.f32.mrf.mxu0
      %v1185 = vadd.f32 0.0, %v1184
      %v1186 = vpop.f32.mrf.mxu0
      %v1187 = vadd.f32 0.0, %v1186
      %1188 = vmatmul.bf16.gmra.mxu0 %v1002
      %v1189 = vpop.f32.mrf.mxu0
      %v1190 = vadd.f32 0.0, %v1189
      %v1191 = vpop.f32.mrf.mxu0
      %v1192 = vadd.f32 0.0, %v1191
      %1193 = vmatmul.bf16.gmra.mxu0 %v1005
      %v1194 = vpop.f32.mrf.mxu0
      %v1195 = vadd.f32 0.0, %v1194
      %v1196 = vpop.f32.mrf.mxu0
      %v1197 = vadd.f32 0.0, %v1196
      %1198 = vdwg.mxu0
      %v1199 = vadd.f32 %v1017, 0.0
      %v1200 = vadd.f32 %v1019, 0.0
      %v1201 = vadd.f32 %v1022, 0.0
      %v1202 = vadd.f32 %v1024, 0.0
      %v1203 = vadd.f32 %v1027, 0.0
      %v1204 = vadd.f32 %v1029, 0.0
      %v1205 = vadd.f32 %v1032, 0.0
      %v1206 = vadd.f32 %v1034, 0.0
      %v1207 = vadd.f32 %v1037, 0.0
      %v1208 = vadd.f32 %v1039, 0.0
      %v1209 = vadd.f32 %v1042, 0.0
      %v1210 = vadd.f32 %v1044, 0.0
      %v1211 = vadd.f32 %v1047, 0.0
      %v1212 = vadd.f32 %v1049, 0.0
      %v1213 = vadd.f32 %v1052, 0.0
      %v1214 = vadd.f32 %v1054, 0.0
      %v1215 = vadd.f32 %v1057, 0.0
      %v1216 = vadd.f32 %v1059, 0.0
      %v1217 = vadd.f32 %v1062, 0.0
      %v1218 = vadd.f32 %v1064, 0.0
      %v1219 = vadd.f32 %v1067, 0.0
      %v1220 = vadd.f32 %v1069, 0.0
      %v1221 = vadd.f32 %v1072, 0.0
      %v1222 = vadd.f32 %v1074, 0.0
      %v1223 = vadd.f32 %v1077, 0.0
      %v1224 = vadd.f32 %v1079, 0.0
      %v1225 = vadd.f32 %v1082, 0.0
      %v1226 = vadd.f32 %v1084, 0.0
      %v1227 = vadd.f32 %v1087, 0.0
      %v1228 = vadd.f32 %v1089, 0.0
      %v1229 = vadd.f32 %v1092, 0.0
      %v1230 = vadd.f32 %v1094, 0.0
      %1263 = vrot.lane.b32.xlu0 %v1022, 64
      %v1264 = vpop.permute.xlu0 %1263
      %1265 = vrot.lane.b32.xlu0 %v1024, 64
      %v1266 = vpop.permute.xlu0 %1265
      %1267 = vrot.lane.b32.xlu0 %v1027, 64
      %v1268 = vpop.permute.xlu0 %1267
      %1269 = vrot.lane.b32.xlu0 %v1029, 64
      %v1270 = vpop.permute.xlu0 %1269
      %1271 = vrot.lane.b32.xlu0 %v1032, 64
      %v1272 = vpop.permute.xlu0 %1271
      %1273 = vrot.lane.b32.xlu0 %v1034, 64
      %v1274 = vpop.permute.xlu0 %1273
      %1275 = vrot.lane.b32.xlu0 %v1037, 64
      %v1276 = vpop.permute.xlu0 %1275
      %1277 = vrot.lane.b32.xlu0 %v1039, 64
      %v1278 = vpop.permute.xlu0 %1277
      %1279 = vrot.lane.b32.xlu0 %v1042, 64
      %v1280 = vpop.permute.xlu0 %1279
      %1281 = vrot.lane.b32.xlu0 %v1044, 64
      %v1282 = vpop.permute.xlu0 %1281
      %1283 = vrot.lane.b32.xlu0 %v1047, 64
      %v1284 = vpop.permute.xlu0 %1283
      %1285 = vrot.lane.b32.xlu0 %v1049, 64
      %v1286 = vpop.permute.xlu0 %1285
      %1287 = vrot.lane.b32.xlu0 %v1052, 64
      %v1288 = vpop.permute.xlu0 %1287
      %1289 = vrot.lane.b32.xlu0 %v1054, 64
      %v1290 = vpop.permute.xlu0 %1289
      %1291 = vrot.lane.b32.xlu0 %v1057, 64
      %v1292 = vpop.permute.xlu0 %1291
      %1293 = vrot.lane.b32.xlu0 %v1059, 64
      %v1294 = vpop.permute.xlu0 %1293
      %1295 = vrot.lane.b32.xlu0 %v1062, 64
      %v1296 = vpop.permute.xlu0 %1295
      %1297 = vrot.lane.b32.xlu0 %v1064, 64
      %v1298 = vpop.permute.xlu0 %1297
      %1299 = vrot.lane.b32.xlu0 %v1067, 64
      %v1300 = vpop.permute.xlu0 %1299
      %1301 = vrot.lane.b32.xlu0 %v1069, 64
      %v1302 = vpop.permute.xlu0 %1301
      %1303 = vrot.lane.b32.xlu0 %v1072, 64
      %v1304 = vpop.permute.xlu0 %1303
      %1305 = vrot.lane.b32.xlu0 %v1074, 64
      %v1306 = vpop.permute.xlu0 %1305
      %1307 = vrot.lane.b32.xlu0 %v1077, 64
      %v1308 = vpop.permute.xlu0 %1307
      %1309 = vrot.lane.b32.xlu0 %v1079, 64
      %v1310 = vpop.permute.xlu0 %1309
      %1311 = vrot.lane.b32.xlu0 %v1082, 64
      %v1312 = vpop.permute.xlu0 %1311
      %1313 = vrot.lane.b32.xlu0 %v1084, 64
      %v1314 = vpop.permute.xlu0 %1313
      %1315 = vrot.lane.b32.xlu0 %v1087, 64
      %v1316 = vpop.permute.xlu0 %1315
      %1317 = vrot.lane.b32.xlu0 %v1089, 64
      %v1318 = vpop.permute.xlu0 %1317
      %1319 = vrot.lane.b32.xlu0 %v1092, 64
      %v1320 = vpop.permute.xlu0 %1319
      %1321 = vrot.lane.b32.xlu0 %v1094, 64
      %v1322 = vpop.permute.xlu0 %1321
      %1323 = vrot.lane.b32.xlu0 %v1097, 64
      %v1324 = vpop.permute.xlu0 %1323
      %1325 = vrot.lane.b32.xlu0 %v1099, 64
      %v1326 = vpop.permute.xlu0 %1325
      %v1359 = vadd.f32 %v1199, %v1264
      %v1360 = vadd.f32 %v1200, %v1266
      %v1361 = vadd.f32 %v1201, %v1268
      %v1362 = vadd.f32 %v1202, %v1270
      %v1363 = vadd.f32 %v1203, %v1272
      %v1364 = vadd.f32 %v1204, %v1274
      %v1365 = vadd.f32 %v1205, %v1276
      %v1366 = vadd.f32 %v1206, %v1278
      %v1367 = vadd.f32 %v1207, %v1280
      %v1368 = vadd.f32 %v1208, %v1282
      %v1369 = vadd.f32 %v1209, %v1284
      %v1370 = vadd.f32 %v1210, %v1286
      %v1371 = vadd.f32 %v1211, %v1288
      %v1372 = vadd.f32 %v1212, %v1290
      %v1373 = vadd.f32 %v1213, %v1292
      %v1374 = vadd.f32 %v1214, %v1294
      %v1375 = vadd.f32 %v1215, %v1296
      %v1376 = vadd.f32 %v1216, %v1298
      %v1377 = vadd.f32 %v1217, %v1300
      %v1378 = vadd.f32 %v1218, %v1302
      %v1379 = vadd.f32 %v1219, %v1304
      %v1380 = vadd.f32 %v1220, %v1306
      %v1381 = vadd.f32 %v1221, %v1308
      %v1382 = vadd.f32 %v1222, %v1310
      %v1383 = vadd.f32 %v1223, %v1312
      %v1384 = vadd.f32 %v1224, %v1314
      %v1385 = vadd.f32 %v1225, %v1316
      %v1386 = vadd.f32 %v1226, %v1318
      %v1387 = vadd.f32 %v1227, %v1320
      %v1388 = vadd.f32 %v1228, %v1322
      %v1389 = vadd.f32 %v1229, %v1324
      %v1390 = vadd.f32 %v1230, %v1326
      %v1391 = vadd.f32 %v1359, %v1120
      %v1392 = vadd.f32 %v1360, %v1122
      %v1393 = vadd.f32 %v1361, %v1125
      %v1394 = vadd.f32 %v1362, %v1127
      %v1395 = vadd.f32 %v1363, %v1130
      %v1396 = vadd.f32 %v1364, %v1132
      %v1397 = vadd.f32 %v1365, %v1135
      %v1398 = vadd.f32 %v1366, %v1137
      %v1399 = vadd.f32 %v1367, %v1140
      %v1400 = vadd.f32 %v1368, %v1142
      %v1401 = vadd.f32 %v1369, %v1145
      %v1402 = vadd.f32 %v1370, %v1147
      %v1403 = vadd.f32 %v1371, %v1150
      %v1404 = vadd.f32 %v1372, %v1152
      %v1405 = vadd.f32 %v1373, %v1155
      %v1406 = vadd.f32 %v1374, %v1157
      %v1407 = vadd.f32 %v1375, %v1160
      %v1408 = vadd.f32 %v1376, %v1162
      %v1409 = vadd.f32 %v1377, %v1165
      %v1410 = vadd.f32 %v1378, %v1167
      %v1411 = vadd.f32 %v1379, %v1170
      %v1412 = vadd.f32 %v1380, %v1172
      %v1413 = vadd.f32 %v1381, %v1175
      %v1414 = vadd.f32 %v1382, %v1177
      %v1415 = vadd.f32 %v1383, %v1180
      %v1416 = vadd.f32 %v1384, %v1182
      %v1417 = vadd.f32 %v1385, %v1185
      %v1418 = vadd.f32 %v1386, %v1187
      %v1419 = vadd.f32 %v1387, %v1190
      %v1420 = vadd.f32 %v1388, %v1192
      %v1421 = vadd.f32 %v1389, %v1195
      %v1422 = vadd.f32 %v1390, %v1197
      %s1423 = scalar_lea.vmem %s1, 64
      %v1424 = vld [vmem:[%s1423] sm:$0xff]
      %v1425 = vld [vmem:[%s1423 + $0x8] sm:$0xff]
      %v1426 = vld [vmem:[%s1423 + $0x10] sm:$0xff]
      %v1427 = vld [vmem:[%s1423 + $0x18] sm:$0xff]
      %v1428 = vld [vmem:[%s1423 + $0x20] sm:$0xff]
      %v1429 = vld [vmem:[%s1423 + $0x28] sm:$0xff]
      %v1430 = vld [vmem:[%s1423 + $0x30] sm:$0xff]
      %v1431 = vld [vmem:[%s1423 + $0x38] sm:$0xff]
      %v1468 = vunpack.c.l.b16 %v398
      %v1469 = vunpack.c.l.b16 %v399
      %v1470 = vunpack.c.l.b16 %v401
      %v1471 = vunpack.c.l.b16 %v402
      %v1472 = vunpack.c.l.b16 %v404
      %v1473 = vunpack.c.l.b16 %v405
      %v1474 = vunpack.c.l.b16 %v407
      %v1475 = vunpack.c.l.b16 %v408
      %v1476 = vunpack.c.l.b16 %v410
      %v1477 = vunpack.c.l.b16 %v411
      %v1478 = vunpack.c.l.b16 %v413
      %v1479 = vunpack.c.l.b16 %v414
      %v1480 = vunpack.c.l.b16 %v416
      %v1481 = vunpack.c.l.b16 %v417
      %v1482 = vunpack.c.l.b16 %v419
      %v1483 = vunpack.c.l.b16 %v420
      %v1484 = vunpack.c.l.b16 %v422
      %v1485 = vunpack.c.l.b16 %v423
      %v1486 = vunpack.c.l.b16 %v425
      %v1487 = vunpack.c.l.b16 %v426
      %v1488 = vunpack.c.l.b16 %v428
      %v1489 = vunpack.c.l.b16 %v429
      %v1490 = vunpack.c.l.b16 %v431
      %v1491 = vunpack.c.l.b16 %v432
      %v1492 = vunpack.c.l.b16 %v434
      %v1493 = vunpack.c.l.b16 %v435
      %v1494 = vunpack.c.l.b16 %v437
      %v1495 = vunpack.c.l.b16 %v438
      %v1496 = vunpack.c.l.b16 %v440
      %v1497 = vunpack.c.l.b16 %v441
      %v1498 = vunpack.c.l.b16 %v443
      %v1499 = vunpack.c.l.b16 %v444
      %v1500 = vunpack.c.l.b16 %v446
      %v1501 = vunpack.c.l.b16 %v447
      %v1502 = vunpack.c.l.b16 %v449
      %v1503 = vunpack.c.l.b16 %v450
      %v1504 = vpack.c.b16 %v1469, %v1468
      %v1505 = vpack.c.b16 %v1471, %v1470
      %v1506 = vpack.c.b16 %v1473, %v1472
      %v1507 = vpack.c.b16 %v1475, %v1474
      %v1508 = vpack.c.b16 %v1477, %v1476
      %v1509 = vpack.c.b16 %v1479, %v1478
      %v1510 = vpack.c.b16 %v1481, %v1480
      %v1511 = vpack.c.b16 %v1483, %v1482
      %v1512 = vpack.c.b16 %v1485, %v1484
      %v1513 = vpack.c.b16 %v1487, %v1486
      %v1514 = vpack.c.b16 %v1489, %v1488
      %v1515 = vpack.c.b16 %v1491, %v1490
      %v1516 = vpack.c.b16 %v1493, %v1492
      %v1517 = vpack.c.b16 %v1495, %v1494
      %v1518 = vpack.c.b16 %v1497, %v1496
      %v1519 = vpack.c.b16 %v1499, %v1498
      %v1520 = vpack.c.b16 %v1501, %v1500
      %v1521 = vpack.c.b16 %v1503, %v1502
      %v1530 = vunpack.c.l.b16 %v1424
      %v1531 = vunpack.c.h.b16 %v1424
      %v1532 = vunpack.c.l.b16 %v1425
      %v1533 = vunpack.c.h.b16 %v1425
      %v1534 = vunpack.c.l.b16 %v1426
      %v1535 = vunpack.c.h.b16 %v1426
      %v1536 = vunpack.c.l.b16 %v1427
      %v1537 = vunpack.c.h.b16 %v1427
      %v1538 = vunpack.c.l.b16 %v1428
      %v1539 = vunpack.c.h.b16 %v1428
      %v1540 = vunpack.c.l.b16 %v1429
      %v1541 = vunpack.c.h.b16 %v1429
      %v1542 = vunpack.c.l.b16 %v1430
      %v1543 = vunpack.c.h.b16 %v1430
      %v1544 = vunpack.c.l.b16 %v1431
      %v1545 = vunpack.c.h.b16 %v1431
      %v1546 = vpack.c.b16 %v1532, %v1530
      %v1547 = vpack.c.b16 %v1533, %v1531
      %v1548 = vpack.c.b16 %v1536, %v1534
      %v1549 = vpack.c.b16 %v1537, %v1535
      %v1550 = vpack.c.b16 %v1540, %v1538
      %v1551 = vpack.c.b16 %v1541, %v1539
      %v1552 = vpack.c.b16 %v1544, %v1542
      %v1553 = vpack.c.b16 %v1545, %v1543
      %v1563 = vsel %vm952, %v1504, 0
      %v1566 = vsel %vm952, %v1505, 0
      %v1569 = vsel %vm952, %v1506, 0
      %v1572 = vsel %vm952, %v1507, 0
      %v1575 = vsel %vm952, %v1508, 0
      %v1578 = vsel %vm952, %v1509, 0
      %v1581 = vsel %vm952, %v1510, 0
      %v1584 = vsel %vm952, %v1511, 0
      %v1587 = vsel %vm952, %v1512, 0
      %v1590 = vsel %vm952, %v1513, 0
      %v1593 = vsel %vm952, %v1514, 0
      %v1596 = vsel %vm952, %v1515, 0
      %v1599 = vsel %vm952, %v1516, 0
      %v1602 = vsel %vm952, %v1517, 0
      %v1605 = vsel %vm952, %v1518, 0
      %v1608 = vsel %vm952, %v1519, 0
      %v1611 = vsel %vm952, %v1520, 0
      %v1614 = vsel %vm952, %v1521, 0
      %1616 = vmatpush.bf16.msra.mxu0 0
      %1617 = vmatpush.bf16.msra.mxu0 0
      %1618 = vmatpush.bf16.msra.mxu0 0
      %1619 = vmatpush.bf16.msra.mxu0 0
      %1620 = vmatpush.bf16.msra.mxu0 %v1552
      %1621 = vmatpush.bf16.msra.mxu0 %v1550
      %1622 = vmatpush.bf16.msra.mxu0 %v1548
      %1623 = vmatpush.bf16.msra.mxu0 %v1546
      %1624 = vmatmul.bf16.gmra.mxu0 %v1563
      %v1625 = vpop.f32.mrf.mxu0
      %v1626 = vadd.f32 0.0, %v1625
      %v1627 = vpop.f32.mrf.mxu0
      %v1628 = vadd.f32 0.0, %v1627
      %1629 = vmatmul.bf16.gmra.mxu0 %v1566
      %v1630 = vpop.f32.mrf.mxu0
      %v1631 = vadd.f32 0.0, %v1630
      %v1632 = vpop.f32.mrf.mxu0
      %v1633 = vadd.f32 0.0, %v1632
      %1634 = vmatmul.bf16.gmra.mxu0 %v1569
      %v1635 = vpop.f32.mrf.mxu0
      %v1636 = vadd.f32 0.0, %v1635
      %v1637 = vpop.f32.mrf.mxu0
      %v1638 = vadd.f32 0.0, %v1637
      %1639 = vmatmul.bf16.gmra.mxu0 %v1572
      %v1640 = vpop.f32.mrf.mxu0
      %v1641 = vadd.f32 0.0, %v1640
      %v1642 = vpop.f32.mrf.mxu0
      %v1643 = vadd.f32 0.0, %v1642
      %1644 = vmatmul.bf16.gmra.mxu0 %v1575
      %v1645 = vpop.f32.mrf.mxu0
      %v1646 = vadd.f32 0.0, %v1645
      %v1647 = vpop.f32.mrf.mxu0
      %v1648 = vadd.f32 0.0, %v1647
      %1649 = vmatmul.bf16.gmra.mxu0 %v1578
      %v1650 = vpop.f32.mrf.mxu0
      %v1651 = vadd.f32 0.0, %v1650
      %v1652 = vpop.f32.mrf.mxu0
      %v1653 = vadd.f32 0.0, %v1652
      %1654 = vmatmul.bf16.gmra.mxu0 %v1581
      %v1655 = vpop.f32.mrf.mxu0
      %v1656 = vadd.f32 0.0, %v1655
      %v1657 = vpop.f32.mrf.mxu0
      %v1658 = vadd.f32 0.0, %v1657
      %1659 = vmatmul.bf16.gmra.mxu0 %v1584
      %v1660 = vpop.f32.mrf.mxu0
      %v1661 = vadd.f32 0.0, %v1660
      %v1662 = vpop.f32.mrf.mxu0
      %v1663 = vadd.f32 0.0, %v1662
      %1664 = vmatmul.bf16.gmra.mxu0 %v1587
      %v1665 = vpop.f32.mrf.mxu0
      %v1666 = vadd.f32 0.0, %v1665
      %v1667 = vpop.f32.mrf.mxu0
      %v1668 = vadd.f32 0.0, %v1667
      %1669 = vmatmul.bf16.gmra.mxu0 %v1590
      %v1670 = vpop.f32.mrf.mxu0
      %v1671 = vadd.f32 0.0, %v1670
      %v1672 = vpop.f32.mrf.mxu0
      %v1673 = vadd.f32 0.0, %v1672
      %1674 = vmatmul.bf16.gmra.mxu0 %v1593
      %v1675 = vpop.f32.mrf.mxu0
      %v1676 = vadd.f32 0.0, %v1675
      %v1677 = vpop.f32.mrf.mxu0
      %v1678 = vadd.f32 0.0, %v1677
      %1679 = vmatmul.bf16.gmra.mxu0 %v1596
      %v1680 = vpop.f32.mrf.mxu0
      %v1681 = vadd.f32 0.0, %v1680
      %v1682 = vpop.f32.mrf.mxu0
      %v1683 = vadd.f32 0.0, %v1682
      %1684 = vmatmul.bf16.gmra.mxu0 %v1599
      %v1685 = vpop.f32.mrf.mxu0
      %v1686 = vadd.f32 0.0, %v1685
      %v1687 = vpop.f32.mrf.mxu0
      %v1688 = vadd.f32 0.0, %v1687
      %1689 = vmatmul.bf16.gmra.mxu0 %v1602
      %v1690 = vpop.f32.mrf.mxu0
      %v1691 = vadd.f32 0.0, %v1690
      %v1692 = vpop.f32.mrf.mxu0
      %v1693 = vadd.f32 0.0, %v1692
      %1694 = vmatmul.bf16.gmra.mxu0 %v1605
      %v1695 = vpop.f32.mrf.mxu0
      %v1696 = vadd.f32 0.0, %v1695
      %v1697 = vpop.f32.mrf.mxu0
      %v1698 = vadd.f32 0.0, %v1697
      %1699 = vmatmul.bf16.gmra.mxu0 %v1608
      %v1700 = vpop.f32.mrf.mxu0
      %v1701 = vadd.f32 0.0, %v1700
      %v1702 = vpop.f32.mrf.mxu0
      %v1703 = vadd.f32 0.0, %v1702
      %1704 = vmatmul.bf16.gmra.mxu0 %v1611
      %v1705 = vpop.f32.mrf.mxu0
      %v1706 = vadd.f32 0.0, %v1705
      %v1707 = vpop.f32.mrf.mxu0
      %v1708 = vadd.f32 0.0, %v1707
      %1709 = vmatmul.bf16.gmra.mxu0 %v1614
      %v1710 = vpop.f32.mrf.mxu0
      %v1711 = vpop.f32.mrf.mxu0
      %1712 = vdwg.mxu0
      %1713 = vmatpush.bf16.msra.mxu0 0
      %1714 = vmatpush.bf16.msra.mxu0 0
      %1715 = vmatpush.bf16.msra.mxu0 0
      %1716 = vmatpush.bf16.msra.mxu0 0
      %1717 = vmatpush.bf16.msra.mxu0 %v1553
      %1718 = vmatpush.bf16.msra.mxu0 %v1551
      %1719 = vmatpush.bf16.msra.mxu0 %v1549
      %1720 = vmatpush.bf16.msra.mxu0 %v1547
      %1721 = vmatmul.bf16.gmra.mxu0 %v1563
      %v1722 = vpop.f32.mrf.mxu0
      %v1723 = vpop.f32.mrf.mxu0
      %1724 = vmatmul.bf16.gmra.mxu0 %v1566
      %v1725 = vpop.f32.mrf.mxu0
      %v1726 = vpop.f32.mrf.mxu0
      %1727 = vmatmul.bf16.gmra.mxu0 %v1569
      %v1728 = vpop.f32.mrf.mxu0
      %v1729 = vadd.f32 0.0, %v1728
      %v1730 = vpop.f32.mrf.mxu0
      %v1731 = vadd.f32 0.0, %v1730
      %1732 = vmatmul.bf16.gmra.mxu0 %v1572
      %v1733 = vpop.f32.mrf.mxu0
      %v1734 = vadd.f32 0.0, %v1733
      %v1735 = vpop.f32.mrf.mxu0
      %v1736 = vadd.f32 0.0, %v1735
      %1737 = vmatmul.bf16.gmra.mxu0 %v1575
      %v1738 = vpop.f32.mrf.mxu0
      %v1739 = vadd.f32 0.0, %v1738
      %v1740 = vpop.f32.mrf.mxu0
      %v1741 = vadd.f32 0.0, %v1740
      %1742 = vmatmul.bf16.gmra.mxu0 %v1578
      %v1743 = vpop.f32.mrf.mxu0
      %v1744 = vadd.f32 0.0, %v1743
      %v1745 = vpop.f32.mrf.mxu0
      %v1746 = vadd.f32 0.0, %v1745
      %1747 = vmatmul.bf16.gmra.mxu0 %v1581
      %v1748 = vpop.f32.mrf.mxu0
      %v1749 = vadd.f32 0.0, %v1748
      %v1750 = vpop.f32.mrf.mxu0
      %v1751 = vadd.f32 0.0, %v1750
      %1752 = vmatmul.bf16.gmra.mxu0 %v1584
      %v1753 = vpop.f32.mrf.mxu0
      %v1754 = vadd.f32 0.0, %v1753
      %v1755 = vpop.f32.mrf.mxu0
      %v1756 = vadd.f32 0.0, %v1755
      %1757 = vmatmul.bf16.gmra.mxu0 %v1587
      %v1758 = vpop.f32.mrf.mxu0
      %v1759 = vadd.f32 0.0, %v1758
      %v1760 = vpop.f32.mrf.mxu0
      %v1761 = vadd.f32 0.0, %v1760
      %1762 = vmatmul.bf16.gmra.mxu0 %v1590
      %v1763 = vpop.f32.mrf.mxu0
      %v1764 = vadd.f32 0.0, %v1763
      %v1765 = vpop.f32.mrf.mxu0
      %v1766 = vadd.f32 0.0, %v1765
      %1767 = vmatmul.bf16.gmra.mxu0 %v1593
      %v1768 = vpop.f32.mrf.mxu0
      %v1769 = vadd.f32 0.0, %v1768
      %v1770 = vpop.f32.mrf.mxu0
      %v1771 = vadd.f32 0.0, %v1770
      %1772 = vmatmul.bf16.gmra.mxu0 %v1596
      %v1773 = vpop.f32.mrf.mxu0
      %v1774 = vadd.f32 0.0, %v1773
      %v1775 = vpop.f32.mrf.mxu0
      %v1776 = vadd.f32 0.0, %v1775
      %1777 = vmatmul.bf16.gmra.mxu0 %v1599
      %v1778 = vpop.f32.mrf.mxu0
      %v1779 = vadd.f32 0.0, %v1778
      %v1780 = vpop.f32.mrf.mxu0
      %v1781 = vadd.f32 0.0, %v1780
      %1782 = vmatmul.bf16.gmra.mxu0 %v1602
      %v1783 = vpop.f32.mrf.mxu0
      %v1784 = vadd.f32 0.0, %v1783
      %v1785 = vpop.f32.mrf.mxu0
      %v1786 = vadd.f32 0.0, %v1785
      %1787 = vmatmul.bf16.gmra.mxu0 %v1605
      %v1788 = vpop.f32.mrf.mxu0
      %v1789 = vadd.f32 0.0, %v1788
      %v1790 = vpop.f32.mrf.mxu0
      %v1791 = vadd.f32 0.0, %v1790
      %1792 = vmatmul.bf16.gmra.mxu0 %v1608
      %v1793 = vpop.f32.mrf.mxu0
      %v1794 = vadd.f32 0.0, %v1793
      %v1795 = vpop.f32.mrf.mxu0
      %v1796 = vadd.f32 0.0, %v1795
      %1797 = vmatmul.bf16.gmra.mxu0 %v1611
      %v1798 = vpop.f32.mrf.mxu0
      %v1799 = vadd.f32 0.0, %v1798
      %v1800 = vpop.f32.mrf.mxu0
      %v1801 = vadd.f32 0.0, %v1800
      %1802 = vmatmul.bf16.gmra.mxu0 %v1614
      %v1803 = vpop.f32.mrf.mxu0
      %v1804 = vadd.f32 0.0, %v1803
      %v1805 = vpop.f32.mrf.mxu0
      %v1806 = vadd.f32 0.0, %v1805
      %1807 = vdwg.mxu0
      %v1808 = vadd.f32 %v1391, %v1626
      %v1809 = vadd.f32 %v1392, %v1628
      %v1810 = vadd.f32 %v1393, %v1631
      %v1811 = vadd.f32 %v1394, %v1633
      %v1812 = vadd.f32 %v1395, %v1636
      %v1813 = vadd.f32 %v1396, %v1638
      %v1814 = vadd.f32 %v1397, %v1641
      %v1815 = vadd.f32 %v1398, %v1643
      %v1816 = vadd.f32 %v1399, %v1646
      %v1817 = vadd.f32 %v1400, %v1648
      %v1818 = vadd.f32 %v1401, %v1651
      %v1819 = vadd.f32 %v1402, %v1653
      %v1820 = vadd.f32 %v1403, %v1656
      %v1821 = vadd.f32 %v1404, %v1658
      %v1822 = vadd.f32 %v1405, %v1661
      %v1823 = vadd.f32 %v1406, %v1663
      %v1824 = vadd.f32 %v1407, %v1666
      %v1825 = vadd.f32 %v1408, %v1668
      %v1826 = vadd.f32 %v1409, %v1671
      %v1827 = vadd.f32 %v1410, %v1673
      %v1828 = vadd.f32 %v1411, %v1676
      %v1829 = vadd.f32 %v1412, %v1678
      %v1830 = vadd.f32 %v1413, %v1681
      %v1831 = vadd.f32 %v1414, %v1683
      %v1832 = vadd.f32 %v1415, %v1686
      %v1833 = vadd.f32 %v1416, %v1688
      %v1834 = vadd.f32 %v1417, %v1691
      %v1835 = vadd.f32 %v1418, %v1693
      %v1836 = vadd.f32 %v1419, %v1696
      %v1837 = vadd.f32 %v1420, %v1698
      %v1838 = vadd.f32 %v1421, %v1701
      %v1839 = vadd.f32 %v1422, %v1703
      %1872 = vrot.lane.b32.xlu0 %v1631, 64
      %v1873 = vpop.permute.xlu0 %1872
      %1874 = vrot.lane.b32.xlu0 %v1633, 64
      %v1875 = vpop.permute.xlu0 %1874
      %1876 = vrot.lane.b32.xlu0 %v1636, 64
      %v1877 = vpop.permute.xlu0 %1876
      %1878 = vrot.lane.b32.xlu0 %v1638, 64
      %v1879 = vpop.permute.xlu0 %1878
      %1880 = vrot.lane.b32.xlu0 %v1641, 64
      %v1881 = vpop.permute.xlu0 %1880
      %1882 = vrot.lane.b32.xlu0 %v1643, 64
      %v1883 = vpop.permute.xlu0 %1882
      %1884 = vrot.lane.b32.xlu0 %v1646, 64
      %v1885 = vpop.permute.xlu0 %1884
      %1886 = vrot.lane.b32.xlu0 %v1648, 64
      %v1887 = vpop.permute.xlu0 %1886
      %1888 = vrot.lane.b32.xlu0 %v1651, 64
      %v1889 = vpop.permute.xlu0 %1888
      %1890 = vrot.lane.b32.xlu0 %v1653, 64
      %v1891 = vpop.permute.xlu0 %1890
      %1892 = vrot.lane.b32.xlu0 %v1656, 64
      %v1893 = vpop.permute.xlu0 %1892
      %1894 = vrot.lane.b32.xlu0 %v1658, 64
      %v1895 = vpop.permute.xlu0 %1894
      %1896 = vrot.lane.b32.xlu0 %v1661, 64
      %v1897 = vpop.permute.xlu0 %1896
      %1898 = vrot.lane.b32.xlu0 %v1663, 64
      %v1899 = vpop.permute.xlu0 %1898
      %1900 = vrot.lane.b32.xlu0 %v1666, 64
      %v1901 = vpop.permute.xlu0 %1900
      %1902 = vrot.lane.b32.xlu0 %v1668, 64
      %v1903 = vpop.permute.xlu0 %1902
      %1904 = vrot.lane.b32.xlu0 %v1671, 64
      %v1905 = vpop.permute.xlu0 %1904
      %1906 = vrot.lane.b32.xlu0 %v1673, 64
      %v1907 = vpop.permute.xlu0 %1906
      %1908 = vrot.lane.b32.xlu0 %v1676, 64
      %v1909 = vpop.permute.xlu0 %1908
      %1910 = vrot.lane.b32.xlu0 %v1678, 64
      %v1911 = vpop.permute.xlu0 %1910
      %1912 = vrot.lane.b32.xlu0 %v1681, 64
      %v1913 = vpop.permute.xlu0 %1912
      %1914 = vrot.lane.b32.xlu0 %v1683, 64
      %v1915 = vpop.permute.xlu0 %1914
      %1916 = vrot.lane.b32.xlu0 %v1686, 64
      %v1917 = vpop.permute.xlu0 %1916
      %1918 = vrot.lane.b32.xlu0 %v1688, 64
      %v1919 = vpop.permute.xlu0 %1918
      %1920 = vrot.lane.b32.xlu0 %v1691, 64
      %v1921 = vpop.permute.xlu0 %1920
      %1922 = vrot.lane.b32.xlu0 %v1693, 64
      %v1923 = vpop.permute.xlu0 %1922
      %1924 = vrot.lane.b32.xlu0 %v1696, 64
      %v1925 = vpop.permute.xlu0 %1924
      %1926 = vrot.lane.b32.xlu0 %v1698, 64
      %v1927 = vpop.permute.xlu0 %1926
      %1928 = vrot.lane.b32.xlu0 %v1701, 64
      %v1929 = vpop.permute.xlu0 %1928
      %1930 = vrot.lane.b32.xlu0 %v1703, 64
      %v1931 = vpop.permute.xlu0 %1930
      %1932 = vrot.lane.b32.xlu0 %v1706, 64
      %v1933 = vpop.permute.xlu0 %1932
      %1934 = vrot.lane.b32.xlu0 %v1708, 64
      %v1935 = vpop.permute.xlu0 %1934
      %v1968 = vadd.f32 %v1808, %v1873
      %v1969 = vadd.f32 %v1809, %v1875
      %v1970 = vadd.f32 %v1810, %v1877
      %v1971 = vadd.f32 %v1811, %v1879
      %v1972 = vadd.f32 %v1812, %v1881
      %v1973 = vadd.f32 %v1813, %v1883
      %v1974 = vadd.f32 %v1814, %v1885
      %v1975 = vadd.f32 %v1815, %v1887
      %v1976 = vadd.f32 %v1816, %v1889
      %v1977 = vadd.f32 %v1817, %v1891
      %v1978 = vadd.f32 %v1818, %v1893
      %v1979 = vadd.f32 %v1819, %v1895
      %v1980 = vadd.f32 %v1820, %v1897
      %v1981 = vadd.f32 %v1821, %v1899
      %v1982 = vadd.f32 %v1822, %v1901
      %v1983 = vadd.f32 %v1823, %v1903
      %v1984 = vadd.f32 %v1824, %v1905
      %v1985 = vadd.f32 %v1825, %v1907
      %v1986 = vadd.f32 %v1826, %v1909
      %v1987 = vadd.f32 %v1827, %v1911
      %v1988 = vadd.f32 %v1828, %v1913
      %v1989 = vadd.f32 %v1829, %v1915
      %v1990 = vadd.f32 %v1830, %v1917
      %v1991 = vadd.f32 %v1831, %v1919
      %v1992 = vadd.f32 %v1832, %v1921
      %v1993 = vadd.f32 %v1833, %v1923
      %v1994 = vadd.f32 %v1834, %v1925
      %v1995 = vadd.f32 %v1835, %v1927
      %v1996 = vadd.f32 %v1836, %v1929
      %v1997 = vadd.f32 %v1837, %v1931
      %v1998 = vadd.f32 %v1838, %v1933
      %v1999 = vadd.f32 %v1839, %v1935
      %v2000 = vadd.f32 %v1968, %v1729
      %v2001 = vadd.f32 %v1969, %v1731
      %v2002 = vadd.f32 %v1970, %v1734
      %v2003 = vadd.f32 %v1971, %v1736
      %v2004 = vadd.f32 %v1972, %v1739
      %v2005 = vadd.f32 %v1973, %v1741
      %v2006 = vadd.f32 %v1974, %v1744
      %v2007 = vadd.f32 %v1975, %v1746
      %v2008 = vadd.f32 %v1976, %v1749
      %v2009 = vadd.f32 %v1977, %v1751
      %v2010 = vadd.f32 %v1978, %v1754
      %v2011 = vadd.f32 %v1979, %v1756
      %v2012 = vadd.f32 %v1980, %v1759
      %v2013 = vadd.f32 %v1981, %v1761
      %v2014 = vadd.f32 %v1982, %v1764
      %v2015 = vadd.f32 %v1983, %v1766
      %v2016 = vadd.f32 %v1984, %v1769
      %v2017 = vadd.f32 %v1985, %v1771
      %v2018 = vadd.f32 %v1986, %v1774
      %v2019 = vadd.f32 %v1987, %v1776
      %v2020 = vadd.f32 %v1988, %v1779
      %v2021 = vadd.f32 %v1989, %v1781
      %v2022 = vadd.f32 %v1990, %v1784
      %v2023 = vadd.f32 %v1991, %v1786
      %v2024 = vadd.f32 %v1992, %v1789
      %v2025 = vadd.f32 %v1993, %v1791
      %v2026 = vadd.f32 %v1994, %v1794
      %v2027 = vadd.f32 %v1995, %v1796
      %v2028 = vadd.f32 %v1996, %v1799
      %v2029 = vadd.f32 %v1997, %v1801
      %v2030 = vadd.f32 %v1998, %v1804
      %v2031 = vadd.f32 %v1999, %v1806
      %v2032 = vld [vmem:[#allocation2 + $0x8] sm:$0xf]
      %v2033 = vld [vmem:[#allocation2 + $0xc] sm:$0xf]
      %v2034 = vld [vmem:[#allocation2 + $0x10] sm:$0x1]
      %v2035 = vld [vmem:[#allocation2 + $0x20] sm:$0xf]
      %v2036 = vld [vmem:[#allocation2 + $0x24] sm:$0xf]
      %v2037 = vld [vmem:[#allocation2 + $0x28] sm:$0x1]
      %v2038 = vld [vmem:[#allocation2 + $0x38] sm:$0xf]
      %v2039 = vld [vmem:[#allocation2 + $0x3c] sm:$0xf]
      %v2040 = vld [vmem:[#allocation2 + $0x40] sm:$0x1]
      %v2041 = vld [vmem:[#allocation2 + $0x50] sm:$0xf]
      %v2042 = vld [vmem:[#allocation2 + $0x54] sm:$0xf]
      %v2043 = vld [vmem:[#allocation2 + $0x58] sm:$0x1]
      %v2044 = vld [vmem:[#allocation2 + $0x68] sm:$0xf]
      %v2045 = vld [vmem:[#allocation2 + $0x6c] sm:$0xf]
      %v2046 = vld [vmem:[#allocation2 + $0x70] sm:$0x1]
      %v2047 = vld [vmem:[#allocation2 + $0x80] sm:$0xf]
      %v2048 = vld [vmem:[#allocation2 + $0x84] sm:$0xf]
      %v2049 = vld [vmem:[#allocation2 + $0x88] sm:$0x1]
      %v2050 = vld [vmem:[#allocation2 + $0x98] sm:$0xf]
      %v2051 = vld [vmem:[#allocation2 + $0x9c] sm:$0xf]
      %v2052 = vld [vmem:[#allocation2 + $0xa0] sm:$0x1]
      %v2053 = vld [vmem:[#allocation2 + $0xb0] sm:$0xf]
      %v2054 = vld [vmem:[#allocation2 + $0xb4] sm:$0xf]
      %v2055 = vld [vmem:[#allocation2 + $0xb8] sm:$0x1]
      %v2056 = vld [vmem:[#allocation2 + $0xc8] sm:$0xf]
      %v2057 = vld [vmem:[#allocation2 + $0xcc] sm:$0xf]
      %v2058 = vld [vmem:[#allocation2 + $0xd0] sm:$0x1]
      %v2059 = vld [vmem:[#allocation2 + $0xe0] sm:$0xf]
      %v2060 = vld [vmem:[#allocation2 + $0xe4] sm:$0xf]
      %v2061 = vld [vmem:[#allocation2 + $0xe8] sm:$0x1]
      %v2062 = vld [vmem:[#allocation2 + $0xf8] sm:$0xf]
      %v2063 = vld [vmem:[#allocation2 + $0xfc] sm:$0xf]
      %v2064 = vld [vmem:[#allocation2 + $0x100] sm:$0x1]
      %v2065 = vld [vmem:[#allocation2 + $0x110] sm:$0xf]
      %v2066 = vld [vmem:[#allocation2 + $0x114] sm:$0xf]
      %v2067 = vld [vmem:[#allocation2 + $0x118] sm:$0x1]
      %v2068 = vld [vmem:[#allocation2 + $0x128] sm:$0xf]
      %v2069 = vld [vmem:[#allocation2 + $0x12c] sm:$0xf]
      %v2070 = vld [vmem:[#allocation2 + $0x130] sm:$0x1]
      %v2071 = vld [vmem:[#allocation2 + $0x140] sm:$0xf]
      %v2072 = vld [vmem:[#allocation2 + $0x144] sm:$0xf]
      %v2073 = vld [vmem:[#allocation2 + $0x148] sm:$0x1]
      %v2074 = vld [vmem:[#allocation2 + $0x158] sm:$0xf]
      %v2075 = vld [vmem:[#allocation2 + $0x15c] sm:$0xf]
      %v2076 = vld [vmem:[#allocation2 + $0x160] sm:$0x1]
      %v2077 = vld [vmem:[#allocation2 + $0x170] sm:$0xf]
      %v2078 = vld [vmem:[#allocation2 + $0x174] sm:$0xf]
      %v2079 = vld [vmem:[#allocation2 + $0x178] sm:$0x1]
      %v2080 = vld [vmem:[#allocation2 + $0x188] sm:$0xf]
      %v2081 = vld [vmem:[#allocation2 + $0x18c] sm:$0xf]
      %v2082 = vld [vmem:[#allocation2 + $0x190] sm:$0x1]
      %v2083 = vld [vmem:[#allocation2 + $0x1a0] sm:$0xf]
      %v2084 = vld [vmem:[#allocation2 + $0x1a4] sm:$0xf]
      %v2085 = vld [vmem:[#allocation2 + $0x1a8] sm:$0x1]
      %vm2086 = vsmask.f32 3328
      %vm2087 = vsmask.f32 7440
      %vm2088 = vmor %vm2086, %vm2087
      %v2090 = vshrl.u32 %v2032, 16
      %v2092 = vrot.slane %v2090, 4
      %v2093 = vshll.u32 %v2032, 16
      %v2095 = vrot.slane %v2093, 5
      %v2096 = vor.u32 %v2092, %v2095
      %v2097 = vrot.slane %v2096, 4
      %v2099 = vshll.u32 %v2033, 16
      %v2101 = vrot.slane %v2099, 5
      %v2102 = vsel %vm2088, %v2097, %v2101
      %v2103 = vshrl.u32 %v2033, 16
      %v2105 = vrot.slane %v2103, 4
      %v2106 = vor.u32 %v2105, %v2101
      %v2107 = vrot.slane %v2106, 4
      %v2109 = vshll.u32 %v2034, 16
      %v2111 = vrot.slane %v2109, 5
      %v2112 = vsel %vm2088, %v2107, %v2111
      %v2114 = vshrl.u32 %v2035, 16
      %v2116 = vrot.slane %v2114, 4
      %v2117 = vshll.u32 %v2035, 16
      %v2119 = vrot.slane %v2117, 5
      %v2120 = vor.u32 %v2116, %v2119
      %v2121 = vrot.slane %v2120, 4
      %v2123 = vshll.u32 %v2036, 16
      %v2125 = vrot.slane %v2123, 5
      %v2126 = vsel %vm2088, %v2121, %v2125
      %v2127 = vshrl.u32 %v2036, 16
      %v2129 = vrot.slane %v2127, 4
      %v2130 = vor.u32 %v2129, %v2125
      %v2131 = vrot.slane %v2130, 4
      %v2133 = vshll.u32 %v2037, 16
      %v2135 = vrot.slane %v2133, 5
      %v2136 = vsel %vm2088, %v2131, %v2135
      %v2138 = vshrl.u32 %v2038, 16
      %v2140 = vrot.slane %v2138, 4
      %v2141 = vshll.u32 %v2038, 16
      %v2143 = vrot.slane %v2141, 5
      %v2144 = vor.u32 %v2140, %v2143
      %v2145 = vrot.slane %v2144, 4
      %v2147 = vshll.u32 %v2039, 16
      %v2149 = vrot.slane %v2147, 5
      %v2150 = vsel %vm2088, %v2145, %v2149
      %v2151 = vshrl.u32 %v2039, 16
      %v2153 = vrot.slane %v2151, 4
      %v2154 = vor.u32 %v2153, %v2149
      %v2155 = vrot.slane %v2154, 4
      %v2157 = vshll.u32 %v2040, 16
      %v2159 = vrot.slane %v2157, 5
      %v2160 = vsel %vm2088, %v2155, %v2159
      %v2162 = vshrl.u32 %v2041, 16
      %v2164 = vrot.slane %v2162, 4
      %v2165 = vshll.u32 %v2041, 16
      %v2167 = vrot.slane %v2165, 5
      %v2168 = vor.u32 %v2164, %v2167
      %v2169 = vrot.slane %v2168, 4
      %v2171 = vshll.u32 %v2042, 16
      %v2173 = vrot.slane %v2171, 5
      %v2174 = vsel %vm2088, %v2169, %v2173
      %v2175 = vshrl.u32 %v2042, 16
      %v2177 = vrot.slane %v2175, 4
      %v2178 = vor.u32 %v2177, %v2173
      %v2179 = vrot.slane %v2178, 4
      %v2181 = vshll.u32 %v2043, 16
      %v2183 = vrot.slane %v2181, 5
      %v2184 = vsel %vm2088, %v2179, %v2183
      %v2186 = vshrl.u32 %v2044, 16
      %v2188 = vrot.slane %v2186, 4
      %v2189 = vshll.u32 %v2044, 16
      %v2191 = vrot.slane %v2189, 5
      %v2192 = vor.u32 %v2188, %v2191
      %v2193 = vrot.slane %v2192, 4
      %v2195 = vshll.u32 %v2045, 16
      %v2197 = vrot.slane %v2195, 5
      %v2198 = vsel %vm2088, %v2193, %v2197
      %v2199 = vshrl.u32 %v2045, 16
      %v2201 = vrot.slane %v2199, 4
      %v2202 = vor.u32 %v2201, %v2197
      %v2203 = vrot.slane %v2202, 4
      %v2205 = vshll.u32 %v2046, 16
      %v2207 = vrot.slane %v2205, 5
      %v2208 = vsel %vm2088, %v2203, %v2207
      %v2210 = vshrl.u32 %v2047, 16
      %v2212 = vrot.slane %v2210, 4
      %v2213 = vshll.u32 %v2047, 16
      %v2215 = vrot.slane %v2213, 5
      %v2216 = vor.u32 %v2212, %v2215
      %v2217 = vrot.slane %v2216, 4
      %v2219 = vshll.u32 %v2048, 16
      %v2221 = vrot.slane %v2219, 5
      %v2222 = vsel %vm2088, %v2217, %v2221
      %v2223 = vshrl.u32 %v2048, 16
      %v2225 = vrot.slane %v2223, 4
      %v2226 = vor.u32 %v2225, %v2221
      %v2227 = vrot.slane %v2226, 4
      %v2229 = vshll.u32 %v2049, 16
      %v2231 = vrot.slane %v2229, 5
      %v2232 = vsel %vm2088, %v2227, %v2231
      %v2234 = vshrl.u32 %v2050, 16
      %v2236 = vrot.slane %v2234, 4
      %v2237 = vshll.u32 %v2050, 16
      %v2239 = vrot.slane %v2237, 5
      %v2240 = vor.u32 %v2236, %v2239
      %v2241 = vrot.slane %v2240, 4
      %v2243 = vshll.u32 %v2051, 16
      %v2245 = vrot.slane %v2243, 5
      %v2246 = vsel %vm2088, %v2241, %v2245
      %v2247 = vshrl.u32 %v2051, 16
      %v2249 = vrot.slane %v2247, 4
      %v2250 = vor.u32 %v2249, %v2245
      %v2251 = vrot.slane %v2250, 4
      %v2253 = vshll.u32 %v2052, 16
      %v2255 = vrot.slane %v2253, 5
      %v2256 = vsel %vm2088, %v2251, %v2255
      %v2258 = vshrl.u32 %v2053, 16
      %v2260 = vrot.slane %v2258, 4
      %v2261 = vshll.u32 %v2053, 16
      %v2263 = vrot.slane %v2261, 5
      %v2264 = vor.u32 %v2260, %v2263
      %v2265 = vrot.slane %v2264, 4
      %v2267 = vshll.u32 %v2054, 16
      %v2269 = vrot.slane %v2267, 5
      %v2270 = vsel %vm2088, %v2265, %v2269
      %v2271 = vshrl.u32 %v2054, 16
      %v2273 = vrot.slane %v2271, 4
      %v2274 = vor.u32 %v2273, %v2269
      %v2275 = vrot.slane %v2274, 4
      %v2277 = vshll.u32 %v2055, 16
      %v2279 = vrot.slane %v2277, 5
      %v2280 = vsel %vm2088, %v2275, %v2279
      %v2282 = vshrl.u32 %v2056, 16
      %v2284 = vrot.slane %v2282, 4
      %v2285 = vshll.u32 %v2056, 16
      %v2287 = vrot.slane %v2285, 5
      %v2288 = vor.u32 %v2284, %v2287
      %v2289 = vrot.slane %v2288, 4
      %v2291 = vshll.u32 %v2057, 16
      %v2293 = vrot.slane %v2291, 5
      %v2294 = vsel %vm2088, %v2289, %v2293
      %v2295 = vshrl.u32 %v2057, 16
      %v2297 = vrot.slane %v2295, 4
      %v2298 = vor.u32 %v2297, %v2293
      %v2299 = vrot.slane %v2298, 4
      %v2301 = vshll.u32 %v2058, 16
      %v2303 = vrot.slane %v2301, 5
      %v2304 = vsel %vm2088, %v2299, %v2303
      %v2306 = vshrl.u32 %v2059, 16
      %v2308 = vrot.slane %v2306, 4
      %v2309 = vshll.u32 %v2059, 16
      %v2311 = vrot.slane %v2309, 5
      %v2312 = vor.u32 %v2308, %v2311
      %v2313 = vrot.slane %v2312, 4
      %v2315 = vshll.u32 %v2060, 16
      %v2317 = vrot.slane %v2315, 5
      %v2318 = vsel %vm2088, %v2313, %v2317
      %v2319 = vshrl.u32 %v2060, 16
      %v2321 = vrot.slane %v2319, 4
      %v2322 = vor.u32 %v2321, %v2317
      %v2323 = vrot.slane %v2322, 4
      %v2325 = vshll.u32 %v2061, 16
      %v2327 = vrot.slane %v2325, 5
      %v2328 = vsel %vm2088, %v2323, %v2327
      %v2330 = vshrl.u32 %v2062, 16
      %v2332 = vrot.slane %v2330, 4
      %v2333 = vshll.u32 %v2062, 16
      %v2335 = vrot.slane %v2333, 5
      %v2336 = vor.u32 %v2332, %v2335
      %v2337 = vrot.slane %v2336, 4
      %v2339 = vshll.u32 %v2063, 16
      %v2341 = vrot.slane %v2339, 5
      %v2342 = vsel %vm2088, %v2337, %v2341
      %v2343 = vshrl.u32 %v2063, 16
      %v2345 = vrot.slane %v2343, 4
      %v2346 = vor.u32 %v2345, %v2341
      %v2347 = vrot.slane %v2346, 4
      %v2349 = vshll.u32 %v2064, 16
      %v2351 = vrot.slane %v2349, 5
      %v2352 = vsel %vm2088, %v2347, %v2351
      %v2354 = vshrl.u32 %v2065, 16
      %v2356 = vrot.slane %v2354, 4
      %v2357 = vshll.u32 %v2065, 16
      %v2359 = vrot.slane %v2357, 5
      %v2360 = vor.u32 %v2356, %v2359
      %v2361 = vrot.slane %v2360, 4
      %v2363 = vshll.u32 %v2066, 16
      %v2365 = vrot.slane %v2363, 5
      %v2366 = vsel %vm2088, %v2361, %v2365
      %v2367 = vshrl.u32 %v2066, 16
      %v2369 = vrot.slane %v2367, 4
      %v2370 = vor.u32 %v2369, %v2365
      %v2371 = vrot.slane %v2370, 4
      %v2373 = vshll.u32 %v2067, 16
      %v2375 = vrot.slane %v2373, 5
      %v2376 = vsel %vm2088, %v2371, %v2375
      %v2378 = vshrl.u32 %v2068, 16
      %v2380 = vrot.slane %v2378, 4
      %v2381 = vshll.u32 %v2068, 16
      %v2383 = vrot.slane %v2381, 5
      %v2384 = vor.u32 %v2380, %v2383
      %v2385 = vrot.slane %v2384, 4
      %v2387 = vshll.u32 %v2069, 16
      %v2389 = vrot.slane %v2387, 5
      %v2390 = vsel %vm2088, %v2385, %v2389
      %v2391 = vshrl.u32 %v2069, 16
      %v2393 = vrot.slane %v2391, 4
      %v2394 = vor.u32 %v2393, %v2389
      %v2395 = vrot.slane %v2394, 4
      %v2397 = vshll.u32 %v2070, 16
      %v2399 = vrot.slane %v2397, 5
      %v2400 = vsel %vm2088, %v2395, %v2399
      %v2402 = vshrl.u32 %v2071, 16
      %v2404 = vrot.slane %v2402, 4
      %v2405 = vshll.u32 %v2071, 16
      %v2407 = vrot.slane %v2405, 5
      %v2408 = vor.u32 %v2404, %v2407
      %v2409 = vrot.slane %v2408, 4
      %v2411 = vshll.u32 %v2072, 16
      %v2413 = vrot.slane %v2411, 5
      %v2414 = vsel %vm2088, %v2409, %v2413
      %v2415 = vshrl.u32 %v2072, 16
      %v2417 = vrot.slane %v2415, 4
      %v2418 = vor.u32 %v2417, %v2413
      %v2419 = vrot.slane %v2418, 4
      %v2421 = vshll.u32 %v2073, 16
      %v2423 = vrot.slane %v2421, 5
      %v2424 = vsel %vm2088, %v2419, %v2423
      %v2426 = vshrl.u32 %v2074, 16
      %v2428 = vrot.slane %v2426, 4
      %v2429 = vshll.u32 %v2074, 16
      %v2431 = vrot.slane %v2429, 5
      %v2432 = vor.u32 %v2428, %v2431
      %v2433 = vrot.slane %v2432, 4
      %v2435 = vshll.u32 %v2075, 16
      %v2437 = vrot.slane %v2435, 5
      %v2438 = vsel %vm2088, %v2433, %v2437
      %v2439 = vshrl.u32 %v2075, 16
      %v2441 = vrot.slane %v2439, 4
      %v2442 = vor.u32 %v2441, %v2437
      %v2443 = vrot.slane %v2442, 4
      %v2445 = vshll.u32 %v2076, 16
      %v2447 = vrot.slane %v2445, 5
      %v2448 = vsel %vm2088, %v2443, %v2447
      %v2450 = vshrl.u32 %v2077, 16
      %v2452 = vrot.slane %v2450, 4
      %v2453 = vshll.u32 %v2077, 16
      %v2455 = vrot.slane %v2453, 5
      %v2456 = vor.u32 %v2452, %v2455
      %v2457 = vrot.slane %v2456, 4
      %v2459 = vshll.u32 %v2078, 16
      %v2461 = vrot.slane %v2459, 5
      %v2462 = vsel %vm2088, %v2457, %v2461
      %v2463 = vshrl.u32 %v2078, 16
      %v2465 = vrot.slane %v2463, 4
      %v2466 = vor.u32 %v2465, %v2461
      %v2467 = vrot.slane %v2466, 4
      %v2469 = vshll.u32 %v2079, 16
      %v2471 = vrot.slane %v2469, 5
      %v2472 = vsel %vm2088, %v2467, %v2471
      %v2474 = vshrl.u32 %v2080, 16
      %v2476 = vrot.slane %v2474, 4
      %v2477 = vshll.u32 %v2080, 16
      %v2479 = vrot.slane %v2477, 5
      %v2480 = vor.u32 %v2476, %v2479
      %v2481 = vrot.slane %v2480, 4
      %v2483 = vshll.u32 %v2081, 16
      %v2485 = vrot.slane %v2483, 5
      %v2486 = vsel %vm2088, %v2481, %v2485
      %v2487 = vshrl.u32 %v2081, 16
      %v2489 = vrot.slane %v2487, 4
      %v2490 = vor.u32 %v2489, %v2485
      %v2491 = vrot.slane %v2490, 4
      %v2493 = vshll.u32 %v2082, 16
      %v2495 = vrot.slane %v2493, 5
      %v2496 = vsel %vm2088, %v2491, %v2495
      %v2498 = vshrl.u32 %v2083, 16
      %v2500 = vrot.slane %v2498, 4
      %v2501 = vshll.u32 %v2083, 16
      %v2503 = vrot.slane %v2501, 5
      %v2504 = vor.u32 %v2500, %v2503
      %v2505 = vrot.slane %v2504, 4
      %v2507 = vshll.u32 %v2084, 16
      %v2509 = vrot.slane %v2507, 5
      %v2510 = vsel %vm2088, %v2505, %v2509
      %v2511 = vshrl.u32 %v2084, 16
      %v2513 = vrot.slane %v2511, 4
      %v2514 = vor.u32 %v2513, %v2509
      %v2515 = vrot.slane %v2514, 4
      %v2517 = vshll.u32 %v2085, 16
      %v2519 = vrot.slane %v2517, 5
      %v2520 = vsel %vm2088, %v2515, %v2519
      %s2521 = scalar_lea.vmem %s1, 128
      %v2522 = vld [vmem:[%s2521] sm:$0xff]
      %v2523 = vld [vmem:[%s2521 + $0x8] sm:$0xff]
      %v2524 = vld [vmem:[%s2521 + $0x10] sm:$0xff]
      %v2525 = vld [vmem:[%s2521 + $0x18] sm:$0xff]
      %v2526 = vld [vmem:[%s2521 + $0x20] sm:$0xff]
      %v2527 = vld [vmem:[%s2521 + $0x28] sm:$0xff]
      %v2528 = vld [vmem:[%s2521 + $0x30] sm:$0xff]
      %v2529 = vld [vmem:[%s2521 + $0x38] sm:$0xff]
      %v2530 = vunpack.c.l.b16 %v2102
      %v2531 = vunpack.c.l.b16 %v2112
      %v2532 = vunpack.c.l.b16 %v2126
      %v2533 = vunpack.c.l.b16 %v2136
      %v2534 = vunpack.c.l.b16 %v2150
      %v2535 = vunpack.c.l.b16 %v2160
      %v2536 = vunpack.c.l.b16 %v2174
      %v2537 = vunpack.c.l.b16 %v2184
      %v2538 = vunpack.c.l.b16 %v2198
      %v2539 = vunpack.c.l.b16 %v2208
      %v2540 = vunpack.c.l.b16 %v2222
      %v2541 = vunpack.c.l.b16 %v2232
      %v2542 = vunpack.c.l.b16 %v2246
      %v2543 = vunpack.c.l.b16 %v2256
      %v2544 = vunpack.c.l.b16 %v2270
      %v2545 = vunpack.c.l.b16 %v2280
      %v2546 = vunpack.c.l.b16 %v2294
      %v2547 = vunpack.c.l.b16 %v2304
      %v2548 = vunpack.c.l.b16 %v2318
      %v2549 = vunpack.c.l.b16 %v2328
      %v2550 = vunpack.c.l.b16 %v2342
      %v2551 = vunpack.c.l.b16 %v2352
      %v2552 = vunpack.c.l.b16 %v2366
      %v2553 = vunpack.c.l.b16 %v2376
      %v2554 = vunpack.c.l.b16 %v2390
      %v2555 = vunpack.c.l.b16 %v2400
      %v2556 = vunpack.c.l.b16 %v2414
      %v2557 = vunpack.c.l.b16 %v2424
      %v2558 = vunpack.c.l.b16 %v2438
      %v2559 = vunpack.c.l.b16 %v2448
      %v2560 = vunpack.c.l.b16 %v2462
      %v2561 = vunpack.c.l.b16 %v2472
      %v2562 = vunpack.c.l.b16 %v2486
      %v2563 = vunpack.c.l.b16 %v2496
      %v2564 = vunpack.c.l.b16 %v2510
      %v2565 = vunpack.c.l.b16 %v2520
      %v2566 = vpack.c.b16 %v2531, %v2530
      %v2567 = vpack.c.b16 %v2533, %v2532
      %v2568 = vpack.c.b16 %v2535, %v2534
      %v2569 = vpack.c.b16 %v2537, %v2536
      %v2570 = vpack.c.b16 %v2539, %v2538
      %v2571 = vpack.c.b16 %v2541, %v2540
      %v2572 = vpack.c.b16 %v2543, %v2542
      %v2573 = vpack.c.b16 %v2545, %v2544
      %v2574 = vpack.c.b16 %v2547, %v2546
      %v2575 = vpack.c.b16 %v2549, %v2548
      %v2576 = vpack.c.b16 %v2551, %v2550
      %v2577 = vpack.c.b16 %v2553, %v2552
      %v2578 = vpack.c.b16 %v2555, %v2554
      %v2579 = vpack.c.b16 %v2557, %v2556
      %v2580 = vpack.c.b16 %v2559, %v2558
      %v2581 = vpack.c.b16 %v2561, %v2560
      %v2582 = vpack.c.b16 %v2563, %v2562
      %v2583 = vpack.c.b16 %v2565, %v2564
      %v2592 = vunpack.c.l.b16 %v2522
      %v2593 = vunpack.c.h.b16 %v2522
      %v2594 = vunpack.c.l.b16 %v2523
      %v2595 = vunpack.c.h.b16 %v2523
      %v2596 = vunpack.c.l.b16 %v2524
      %v2597 = vunpack.c.h.b16 %v2524
      %v2598 = vunpack.c.l.b16 %v2525
      %v2599 = vunpack.c.h.b16 %v2525
      %v2600 = vunpack.c.l.b16 %v2526
      %v2601 = vunpack.c.h.b16 %v2526
      %v2602 = vunpack.c.l.b16 %v2527
      %v2603 = vunpack.c.h.b16 %v2527
      %v2604 = vunpack.c.l.b16 %v2528
      %v2605 = vunpack.c.h.b16 %v2528
      %v2606 = vunpack.c.l.b16 %v2529
      %v2607 = vunpack.c.h.b16 %v2529
      %v2608 = vpack.c.b16 %v2594, %v2592
      %v2609 = vpack.c.b16 %v2595, %v2593
      %v2610 = vpack.c.b16 %v2598, %v2596
      %v2611 = vpack.c.b16 %v2599, %v2597
      %v2612 = vpack.c.b16 %v2602, %v2600
      %v2613 = vpack.c.b16 %v2603, %v2601
      %v2614 = vpack.c.b16 %v2606, %v2604
      %v2615 = vpack.c.b16 %v2607, %v2605
      %v2625 = vsel %vm952, %v2566, 0
      %v2628 = vsel %vm952, %v2567, 0
      %v2631 = vsel %vm952, %v2568, 0
      %v2634 = vsel %vm952, %v2569, 0
      %v2637 = vsel %vm952, %v2570, 0
      %v2640 = vsel %vm952, %v2571, 0
      %v2643 = vsel %vm952, %v2572, 0
      %v2646 = vsel %vm952, %v2573, 0
      %v2649 = vsel %vm952, %v2574, 0
      %v2652 = vsel %vm952, %v2575, 0
      %v2655 = vsel %vm952, %v2576, 0
      %v2658 = vsel %vm952, %v2577, 0
      %v2661 = vsel %vm952, %v2578, 0
      %v2664 = vsel %vm952, %v2579, 0
      %v2667 = vsel %vm952, %v2580, 0
      %v2670 = vsel %vm952, %v2581, 0
      %v2673 = vsel %vm952, %v2582, 0
      %v2676 = vsel %vm952, %v2583, 0
      %2678 = vmatpush.bf16.msra.mxu0 0
      %2679 = vmatpush.bf16.msra.mxu0 0
      %2680 = vmatpush.bf16.msra.mxu0 0
      %2681 = vmatpush.bf16.msra.mxu0 0
      %2682 = vmatpush.bf16.msra.mxu0 %v2614
      %2683 = vmatpush.bf16.msra.mxu0 %v2612
      %2684 = vmatpush.bf16.msra.mxu0 %v2610
      %2685 = vmatpush.bf16.msra.mxu0 %v2608
      %2686 = vmatmul.bf16.gmra.mxu0 %v2625
      %v2687 = vpop.f32.mrf.mxu0
      %v2688 = vadd.f32 0.0, %v2687
      %v2689 = vpop.f32.mrf.mxu0
      %v2690 = vadd.f32 0.0, %v2689
      %2691 = vmatmul.bf16.gmra.mxu0 %v2628
      %v2692 = vpop.f32.mrf.mxu0
      %v2693 = vadd.f32 0.0, %v2692
      %v2694 = vpop.f32.mrf.mxu0
      %v2695 = vadd.f32 0.0, %v2694
      %2696 = vmatmul.bf16.gmra.mxu0 %v2631
      %v2697 = vpop.f32.mrf.mxu0
      %v2698 = vadd.f32 0.0, %v2697
      %v2699 = vpop.f32.mrf.mxu0
      %v2700 = vadd.f32 0.0, %v2699
      %2701 = vmatmul.bf16.gmra.mxu0 %v2634
      %v2702 = vpop.f32.mrf.mxu0
      %v2703 = vadd.f32 0.0, %v2702
      %v2704 = vpop.f32.mrf.mxu0
      %v2705 = vadd.f32 0.0, %v2704
      %2706 = vmatmul.bf16.gmra.mxu0 %v2637
      %v2707 = vpop.f32.mrf.mxu0
      %v2708 = vadd.f32 0.0, %v2707
      %v2709 = vpop.f32.mrf.mxu0
      %v2710 = vadd.f32 0.0, %v2709
      %2711 = vmatmul.bf16.gmra.mxu0 %v2640
      %v2712 = vpop.f32.mrf.mxu0
      %v2713 = vadd.f32 0.0, %v2712
      %v2714 = vpop.f32.mrf.mxu0
      %v2715 = vadd.f32 0.0, %v2714
      %2716 = vmatmul.bf16.gmra.mxu0 %v2643
      %v2717 = vpop.f32.mrf.mxu0
      %v2718 = vadd.f32 0.0, %v2717
      %v2719 = vpop.f32.mrf.mxu0
      %v2720 = vadd.f32 0.0, %v2719
      %2721 = vmatmul.bf16.gmra.mxu0 %v2646
      %v2722 = vpop.f32.mrf.mxu0
      %v2723 = vadd.f32 0.0, %v2722
      %v2724 = vpop.f32.mrf.mxu0
      %v2725 = vadd.f32 0.0, %v2724
      %2726 = vmatmul.bf16.gmra.mxu0 %v2649
      %v2727 = vpop.f32.mrf.mxu0
      %v2728 = vadd.f32 0.0, %v2727
      %v2729 = vpop.f32.mrf.mxu0
      %v2730 = vadd.f32 0.0, %v2729
      %2731 = vmatmul.bf16.gmra.mxu0 %v2652
      %v2732 = vpop.f32.mrf.mxu0
      %v2733 = vadd.f32 0.0, %v2732
      %v2734 = vpop.f32.mrf.mxu0
      %v2735 = vadd.f32 0.0, %v2734
      %2736 = vmatmul.bf16.gmra.mxu0 %v2655
      %v2737 = vpop.f32.mrf.mxu0
      %v2738 = vadd.f32 0.0, %v2737
      %v2739 = vpop.f32.mrf.mxu0
      %v2740 = vadd.f32 0.0, %v2739
      %2741 = vmatmul.bf16.gmra.mxu0 %v2658
      %v2742 = vpop.f32.mrf.mxu0
      %v2743 = vadd.f32 0.0, %v2742
      %v2744 = vpop.f32.mrf.mxu0
      %v2745 = vadd.f32 0.0, %v2744
      %2746 = vmatmul.bf16.gmra.mxu0 %v2661
      %v2747 = vpop.f32.mrf.mxu0
      %v2748 = vadd.f32 0.0, %v2747
      %v2749 = vpop.f32.mrf.mxu0
      %v2750 = vadd.f32 0.0, %v2749
      %2751 = vmatmul.bf16.gmra.mxu0 %v2664
      %v2752 = vpop.f32.mrf.mxu0
      %v2753 = vadd.f32 0.0, %v2752
      %v2754 = vpop.f32.mrf.mxu0
      %v2755 = vadd.f32 0.0, %v2754
      %2756 = vmatmul.bf16.gmra.mxu0 %v2667
      %v2757 = vpop.f32.mrf.mxu0
      %v2758 = vadd.f32 0.0, %v2757
      %v2759 = vpop.f32.mrf.mxu0
      %v2760 = vadd.f32 0.0, %v2759
      %2761 = vmatmul.bf16.gmra.mxu0 %v2670
      %v2762 = vpop.f32.mrf.mxu0
      %v2763 = vadd.f32 0.0, %v2762
      %v2764 = vpop.f32.mrf.mxu0
      %v2765 = vadd.f32 0.0, %v2764
      %2766 = vmatmul.bf16.gmra.mxu0 %v2673
      %v2767 = vpop.f32.mrf.mxu0
      %v2768 = vadd.f32 0.0, %v2767
      %v2769 = vpop.f32.mrf.mxu0
      %v2770 = vadd.f32 0.0, %v2769
      %2771 = vmatmul.bf16.gmra.mxu0 %v2676
      %v2772 = vpop.f32.mrf.mxu0
      %v2773 = vpop.f32.mrf.mxu0
      %2774 = vdwg.mxu0
      %2775 = vmatpush.bf16.msra.mxu0 0
      %2776 = vmatpush.bf16.msra.mxu0 0
      %2777 = vmatpush.bf16.msra.mxu0 0
      %2778 = vmatpush.bf16.msra.mxu0 0
      %2779 = vmatpush.bf16.msra.mxu0 %v2615
      %2780 = vmatpush.bf16.msra.mxu0 %v2613
      %2781 = vmatpush.bf16.msra.mxu0 %v2611
      %2782 = vmatpush.bf16.msra.mxu0 %v2609
      %2783 = vmatmul.bf16.gmra.mxu0 %v2625
      %v2784 = vpop.f32.mrf.mxu0
      %v2785 = vpop.f32.mrf.mxu0
      %2786 = vmatmul.bf16.gmra.mxu0 %v2628
      %v2787 = vpop.f32.mrf.mxu0
      %v2788 = vpop.f32.mrf.mxu0
      %2789 = vmatmul.bf16.gmra.mxu0 %v2631
      %v2790 = vpop.f32.mrf.mxu0
      %v2791 = vadd.f32 0.0, %v2790
      %v2792 = vpop.f32.mrf.mxu0
      %v2793 = vadd.f32 0.0, %v2792
      %2794 = vmatmul.bf16.gmra.mxu0 %v2634
      %v2795 = vpop.f32.mrf.mxu0
      %v2796 = vadd.f32 0.0, %v2795
      %v2797 = vpop.f32.mrf.mxu0
      %v2798 = vadd.f32 0.0, %v2797
      %2799 = vmatmul.bf16.gmra.mxu0 %v2637
      %v2800 = vpop.f32.mrf.mxu0
      %v2801 = vadd.f32 0.0, %v2800
      %v2802 = vpop.f32.mrf.mxu0
      %v2803 = vadd.f32 0.0, %v2802
      %2804 = vmatmul.bf16.gmra.mxu0 %v2640
      %v2805 = vpop.f32.mrf.mxu0
      %v2806 = vadd.f32 0.0, %v2805
      %v2807 = vpop.f32.mrf.mxu0
      %v2808 = vadd.f32 0.0, %v2807
      %2809 = vmatmul.bf16.gmra.mxu0 %v2643
      %v2810 = vpop.f32.mrf.mxu0
      %v2811 = vadd.f32 0.0, %v2810
      %v2812 = vpop.f32.mrf.mxu0
      %v2813 = vadd.f32 0.0, %v2812
      %2814 = vmatmul.bf16.gmra.mxu0 %v2646
      %v2815 = vpop.f32.mrf.mxu0
      %v2816 = vadd.f32 0.0, %v2815
      %v2817 = vpop.f32.mrf.mxu0
      %v2818 = vadd.f32 0.0, %v2817
      %2819 = vmatmul.bf16.gmra.mxu0 %v2649
      %v2820 = vpop.f32.mrf.mxu0
      %v2821 = vadd.f32 0.0, %v2820
      %v2822 = vpop.f32.mrf.mxu0
      %v2823 = vadd.f32 0.0, %v2822
      %2824 = vmatmul.bf16.gmra.mxu0 %v2652
      %v2825 = vpop.f32.mrf.mxu0
      %v2826 = vadd.f32 0.0, %v2825
      %v2827 = vpop.f32.mrf.mxu0
      %v2828 = vadd.f32 0.0, %v2827
      %2829 = vmatmul.bf16.gmra.mxu0 %v2655
      %v2830 = vpop.f32.mrf.mxu0
      %v2831 = vadd.f32 0.0, %v2830
      %v2832 = vpop.f32.mrf.mxu0
      %v2833 = vadd.f32 0.0, %v2832
      %2834 = vmatmul.bf16.gmra.mxu0 %v2658
      %v2835 = vpop.f32.mrf.mxu0
      %v2836 = vadd.f32 0.0, %v2835
      %v2837 = vpop.f32.mrf.mxu0
      %v2838 = vadd.f32 0.0, %v2837
      %2839 = vmatmul.bf16.gmra.mxu0 %v2661
      %v2840 = vpop.f32.mrf.mxu0
      %v2841 = vadd.f32 0.0, %v2840
      %v2842 = vpop.f32.mrf.mxu0
      %v2843 = vadd.f32 0.0, %v2842
      %2844 = vmatmul.bf16.gmra.mxu0 %v2664
      %v2845 = vpop.f32.mrf.mxu0
      %v2846 = vadd.f32 0.0, %v2845
      %v2847 = vpop.f32.mrf.mxu0
      %v2848 = vadd.f32 0.0, %v2847
      %2849 = vmatmul.bf16.gmra.mxu0 %v2667
      %v2850 = vpop.f32.mrf.mxu0
      %v2851 = vadd.f32 0.0, %v2850
      %v2852 = vpop.f32.mrf.mxu0
      %v2853 = vadd.f32 0.0, %v2852
      %2854 = vmatmul.bf16.gmra.mxu0 %v2670
      %v2855 = vpop.f32.mrf.mxu0
      %v2856 = vadd.f32 0.0, %v2855
      %v2857 = vpop.f32.mrf.mxu0
      %v2858 = vadd.f32 0.0, %v2857
      %2859 = vmatmul.bf16.gmra.mxu0 %v2673
      %v2860 = vpop.f32.mrf.mxu0
      %v2861 = vadd.f32 0.0, %v2860
      %v2862 = vpop.f32.mrf.mxu0
      %v2863 = vadd.f32 0.0, %v2862
      %2864 = vmatmul.bf16.gmra.mxu0 %v2676
      %v2865 = vpop.f32.mrf.mxu0
      %v2866 = vadd.f32 0.0, %v2865
      %v2867 = vpop.f32.mrf.mxu0
      %v2868 = vadd.f32 0.0, %v2867
      %2869 = vdwg.mxu0
      %v2870 = vadd.f32 %v2000, %v2688
      %v2871 = vadd.f32 %v2001, %v2690
      %v2872 = vadd.f32 %v2002, %v2693
      %v2873 = vadd.f32 %v2003, %v2695
      %v2874 = vadd.f32 %v2004, %v2698
      %v2875 = vadd.f32 %v2005, %v2700
      %v2876 = vadd.f32 %v2006, %v2703
      %v2877 = vadd.f32 %v2007, %v2705
      %v2878 = vadd.f32 %v2008, %v2708
      %v2879 = vadd.f32 %v2009, %v2710
      %v2880 = vadd.f32 %v2010, %v2713
      %v2881 = vadd.f32 %v2011, %v2715
      %v2882 = vadd.f32 %v2012, %v2718
      %v2883 = vadd.f32 %v2013, %v2720
      %v2884 = vadd.f32 %v2014, %v2723
      %v2885 = vadd.f32 %v2015, %v2725
      %v2886 = vadd.f32 %v2016, %v2728
      %v2887 = vadd.f32 %v2017, %v2730
      %v2888 = vadd.f32 %v2018, %v2733
      %v2889 = vadd.f32 %v2019, %v2735
      %v2890 = vadd.f32 %v2020, %v2738
      %v2891 = vadd.f32 %v2021, %v2740
      %v2892 = vadd.f32 %v2022, %v2743
      %v2893 = vadd.f32 %v2023, %v2745
      %v2894 = vadd.f32 %v2024, %v2748
      %v2895 = vadd.f32 %v2025, %v2750
      %v2896 = vadd.f32 %v2026, %v2753
      %v2897 = vadd.f32 %v2027, %v2755
      %v2898 = vadd.f32 %v2028, %v2758
      %v2899 = vadd.f32 %v2029, %v2760
      %v2900 = vadd.f32 %v2030, %v2763
      %v2901 = vadd.f32 %v2031, %v2765
      %2934 = vrot.lane.b32.xlu0 %v2693, 64
      %v2935 = vpop.permute.xlu0 %2934
      %2936 = vrot.lane.b32.xlu0 %v2695, 64
      %v2937 = vpop.permute.xlu0 %2936
      %2938 = vrot.lane.b32.xlu0 %v2698, 64
      %v2939 = vpop.permute.xlu0 %2938
      %2940 = vrot.lane.b32.xlu0 %v2700, 64
      %v2941 = vpop.permute.xlu0 %2940
      %2942 = vrot.lane.b32.xlu0 %v2703, 64
      %v2943 = vpop.permute.xlu0 %2942
      %2944 = vrot.lane.b32.xlu0 %v2705, 64
      %v2945 = vpop.permute.xlu0 %2944
      %2946 = vrot.lane.b32.xlu0 %v2708, 64
      %v2947 = vpop.permute.xlu0 %2946
      %2948 = vrot.lane.b32.xlu0 %v2710, 64
      %v2949 = vpop.permute.xlu0 %2948
      %2950 = vrot.lane.b32.xlu0 %v2713, 64
      %v2951 = vpop.permute.xlu0 %2950
      %2952 = vrot.lane.b32.xlu0 %v2715, 64
      %v2953 = vpop.permute.xlu0 %2952
      %2954 = vrot.lane.b32.xlu0 %v2718, 64
      %v2955 = vpop.permute.xlu0 %2954
      %2956 = vrot.lane.b32.xlu0 %v2720, 64
      %v2957 = vpop.permute.xlu0 %2956
      %2958 = vrot.lane.b32.xlu0 %v2723, 64
      %v2959 = vpop.permute.xlu0 %2958
      %2960 = vrot.lane.b32.xlu0 %v2725, 64
      %v2961 = vpop.permute.xlu0 %2960
      %2962 = vrot.lane.b32.xlu0 %v2728, 64
      %v2963 = vpop.permute.xlu0 %2962
      %2964 = vrot.lane.b32.xlu0 %v2730, 64
      %v2965 = vpop.permute.xlu0 %2964
      %2966 = vrot.lane.b32.xlu0 %v2733, 64
      %v2967 = vpop.permute.xlu0 %2966
      %2968 = vrot.lane.b32.xlu0 %v2735, 64
      %v2969 = vpop.permute.xlu0 %2968
      %2970 = vrot.lane.b32.xlu0 %v2738, 64
      %v2971 = vpop.permute.xlu0 %2970
      %2972 = vrot.lane.b32.xlu0 %v2740, 64
      %v2973 = vpop.permute.xlu0 %2972
      %2974 = vrot.lane.b32.xlu0 %v2743, 64
      %v2975 = vpop.permute.xlu0 %2974
      %2976 = vrot.lane.b32.xlu0 %v2745, 64
      %v2977 = vpop.permute.xlu0 %2976
      %2978 = vrot.lane.b32.xlu0 %v2748, 64
      %v2979 = vpop.permute.xlu0 %2978
      %2980 = vrot.lane.b32.xlu0 %v2750, 64
      %v2981 = vpop.permute.xlu0 %2980
      %2982 = vrot.lane.b32.xlu0 %v2753, 64
      %v2983 = vpop.permute.xlu0 %2982
      %2984 = vrot.lane.b32.xlu0 %v2755, 64
      %v2985 = vpop.permute.xlu0 %2984
      %2986 = vrot.lane.b32.xlu0 %v2758, 64
      %v2987 = vpop.permute.xlu0 %2986
      %2988 = vrot.lane.b32.xlu0 %v2760, 64
      %v2989 = vpop.permute.xlu0 %2988
      %2990 = vrot.lane.b32.xlu0 %v2763, 64
      %v2991 = vpop.permute.xlu0 %2990
      %2992 = vrot.lane.b32.xlu0 %v2765, 64
      %v2993 = vpop.permute.xlu0 %2992
      %2994 = vrot.lane.b32.xlu0 %v2768, 64
      %v2995 = vpop.permute.xlu0 %2994
      %2996 = vrot.lane.b32.xlu0 %v2770, 64
      %v2997 = vpop.permute.xlu0 %2996
      %v3030 = vadd.f32 %v2870, %v2935
      %v3031 = vadd.f32 %v2871, %v2937
      %v3032 = vadd.f32 %v2872, %v2939
      %v3033 = vadd.f32 %v2873, %v2941
      %v3034 = vadd.f32 %v2874, %v2943
      %v3035 = vadd.f32 %v2875, %v2945
      %v3036 = vadd.f32 %v2876, %v2947
      %v3037 = vadd.f32 %v2877, %v2949
      %v3038 = vadd.f32 %v2878, %v2951
      %v3039 = vadd.f32 %v2879, %v2953
      %v3040 = vadd.f32 %v2880, %v2955
      %v3041 = vadd.f32 %v2881, %v2957
      %v3042 = vadd.f32 %v2882, %v2959
      %v3043 = vadd.f32 %v2883, %v2961
      %v3044 = vadd.f32 %v2884, %v2963
      %v3045 = vadd.f32 %v2885, %v2965
      %v3046 = vadd.f32 %v2886, %v2967
      %v3047 = vadd.f32 %v2887, %v2969
      %v3048 = vadd.f32 %v2888, %v2971
      %v3049 = vadd.f32 %v2889, %v2973
      %v3050 = vadd.f32 %v2890, %v2975
      %v3051 = vadd.f32 %v2891, %v2977
      %v3052 = vadd.f32 %v2892, %v2979
      %v3053 = vadd.f32 %v2893, %v2981
      %v3054 = vadd.f32 %v2894, %v2983
      %v3055 = vadd.f32 %v2895, %v2985
      %v3056 = vadd.f32 %v2896, %v2987
      %v3057 = vadd.f32 %v2897, %v2989
      %v3058 = vadd.f32 %v2898, %v2991
      %v3059 = vadd.f32 %v2899, %v2993
      %v3060 = vadd.f32 %v2900, %v2995
      %v3061 = vadd.f32 %v2901, %v2997
      %v3062 = vadd.f32 %v3030, %v2791
      %v3063 = vadd.f32 %v3031, %v2793
      %v3064 = vadd.f32 %v3032, %v2796
      %v3065 = vadd.f32 %v3033, %v2798
      %v3066 = vadd.f32 %v3034, %v2801
      %v3067 = vadd.f32 %v3035, %v2803
      %v3068 = vadd.f32 %v3036, %v2806
      %v3069 = vadd.f32 %v3037, %v2808
      %v3070 = vadd.f32 %v3038, %v2811
      %v3071 = vadd.f32 %v3039, %v2813
      %v3072 = vadd.f32 %v3040, %v2816
      %v3073 = vadd.f32 %v3041, %v2818
      %v3074 = vadd.f32 %v3042, %v2821
      %v3075 = vadd.f32 %v3043, %v2823
      %v3076 = vadd.f32 %v3044, %v2826
      %v3077 = vadd.f32 %v3045, %v2828
      %v3078 = vadd.f32 %v3046, %v2831
      %v3079 = vadd.f32 %v3047, %v2833
      %v3080 = vadd.f32 %v3048, %v2836
      %v3081 = vadd.f32 %v3049, %v2838
      %v3082 = vadd.f32 %v3050, %v2841
      %v3083 = vadd.f32 %v3051, %v2843
      %v3084 = vadd.f32 %v3052, %v2846
      %v3085 = vadd.f32 %v3053, %v2848
      %v3086 = vadd.f32 %v3054, %v2851
      %v3087 = vadd.f32 %v3055, %v2853
      %v3088 = vadd.f32 %v3056, %v2856
      %v3089 = vadd.f32 %v3057, %v2858
      %v3090 = vadd.f32 %v3058, %v2861
      %v3091 = vadd.f32 %v3059, %v2863
      %v3092 = vadd.f32 %v3060, %v2866
      %v3093 = vadd.f32 %v3061, %v2868
      %v3094 = vld [vmem:[%s2] sm:$0x1]
      %v3096 = vperm.slane %v3094, 0
      %v3098 = vadd.f32 %v3062, %v3096
      %v3099 = vadd.f32 %v3063, %v3096
      %v3100 = vadd.f32 %v3064, %v3096
      %v3101 = vadd.f32 %v3065, %v3096
      %v3102 = vadd.f32 %v3066, %v3096
      %v3103 = vadd.f32 %v3067, %v3096
      %v3104 = vadd.f32 %v3068, %v3096
      %v3105 = vadd.f32 %v3069, %v3096
      %v3106 = vadd.f32 %v3070, %v3096
      %v3107 = vadd.f32 %v3071, %v3096
      %v3108 = vadd.f32 %v3072, %v3096
      %v3109 = vadd.f32 %v3073, %v3096
      %v3110 = vadd.f32 %v3074, %v3096
      %v3111 = vadd.f32 %v3075, %v3096
      %v3112 = vadd.f32 %v3076, %v3096
      %v3113 = vadd.f32 %v3077, %v3096
      %v3114 = vadd.f32 %v3078, %v3096
      %v3115 = vadd.f32 %v3079, %v3096
      %v3116 = vadd.f32 %v3080, %v3096
      %v3117 = vadd.f32 %v3081, %v3096
      %v3118 = vadd.f32 %v3082, %v3096
      %v3119 = vadd.f32 %v3083, %v3096
      %v3120 = vadd.f32 %v3084, %v3096
      %v3121 = vadd.f32 %v3085, %v3096
      %v3122 = vadd.f32 %v3086, %v3096
      %v3123 = vadd.f32 %v3087, %v3096
      %v3124 = vadd.f32 %v3088, %v3096
      %v3125 = vadd.f32 %v3089, %v3096
      %v3126 = vadd.f32 %v3090, %v3096
      %v3127 = vadd.f32 %v3091, %v3096
      %v3128 = vadd.f32 %v3092, %v3096
      %v3129 = vadd.f32 %v3093, %v3096
      %vm3130 = vcmp.ge.f32.partialorder %v3098, 0.0
      %vm3131 = vcmp.ge.f32.partialorder %v3099, 0.0
      %vm3132 = vcmp.ge.f32.partialorder %v3100, 0.0
      %vm3133 = vcmp.ge.f32.partialorder %v3101, 0.0
      %vm3134 = vcmp.ge.f32.partialorder %v3102, 0.0
      %vm3135 = vcmp.ge.f32.partialorder %v3103, 0.0
      %vm3136 = vcmp.ge.f32.partialorder %v3104, 0.0
      %vm3137 = vcmp.ge.f32.partialorder %v3105, 0.0
      %vm3138 = vcmp.ge.f32.partialorder %v3106, 0.0
      %vm3139 = vcmp.ge.f32.partialorder %v3107, 0.0
      %vm3140 = vcmp.ge.f32.partialorder %v3108, 0.0
      %vm3141 = vcmp.ge.f32.partialorder %v3109, 0.0
      %vm3142 = vcmp.ge.f32.partialorder %v3110, 0.0
      %vm3143 = vcmp.ge.f32.partialorder %v3111, 0.0
      %vm3144 = vcmp.ge.f32.partialorder %v3112, 0.0
      %vm3145 = vcmp.ge.f32.partialorder %v3113, 0.0
      %vm3146 = vcmp.ge.f32.partialorder %v3114, 0.0
      %vm3147 = vcmp.ge.f32.partialorder %v3115, 0.0
      %vm3148 = vcmp.ge.f32.partialorder %v3116, 0.0
      %vm3149 = vcmp.ge.f32.partialorder %v3117, 0.0
      %vm3150 = vcmp.ge.f32.partialorder %v3118, 0.0
      %vm3151 = vcmp.ge.f32.partialorder %v3119, 0.0
      %vm3152 = vcmp.ge.f32.partialorder %v3120, 0.0
      %vm3153 = vcmp.ge.f32.partialorder %v3121, 0.0
      %vm3154 = vcmp.ge.f32.partialorder %v3122, 0.0
      %vm3155 = vcmp.ge.f32.partialorder %v3123, 0.0
      %vm3156 = vcmp.ge.f32.partialorder %v3124, 0.0
      %vm3157 = vcmp.ge.f32.partialorder %v3125, 0.0
      %vm3158 = vcmp.ge.f32.partialorder %v3126, 0.0
      %vm3159 = vcmp.ge.f32.partialorder %v3127, 0.0
      %vm3160 = vcmp.ge.f32.partialorder %v3128, 0.0
      %vm3161 = vcmp.ge.f32.partialorder %v3129, 0.0
      %v3162 = vmul.f32 %v3098, 0.2
      %v3163 = vmul.f32 %v3099, 0.2
      %v3164 = vmul.f32 %v3100, 0.2
      %v3165 = vmul.f32 %v3101, 0.2
      %v3166 = vmul.f32 %v3102, 0.2
      %v3167 = vmul.f32 %v3103, 0.2
      %v3168 = vmul.f32 %v3104, 0.2
      %v3169 = vmul.f32 %v3105, 0.2
      %v3170 = vmul.f32 %v3106, 0.2
      %v3171 = vmul.f32 %v3107, 0.2
      %v3172 = vmul.f32 %v3108, 0.2
      %v3173 = vmul.f32 %v3109, 0.2
      %v3174 = vmul.f32 %v3110, 0.2
      %v3175 = vmul.f32 %v3111, 0.2
      %v3176 = vmul.f32 %v3112, 0.2
      %v3177 = vmul.f32 %v3113, 0.2
      %v3178 = vmul.f32 %v3114, 0.2
      %v3179 = vmul.f32 %v3115, 0.2
      %v3180 = vmul.f32 %v3116, 0.2
      %v3181 = vmul.f32 %v3117, 0.2
      %v3182 = vmul.f32 %v3118, 0.2
      %v3183 = vmul.f32 %v3119, 0.2
      %v3184 = vmul.f32 %v3120, 0.2
      %v3185 = vmul.f32 %v3121, 0.2
      %v3186 = vmul.f32 %v3122, 0.2
      %v3187 = vmul.f32 %v3123, 0.2
      %v3188 = vmul.f32 %v3124, 0.2
      %v3189 = vmul.f32 %v3125, 0.2
      %v3190 = vmul.f32 %v3126, 0.2
      %v3191 = vmul.f32 %v3127, 0.2
      %v3192 = vmul.f32 %v3128, 0.2
      %v3193 = vmul.f32 %v3129, 0.2
      %v3194 = vsel %vm3130, %v3098, %v3162
      %v3195 = vsel %vm3131, %v3099, %v3163
      %v3196 = vsel %vm3132, %v3100, %v3164
      %v3197 = vsel %vm3133, %v3101, %v3165
      %v3198 = vsel %vm3134, %v3102, %v3166
      %v3199 = vsel %vm3135, %v3103, %v3167
      %v3200 = vsel %vm3136, %v3104, %v3168
      %v3201 = vsel %vm3137, %v3105, %v3169
      %v3202 = vsel %vm3138, %v3106, %v3170
      %v3203 = vsel %vm3139, %v3107, %v3171
      %v3204 = vsel %vm3140, %v3108, %v3172
      %v3205 = vsel %vm3141, %v3109, %v3173
      %v3206 = vsel %vm3142, %v3110, %v3174
      %v3207 = vsel %vm3143, %v3111, %v3175
      %v3208 = vsel %vm3144, %v3112, %v3176
      %v3209 = vsel %vm3145, %v3113, %v3177
      %v3210 = vsel %vm3146, %v3114, %v3178
      %v3211 = vsel %vm3147, %v3115, %v3179
      %v3212 = vsel %vm3148, %v3116, %v3180
      %v3213 = vsel %vm3149, %v3117, %v3181
      %v3214 = vsel %vm3150, %v3118, %v3182
      %v3215 = vsel %vm3151, %v3119, %v3183
      %v3216 = vsel %vm3152, %v3120, %v3184
      %v3217 = vsel %vm3153, %v3121, %v3185
      %v3218 = vsel %vm3154, %v3122, %v3186
      %v3219 = vsel %vm3155, %v3123, %v3187
      %v3220 = vsel %vm3156, %v3124, %v3188
      %v3221 = vsel %vm3157, %v3125, %v3189
      %v3222 = vsel %vm3158, %v3126, %v3190
      %v3223 = vsel %vm3159, %v3127, %v3191
      %v3224 = vsel %vm3160, %v3128, %v3192
      %v3225 = vsel %vm3161, %v3129, %v3193
      %v3226 = vpack.c.bf16 %v3194, %v3194
      %v3227 = vpack.c.bf16 %v3195, %v3195
      %v3228 = vpack.c.bf16 %v3196, %v3196
      %v3229 = vpack.c.bf16 %v3197, %v3197
      %v3230 = vpack.c.bf16 %v3198, %v3198
      %v3231 = vpack.c.bf16 %v3199, %v3199
      %v3232 = vpack.c.bf16 %v3200, %v3200
      %v3233 = vpack.c.bf16 %v3201, %v3201
      %v3234 = vpack.c.bf16 %v3202, %v3202
      %v3235 = vpack.c.bf16 %v3203, %v3203
      %v3236 = vpack.c.bf16 %v3204, %v3204
      %v3237 = vpack.c.bf16 %v3205, %v3205
      %v3238 = vpack.c.bf16 %v3206, %v3206
      %v3239 = vpack.c.bf16 %v3207, %v3207
      %v3240 = vpack.c.bf16 %v3208, %v3208
      %v3241 = vpack.c.bf16 %v3209, %v3209
      %v3242 = vpack.c.bf16 %v3210, %v3210
      %v3243 = vpack.c.bf16 %v3211, %v3211
      %v3244 = vpack.c.bf16 %v3212, %v3212
      %v3245 = vpack.c.bf16 %v3213, %v3213
      %v3246 = vpack.c.bf16 %v3214, %v3214
      %v3247 = vpack.c.bf16 %v3215, %v3215
      %v3248 = vpack.c.bf16 %v3216, %v3216
      %v3249 = vpack.c.bf16 %v3217, %v3217
      %v3250 = vpack.c.bf16 %v3218, %v3218
      %v3251 = vpack.c.bf16 %v3219, %v3219
      %v3252 = vpack.c.bf16 %v3220, %v3220
      %v3253 = vpack.c.bf16 %v3221, %v3221
      %v3254 = vpack.c.bf16 %v3222, %v3222
      %v3255 = vpack.c.bf16 %v3223, %v3223
      %v3256 = vpack.c.bf16 %v3224, %v3224
      %v3257 = vpack.c.bf16 %v3225, %v3225
      %3258 = vst.msk [vmem:[%s364 + $0x8] sm:$0xf] %vm280, %v3226
      %3259 = vst.msk [vmem:[%s364 + $0xc] sm:$0xf] %vm280, %v3227
      %3260 = vst.msk [vmem:[%s364 + $0x20] sm:$0xf] %vm280, %v3228
      %3261 = vst.msk [vmem:[%s364 + $0x24] sm:$0xf] %vm280, %v3229
      %3262 = vst.msk [vmem:[%s364 + $0x38] sm:$0xf] %vm280, %v3230
      %3263 = vst.msk [vmem:[%s364 + $0x3c] sm:$0xf] %vm280, %v3231
      %3264 = vst.msk [vmem:[%s364 + $0x50] sm:$0xf] %vm280, %v3232
      %3265 = vst.msk [vmem:[%s364 + $0x54] sm:$0xf] %vm280, %v3233
      %3266 = vst.msk [vmem:[%s364 + $0x68] sm:$0xf] %vm280, %v3234
      %3267 = vst.msk [vmem:[%s364 + $0x6c] sm:$0xf] %vm280, %v3235
      %3268 = vst.msk [vmem:[%s364 + $0x80] sm:$0xf] %vm280, %v3236
      %3269 = vst.msk [vmem:[%s364 + $0x84] sm:$0xf] %vm280, %v3237
      %3270 = vst.msk [vmem:[%s364 + $0x98] sm:$0xf] %vm280, %v3238
      %3271 = vst.msk [vmem:[%s364 + $0x9c] sm:$0xf] %vm280, %v3239
      %3272 = vst.msk [vmem:[%s364 + $0xb0] sm:$0xf] %vm280, %v3240
      %3273 = vst.msk [vmem:[%s364 + $0xb4] sm:$0xf] %vm280, %v3241
      %3274 = vst.msk [vmem:[%s364 + $0xc8] sm:$0xf] %vm280, %v3242
      %3275 = vst.msk [vmem:[%s364 + $0xcc] sm:$0xf] %vm280, %v3243
      %3276 = vst.msk [vmem:[%s364 + $0xe0] sm:$0xf] %vm280, %v3244
      %3277 = vst.msk [vmem:[%s364 + $0xe4] sm:$0xf] %vm280, %v3245
      %3278 = vst.msk [vmem:[%s364 + $0xf8] sm:$0xf] %vm280, %v3246
      %3279 = vst.msk [vmem:[%s364 + $0xfc] sm:$0xf] %vm280, %v3247
      %3280 = vst.msk [vmem:[%s364 + $0x110] sm:$0xf] %vm280, %v3248
      %3281 = vst.msk [vmem:[%s364 + $0x114] sm:$0xf] %vm280, %v3249
      %3282 = vst.msk [vmem:[%s364 + $0x128] sm:$0xf] %vm280, %v3250
      %3283 = vst.msk [vmem:[%s364 + $0x12c] sm:$0xf] %vm280, %v3251
      %3284 = vst.msk [vmem:[%s364 + $0x140] sm:$0xf] %vm280, %v3252
      %3285 = vst.msk [vmem:[%s364 + $0x144] sm:$0xf] %vm280, %v3253
      %3286 = vst.msk [vmem:[%s364 + $0x158] sm:$0xf] %vm280, %v3254
      %3287 = vst.msk [vmem:[%s364 + $0x15c] sm:$0xf] %vm280, %v3255
      %3288 = vst.msk [vmem:[%s364 + $0x170] sm:$0xf] %vm280, %v3256
      %3289 = vst.msk [vmem:[%s364 + $0x174] sm:$0xf] %vm280, %v3257
      %v3290 = vld [vmem:[#allocation2 + $0x4] sm:$0x8]
      %v3291 = vld [vmem:[#allocation2 + $0x8] sm:$0xf]
      %v3292 = vld [vmem:[#allocation2 + $0xc] sm:$0xf]
      %v3293 = vld [vmem:[#allocation2 + $0x1c] sm:$0x8]
      %v3294 = vld [vmem:[#allocation2 + $0x20] sm:$0xf]
      %v3295 = vld [vmem:[#allocation2 + $0x24] sm:$0xf]
      %v3296 = vld [vmem:[#allocation2 + $0x34] sm:$0x8]
      %v3297 = vld [vmem:[#allocation2 + $0x38] sm:$0xf]
      %v3298 = vld [vmem:[#allocation2 + $0x3c] sm:$0xf]
      %v3299 = vld [vmem:[#allocation2 + $0x4c] sm:$0x8]
      %v3300 = vld [vmem:[#allocation2 + $0x50] sm:$0xf]
      %v3301 = vld [vmem:[#allocation2 + $0x54] sm:$0xf]
      %v3302 = vld [vmem:[#allocation2 + $0x64] sm:$0x8]
      %v3303 = vld [vmem:[#allocation2 + $0x68] sm:$0xf]
      %v3304 = vld [vmem:[#allocation2 + $0x6c] sm:$0xf]
      %v3305 = vld [vmem:[#allocation2 + $0x7c] sm:$0x8]
      %v3306 = vld [vmem:[#allocation2 + $0x80] sm:$0xf]
      %v3307 = vld [vmem:[#allocation2 + $0x84] sm:$0xf]
      %v3308 = vld [vmem:[#allocation2 + $0x94] sm:$0x8]
      %v3309 = vld [vmem:[#allocation2 + $0x98] sm:$0xf]
      %v3310 = vld [vmem:[#allocation2 + $0x9c] sm:$0xf]
      %v3311 = vld [vmem:[#allocation2 + $0xac] sm:$0x8]
      %v3312 = vld [vmem:[#allocation2 + $0xb0] sm:$0xf]
      %v3313 = vld [vmem:[#allocation2 + $0xb4] sm:$0xf]
      %v3314 = vld [vmem:[#allocation2 + $0xc4] sm:$0x8]
      %v3315 = vld [vmem:[#allocation2 + $0xc8] sm:$0xf]
      %v3316 = vld [vmem:[#allocation2 + $0xcc] sm:$0xf]
      %v3317 = vld [vmem:[#allocation2 + $0xdc] sm:$0x8]
      %v3318 = vld [vmem:[#allocation2 + $0xe0] sm:$0xf]
      %v3319 = vld [vmem:[#allocation2 + $0xe4] sm:$0xf]
      %v3320 = vld [vmem:[#allocation2 + $0xf4] sm:$0x8]
      %v3321 = vld [vmem:[#allocation2 + $0xf8] sm:$0xf]
      %v3322 = vld [vmem:[#allocation2 + $0xfc] sm:$0xf]
      %v3323 = vld [vmem:[#allocation2 + $0x10c] sm:$0x8]
      %v3324 = vld [vmem:[#allocation2 + $0x110] sm:$0xf]
      %v3325 = vld [vmem:[#allocation2 + $0x114] sm:$0xf]
      %v3326 = vld [vmem:[#allocation2 + $0x124] sm:$0x8]
      %v3327 = vld [vmem:[#allocation2 + $0x128] sm:$0xf]
      %v3328 = vld [vmem:[#allocation2 + $0x12c] sm:$0xf]
      %v3329 = vld [vmem:[#allocation2 + $0x13c] sm:$0x8]
      %v3330 = vld [vmem:[#allocation2 + $0x140] sm:$0xf]
      %v3331 = vld [vmem:[#allocation2 + $0x144] sm:$0xf]
      %v3332 = vld [vmem:[#allocation2 + $0x154] sm:$0x8]
      %v3333 = vld [vmem:[#allocation2 + $0x158] sm:$0xf]
      %v3334 = vld [vmem:[#allocation2 + $0x15c] sm:$0xf]
      %v3335 = vld [vmem:[#allocation2 + $0x16c] sm:$0x8]
      %v3336 = vld [vmem:[#allocation2 + $0x170] sm:$0xf]
      %v3337 = vld [vmem:[#allocation2 + $0x174] sm:$0xf]
      %v3338 = vld [vmem:[#allocation2 + $0x184] sm:$0x8]
      %v3339 = vld [vmem:[#allocation2 + $0x188] sm:$0xf]
      %v3340 = vld [vmem:[#allocation2 + $0x18c] sm:$0xf]
      %v3341 = vld [vmem:[#allocation2 + $0x19c] sm:$0x8]
      %v3342 = vld [vmem:[#allocation2 + $0x1a0] sm:$0xf]
      %v3343 = vld [vmem:[#allocation2 + $0x1a4] sm:$0xf]
      %v3345 = vshrl.u32 %v3290, 16
      %v3347 = vrot.slane %v3345, 7
      %v3348 = vrot.slane %v3347, 4
      %v3350 = vshrl.u32 %v3291, 16
      %v3352 = vrot.slane %v3350, 7
      %v3353 = vshll.u32 %v3291, 16
      %v3355 = vor.u32 %v3352, %v3353
      %v3356 = vsel %vm453, %v3348, %v3355
      %v3357 = vrot.slane %v3352, 4
      %v3359 = vshrl.u32 %v3292, 16
      %v3361 = vrot.slane %v3359, 7
      %v3362 = vshll.u32 %v3292, 16
      %v3364 = vor.u32 %v3361, %v3362
      %v3365 = vsel %vm453, %v3357, %v3364
      %v3367 = vshrl.u32 %v3293, 16
      %v3369 = vrot.slane %v3367, 7
      %v3370 = vrot.slane %v3369, 4
      %v3372 = vshrl.u32 %v3294, 16
      %v3374 = vrot.slane %v3372, 7
      %v3375 = vshll.u32 %v3294, 16
      %v3377 = vor.u32 %v3374, %v3375
      %v3378 = vsel %vm453, %v3370, %v3377
      %v3379 = vrot.slane %v3374, 4
      %v3381 = vshrl.u32 %v3295, 16
      %v3383 = vrot.slane %v3381, 7
      %v3384 = vshll.u32 %v3295, 16
      %v3386 = vor.u32 %v3383, %v3384
      %v3387 = vsel %vm453, %v3379, %v3386
      %v3389 = vshrl.u32 %v3296, 16
      %v3391 = vrot.slane %v3389, 7
      %v3392 = vrot.slane %v3391, 4
      %v3394 = vshrl.u32 %v3297, 16
      %v3396 = vrot.slane %v3394, 7
      %v3397 = vshll.u32 %v3297, 16
      %v3399 = vor.u32 %v3396, %v3397
      %v3400 = vsel %vm453, %v3392, %v3399
      %v3401 = vrot.slane %v3396, 4
      %v3403 = vshrl.u32 %v3298, 16
      %v3405 = vrot.slane %v3403, 7
      %v3406 = vshll.u32 %v3298, 16
      %v3408 = vor.u32 %v3405, %v3406
      %v3409 = vsel %vm453, %v3401, %v3408
      %v3411 = vshrl.u32 %v3299, 16
      %v3413 = vrot.slane %v3411, 7
      %v3414 = vrot.slane %v3413, 4
      %v3416 = vshrl.u32 %v3300, 16
      %v3418 = vrot.slane %v3416, 7
      %v3419 = vshll.u32 %v3300, 16
      %v3421 = vor.u32 %v3418, %v3419
      %v3422 = vsel %vm453, %v3414, %v3421
      %v3423 = vrot.slane %v3418, 4
      %v3425 = vshrl.u32 %v3301, 16
      %v3427 = vrot.slane %v3425, 7
      %v3428 = vshll.u32 %v3301, 16
      %v3430 = vor.u32 %v3427, %v3428
      %v3431 = vsel %vm453, %v3423, %v3430
      %v3433 = vshrl.u32 %v3302, 16
      %v3435 = vrot.slane %v3433, 7
      %v3436 = vrot.slane %v3435, 4
      %v3438 = vshrl.u32 %v3303, 16
      %v3440 = vrot.slane %v3438, 7
      %v3441 = vshll.u32 %v3303, 16
      %v3443 = vor.u32 %v3440, %v3441
      %v3444 = vsel %vm453, %v3436, %v3443
      %v3445 = vrot.slane %v3440, 4
      %v3447 = vshrl.u32 %v3304, 16
      %v3449 = vrot.slane %v3447, 7
      %v3450 = vshll.u32 %v3304, 16
      %v3452 = vor.u32 %v3449, %v3450
      %v3453 = vsel %vm453, %v3445, %v3452
      %v3455 = vshrl.u32 %v3305, 16
      %v3457 = vrot.slane %v3455, 7
      %v3458 = vrot.slane %v3457, 4
      %v3460 = vshrl.u32 %v3306, 16
      %v3462 = vrot.slane %v3460, 7
      %v3463 = vshll.u32 %v3306, 16
      %v3465 = vor.u32 %v3462, %v3463
      %v3466 = vsel %vm453, %v3458, %v3465
      %v3467 = vrot.slane %v3462, 4
      %v3469 = vshrl.u32 %v3307, 16
      %v3471 = vrot.slane %v3469, 7
      %v3472 = vshll.u32 %v3307, 16
      %v3474 = vor.u32 %v3471, %v3472
      %v3475 = vsel %vm453, %v3467, %v3474
      %v3477 = vshrl.u32 %v3308, 16
      %v3479 = vrot.slane %v3477, 7
      %v3480 = vrot.slane %v3479, 4
      %v3482 = vshrl.u32 %v3309, 16
      %v3484 = vrot.slane %v3482, 7
      %v3485 = vshll.u32 %v3309, 16
      %v3487 = vor.u32 %v3484, %v3485
      %v3488 = vsel %vm453, %v3480, %v3487
      %v3489 = vrot.slane %v3484, 4
      %v3491 = vshrl.u32 %v3310, 16
      %v3493 = vrot.slane %v3491, 7
      %v3494 = vshll.u32 %v3310, 16
      %v3496 = vor.u32 %v3493, %v3494
      %v3497 = vsel %vm453, %v3489, %v3496
      %v3499 = vshrl.u32 %v3311, 16
      %v3501 = vrot.slane %v3499, 7
      %v3502 = vrot.slane %v3501, 4
      %v3504 = vshrl.u32 %v3312, 16
      %v3506 = vrot.slane %v3504, 7
      %v3507 = vshll.u32 %v3312, 16
      %v3509 = vor.u32 %v3506, %v3507
      %v3510 = vsel %vm453, %v3502, %v3509
      %v3511 = vrot.slane %v3506, 4
      %v3513 = vshrl.u32 %v3313, 16
      %v3515 = vrot.slane %v3513, 7
      %v3516 = vshll.u32 %v3313, 16
      %v3518 = vor.u32 %v3515, %v3516
      %v3519 = vsel %vm453, %v3511, %v3518
      %v3521 = vshrl.u32 %v3314, 16
      %v3523 = vrot.slane %v3521, 7
      %v3524 = vrot.slane %v3523, 4
      %v3526 = vshrl.u32 %v3315, 16
      %v3528 = vrot.slane %v3526, 7
      %v3529 = vshll.u32 %v3315, 16
      %v3531 = vor.u32 %v3528, %v3529
      %v3532 = vsel %vm453, %v3524, %v3531
      %v3533 = vrot.slane %v3528, 4
      %v3535 = vshrl.u32 %v3316, 16
      %v3537 = vrot.slane %v3535, 7
      %v3538 = vshll.u32 %v3316, 16
      %v3540 = vor.u32 %v3537, %v3538
      %v3541 = vsel %vm453, %v3533, %v3540
      %v3543 = vshrl.u32 %v3317, 16
      %v3545 = vrot.slane %v3543, 7
      %v3546 = vrot.slane %v3545, 4
      %v3548 = vshrl.u32 %v3318, 16
      %v3550 = vrot.slane %v3548, 7
      %v3551 = vshll.u32 %v3318, 16
      %v3553 = vor.u32 %v3550, %v3551
      %v3554 = vsel %vm453, %v3546, %v3553
      %v3555 = vrot.slane %v3550, 4
      %v3557 = vshrl.u32 %v3319, 16
      %v3559 = vrot.slane %v3557, 7
      %v3560 = vshll.u32 %v3319, 16
      %v3562 = vor.u32 %v3559, %v3560
      %v3563 = vsel %vm453, %v3555, %v3562
      %v3565 = vshrl.u32 %v3320, 16
      %v3567 = vrot.slane %v3565, 7
      %v3568 = vrot.slane %v3567, 4
      %v3570 = vshrl.u32 %v3321, 16
      %v3572 = vrot.slane %v3570, 7
      %v3573 = vshll.u32 %v3321, 16
      %v3575 = vor.u32 %v3572, %v3573
      %v3576 = vsel %vm453, %v3568, %v3575
      %v3577 = vrot.slane %v3572, 4
      %v3579 = vshrl.u32 %v3322, 16
      %v3581 = vrot.slane %v3579, 7
      %v3582 = vshll.u32 %v3322, 16
      %v3584 = vor.u32 %v3581, %v3582
      %v3585 = vsel %vm453, %v3577, %v3584
      %v3587 = vshrl.u32 %v3323, 16
      %v3589 = vrot.slane %v3587, 7
      %v3590 = vrot.slane %v3589, 4
      %v3592 = vshrl.u32 %v3324, 16
      %v3594 = vrot.slane %v3592, 7
      %v3595 = vshll.u32 %v3324, 16
      %v3597 = vor.u32 %v3594, %v3595
      %v3598 = vsel %vm453, %v3590, %v3597
      %v3599 = vrot.slane %v3594, 4
      %v3601 = vshrl.u32 %v3325, 16
      %v3603 = vrot.slane %v3601, 7
      %v3604 = vshll.u32 %v3325, 16
      %v3606 = vor.u32 %v3603, %v3604
      %v3607 = vsel %vm453, %v3599, %v3606
      %v3609 = vshrl.u32 %v3326, 16
      %v3611 = vrot.slane %v3609, 7
      %v3612 = vrot.slane %v3611, 4
      %v3614 = vshrl.u32 %v3327, 16
      %v3616 = vrot.slane %v3614, 7
      %v3617 = vshll.u32 %v3327, 16
      %v3619 = vor.u32 %v3616, %v3617
      %v3620 = vsel %vm453, %v3612, %v3619
      %v3621 = vrot.slane %v3616, 4
      %v3623 = vshrl.u32 %v3328, 16
      %v3625 = vrot.slane %v3623, 7
      %v3626 = vshll.u32 %v3328, 16
      %v3628 = vor.u32 %v3625, %v3626
      %v3629 = vsel %vm453, %v3621, %v3628
      %v3631 = vshrl.u32 %v3329, 16
      %v3633 = vrot.slane %v3631, 7
      %v3634 = vrot.slane %v3633, 4
      %v3636 = vshrl.u32 %v3330, 16
      %v3638 = vrot.slane %v3636, 7
      %v3639 = vshll.u32 %v3330, 16
      %v3641 = vor.u32 %v3638, %v3639
      %v3642 = vsel %vm453, %v3634, %v3641
      %v3643 = vrot.slane %v3638, 4
      %v3645 = vshrl.u32 %v3331, 16
      %v3647 = vrot.slane %v3645, 7
      %v3648 = vshll.u32 %v3331, 16
      %v3650 = vor.u32 %v3647, %v3648
      %v3651 = vsel %vm453, %v3643, %v3650
      %v3653 = vshrl.u32 %v3332, 16
      %v3655 = vrot.slane %v3653, 7
      %v3656 = vrot.slane %v3655, 4
      %v3658 = vshrl.u32 %v3333, 16
      %v3660 = vrot.slane %v3658, 7
      %v3661 = vshll.u32 %v3333, 16
      %v3663 = vor.u32 %v3660, %v3661
      %v3664 = vsel %vm453, %v3656, %v3663
      %v3665 = vrot.slane %v3660, 4
      %v3667 = vshrl.u32 %v3334, 16
      %v3669 = vrot.slane %v3667, 7
      %v3670 = vshll.u32 %v3334, 16
      %v3672 = vor.u32 %v3669, %v3670
      %v3673 = vsel %vm453, %v3665, %v3672
      %v3675 = vshrl.u32 %v3335, 16
      %v3677 = vrot.slane %v3675, 7
      %v3678 = vrot.slane %v3677, 4
      %v3680 = vshrl.u32 %v3336, 16
      %v3682 = vrot.slane %v3680, 7
      %v3683 = vshll.u32 %v3336, 16
      %v3685 = vor.u32 %v3682, %v3683
      %v3686 = vsel %vm453, %v3678, %v3685
      %v3687 = vrot.slane %v3682, 4
      %v3689 = vshrl.u32 %v3337, 16
      %v3691 = vrot.slane %v3689, 7
      %v3692 = vshll.u32 %v3337, 16
      %v3694 = vor.u32 %v3691, %v3692
      %v3695 = vsel %vm453, %v3687, %v3694
      %v3697 = vshrl.u32 %v3338, 16
      %v3699 = vrot.slane %v3697, 7
      %v3700 = vrot.slane %v3699, 4
      %v3702 = vshrl.u32 %v3339, 16
      %v3704 = vrot.slane %v3702, 7
      %v3705 = vshll.u32 %v3339, 16
      %v3707 = vor.u32 %v3704, %v3705
      %v3708 = vsel %vm453, %v3700, %v3707
      %v3709 = vrot.slane %v3704, 4
      %v3711 = vshrl.u32 %v3340, 16
      %v3713 = vrot.slane %v3711, 7
      %v3714 = vshll.u32 %v3340, 16
      %v3716 = vor.u32 %v3713, %v3714
      %v3717 = vsel %vm453, %v3709, %v3716
      %v3719 = vshrl.u32 %v3341, 16
      %v3721 = vrot.slane %v3719, 7
      %v3722 = vrot.slane %v3721, 4
      %v3724 = vshrl.u32 %v3342, 16
      %v3726 = vrot.slane %v3724, 7
      %v3727 = vshll.u32 %v3342, 16
      %v3729 = vor.u32 %v3726, %v3727
      %v3730 = vsel %vm453, %v3722, %v3729
      %v3731 = vrot.slane %v3726, 4
      %v3733 = vshrl.u32 %v3343, 16
      %v3735 = vrot.slane %v3733, 7
      %v3736 = vshll.u32 %v3343, 16
      %v3738 = vor.u32 %v3735, %v3736
      %v3739 = vsel %vm453, %v3731, %v3738
      %v3740 = vld [vmem:[%s3] sm:$0xff]
      %v3741 = vld [vmem:[%s3 + $0x8] sm:$0xff]
      %v3742 = vld [vmem:[%s3 + $0x10] sm:$0xff]
      %v3743 = vld [vmem:[%s3 + $0x18] sm:$0xff]
      %v3744 = vld [vmem:[%s3 + $0x20] sm:$0xff]
      %v3745 = vld [vmem:[%s3 + $0x28] sm:$0xff]
      %v3746 = vld [vmem:[%s3 + $0x30] sm:$0xff]
      %v3747 = vld [vmem:[%s3 + $0x38] sm:$0xff]
      %v3748 = vunpack.c.l.b16 %v3356
      %v3749 = vunpack.c.l.b16 %v3365
      %v3750 = vunpack.c.l.b16 %v3378
      %v3751 = vunpack.c.l.b16 %v3387
      %v3752 = vunpack.c.l.b16 %v3400
      %v3753 = vunpack.c.l.b16 %v3409
      %v3754 = vunpack.c.l.b16 %v3422
      %v3755 = vunpack.c.l.b16 %v3431
      %v3756 = vunpack.c.l.b16 %v3444
      %v3757 = vunpack.c.l.b16 %v3453
      %v3758 = vunpack.c.l.b16 %v3466
      %v3759 = vunpack.c.l.b16 %v3475
      %v3760 = vunpack.c.l.b16 %v3488
      %v3761 = vunpack.c.l.b16 %v3497
      %v3762 = vunpack.c.l.b16 %v3510
      %v3763 = vunpack.c.l.b16 %v3519
      %v3764 = vunpack.c.l.b16 %v3532
      %v3765 = vunpack.c.l.b16 %v3541
      %v3766 = vunpack.c.l.b16 %v3554
      %v3767 = vunpack.c.l.b16 %v3563
      %v3768 = vunpack.c.l.b16 %v3576
      %v3769 = vunpack.c.l.b16 %v3585
      %v3770 = vunpack.c.l.b16 %v3598
      %v3771 = vunpack.c.l.b16 %v3607
      %v3772 = vunpack.c.l.b16 %v3620
      %v3773 = vunpack.c.l.b16 %v3629
      %v3774 = vunpack.c.l.b16 %v3642
      %v3775 = vunpack.c.l.b16 %v3651
      %v3776 = vunpack.c.l.b16 %v3664
      %v3777 = vunpack.c.l.b16 %v3673
      %v3778 = vunpack.c.l.b16 %v3686
      %v3779 = vunpack.c.l.b16 %v3695
      %v3780 = vunpack.c.l.b16 %v3708
      %v3781 = vunpack.c.l.b16 %v3717
      %v3782 = vunpack.c.l.b16 %v3730
      %v3783 = vunpack.c.l.b16 %v3739
      %v3784 = vpack.c.b16 %v3749, %v3748
      %v3785 = vpack.c.b16 %v3751, %v3750
      %v3786 = vpack.c.b16 %v3753, %v3752
      %v3787 = vpack.c.b16 %v3755, %v3754
      %v3788 = vpack.c.b16 %v3757, %v3756
      %v3789 = vpack.c.b16 %v3759, %v3758
      %v3790 = vpack.c.b16 %v3761, %v3760
      %v3791 = vpack.c.b16 %v3763, %v3762
      %v3792 = vpack.c.b16 %v3765, %v3764
      %v3793 = vpack.c.b16 %v3767, %v3766
      %v3794 = vpack.c.b16 %v3769, %v3768
      %v3795 = vpack.c.b16 %v3771, %v3770
      %v3796 = vpack.c.b16 %v3773, %v3772
      %v3797 = vpack.c.b16 %v3775, %v3774
      %v3798 = vpack.c.b16 %v3777, %v3776
      %v3799 = vpack.c.b16 %v3779, %v3778
      %v3800 = vpack.c.b16 %v3781, %v3780
      %v3801 = vpack.c.b16 %v3783, %v3782
      %v3810 = vunpack.c.l.b16 %v3740
      %v3811 = vunpack.c.h.b16 %v3740
      %v3812 = vunpack.c.l.b16 %v3741
      %v3813 = vunpack.c.h.b16 %v3741
      %v3814 = vunpack.c.l.b16 %v3742
      %v3815 = vunpack.c.h.b16 %v3742
      %v3816 = vunpack.c.l.b16 %v3743
      %v3817 = vunpack.c.h.b16 %v3743
      %v3818 = vunpack.c.l.b16 %v3744
      %v3819 = vunpack.c.h.b16 %v3744
      %v3820 = vunpack.c.l.b16 %v3745
      %v3821 = vunpack.c.h.b16 %v3745
      %v3822 = vunpack.c.l.b16 %v3746
      %v3823 = vunpack.c.h.b16 %v3746
      %v3824 = vunpack.c.l.b16 %v3747
      %v3825 = vunpack.c.h.b16 %v3747
      %v3826 = vpack.c.b16 %v3812, %v3810
      %v3827 = vpack.c.b16 %v3813, %v3811
      %v3828 = vpack.c.b16 %v3816, %v3814
      %v3829 = vpack.c.b16 %v3817, %v3815
      %v3830 = vpack.c.b16 %v3820, %v3818
      %v3831 = vpack.c.b16 %v3821, %v3819
      %v3832 = vpack.c.b16 %v3824, %v3822
      %v3833 = vpack.c.b16 %v3825, %v3823
      %v3843 = vsel %vm952, %v3784, 0
      %v3846 = vsel %vm952, %v3785, 0
      %v3849 = vsel %vm952, %v3786, 0
      %v3852 = vsel %vm952, %v3787, 0
      %v3855 = vsel %vm952, %v3788, 0
      %v3858 = vsel %vm952, %v3789, 0
      %v3861 = vsel %vm952, %v3790, 0
      %v3864 = vsel %vm952, %v3791, 0
      %v3867 = vsel %vm952, %v3792, 0
      %v3870 = vsel %vm952, %v3793, 0
      %v3873 = vsel %vm952, %v3794, 0
      %v3876 = vsel %vm952, %v3795, 0
      %v3879 = vsel %vm952, %v3796, 0
      %v3882 = vsel %vm952, %v3797, 0
      %v3885 = vsel %vm952, %v3798, 0
      %v3888 = vsel %vm952, %v3799, 0
      %v3891 = vsel %vm952, %v3800, 0
      %v3894 = vsel %vm952, %v3801, 0
      %3896 = vmatpush.bf16.msra.mxu0 0
      %3897 = vmatpush.bf16.msra.mxu0 0
      %3898 = vmatpush.bf16.msra.mxu0 0
      %3899 = vmatpush.bf16.msra.mxu0 0
      %3900 = vmatpush.bf16.msra.mxu0 %v3832
      %3901 = vmatpush.bf16.msra.mxu0 %v3830
      %3902 = vmatpush.bf16.msra.mxu0 %v3828
      %3903 = vmatpush.bf16.msra.mxu0 %v3826
      %3904 = vmatmul.bf16.gmra.mxu0 %v3843
      %v3905 = vpop.f32.mrf.mxu0
      %v3906 = vadd.f32 0.0, %v3905
      %v3907 = vpop.f32.mrf.mxu0
      %v3908 = vadd.f32 0.0, %v3907
      %3909 = vmatmul.bf16.gmra.mxu0 %v3846
      %v3910 = vpop.f32.mrf.mxu0
      %v3911 = vadd.f32 0.0, %v3910
      %v3912 = vpop.f32.mrf.mxu0
      %v3913 = vadd.f32 0.0, %v3912
      %3914 = vmatmul.bf16.gmra.mxu0 %v3849
      %v3915 = vpop.f32.mrf.mxu0
      %v3916 = vadd.f32 0.0, %v3915
      %v3917 = vpop.f32.mrf.mxu0
      %v3918 = vadd.f32 0.0, %v3917
      %3919 = vmatmul.bf16.gmra.mxu0 %v3852
      %v3920 = vpop.f32.mrf.mxu0
      %v3921 = vadd.f32 0.0, %v3920
      %v3922 = vpop.f32.mrf.mxu0
      %v3923 = vadd.f32 0.0, %v3922
      %3924 = vmatmul.bf16.gmra.mxu0 %v3855
      %v3925 = vpop.f32.mrf.mxu0
      %v3926 = vadd.f32 0.0, %v3925
      %v3927 = vpop.f32.mrf.mxu0
      %v3928 = vadd.f32 0.0, %v3927
      %3929 = vmatmul.bf16.gmra.mxu0 %v3858
      %v3930 = vpop.f32.mrf.mxu0
      %v3931 = vadd.f32 0.0, %v3930
      %v3932 = vpop.f32.mrf.mxu0
      %v3933 = vadd.f32 0.0, %v3932
      %3934 = vmatmul.bf16.gmra.mxu0 %v3861
      %v3935 = vpop.f32.mrf.mxu0
      %v3936 = vadd.f32 0.0, %v3935
      %v3937 = vpop.f32.mrf.mxu0
      %v3938 = vadd.f32 0.0, %v3937
      %3939 = vmatmul.bf16.gmra.mxu0 %v3864
      %v3940 = vpop.f32.mrf.mxu0
      %v3941 = vadd.f32 0.0, %v3940
      %v3942 = vpop.f32.mrf.mxu0
      %v3943 = vadd.f32 0.0, %v3942
      %3944 = vmatmul.bf16.gmra.mxu0 %v3867
      %v3945 = vpop.f32.mrf.mxu0
      %v3946 = vadd.f32 0.0, %v3945
      %v3947 = vpop.f32.mrf.mxu0
      %v3948 = vadd.f32 0.0, %v3947
      %3949 = vmatmul.bf16.gmra.mxu0 %v3870
      %v3950 = vpop.f32.mrf.mxu0
      %v3951 = vadd.f32 0.0, %v3950
      %v3952 = vpop.f32.mrf.mxu0
      %v3953 = vadd.f32 0.0, %v3952
      %3954 = vmatmul.bf16.gmra.mxu0 %v3873
      %v3955 = vpop.f32.mrf.mxu0
      %v3956 = vadd.f32 0.0, %v3955
      %v3957 = vpop.f32.mrf.mxu0
      %v3958 = vadd.f32 0.0, %v3957
      %3959 = vmatmul.bf16.gmra.mxu0 %v3876
      %v3960 = vpop.f32.mrf.mxu0
      %v3961 = vadd.f32 0.0, %v3960
      %v3962 = vpop.f32.mrf.mxu0
      %v3963 = vadd.f32 0.0, %v3962
      %3964 = vmatmul.bf16.gmra.mxu0 %v3879
      %v3965 = vpop.f32.mrf.mxu0
      %v3966 = vadd.f32 0.0, %v3965
      %v3967 = vpop.f32.mrf.mxu0
      %v3968 = vadd.f32 0.0, %v3967
      %3969 = vmatmul.bf16.gmra.mxu0 %v3882
      %v3970 = vpop.f32.mrf.mxu0
      %v3971 = vadd.f32 0.0, %v3970
      %v3972 = vpop.f32.mrf.mxu0
      %v3973 = vadd.f32 0.0, %v3972
      %3974 = vmatmul.bf16.gmra.mxu0 %v3885
      %v3975 = vpop.f32.mrf.mxu0
      %v3976 = vadd.f32 0.0, %v3975
      %v3977 = vpop.f32.mrf.mxu0
      %v3978 = vadd.f32 0.0, %v3977
      %3979 = vmatmul.bf16.gmra.mxu0 %v3888
      %v3980 = vpop.f32.mrf.mxu0
      %v3981 = vadd.f32 0.0, %v3980
      %v3982 = vpop.f32.mrf.mxu0
      %v3983 = vadd.f32 0.0, %v3982
      %3984 = vmatmul.bf16.gmra.mxu0 %v3891
      %v3985 = vpop.f32.mrf.mxu0
      %v3986 = vadd.f32 0.0, %v3985
      %v3987 = vpop.f32.mrf.mxu0
      %v3988 = vadd.f32 0.0, %v3987
      %3989 = vmatmul.bf16.gmra.mxu0 %v3894
      %v3990 = vpop.f32.mrf.mxu0
      %v3991 = vpop.f32.mrf.mxu0
      %3992 = vdwg.mxu0
      %3993 = vmatpush.bf16.msra.mxu0 0
      %3994 = vmatpush.bf16.msra.mxu0 0
      %3995 = vmatpush.bf16.msra.mxu0 0
      %3996 = vmatpush.bf16.msra.mxu0 0
      %3997 = vmatpush.bf16.msra.mxu0 %v3833
      %3998 = vmatpush.bf16.msra.mxu0 %v3831
      %3999 = vmatpush.bf16.msra.mxu0 %v3829
      %4000 = vmatpush.bf16.msra.mxu0 %v3827
      %4001 = vmatmul.bf16.gmra.mxu0 %v3843
      %v4002 = vpop.f32.mrf.mxu0
      %v4003 = vpop.f32.mrf.mxu0
      %4004 = vmatmul.bf16.gmra.mxu0 %v3846
      %v4005 = vpop.f32.mrf.mxu0
      %v4006 = vpop.f32.mrf.mxu0
      %4007 = vmatmul.bf16.gmra.mxu0 %v3849
      %v4008 = vpop.f32.mrf.mxu0
      %v4009 = vadd.f32 0.0, %v4008
      %v4010 = vpop.f32.mrf.mxu0
      %v4011 = vadd.f32 0.0, %v4010
      %4012 = vmatmul.bf16.gmra.mxu0 %v3852
      %v4013 = vpop.f32.mrf.mxu0
      %v4014 = vadd.f32 0.0, %v4013
      %v4015 = vpop.f32.mrf.mxu0
      %v4016 = vadd.f32 0.0, %v4015
      %4017 = vmatmul.bf16.gmra.mxu0 %v3855
      %v4018 = vpop.f32.mrf.mxu0
      %v4019 = vadd.f32 0.0, %v4018
      %v4020 = vpop.f32.mrf.mxu0
      %v4021 = vadd.f32 0.0, %v4020
      %4022 = vmatmul.bf16.gmra.mxu0 %v3858
      %v4023 = vpop.f32.mrf.mxu0
      %v4024 = vadd.f32 0.0, %v4023
      %v4025 = vpop.f32.mrf.mxu0
      %v4026 = vadd.f32 0.0, %v4025
      %4027 = vmatmul.bf16.gmra.mxu0 %v3861
      %v4028 = vpop.f32.mrf.mxu0
      %v4029 = vadd.f32 0.0, %v4028
      %v4030 = vpop.f32.mrf.mxu0
      %v4031 = vadd.f32 0.0, %v4030
      %4032 = vmatmul.bf16.gmra.mxu0 %v3864
      %v4033 = vpop.f32.mrf.mxu0
      %v4034 = vadd.f32 0.0, %v4033
      %v4035 = vpop.f32.mrf.mxu0
      %v4036 = vadd.f32 0.0, %v4035
      %4037 = vmatmul.bf16.gmra.mxu0 %v3867
      %v4038 = vpop.f32.mrf.mxu0
      %v4039 = vadd.f32 0.0, %v4038
      %v4040 = vpop.f32.mrf.mxu0
      %v4041 = vadd.f32 0.0, %v4040
      %4042 = vmatmul.bf16.gmra.mxu0 %v3870
      %v4043 = vpop.f32.mrf.mxu0
      %v4044 = vadd.f32 0.0, %v4043
      %v4045 = vpop.f32.mrf.mxu0
      %v4046 = vadd.f32 0.0, %v4045
      %4047 = vmatmul.bf16.gmra.mxu0 %v3873
      %v4048 = vpop.f32.mrf.mxu0
      %v4049 = vadd.f32 0.0, %v4048
      %v4050 = vpop.f32.mrf.mxu0
      %v4051 = vadd.f32 0.0, %v4050
      %4052 = vmatmul.bf16.gmra.mxu0 %v3876
      %v4053 = vpop.f32.mrf.mxu0
      %v4054 = vadd.f32 0.0, %v4053
      %v4055 = vpop.f32.mrf.mxu0
      %v4056 = vadd.f32 0.0, %v4055
      %4057 = vmatmul.bf16.gmra.mxu0 %v3879
      %v4058 = vpop.f32.mrf.mxu0
      %v4059 = vadd.f32 0.0, %v4058
      %v4060 = vpop.f32.mrf.mxu0
      %v4061 = vadd.f32 0.0, %v4060
      %4062 = vmatmul.bf16.gmra.mxu0 %v3882
      %v4063 = vpop.f32.mrf.mxu0
      %v4064 = vadd.f32 0.0, %v4063
      %v4065 = vpop.f32.mrf.mxu0
      %v4066 = vadd.f32 0.0, %v4065
      %4067 = vmatmul.bf16.gmra.mxu0 %v3885
      %v4068 = vpop.f32.mrf.mxu0
      %v4069 = vadd.f32 0.0, %v4068
      %v4070 = vpop.f32.mrf.mxu0
      %v4071 = vadd.f32 0.0, %v4070
      %4072 = vmatmul.bf16.gmra.mxu0 %v3888
      %v4073 = vpop.f32.mrf.mxu0
      %v4074 = vadd.f32 0.0, %v4073
      %v4075 = vpop.f32.mrf.mxu0
      %v4076 = vadd.f32 0.0, %v4075
      %4077 = vmatmul.bf16.gmra.mxu0 %v3891
      %v4078 = vpop.f32.mrf.mxu0
      %v4079 = vadd.f32 0.0, %v4078
      %v4080 = vpop.f32.mrf.mxu0
      %v4081 = vadd.f32 0.0, %v4080
      %4082 = vmatmul.bf16.gmra.mxu0 %v3894
      %v4083 = vpop.f32.mrf.mxu0
      %v4084 = vadd.f32 0.0, %v4083
      %v4085 = vpop.f32.mrf.mxu0
      %v4086 = vadd.f32 0.0, %v4085
      %4087 = vdwg.mxu0
      %v4088 = vadd.f32 %v3906, 0.0
      %v4089 = vadd.f32 %v3908, 0.0
      %v4090 = vadd.f32 %v3911, 0.0
      %v4091 = vadd.f32 %v3913, 0.0
      %v4092 = vadd.f32 %v3916, 0.0
      %v4093 = vadd.f32 %v3918, 0.0
      %v4094 = vadd.f32 %v3921, 0.0
      %v4095 = vadd.f32 %v3923, 0.0
      %v4096 = vadd.f32 %v3926, 0.0
      %v4097 = vadd.f32 %v3928, 0.0
      %v4098 = vadd.f32 %v3931, 0.0
      %v4099 = vadd.f32 %v3933, 0.0
      %v4100 = vadd.f32 %v3936, 0.0
      %v4101 = vadd.f32 %v3938, 0.0
      %v4102 = vadd.f32 %v3941, 0.0
      %v4103 = vadd.f32 %v3943, 0.0
      %v4104 = vadd.f32 %v3946, 0.0
      %v4105 = vadd.f32 %v3948, 0.0
      %v4106 = vadd.f32 %v3951, 0.0
      %v4107 = vadd.f32 %v3953, 0.0
      %v4108 = vadd.f32 %v3956, 0.0
      %v4109 = vadd.f32 %v3958, 0.0
      %v4110 = vadd.f32 %v3961, 0.0
      %v4111 = vadd.f32 %v3963, 0.0
      %v4112 = vadd.f32 %v3966, 0.0
      %v4113 = vadd.f32 %v3968, 0.0
      %v4114 = vadd.f32 %v3971, 0.0
      %v4115 = vadd.f32 %v3973, 0.0
      %v4116 = vadd.f32 %v3976, 0.0
      %v4117 = vadd.f32 %v3978, 0.0
      %v4118 = vadd.f32 %v3981, 0.0
      %v4119 = vadd.f32 %v3983, 0.0
      %4152 = vrot.lane.b32.xlu0 %v3911, 64
      %v4153 = vpop.permute.xlu0 %4152
      %4154 = vrot.lane.b32.xlu0 %v3913, 64
      %v4155 = vpop.permute.xlu0 %4154
      %4156 = vrot.lane.b32.xlu0 %v3916, 64
      %v4157 = vpop.permute.xlu0 %4156
      %4158 = vrot.lane.b32.xlu0 %v3918, 64
      %v4159 = vpop.permute.xlu0 %4158
      %4160 = vrot.lane.b32.xlu0 %v3921, 64
      %v4161 = vpop.permute.xlu0 %4160
      %4162 = vrot.lane.b32.xlu0 %v3923, 64
      %v4163 = vpop.permute.xlu0 %4162
      %4164 = vrot.lane.b32.xlu0 %v3926, 64
      %v4165 = vpop.permute.xlu0 %4164
      %4166 = vrot.lane.b32.xlu0 %v3928, 64
      %v4167 = vpop.permute.xlu0 %4166
      %4168 = vrot.lane.b32.xlu0 %v3931, 64
      %v4169 = vpop.permute.xlu0 %4168
      %4170 = vrot.lane.b32.xlu0 %v3933, 64
      %v4171 = vpop.permute.xlu0 %4170
      %4172 = vrot.lane.b32.xlu0 %v3936, 64
      %v4173 = vpop.permute.xlu0 %4172
      %4174 = vrot.lane.b32.xlu0 %v3938, 64
      %v4175 = vpop.permute.xlu0 %4174
      %4176 = vrot.lane.b32.xlu0 %v3941, 64
      %v4177 = vpop.permute.xlu0 %4176
      %4178 = vrot.lane.b32.xlu0 %v3943, 64
      %v4179 = vpop.permute.xlu0 %4178
      %4180 = vrot.lane.b32.xlu0 %v3946, 64
      %v4181 = vpop.permute.xlu0 %4180
      %4182 = vrot.lane.b32.xlu0 %v3948, 64
      %v4183 = vpop.permute.xlu0 %4182
      %4184 = vrot.lane.b32.xlu0 %v3951, 64
      %v4185 = vpop.permute.xlu0 %4184
      %4186 = vrot.lane.b32.xlu0 %v3953, 64
      %v4187 = vpop.permute.xlu0 %4186
      %4188 = vrot.lane.b32.xlu0 %v3956, 64
      %v4189 = vpop.permute.xlu0 %4188
      %4190 = vrot.lane.b32.xlu0 %v3958, 64
      %v4191 = vpop.permute.xlu0 %4190
      %4192 = vrot.lane.b32.xlu0 %v3961, 64
      %v4193 = vpop.permute.xlu0 %4192
      %4194 = vrot.lane.b32.xlu0 %v3963, 64
      %v4195 = vpop.permute.xlu0 %4194
      %4196 = vrot.lane.b32.xlu0 %v3966, 64
      %v4197 = vpop.permute.xlu0 %4196
      %4198 = vrot.lane.b32.xlu0 %v3968, 64
      %v4199 = vpop.permute.xlu0 %4198
      %4200 = vrot.lane.b32.xlu0 %v3971, 64
      %v4201 = vpop.permute.xlu0 %4200
      %4202 = vrot.lane.b32.xlu0 %v3973, 64
      %v4203 = vpop.permute.xlu0 %4202
      %4204 = vrot.lane.b32.xlu0 %v3976, 64
      %v4205 = vpop.permute.xlu0 %4204
      %4206 = vrot.lane.b32.xlu0 %v3978, 64
      %v4207 = vpop.permute.xlu0 %4206
      %4208 = vrot.lane.b32.xlu0 %v3981, 64
      %v4209 = vpop.permute.xlu0 %4208
      %4210 = vrot.lane.b32.xlu0 %v3983, 64
      %v4211 = vpop.permute.xlu0 %4210
      %4212 = vrot.lane.b32.xlu0 %v3986, 64
      %v4213 = vpop.permute.xlu0 %4212
      %4214 = vrot.lane.b32.xlu0 %v3988, 64
      %v4215 = vpop.permute.xlu0 %4214
      %v4248 = vadd.f32 %v4088, %v4153
      %v4249 = vadd.f32 %v4089, %v4155
      %v4250 = vadd.f32 %v4090, %v4157
      %v4251 = vadd.f32 %v4091, %v4159
      %v4252 = vadd.f32 %v4092, %v4161
      %v4253 = vadd.f32 %v4093, %v4163
      %v4254 = vadd.f32 %v4094, %v4165
      %v4255 = vadd.f32 %v4095, %v4167
      %v4256 = vadd.f32 %v4096, %v4169
      %v4257 = vadd.f32 %v4097, %v4171
      %v4258 = vadd.f32 %v4098, %v4173
      %v4259 = vadd.f32 %v4099, %v4175
      %v4260 = vadd.f32 %v4100, %v4177
      %v4261 = vadd.f32 %v4101, %v4179
      %v4262 = vadd.f32 %v4102, %v4181
      %v4263 = vadd.f32 %v4103, %v4183
      %v4264 = vadd.f32 %v4104, %v4185
      %v4265 = vadd.f32 %v4105, %v4187
      %v4266 = vadd.f32 %v4106, %v4189
      %v4267 = vadd.f32 %v4107, %v4191
      %v4268 = vadd.f32 %v4108, %v4193
      %v4269 = vadd.f32 %v4109, %v4195
      %v4270 = vadd.f32 %v4110, %v4197
      %v4271 = vadd.f32 %v4111, %v4199
      %v4272 = vadd.f32 %v4112, %v4201
      %v4273 = vadd.f32 %v4113, %v4203
      %v4274 = vadd.f32 %v4114, %v4205
      %v4275 = vadd.f32 %v4115, %v4207
      %v4276 = vadd.f32 %v4116, %v4209
      %v4277 = vadd.f32 %v4117, %v4211
      %v4278 = vadd.f32 %v4118, %v4213
      %v4279 = vadd.f32 %v4119, %v4215
      %v4280 = vadd.f32 %v4248, %v4009
      %v4281 = vadd.f32 %v4249, %v4011
      %v4282 = vadd.f32 %v4250, %v4014
      %v4283 = vadd.f32 %v4251, %v4016
      %v4284 = vadd.f32 %v4252, %v4019
      %v4285 = vadd.f32 %v4253, %v4021
      %v4286 = vadd.f32 %v4254, %v4024
      %v4287 = vadd.f32 %v4255, %v4026
      %v4288 = vadd.f32 %v4256, %v4029
      %v4289 = vadd.f32 %v4257, %v4031
      %v4290 = vadd.f32 %v4258, %v4034
      %v4291 = vadd.f32 %v4259, %v4036
      %v4292 = vadd.f32 %v4260, %v4039
      %v4293 = vadd.f32 %v4261, %v4041
      %v4294 = vadd.f32 %v4262, %v4044
      %v4295 = vadd.f32 %v4263, %v4046
      %v4296 = vadd.f32 %v4264, %v4049
      %v4297 = vadd.f32 %v4265, %v4051
      %v4298 = vadd.f32 %v4266, %v4054
      %v4299 = vadd.f32 %v4267, %v4056
      %v4300 = vadd.f32 %v4268, %v4059
      %v4301 = vadd.f32 %v4269, %v4061
      %v4302 = vadd.f32 %v4270, %v4064
      %v4303 = vadd.f32 %v4271, %v4066
      %v4304 = vadd.f32 %v4272, %v4069
      %v4305 = vadd.f32 %v4273, %v4071
      %v4306 = vadd.f32 %v4274, %v4074
      %v4307 = vadd.f32 %v4275, %v4076
      %v4308 = vadd.f32 %v4276, %v4079
      %v4309 = vadd.f32 %v4277, %v4081
      %v4310 = vadd.f32 %v4278, %v4084
      %v4311 = vadd.f32 %v4279, %v4086
      %s4312 = scalar_lea.vmem %s3, 64
      %v4313 = vld [vmem:[%s4312] sm:$0xff]
      %v4314 = vld [vmem:[%s4312 + $0x8] sm:$0xff]
      %v4315 = vld [vmem:[%s4312 + $0x10] sm:$0xff]
      %v4316 = vld [vmem:[%s4312 + $0x18] sm:$0xff]
      %v4317 = vld [vmem:[%s4312 + $0x20] sm:$0xff]
      %v4318 = vld [vmem:[%s4312 + $0x28] sm:$0xff]
      %v4319 = vld [vmem:[%s4312 + $0x30] sm:$0xff]
      %v4320 = vld [vmem:[%s4312 + $0x38] sm:$0xff]
      %v4357 = vunpack.c.l.b16 %v3291
      %v4358 = vunpack.c.l.b16 %v3292
      %v4359 = vunpack.c.l.b16 %v3294
      %v4360 = vunpack.c.l.b16 %v3295
      %v4361 = vunpack.c.l.b16 %v3297
      %v4362 = vunpack.c.l.b16 %v3298
      %v4363 = vunpack.c.l.b16 %v3300
      %v4364 = vunpack.c.l.b16 %v3301
      %v4365 = vunpack.c.l.b16 %v3303
      %v4366 = vunpack.c.l.b16 %v3304
      %v4367 = vunpack.c.l.b16 %v3306
      %v4368 = vunpack.c.l.b16 %v3307
      %v4369 = vunpack.c.l.b16 %v3309
      %v4370 = vunpack.c.l.b16 %v3310
      %v4371 = vunpack.c.l.b16 %v3312
      %v4372 = vunpack.c.l.b16 %v3313
      %v4373 = vunpack.c.l.b16 %v3315
      %v4374 = vunpack.c.l.b16 %v3316
      %v4375 = vunpack.c.l.b16 %v3318
      %v4376 = vunpack.c.l.b16 %v3319
      %v4377 = vunpack.c.l.b16 %v3321
      %v4378 = vunpack.c.l.b16 %v3322
      %v4379 = vunpack.c.l.b16 %v3324
      %v4380 = vunpack.c.l.b16 %v3325
      %v4381 = vunpack.c.l.b16 %v3327
      %v4382 = vunpack.c.l.b16 %v3328
      %v4383 = vunpack.c.l.b16 %v3330
      %v4384 = vunpack.c.l.b16 %v3331
      %v4385 = vunpack.c.l.b16 %v3333
      %v4386 = vunpack.c.l.b16 %v3334
      %v4387 = vunpack.c.l.b16 %v3336
      %v4388 = vunpack.c.l.b16 %v3337
      %v4389 = vunpack.c.l.b16 %v3339
      %v4390 = vunpack.c.l.b16 %v3340
      %v4391 = vunpack.c.l.b16 %v3342
      %v4392 = vunpack.c.l.b16 %v3343
      %v4393 = vpack.c.b16 %v4358, %v4357
      %v4394 = vpack.c.b16 %v4360, %v4359
      %v4395 = vpack.c.b16 %v4362, %v4361
      %v4396 = vpack.c.b16 %v4364, %v4363
      %v4397 = vpack.c.b16 %v4366, %v4365
      %v4398 = vpack.c.b16 %v4368, %v4367
      %v4399 = vpack.c.b16 %v4370, %v4369
      %v4400 = vpack.c.b16 %v4372, %v4371
      %v4401 = vpack.c.b16 %v4374, %v4373
      %v4402 = vpack.c.b16 %v4376, %v4375
      %v4403 = vpack.c.b16 %v4378, %v4377
      %v4404 = vpack.c.b16 %v4380, %v4379
      %v4405 = vpack.c.b16 %v4382, %v4381
      %v4406 = vpack.c.b16 %v4384, %v4383
      %v4407 = vpack.c.b16 %v4386, %v4385
      %v4408 = vpack.c.b16 %v4388, %v4387
      %v4409 = vpack.c.b16 %v4390, %v4389
      %v4410 = vpack.c.b16 %v4392, %v4391
      %v4419 = vunpack.c.l.b16 %v4313
      %v4420 = vunpack.c.h.b16 %v4313
      %v4421 = vunpack.c.l.b16 %v4314
      %v4422 = vunpack.c.h.b16 %v4314
      %v4423 = vunpack.c.l.b16 %v4315
      %v4424 = vunpack.c.h.b16 %v4315
      %v4425 = vunpack.c.l.b16 %v4316
      %v4426 = vunpack.c.h.b16 %v4316
      %v4427 = vunpack.c.l.b16 %v4317
      %v4428 = vunpack.c.h.b16 %v4317
      %v4429 = vunpack.c.l.b16 %v4318
      %v4430 = vunpack.c.h.b16 %v4318
      %v4431 = vunpack.c.l.b16 %v4319
      %v4432 = vunpack.c.h.b16 %v4319
      %v4433 = vunpack.c.l.b16 %v4320
      %v4434 = vunpack.c.h.b16 %v4320
      %v4435 = vpack.c.b16 %v4421, %v4419
      %v4436 = vpack.c.b16 %v4422, %v4420
      %v4437 = vpack.c.b16 %v4425, %v4423
      %v4438 = vpack.c.b16 %v4426, %v4424
      %v4439 = vpack.c.b16 %v4429, %v4427
      %v4440 = vpack.c.b16 %v4430, %v4428
      %v4441 = vpack.c.b16 %v4433, %v4431
      %v4442 = vpack.c.b16 %v4434, %v4432
      %v4452 = vsel %vm952, %v4393, 0
      %v4455 = vsel %vm952, %v4394, 0
      %v4458 = vsel %vm952, %v4395, 0
      %v4461 = vsel %vm952, %v4396, 0
      %v4464 = vsel %vm952, %v4397, 0
      %v4467 = vsel %vm952, %v4398, 0
      %v4470 = vsel %vm952, %v4399, 0
      %v4473 = vsel %vm952, %v4400, 0
      %v4476 = vsel %vm952, %v4401, 0
      %v4479 = vsel %vm952, %v4402, 0
      %v4482 = vsel %vm952, %v4403, 0
      %v4485 = vsel %vm952, %v4404, 0
      %v4488 = vsel %vm952, %v4405, 0
      %v4491 = vsel %vm952, %v4406, 0
      %v4494 = vsel %vm952, %v4407, 0
      %v4497 = vsel %vm952, %v4408, 0
      %v4500 = vsel %vm952, %v4409, 0
      %v4503 = vsel %vm952, %v4410, 0
      %4505 = vmatpush.bf16.msra.mxu0 0
      %4506 = vmatpush.bf16.msra.mxu0 0
      %4507 = vmatpush.bf16.msra.mxu0 0
      %4508 = vmatpush.bf16.msra.mxu0 0
      %4509 = vmatpush.bf16.msra.mxu0 %v4441
      %4510 = vmatpush.bf16.msra.mxu0 %v4439
      %4511 = vmatpush.bf16.msra.mxu0 %v4437
      %4512 = vmatpush.bf16.msra.mxu0 %v4435
      %4513 = vmatmul.bf16.gmra.mxu0 %v4452
      %v4514 = vpop.f32.mrf.mxu0
      %v4515 = vadd.f32 0.0, %v4514
      %v4516 = vpop.f32.mrf.mxu0
      %v4517 = vadd.f32 0.0, %v4516
      %4518 = vmatmul.bf16.gmra.mxu0 %v4455
      %v4519 = vpop.f32.mrf.mxu0
      %v4520 = vadd.f32 0.0, %v4519
      %v4521 = vpop.f32.mrf.mxu0
      %v4522 = vadd.f32 0.0, %v4521
      %4523 = vmatmul.bf16.gmra.mxu0 %v4458
      %v4524 = vpop.f32.mrf.mxu0
      %v4525 = vadd.f32 0.0, %v4524
      %v4526 = vpop.f32.mrf.mxu0
      %v4527 = vadd.f32 0.0, %v4526
      %4528 = vmatmul.bf16.gmra.mxu0 %v4461
      %v4529 = vpop.f32.mrf.mxu0
      %v4530 = vadd.f32 0.0, %v4529
      %v4531 = vpop.f32.mrf.mxu0
      %v4532 = vadd.f32 0.0, %v4531
      %4533 = vmatmul.bf16.gmra.mxu0 %v4464
      %v4534 = vpop.f32.mrf.mxu0
      %v4535 = vadd.f32 0.0, %v4534
      %v4536 = vpop.f32.mrf.mxu0
      %v4537 = vadd.f32 0.0, %v4536
      %4538 = vmatmul.bf16.gmra.mxu0 %v4467
      %v4539 = vpop.f32.mrf.mxu0
      %v4540 = vadd.f32 0.0, %v4539
      %v4541 = vpop.f32.mrf.mxu0
      %v4542 = vadd.f32 0.0, %v4541
      %4543 = vmatmul.bf16.gmra.mxu0 %v4470
      %v4544 = vpop.f32.mrf.mxu0
      %v4545 = vadd.f32 0.0, %v4544
      %v4546 = vpop.f32.mrf.mxu0
      %v4547 = vadd.f32 0.0, %v4546
      %4548 = vmatmul.bf16.gmra.mxu0 %v4473
      %v4549 = vpop.f32.mrf.mxu0
      %v4550 = vadd.f32 0.0, %v4549
      %v4551 = vpop.f32.mrf.mxu0
      %v4552 = vadd.f32 0.0, %v4551
      %4553 = vmatmul.bf16.gmra.mxu0 %v4476
      %v4554 = vpop.f32.mrf.mxu0
      %v4555 = vadd.f32 0.0, %v4554
      %v4556 = vpop.f32.mrf.mxu0
      %v4557 = vadd.f32 0.0, %v4556
      %4558 = vmatmul.bf16.gmra.mxu0 %v4479
      %v4559 = vpop.f32.mrf.mxu0
      %v4560 = vadd.f32 0.0, %v4559
      %v4561 = vpop.f32.mrf.mxu0
      %v4562 = vadd.f32 0.0, %v4561
      %4563 = vmatmul.bf16.gmra.mxu0 %v4482
      %v4564 = vpop.f32.mrf.mxu0
      %v4565 = vadd.f32 0.0, %v4564
      %v4566 = vpop.f32.mrf.mxu0
      %v4567 = vadd.f32 0.0, %v4566
      %4568 = vmatmul.bf16.gmra.mxu0 %v4485
      %v4569 = vpop.f32.mrf.mxu0
      %v4570 = vadd.f32 0.0, %v4569
      %v4571 = vpop.f32.mrf.mxu0
      %v4572 = vadd.f32 0.0, %v4571
      %4573 = vmatmul.bf16.gmra.mxu0 %v4488
      %v4574 = vpop.f32.mrf.mxu0
      %v4575 = vadd.f32 0.0, %v4574
      %v4576 = vpop.f32.mrf.mxu0
      %v4577 = vadd.f32 0.0, %v4576
      %4578 = vmatmul.bf16.gmra.mxu0 %v4491
      %v4579 = vpop.f32.mrf.mxu0
      %v4580 = vadd.f32 0.0, %v4579
      %v4581 = vpop.f32.mrf.mxu0
      %v4582 = vadd.f32 0.0, %v4581
      %4583 = vmatmul.bf16.gmra.mxu0 %v4494
      %v4584 = vpop.f32.mrf.mxu0
      %v4585 = vadd.f32 0.0, %v4584
      %v4586 = vpop.f32.mrf.mxu0
      %v4587 = vadd.f32 0.0, %v4586
      %4588 = vmatmul.bf16.gmra.mxu0 %v4497
      %v4589 = vpop.f32.mrf.mxu0
      %v4590 = vadd.f32 0.0, %v4589
      %v4591 = vpop.f32.mrf.mxu0
      %v4592 = vadd.f32 0.0, %v4591
      %4593 = vmatmul.bf16.gmra.mxu0 %v4500
      %v4594 = vpop.f32.mrf.mxu0
      %v4595 = vadd.f32 0.0, %v4594
      %v4596 = vpop.f32.mrf.mxu0
      %v4597 = vadd.f32 0.0, %v4596
      %4598 = vmatmul.bf16.gmra.mxu0 %v4503
      %v4599 = vpop.f32.mrf.mxu0
      %v4600 = vpop.f32.mrf.mxu0
      %4601 = vdwg.mxu0
      %4602 = vmatpush.bf16.msra.mxu0 0
      %4603 = vmatpush.bf16.msra.mxu0 0
      %4604 = vmatpush.bf16.msra.mxu0 0
      %4605 = vmatpush.bf16.msra.mxu0 0
      %4606 = vmatpush.bf16.msra.mxu0 %v4442
      %4607 = vmatpush.bf16.msra.mxu0 %v4440
      %4608 = vmatpush.bf16.msra.mxu0 %v4438
      %4609 = vmatpush.bf16.msra.mxu0 %v4436
      %4610 = vmatmul.bf16.gmra.mxu0 %v4452
      %v4611 = vpop.f32.mrf.mxu0
      %v4612 = vpop.f32.mrf.mxu0
      %4613 = vmatmul.bf16.gmra.mxu0 %v4455
      %v4614 = vpop.f32.mrf.mxu0
      %v4615 = vpop.f32.mrf.mxu0
      %4616 = vmatmul.bf16.gmra.mxu0 %v4458
      %v4617 = vpop.f32.mrf.mxu0
      %v4618 = vadd.f32 0.0, %v4617
      %v4619 = vpop.f32.mrf.mxu0
      %v4620 = vadd.f32 0.0, %v4619
      %4621 = vmatmul.bf16.gmra.mxu0 %v4461
      %v4622 = vpop.f32.mrf.mxu0
      %v4623 = vadd.f32 0.0, %v4622
      %v4624 = vpop.f32.mrf.mxu0
      %v4625 = vadd.f32 0.0, %v4624
      %4626 = vmatmul.bf16.gmra.mxu0 %v4464
      %v4627 = vpop.f32.mrf.mxu0
      %v4628 = vadd.f32 0.0, %v4627
      %v4629 = vpop.f32.mrf.mxu0
      %v4630 = vadd.f32 0.0, %v4629
      %4631 = vmatmul.bf16.gmra.mxu0 %v4467
      %v4632 = vpop.f32.mrf.mxu0
      %v4633 = vadd.f32 0.0, %v4632
      %v4634 = vpop.f32.mrf.mxu0
      %v4635 = vadd.f32 0.0, %v4634
      %4636 = vmatmul.bf16.gmra.mxu0 %v4470
      %v4637 = vpop.f32.mrf.mxu0
      %v4638 = vadd.f32 0.0, %v4637
      %v4639 = vpop.f32.mrf.mxu0
      %v4640 = vadd.f32 0.0, %v4639
      %4641 = vmatmul.bf16.gmra.mxu0 %v4473
      %v4642 = vpop.f32.mrf.mxu0
      %v4643 = vadd.f32 0.0, %v4642
      %v4644 = vpop.f32.mrf.mxu0
      %v4645 = vadd.f32 0.0, %v4644
      %4646 = vmatmul.bf16.gmra.mxu0 %v4476
      %v4647 = vpop.f32.mrf.mxu0
      %v4648 = vadd.f32 0.0, %v4647
      %v4649 = vpop.f32.mrf.mxu0
      %v4650 = vadd.f32 0.0, %v4649
      %4651 = vmatmul.bf16.gmra.mxu0 %v4479
      %v4652 = vpop.f32.mrf.mxu0
      %v4653 = vadd.f32 0.0, %v4652
      %v4654 = vpop.f32.mrf.mxu0
      %v4655 = vadd.f32 0.0, %v4654
      %4656 = vmatmul.bf16.gmra.mxu0 %v4482
      %v4657 = vpop.f32.mrf.mxu0
      %v4658 = vadd.f32 0.0, %v4657
      %v4659 = vpop.f32.mrf.mxu0
      %v4660 = vadd.f32 0.0, %v4659
      %4661 = vmatmul.bf16.gmra.mxu0 %v4485
      %v4662 = vpop.f32.mrf.mxu0
      %v4663 = vadd.f32 0.0, %v4662
      %v4664 = vpop.f32.mrf.mxu0
      %v4665 = vadd.f32 0.0, %v4664
      %4666 = vmatmul.bf16.gmra.mxu0 %v4488
      %v4667 = vpop.f32.mrf.mxu0
      %v4668 = vadd.f32 0.0, %v4667
      %v4669 = vpop.f32.mrf.mxu0
      %v4670 = vadd.f32 0.0, %v4669
      %4671 = vmatmul.bf16.gmra.mxu0 %v4491
      %v4672 = vpop.f32.mrf.mxu0
      %v4673 = vadd.f32 0.0, %v4672
      %v4674 = vpop.f32.mrf.mxu0
      %v4675 = vadd.f32 0.0, %v4674
      %4676 = vmatmul.bf16.gmra.mxu0 %v4494
      %v4677 = vpop.f32.mrf.mxu0
      %v4678 = vadd.f32 0.0, %v4677
      %v4679 = vpop.f32.mrf.mxu0
      %v4680 = vadd.f32 0.0, %v4679
      %4681 = vmatmul.bf16.gmra.mxu0 %v4497
      %v4682 = vpop.f32.mrf.mxu0
      %v4683 = vadd.f32 0.0, %v4682
      %v4684 = vpop.f32.mrf.mxu0
      %v4685 = vadd.f32 0.0, %v4684
      %4686 = vmatmul.bf16.gmra.mxu0 %v4500
      %v4687 = vpop.f32.mrf.mxu0
      %v4688 = vadd.f32 0.0, %v4687
      %v4689 = vpop.f32.mrf.mxu0
      %v4690 = vadd.f32 0.0, %v4689
      %4691 = vmatmul.bf16.gmra.mxu0 %v4503
      %v4692 = vpop.f32.mrf.mxu0
      %v4693 = vadd.f32 0.0, %v4692
      %v4694 = vpop.f32.mrf.mxu0
      %v4695 = vadd.f32 0.0, %v4694
      %4696 = vdwg.mxu0
      %v4697 = vadd.f32 %v4280, %v4515
      %v4698 = vadd.f32 %v4281, %v4517
      %v4699 = vadd.f32 %v4282, %v4520
      %v4700 = vadd.f32 %v4283, %v4522
      %v4701 = vadd.f32 %v4284, %v4525
      %v4702 = vadd.f32 %v4285, %v4527
      %v4703 = vadd.f32 %v4286, %v4530
      %v4704 = vadd.f32 %v4287, %v4532
      %v4705 = vadd.f32 %v4288, %v4535
      %v4706 = vadd.f32 %v4289, %v4537
      %v4707 = vadd.f32 %v4290, %v4540
      %v4708 = vadd.f32 %v4291, %v4542
      %v4709 = vadd.f32 %v4292, %v4545
      %v4710 = vadd.f32 %v4293, %v4547
      %v4711 = vadd.f32 %v4294, %v4550
      %v4712 = vadd.f32 %v4295, %v4552
      %v4713 = vadd.f32 %v4296, %v4555
      %v4714 = vadd.f32 %v4297, %v4557
      %v4715 = vadd.f32 %v4298, %v4560
      %v4716 = vadd.f32 %v4299, %v4562
      %v4717 = vadd.f32 %v4300, %v4565
      %v4718 = vadd.f32 %v4301, %v4567
      %v4719 = vadd.f32 %v4302, %v4570
      %v4720 = vadd.f32 %v4303, %v4572
      %v4721 = vadd.f32 %v4304, %v4575
      %v4722 = vadd.f32 %v4305, %v4577
      %v4723 = vadd.f32 %v4306, %v4580
      %v4724 = vadd.f32 %v4307, %v4582
      %v4725 = vadd.f32 %v4308, %v4585
      %v4726 = vadd.f32 %v4309, %v4587
      %v4727 = vadd.f32 %v4310, %v4590
      %v4728 = vadd.f32 %v4311, %v4592
      %4761 = vrot.lane.b32.xlu0 %v4520, 64
      %v4762 = vpop.permute.xlu0 %4761
      %4763 = vrot.lane.b32.xlu0 %v4522, 64
      %v4764 = vpop.permute.xlu0 %4763
      %4765 = vrot.lane.b32.xlu0 %v4525, 64
      %v4766 = vpop.permute.xlu0 %4765
      %4767 = vrot.lane.b32.xlu0 %v4527, 64
      %v4768 = vpop.permute.xlu0 %4767
      %4769 = vrot.lane.b32.xlu0 %v4530, 64
      %v4770 = vpop.permute.xlu0 %4769
      %4771 = vrot.lane.b32.xlu0 %v4532, 64
      %v4772 = vpop.permute.xlu0 %4771
      %4773 = vrot.lane.b32.xlu0 %v4535, 64
      %v4774 = vpop.permute.xlu0 %4773
      %4775 = vrot.lane.b32.xlu0 %v4537, 64
      %v4776 = vpop.permute.xlu0 %4775
      %4777 = vrot.lane.b32.xlu0 %v4540, 64
      %v4778 = vpop.permute.xlu0 %4777
      %4779 = vrot.lane.b32.xlu0 %v4542, 64
      %v4780 = vpop.permute.xlu0 %4779
      %4781 = vrot.lane.b32.xlu0 %v4545, 64
      %v4782 = vpop.permute.xlu0 %4781
      %4783 = vrot.lane.b32.xlu0 %v4547, 64
      %v4784 = vpop.permute.xlu0 %4783
      %4785 = vrot.lane.b32.xlu0 %v4550, 64
      %v4786 = vpop.permute.xlu0 %4785
      %4787 = vrot.lane.b32.xlu0 %v4552, 64
      %v4788 = vpop.permute.xlu0 %4787
      %4789 = vrot.lane.b32.xlu0 %v4555, 64
      %v4790 = vpop.permute.xlu0 %4789
      %4791 = vrot.lane.b32.xlu0 %v4557, 64
      %v4792 = vpop.permute.xlu0 %4791
      %4793 = vrot.lane.b32.xlu0 %v4560, 64
      %v4794 = vpop.permute.xlu0 %4793
      %4795 = vrot.lane.b32.xlu0 %v4562, 64
      %v4796 = vpop.permute.xlu0 %4795
      %4797 = vrot.lane.b32.xlu0 %v4565, 64
      %v4798 = vpop.permute.xlu0 %4797
      %4799 = vrot.lane.b32.xlu0 %v4567, 64
      %v4800 = vpop.permute.xlu0 %4799
      %4801 = vrot.lane.b32.xlu0 %v4570, 64
      %v4802 = vpop.permute.xlu0 %4801
      %4803 = vrot.lane.b32.xlu0 %v4572, 64
      %v4804 = vpop.permute.xlu0 %4803
      %4805 = vrot.lane.b32.xlu0 %v4575, 64
      %v4806 = vpop.permute.xlu0 %4805
      %4807 = vrot.lane.b32.xlu0 %v4577, 64
      %v4808 = vpop.permute.xlu0 %4807
      %4809 = vrot.lane.b32.xlu0 %v4580, 64
      %v4810 = vpop.permute.xlu0 %4809
      %4811 = vrot.lane.b32.xlu0 %v4582, 64
      %v4812 = vpop.permute.xlu0 %4811
      %4813 = vrot.lane.b32.xlu0 %v4585, 64
      %v4814 = vpop.permute.xlu0 %4813
      %4815 = vrot.lane.b32.xlu0 %v4587, 64
      %v4816 = vpop.permute.xlu0 %4815
      %4817 = vrot.lane.b32.xlu0 %v4590, 64
      %v4818 = vpop.permute.xlu0 %4817
      %4819 = vrot.lane.b32.xlu0 %v4592, 64
      %v4820 = vpop.permute.xlu0 %4819
      %4821 = vrot.lane.b32.xlu0 %v4595, 64
      %v4822 = vpop.permute.xlu0 %4821
      %4823 = vrot.lane.b32.xlu0 %v4597, 64
      %v4824 = vpop.permute.xlu0 %4823
      %v4857 = vadd.f32 %v4697, %v4762
      %v4858 = vadd.f32 %v4698, %v4764
      %v4859 = vadd.f32 %v4699, %v4766
      %v4860 = vadd.f32 %v4700, %v4768
      %v4861 = vadd.f32 %v4701, %v4770
      %v4862 = vadd.f32 %v4702, %v4772
      %v4863 = vadd.f32 %v4703, %v4774
      %v4864 = vadd.f32 %v4704, %v4776
      %v4865 = vadd.f32 %v4705, %v4778
      %v4866 = vadd.f32 %v4706, %v4780
      %v4867 = vadd.f32 %v4707, %v4782
      %v4868 = vadd.f32 %v4708, %v4784
      %v4869 = vadd.f32 %v4709, %v4786
      %v4870 = vadd.f32 %v4710, %v4788
      %v4871 = vadd.f32 %v4711, %v4790
      %v4872 = vadd.f32 %v4712, %v4792
      %v4873 = vadd.f32 %v4713, %v4794
      %v4874 = vadd.f32 %v4714, %v4796
      %v4875 = vadd.f32 %v4715, %v4798
      %v4876 = vadd.f32 %v4716, %v4800
      %v4877 = vadd.f32 %v4717, %v4802
      %v4878 = vadd.f32 %v4718, %v4804
      %v4879 = vadd.f32 %v4719, %v4806
      %v4880 = vadd.f32 %v4720, %v4808
      %v4881 = vadd.f32 %v4721, %v4810
      %v4882 = vadd.f32 %v4722, %v4812
      %v4883 = vadd.f32 %v4723, %v4814
      %v4884 = vadd.f32 %v4724, %v4816
      %v4885 = vadd.f32 %v4725, %v4818
      %v4886 = vadd.f32 %v4726, %v4820
      %v4887 = vadd.f32 %v4727, %v4822
      %v4888 = vadd.f32 %v4728, %v4824
      %v4889 = vadd.f32 %v4857, %v4618
      %v4890 = vadd.f32 %v4858, %v4620
      %v4891 = vadd.f32 %v4859, %v4623
      %v4892 = vadd.f32 %v4860, %v4625
      %v4893 = vadd.f32 %v4861, %v4628
      %v4894 = vadd.f32 %v4862, %v4630
      %v4895 = vadd.f32 %v4863, %v4633
      %v4896 = vadd.f32 %v4864, %v4635
      %v4897 = vadd.f32 %v4865, %v4638
      %v4898 = vadd.f32 %v4866, %v4640
      %v4899 = vadd.f32 %v4867, %v4643
      %v4900 = vadd.f32 %v4868, %v4645
      %v4901 = vadd.f32 %v4869, %v4648
      %v4902 = vadd.f32 %v4870, %v4650
      %v4903 = vadd.f32 %v4871, %v4653
      %v4904 = vadd.f32 %v4872, %v4655
      %v4905 = vadd.f32 %v4873, %v4658
      %v4906 = vadd.f32 %v4874, %v4660
      %v4907 = vadd.f32 %v4875, %v4663
      %v4908 = vadd.f32 %v4876, %v4665
      %v4909 = vadd.f32 %v4877, %v4668
      %v4910 = vadd.f32 %v4878, %v4670
      %v4911 = vadd.f32 %v4879, %v4673
      %v4912 = vadd.f32 %v4880, %v4675
      %v4913 = vadd.f32 %v4881, %v4678
      %v4914 = vadd.f32 %v4882, %v4680
      %v4915 = vadd.f32 %v4883, %v4683
      %v4916 = vadd.f32 %v4884, %v4685
      %v4917 = vadd.f32 %v4885, %v4688
      %v4918 = vadd.f32 %v4886, %v4690
      %v4919 = vadd.f32 %v4887, %v4693
      %v4920 = vadd.f32 %v4888, %v4695
      %v4921 = vld [vmem:[#allocation2 + $0x8] sm:$0xf]
      %v4922 = vld [vmem:[#allocation2 + $0xc] sm:$0xf]
      %v4923 = vld [vmem:[#allocation2 + $0x10] sm:$0x1]
      %v4924 = vld [vmem:[#allocation2 + $0x20] sm:$0xf]
      %v4925 = vld [vmem:[#allocation2 + $0x24] sm:$0xf]
      %v4926 = vld [vmem:[#allocation2 + $0x28] sm:$0x1]
      %v4927 = vld [vmem:[#allocation2 + $0x38] sm:$0xf]
      %v4928 = vld [vmem:[#allocation2 + $0x3c] sm:$0xf]
      %v4929 = vld [vmem:[#allocation2 + $0x40] sm:$0x1]
      %v4930 = vld [vmem:[#allocation2 + $0x50] sm:$0xf]
      %v4931 = vld [vmem:[#allocation2 + $0x54] sm:$0xf]
      %v4932 = vld [vmem:[#allocation2 + $0x58] sm:$0x1]
      %v4933 = vld [vmem:[#allocation2 + $0x68] sm:$0xf]
      %v4934 = vld [vmem:[#allocation2 + $0x6c] sm:$0xf]
      %v4935 = vld [vmem:[#allocation2 + $0x70] sm:$0x1]
      %v4936 = vld [vmem:[#allocation2 + $0x80] sm:$0xf]
      %v4937 = vld [vmem:[#allocation2 + $0x84] sm:$0xf]
      %v4938 = vld [vmem:[#allocation2 + $0x88] sm:$0x1]
      %v4939 = vld [vmem:[#allocation2 + $0x98] sm:$0xf]
      %v4940 = vld [vmem:[#allocation2 + $0x9c] sm:$0xf]
      %v4941 = vld [vmem:[#allocation2 + $0xa0] sm:$0x1]
      %v4942 = vld [vmem:[#allocation2 + $0xb0] sm:$0xf]
      %v4943 = vld [vmem:[#allocation2 + $0xb4] sm:$0xf]
      %v4944 = vld [vmem:[#allocation2 + $0xb8] sm:$0x1]
      %v4945 = vld [vmem:[#allocation2 + $0xc8] sm:$0xf]
      %v4946 = vld [vmem:[#allocation2 + $0xcc] sm:$0xf]
      %v4947 = vld [vmem:[#allocation2 + $0xd0] sm:$0x1]
      %v4948 = vld [vmem:[#allocation2 + $0xe0] sm:$0xf]
      %v4949 = vld [vmem:[#allocation2 + $0xe4] sm:$0xf]
      %v4950 = vld [vmem:[#allocation2 + $0xe8] sm:$0x1]
      %v4951 = vld [vmem:[#allocation2 + $0xf8] sm:$0xf]
      %v4952 = vld [vmem:[#allocation2 + $0xfc] sm:$0xf]
      %v4953 = vld [vmem:[#allocation2 + $0x100] sm:$0x1]
      %v4954 = vld [vmem:[#allocation2 + $0x110] sm:$0xf]
      %v4955 = vld [vmem:[#allocation2 + $0x114] sm:$0xf]
      %v4956 = vld [vmem:[#allocation2 + $0x118] sm:$0x1]
      %v4957 = vld [vmem:[#allocation2 + $0x128] sm:$0xf]
      %v4958 = vld [vmem:[#allocation2 + $0x12c] sm:$0xf]
      %v4959 = vld [vmem:[#allocation2 + $0x130] sm:$0x1]
      %v4960 = vld [vmem:[#allocation2 + $0x140] sm:$0xf]
      %v4961 = vld [vmem:[#allocation2 + $0x144] sm:$0xf]
      %v4962 = vld [vmem:[#allocation2 + $0x148] sm:$0x1]
      %v4963 = vld [vmem:[#allocation2 + $0x158] sm:$0xf]
      %v4964 = vld [vmem:[#allocation2 + $0x15c] sm:$0xf]
      %v4965 = vld [vmem:[#allocation2 + $0x160] sm:$0x1]
      %v4966 = vld [vmem:[#allocation2 + $0x170] sm:$0xf]
      %v4967 = vld [vmem:[#allocation2 + $0x174] sm:$0xf]
      %v4968 = vld [vmem:[#allocation2 + $0x178] sm:$0x1]
      %v4969 = vld [vmem:[#allocation2 + $0x188] sm:$0xf]
      %v4970 = vld [vmem:[#allocation2 + $0x18c] sm:$0xf]
      %v4971 = vld [vmem:[#allocation2 + $0x190] sm:$0x1]
      %v4972 = vld [vmem:[#allocation2 + $0x1a0] sm:$0xf]
      %v4973 = vld [vmem:[#allocation2 + $0x1a4] sm:$0xf]
      %v4974 = vld [vmem:[#allocation2 + $0x1a8] sm:$0x1]
      %v4976 = vshrl.u32 %v4921, 16
      %v4978 = vrot.slane %v4976, 4
      %v4979 = vshll.u32 %v4921, 16
      %v4981 = vrot.slane %v4979, 5
      %v4982 = vor.u32 %v4978, %v4981
      %v4983 = vrot.slane %v4982, 4
      %v4985 = vshll.u32 %v4922, 16
      %v4987 = vrot.slane %v4985, 5
      %v4988 = vsel %vm2088, %v4983, %v4987
      %v4989 = vshrl.u32 %v4922, 16
      %v4991 = vrot.slane %v4989, 4
      %v4992 = vor.u32 %v4991, %v4987
      %v4993 = vrot.slane %v4992, 4
      %v4995 = vshll.u32 %v4923, 16
      %v4997 = vrot.slane %v4995, 5
      %v4998 = vsel %vm2088, %v4993, %v4997
      %v5000 = vshrl.u32 %v4924, 16
      %v5002 = vrot.slane %v5000, 4
      %v5003 = vshll.u32 %v4924, 16
      %v5005 = vrot.slane %v5003, 5
      %v5006 = vor.u32 %v5002, %v5005
      %v5007 = vrot.slane %v5006, 4
      %v5009 = vshll.u32 %v4925, 16
      %v5011 = vrot.slane %v5009, 5
      %v5012 = vsel %vm2088, %v5007, %v5011
      %v5013 = vshrl.u32 %v4925, 16
      %v5015 = vrot.slane %v5013, 4
      %v5016 = vor.u32 %v5015, %v5011
      %v5017 = vrot.slane %v5016, 4
      %v5019 = vshll.u32 %v4926, 16
      %v5021 = vrot.slane %v5019, 5
      %v5022 = vsel %vm2088, %v5017, %v5021
      %v5024 = vshrl.u32 %v4927, 16
      %v5026 = vrot.slane %v5024, 4
      %v5027 = vshll.u32 %v4927, 16
      %v5029 = vrot.slane %v5027, 5
      %v5030 = vor.u32 %v5026, %v5029
      %v5031 = vrot.slane %v5030, 4
      %v5033 = vshll.u32 %v4928, 16
      %v5035 = vrot.slane %v5033, 5
      %v5036 = vsel %vm2088, %v5031, %v5035
      %v5037 = vshrl.u32 %v4928, 16
      %v5039 = vrot.slane %v5037, 4
      %v5040 = vor.u32 %v5039, %v5035
      %v5041 = vrot.slane %v5040, 4
      %v5043 = vshll.u32 %v4929, 16
      %v5045 = vrot.slane %v5043, 5
      %v5046 = vsel %vm2088, %v5041, %v5045
      %v5048 = vshrl.u32 %v4930, 16
      %v5050 = vrot.slane %v5048, 4
      %v5051 = vshll.u32 %v4930, 16
      %v5053 = vrot.slane %v5051, 5
      %v5054 = vor.u32 %v5050, %v5053
      %v5055 = vrot.slane %v5054, 4
      %v5057 = vshll.u32 %v4931, 16
      %v5059 = vrot.slane %v5057, 5
      %v5060 = vsel %vm2088, %v5055, %v5059
      %v5061 = vshrl.u32 %v4931, 16
      %v5063 = vrot.slane %v5061, 4
      %v5064 = vor.u32 %v5063, %v5059
      %v5065 = vrot.slane %v5064, 4
      %v5067 = vshll.u32 %v4932, 16
      %v5069 = vrot.slane %v5067, 5
      %v5070 = vsel %vm2088, %v5065, %v5069
      %v5072 = vshrl.u32 %v4933, 16
      %v5074 = vrot.slane %v5072, 4
      %v5075 = vshll.u32 %v4933, 16
      %v5077 = vrot.slane %v5075, 5
      %v5078 = vor.u32 %v5074, %v5077
      %v5079 = vrot.slane %v5078, 4
      %v5081 = vshll.u32 %v4934, 16
      %v5083 = vrot.slane %v5081, 5
      %v5084 = vsel %vm2088, %v5079, %v5083
      %v5085 = vshrl.u32 %v4934, 16
      %v5087 = vrot.slane %v5085, 4
      %v5088 = vor.u32 %v5087, %v5083
      %v5089 = vrot.slane %v5088, 4
      %v5091 = vshll.u32 %v4935, 16
      %v5093 = vrot.slane %v5091, 5
      %v5094 = vsel %vm2088, %v5089, %v5093
      %v5096 = vshrl.u32 %v4936, 16
      %v5098 = vrot.slane %v5096, 4
      %v5099 = vshll.u32 %v4936, 16
      %v5101 = vrot.slane %v5099, 5
      %v5102 = vor.u32 %v5098, %v5101
      %v5103 = vrot.slane %v5102, 4
      %v5105 = vshll.u32 %v4937, 16
      %v5107 = vrot.slane %v5105, 5
      %v5108 = vsel %vm2088, %v5103, %v5107
      %v5109 = vshrl.u32 %v4937, 16
      %v5111 = vrot.slane %v5109, 4
      %v5112 = vor.u32 %v5111, %v5107
      %v5113 = vrot.slane %v5112, 4
      %v5115 = vshll.u32 %v4938, 16
      %v5117 = vrot.slane %v5115, 5
      %v5118 = vsel %vm2088, %v5113, %v5117
      %v5120 = vshrl.u32 %v4939, 16
      %v5122 = vrot.slane %v5120, 4
      %v5123 = vshll.u32 %v4939, 16
      %v5125 = vrot.slane %v5123, 5
      %v5126 = vor.u32 %v5122, %v5125
      %v5127 = vrot.slane %v5126, 4
      %v5129 = vshll.u32 %v4940, 16
      %v5131 = vrot.slane %v5129, 5
      %v5132 = vsel %vm2088, %v5127, %v5131
      %v5133 = vshrl.u32 %v4940, 16
      %v5135 = vrot.slane %v5133, 4
      %v5136 = vor.u32 %v5135, %v5131
      %v5137 = vrot.slane %v5136, 4
      %v5139 = vshll.u32 %v4941, 16
      %v5141 = vrot.slane %v5139, 5
      %v5142 = vsel %vm2088, %v5137, %v5141
      %v5144 = vshrl.u32 %v4942, 16
      %v5146 = vrot.slane %v5144, 4
      %v5147 = vshll.u32 %v4942, 16
      %v5149 = vrot.slane %v5147, 5
      %v5150 = vor.u32 %v5146, %v5149
      %v5151 = vrot.slane %v5150, 4
      %v5153 = vshll.u32 %v4943, 16
      %v5155 = vrot.slane %v5153, 5
      %v5156 = vsel %vm2088, %v5151, %v5155
      %v5157 = vshrl.u32 %v4943, 16
      %v5159 = vrot.slane %v5157, 4
      %v5160 = vor.u32 %v5159, %v5155
      %v5161 = vrot.slane %v5160, 4
      %v5163 = vshll.u32 %v4944, 16
      %v5165 = vrot.slane %v5163, 5
      %v5166 = vsel %vm2088, %v5161, %v5165
      %v5168 = vshrl.u32 %v4945, 16
      %v5170 = vrot.slane %v5168, 4
      %v5171 = vshll.u32 %v4945, 16
      %v5173 = vrot.slane %v5171, 5
      %v5174 = vor.u32 %v5170, %v5173
      %v5175 = vrot.slane %v5174, 4
      %v5177 = vshll.u32 %v4946, 16
      %v5179 = vrot.slane %v5177, 5
      %v5180 = vsel %vm2088, %v5175, %v5179
      %v5181 = vshrl.u32 %v4946, 16
      %v5183 = vrot.slane %v5181, 4
      %v5184 = vor.u32 %v5183, %v5179
      %v5185 = vrot.slane %v5184, 4
      %v5187 = vshll.u32 %v4947, 16
      %v5189 = vrot.slane %v5187, 5
      %v5190 = vsel %vm2088, %v5185, %v5189
      %v5192 = vshrl.u32 %v4948, 16
      %v5194 = vrot.slane %v5192, 4
      %v5195 = vshll.u32 %v4948, 16
      %v5197 = vrot.slane %v5195, 5
      %v5198 = vor.u32 %v5194, %v5197
      %v5199 = vrot.slane %v5198, 4
      %v5201 = vshll.u32 %v4949, 16
      %v5203 = vrot.slane %v5201, 5
      %v5204 = vsel %vm2088, %v5199, %v5203
      %v5205 = vshrl.u32 %v4949, 16
      %v5207 = vrot.slane %v5205, 4
      %v5208 = vor.u32 %v5207, %v5203
      %v5209 = vrot.slane %v5208, 4
      %v5211 = vshll.u32 %v4950, 16
      %v5213 = vrot.slane %v5211, 5
      %v5214 = vsel %vm2088, %v5209, %v5213
      %v5216 = vshrl.u32 %v4951, 16
      %v5218 = vrot.slane %v5216, 4
      %v5219 = vshll.u32 %v4951, 16
      %v5221 = vrot.slane %v5219, 5
      %v5222 = vor.u32 %v5218, %v5221
      %v5223 = vrot.slane %v5222, 4
      %v5225 = vshll.u32 %v4952, 16
      %v5227 = vrot.slane %v5225, 5
      %v5228 = vsel %vm2088, %v5223, %v5227
      %v5229 = vshrl.u32 %v4952, 16
      %v5231 = vrot.slane %v5229, 4
      %v5232 = vor.u32 %v5231, %v5227
      %v5233 = vrot.slane %v5232, 4
      %v5235 = vshll.u32 %v4953, 16
      %v5237 = vrot.slane %v5235, 5
      %v5238 = vsel %vm2088, %v5233, %v5237
      %v5240 = vshrl.u32 %v4954, 16
      %v5242 = vrot.slane %v5240, 4
      %v5243 = vshll.u32 %v4954, 16
      %v5245 = vrot.slane %v5243, 5
      %v5246 = vor.u32 %v5242, %v5245
      %v5247 = vrot.slane %v5246, 4
      %v5249 = vshll.u32 %v4955, 16
      %v5251 = vrot.slane %v5249, 5
      %v5252 = vsel %vm2088, %v5247, %v5251
      %v5253 = vshrl.u32 %v4955, 16
      %v5255 = vrot.slane %v5253, 4
      %v5256 = vor.u32 %v5255, %v5251
      %v5257 = vrot.slane %v5256, 4
      %v5259 = vshll.u32 %v4956, 16
      %v5261 = vrot.slane %v5259, 5
      %v5262 = vsel %vm2088, %v5257, %v5261
      %v5264 = vshrl.u32 %v4957, 16
      %v5266 = vrot.slane %v5264, 4
      %v5267 = vshll.u32 %v4957, 16
      %v5269 = vrot.slane %v5267, 5
      %v5270 = vor.u32 %v5266, %v5269
      %v5271 = vrot.slane %v5270, 4
      %v5273 = vshll.u32 %v4958, 16
      %v5275 = vrot.slane %v5273, 5
      %v5276 = vsel %vm2088, %v5271, %v5275
      %v5277 = vshrl.u32 %v4958, 16
      %v5279 = vrot.slane %v5277, 4
      %v5280 = vor.u32 %v5279, %v5275
      %v5281 = vrot.slane %v5280, 4
      %v5283 = vshll.u32 %v4959, 16
      %v5285 = vrot.slane %v5283, 5
      %v5286 = vsel %vm2088, %v5281, %v5285
      %v5288 = vshrl.u32 %v4960, 16
      %v5290 = vrot.slane %v5288, 4
      %v5291 = vshll.u32 %v4960, 16
      %v5293 = vrot.slane %v5291, 5
      %v5294 = vor.u32 %v5290, %v5293
      %v5295 = vrot.slane %v5294, 4
      %v5297 = vshll.u32 %v4961, 16
      %v5299 = vrot.slane %v5297, 5
      %v5300 = vsel %vm2088, %v5295, %v5299
      %v5301 = vshrl.u32 %v4961, 16
      %v5303 = vrot.slane %v5301, 4
      %v5304 = vor.u32 %v5303, %v5299
      %v5305 = vrot.slane %v5304, 4
      %v5307 = vshll.u32 %v4962, 16
      %v5309 = vrot.slane %v5307, 5
      %v5310 = vsel %vm2088, %v5305, %v5309
      %v5312 = vshrl.u32 %v4963, 16
      %v5314 = vrot.slane %v5312, 4
      %v5315 = vshll.u32 %v4963, 16
      %v5317 = vrot.slane %v5315, 5
      %v5318 = vor.u32 %v5314, %v5317
      %v5319 = vrot.slane %v5318, 4
      %v5321 = vshll.u32 %v4964, 16
      %v5323 = vrot.slane %v5321, 5
      %v5324 = vsel %vm2088, %v5319, %v5323
      %v5325 = vshrl.u32 %v4964, 16
      %v5327 = vrot.slane %v5325, 4
      %v5328 = vor.u32 %v5327, %v5323
      %v5329 = vrot.slane %v5328, 4
      %v5331 = vshll.u32 %v4965, 16
      %v5333 = vrot.slane %v5331, 5
      %v5334 = vsel %vm2088, %v5329, %v5333
      %v5336 = vshrl.u32 %v4966, 16
      %v5338 = vrot.slane %v5336, 4
      %v5339 = vshll.u32 %v4966, 16
      %v5341 = vrot.slane %v5339, 5
      %v5342 = vor.u32 %v5338, %v5341
      %v5343 = vrot.slane %v5342, 4
      %v5345 = vshll.u32 %v4967, 16
      %v5347 = vrot.slane %v5345, 5
      %v5348 = vsel %vm2088, %v5343, %v5347
      %v5349 = vshrl.u32 %v4967, 16
      %v5351 = vrot.slane %v5349, 4
      %v5352 = vor.u32 %v5351, %v5347
      %v5353 = vrot.slane %v5352, 4
      %v5355 = vshll.u32 %v4968, 16
      %v5357 = vrot.slane %v5355, 5
      %v5358 = vsel %vm2088, %v5353, %v5357
      %v5360 = vshrl.u32 %v4969, 16
      %v5362 = vrot.slane %v5360, 4
      %v5363 = vshll.u32 %v4969, 16
      %v5365 = vrot.slane %v5363, 5
      %v5366 = vor.u32 %v5362, %v5365
      %v5367 = vrot.slane %v5366, 4
      %v5369 = vshll.u32 %v4970, 16
      %v5371 = vrot.slane %v5369, 5
      %v5372 = vsel %vm2088, %v5367, %v5371
      %v5373 = vshrl.u32 %v4970, 16
      %v5375 = vrot.slane %v5373, 4
      %v5376 = vor.u32 %v5375, %v5371
      %v5377 = vrot.slane %v5376, 4
      %v5379 = vshll.u32 %v4971, 16
      %v5381 = vrot.slane %v5379, 5
      %v5382 = vsel %vm2088, %v5377, %v5381
      %v5384 = vshrl.u32 %v4972, 16
      %v5386 = vrot.slane %v5384, 4
      %v5387 = vshll.u32 %v4972, 16
      %v5389 = vrot.slane %v5387, 5
      %v5390 = vor.u32 %v5386, %v5389
      %v5391 = vrot.slane %v5390, 4
      %v5393 = vshll.u32 %v4973, 16
      %v5395 = vrot.slane %v5393, 5
      %v5396 = vsel %vm2088, %v5391, %v5395
      %v5397 = vshrl.u32 %v4973, 16
      %v5399 = vrot.slane %v5397, 4
      %v5400 = vor.u32 %v5399, %v5395
      %v5401 = vrot.slane %v5400, 4
      %v5403 = vshll.u32 %v4974, 16
      %v5405 = vrot.slane %v5403, 5
      %v5406 = vsel %vm2088, %v5401, %v5405
      %s5407 = scalar_lea.vmem %s3, 128
      %v5408 = vld [vmem:[%s5407] sm:$0xff]
      %v5409 = vld [vmem:[%s5407 + $0x8] sm:$0xff]
      %v5410 = vld [vmem:[%s5407 + $0x10] sm:$0xff]
      %v5411 = vld [vmem:[%s5407 + $0x18] sm:$0xff]
      %v5412 = vld [vmem:[%s5407 + $0x20] sm:$0xff]
      %v5413 = vld [vmem:[%s5407 + $0x28] sm:$0xff]
      %v5414 = vld [vmem:[%s5407 + $0x30] sm:$0xff]
      %v5415 = vld [vmem:[%s5407 + $0x38] sm:$0xff]
      %v5416 = vunpack.c.l.b16 %v4988
      %v5417 = vunpack.c.l.b16 %v4998
      %v5418 = vunpack.c.l.b16 %v5012
      %v5419 = vunpack.c.l.b16 %v5022
      %v5420 = vunpack.c.l.b16 %v5036
      %v5421 = vunpack.c.l.b16 %v5046
      %v5422 = vunpack.c.l.b16 %v5060
      %v5423 = vunpack.c.l.b16 %v5070
      %v5424 = vunpack.c.l.b16 %v5084
      %v5425 = vunpack.c.l.b16 %v5094
      %v5426 = vunpack.c.l.b16 %v5108
      %v5427 = vunpack.c.l.b16 %v5118
      %v5428 = vunpack.c.l.b16 %v5132
      %v5429 = vunpack.c.l.b16 %v5142
      %v5430 = vunpack.c.l.b16 %v5156
      %v5431 = vunpack.c.l.b16 %v5166
      %v5432 = vunpack.c.l.b16 %v5180
      %v5433 = vunpack.c.l.b16 %v5190
      %v5434 = vunpack.c.l.b16 %v5204
      %v5435 = vunpack.c.l.b16 %v5214
      %v5436 = vunpack.c.l.b16 %v5228
      %v5437 = vunpack.c.l.b16 %v5238
      %v5438 = vunpack.c.l.b16 %v5252
      %v5439 = vunpack.c.l.b16 %v5262
      %v5440 = vunpack.c.l.b16 %v5276
      %v5441 = vunpack.c.l.b16 %v5286
      %v5442 = vunpack.c.l.b16 %v5300
      %v5443 = vunpack.c.l.b16 %v5310
      %v5444 = vunpack.c.l.b16 %v5324
      %v5445 = vunpack.c.l.b16 %v5334
      %v5446 = vunpack.c.l.b16 %v5348
      %v5447 = vunpack.c.l.b16 %v5358
      %v5448 = vunpack.c.l.b16 %v5372
      %v5449 = vunpack.c.l.b16 %v5382
      %v5450 = vunpack.c.l.b16 %v5396
      %v5451 = vunpack.c.l.b16 %v5406
      %v5452 = vpack.c.b16 %v5417, %v5416
      %v5453 = vpack.c.b16 %v5419, %v5418
      %v5454 = vpack.c.b16 %v5421, %v5420
      %v5455 = vpack.c.b16 %v5423, %v5422
      %v5456 = vpack.c.b16 %v5425, %v5424
      %v5457 = vpack.c.b16 %v5427, %v5426
      %v5458 = vpack.c.b16 %v5429, %v5428
      %v5459 = vpack.c.b16 %v5431, %v5430
      %v5460 = vpack.c.b16 %v5433, %v5432
      %v5461 = vpack.c.b16 %v5435, %v5434
      %v5462 = vpack.c.b16 %v5437, %v5436
      %v5463 = vpack.c.b16 %v5439, %v5438
      %v5464 = vpack.c.b16 %v5441, %v5440
      %v5465 = vpack.c.b16 %v5443, %v5442
      %v5466 = vpack.c.b16 %v5445, %v5444
      %v5467 = vpack.c.b16 %v5447, %v5446
      %v5468 = vpack.c.b16 %v5449, %v5448
      %v5469 = vpack.c.b16 %v5451, %v5450
      %v5478 = vunpack.c.l.b16 %v5408
      %v5479 = vunpack.c.h.b16 %v5408
      %v5480 = vunpack.c.l.b16 %v5409
      %v5481 = vunpack.c.h.b16 %v5409
      %v5482 = vunpack.c.l.b16 %v5410
      %v5483 = vunpack.c.h.b16 %v5410
      %v5484 = vunpack.c.l.b16 %v5411
      %v5485 = vunpack.c.h.b16 %v5411
      %v5486 = vunpack.c.l.b16 %v5412
      %v5487 = vunpack.c.h.b16 %v5412
      %v5488 = vunpack.c.l.b16 %v5413
      %v5489 = vunpack.c.h.b16 %v5413
      %v5490 = vunpack.c.l.b16 %v5414
      %v5491 = vunpack.c.h.b16 %v5414
      %v5492 = vunpack.c.l.b16 %v5415
      %v5493 = vunpack.c.h.b16 %v5415
      %v5494 = vpack.c.b16 %v5480, %v5478
      %v5495 = vpack.c.b16 %v5481, %v5479
      %v5496 = vpack.c.b16 %v5484, %v5482
      %v5497 = vpack.c.b16 %v5485, %v5483
      %v5498 = vpack.c.b16 %v5488, %v5486
      %v5499 = vpack.c.b16 %v5489, %v5487
      %v5500 = vpack.c.b16 %v5492, %v5490
      %v5501 = vpack.c.b16 %v5493, %v5491
      %v5511 = vsel %vm952, %v5452, 0
      %v5514 = vsel %vm952, %v5453, 0
      %v5517 = vsel %vm952, %v5454, 0
      %v5520 = vsel %vm952, %v5455, 0
      %v5523 = vsel %vm952, %v5456, 0
      %v5526 = vsel %vm952, %v5457, 0
      %v5529 = vsel %vm952, %v5458, 0
      %v5532 = vsel %vm952, %v5459, 0
      %v5535 = vsel %vm952, %v5460, 0
      %v5538 = vsel %vm952, %v5461, 0
      %v5541 = vsel %vm952, %v5462, 0
      %v5544 = vsel %vm952, %v5463, 0
      %v5547 = vsel %vm952, %v5464, 0
      %v5550 = vsel %vm952, %v5465, 0
      %v5553 = vsel %vm952, %v5466, 0
      %v5556 = vsel %vm952, %v5467, 0
      %v5559 = vsel %vm952, %v5468, 0
      %v5562 = vsel %vm952, %v5469, 0
      %5564 = vmatpush.bf16.msra.mxu0 0
      %5565 = vmatpush.bf16.msra.mxu0 0
      %5566 = vmatpush.bf16.msra.mxu0 0
      %5567 = vmatpush.bf16.msra.mxu0 0
      %5568 = vmatpush.bf16.msra.mxu0 %v5500
      %5569 = vmatpush.bf16.msra.mxu0 %v5498
      %5570 = vmatpush.bf16.msra.mxu0 %v5496
      %5571 = vmatpush.bf16.msra.mxu0 %v5494
      %5572 = vmatmul.bf16.gmra.mxu0 %v5511
      %v5573 = vpop.f32.mrf.mxu0
      %v5574 = vadd.f32 0.0, %v5573
      %v5575 = vpop.f32.mrf.mxu0
      %v5576 = vadd.f32 0.0, %v5575
      %5577 = vmatmul.bf16.gmra.mxu0 %v5514
      %v5578 = vpop.f32.mrf.mxu0
      %v5579 = vadd.f32 0.0, %v5578
      %v5580 = vpop.f32.mrf.mxu0
      %v5581 = vadd.f32 0.0, %v5580
      %5582 = vmatmul.bf16.gmra.mxu0 %v5517
      %v5583 = vpop.f32.mrf.mxu0
      %v5584 = vadd.f32 0.0, %v5583
      %v5585 = vpop.f32.mrf.mxu0
      %v5586 = vadd.f32 0.0, %v5585
      %5587 = vmatmul.bf16.gmra.mxu0 %v5520
      %v5588 = vpop.f32.mrf.mxu0
      %v5589 = vadd.f32 0.0, %v5588
      %v5590 = vpop.f32.mrf.mxu0
      %v5591 = vadd.f32 0.0, %v5590
      %5592 = vmatmul.bf16.gmra.mxu0 %v5523
      %v5593 = vpop.f32.mrf.mxu0
      %v5594 = vadd.f32 0.0, %v5593
      %v5595 = vpop.f32.mrf.mxu0
      %v5596 = vadd.f32 0.0, %v5595
      %5597 = vmatmul.bf16.gmra.mxu0 %v5526
      %v5598 = vpop.f32.mrf.mxu0
      %v5599 = vadd.f32 0.0, %v5598
      %v5600 = vpop.f32.mrf.mxu0
      %v5601 = vadd.f32 0.0, %v5600
      %5602 = vmatmul.bf16.gmra.mxu0 %v5529
      %v5603 = vpop.f32.mrf.mxu0
      %v5604 = vadd.f32 0.0, %v5603
      %v5605 = vpop.f32.mrf.mxu0
      %v5606 = vadd.f32 0.0, %v5605
      %5607 = vmatmul.bf16.gmra.mxu0 %v5532
      %v5608 = vpop.f32.mrf.mxu0
      %v5609 = vadd.f32 0.0, %v5608
      %v5610 = vpop.f32.mrf.mxu0
      %v5611 = vadd.f32 0.0, %v5610
      %5612 = vmatmul.bf16.gmra.mxu0 %v5535
      %v5613 = vpop.f32.mrf.mxu0
      %v5614 = vadd.f32 0.0, %v5613
      %v5615 = vpop.f32.mrf.mxu0
      %v5616 = vadd.f32 0.0, %v5615
      %5617 = vmatmul.bf16.gmra.mxu0 %v5538
      %v5618 = vpop.f32.mrf.mxu0
      %v5619 = vadd.f32 0.0, %v5618
      %v5620 = vpop.f32.mrf.mxu0
      %v5621 = vadd.f32 0.0, %v5620
      %5622 = vmatmul.bf16.gmra.mxu0 %v5541
      %v5623 = vpop.f32.mrf.mxu0
      %v5624 = vadd.f32 0.0, %v5623
      %v5625 = vpop.f32.mrf.mxu0
      %v5626 = vadd.f32 0.0, %v5625
      %5627 = vmatmul.bf16.gmra.mxu0 %v5544
      %v5628 = vpop.f32.mrf.mxu0
      %v5629 = vadd.f32 0.0, %v5628
      %v5630 = vpop.f32.mrf.mxu0
      %v5631 = vadd.f32 0.0, %v5630
      %5632 = vmatmul.bf16.gmra.mxu0 %v5547
      %v5633 = vpop.f32.mrf.mxu0
      %v5634 = vadd.f32 0.0, %v5633
      %v5635 = vpop.f32.mrf.mxu0
      %v5636 = vadd.f32 0.0, %v5635
      %5637 = vmatmul.bf16.gmra.mxu0 %v5550
      %v5638 = vpop.f32.mrf.mxu0
      %v5639 = vadd.f32 0.0, %v5638
      %v5640 = vpop.f32.mrf.mxu0
      %v5641 = vadd.f32 0.0, %v5640
      %5642 = vmatmul.bf16.gmra.mxu0 %v5553
      %v5643 = vpop.f32.mrf.mxu0
      %v5644 = vadd.f32 0.0, %v5643
      %v5645 = vpop.f32.mrf.mxu0
      %v5646 = vadd.f32 0.0, %v5645
      %5647 = vmatmul.bf16.gmra.mxu0 %v5556
      %v5648 = vpop.f32.mrf.mxu0
      %v5649 = vadd.f32 0.0, %v5648
      %v5650 = vpop.f32.mrf.mxu0
      %v5651 = vadd.f32 0.0, %v5650
      %5652 = vmatmul.bf16.gmra.mxu0 %v5559
      %v5653 = vpop.f32.mrf.mxu0
      %v5654 = vadd.f32 0.0, %v5653
      %v5655 = vpop.f32.mrf.mxu0
      %v5656 = vadd.f32 0.0, %v5655
      %5657 = vmatmul.bf16.gmra.mxu0 %v5562
      %v5658 = vpop.f32.mrf.mxu0
      %v5659 = vpop.f32.mrf.mxu0
      %5660 = vdwg.mxu0
      %5661 = vmatpush.bf16.msra.mxu0 0
      %5662 = vmatpush.bf16.msra.mxu0 0
      %5663 = vmatpush.bf16.msra.mxu0 0
      %5664 = vmatpush.bf16.msra.mxu0 0
      %5665 = vmatpush.bf16.msra.mxu0 %v5501
      %5666 = vmatpush.bf16.msra.mxu0 %v5499
      %5667 = vmatpush.bf16.msra.mxu0 %v5497
      %5668 = vmatpush.bf16.msra.mxu0 %v5495
      %5669 = vmatmul.bf16.gmra.mxu0 %v5511
      %v5670 = vpop.f32.mrf.mxu0
      %v5671 = vpop.f32.mrf.mxu0
      %5672 = vmatmul.bf16.gmra.mxu0 %v5514
      %v5673 = vpop.f32.mrf.mxu0
      %v5674 = vpop.f32.mrf.mxu0
      %5675 = vmatmul.bf16.gmra.mxu0 %v5517
      %v5676 = vpop.f32.mrf.mxu0
      %v5677 = vadd.f32 0.0, %v5676
      %v5678 = vpop.f32.mrf.mxu0
      %v5679 = vadd.f32 0.0, %v5678
      %5680 = vmatmul.bf16.gmra.mxu0 %v5520
      %v5681 = vpop.f32.mrf.mxu0
      %v5682 = vadd.f32 0.0, %v5681
      %v5683 = vpop.f32.mrf.mxu0
      %v5684 = vadd.f32 0.0, %v5683
      %5685 = vmatmul.bf16.gmra.mxu0 %v5523
      %v5686 = vpop.f32.mrf.mxu0
      %v5687 = vadd.f32 0.0, %v5686
      %v5688 = vpop.f32.mrf.mxu0
      %v5689 = vadd.f32 0.0, %v5688
      %5690 = vmatmul.bf16.gmra.mxu0 %v5526
      %v5691 = vpop.f32.mrf.mxu0
      %v5692 = vadd.f32 0.0, %v5691
      %v5693 = vpop.f32.mrf.mxu0
      %v5694 = vadd.f32 0.0, %v5693
      %5695 = vmatmul.bf16.gmra.mxu0 %v5529
      %v5696 = vpop.f32.mrf.mxu0
      %v5697 = vadd.f32 0.0, %v5696
      %v5698 = vpop.f32.mrf.mxu0
      %v5699 = vadd.f32 0.0, %v5698
      %5700 = vmatmul.bf16.gmra.mxu0 %v5532
      %v5701 = vpop.f32.mrf.mxu0
      %v5702 = vadd.f32 0.0, %v5701
      %v5703 = vpop.f32.mrf.mxu0
      %v5704 = vadd.f32 0.0, %v5703
      %5705 = vmatmul.bf16.gmra.mxu0 %v5535
      %v5706 = vpop.f32.mrf.mxu0
      %v5707 = vadd.f32 0.0, %v5706
      %v5708 = vpop.f32.mrf.mxu0
      %v5709 = vadd.f32 0.0, %v5708
      %5710 = vmatmul.bf16.gmra.mxu0 %v5538
      %v5711 = vpop.f32.mrf.mxu0
      %v5712 = vadd.f32 0.0, %v5711
      %v5713 = vpop.f32.mrf.mxu0
      %v5714 = vadd.f32 0.0, %v5713
      %5715 = vmatmul.bf16.gmra.mxu0 %v5541
      %v5716 = vpop.f32.mrf.mxu0
      %v5717 = vadd.f32 0.0, %v5716
      %v5718 = vpop.f32.mrf.mxu0
      %v5719 = vadd.f32 0.0, %v5718
      %5720 = vmatmul.bf16.gmra.mxu0 %v5544
      %v5721 = vpop.f32.mrf.mxu0
      %v5722 = vadd.f32 0.0, %v5721
      %v5723 = vpop.f32.mrf.mxu0
      %v5724 = vadd.f32 0.0, %v5723
      %5725 = vmatmul.bf16.gmra.mxu0 %v5547
      %v5726 = vpop.f32.mrf.mxu0
      %v5727 = vadd.f32 0.0, %v5726
      %v5728 = vpop.f32.mrf.mxu0
      %v5729 = vadd.f32 0.0, %v5728
      %5730 = vmatmul.bf16.gmra.mxu0 %v5550
      %v5731 = vpop.f32.mrf.mxu0
      %v5732 = vadd.f32 0.0, %v5731
      %v5733 = vpop.f32.mrf.mxu0
      %v5734 = vadd.f32 0.0, %v5733
      %5735 = vmatmul.bf16.gmra.mxu0 %v5553
      %v5736 = vpop.f32.mrf.mxu0
      %v5737 = vadd.f32 0.0, %v5736
      %v5738 = vpop.f32.mrf.mxu0
      %v5739 = vadd.f32 0.0, %v5738
      %5740 = vmatmul.bf16.gmra.mxu0 %v5556
      %v5741 = vpop.f32.mrf.mxu0
      %v5742 = vadd.f32 0.0, %v5741
      %v5743 = vpop.f32.mrf.mxu0
      %v5744 = vadd.f32 0.0, %v5743
      %5745 = vmatmul.bf16.gmra.mxu0 %v5559
      %v5746 = vpop.f32.mrf.mxu0
      %v5747 = vadd.f32 0.0, %v5746
      %v5748 = vpop.f32.mrf.mxu0
      %v5749 = vadd.f32 0.0, %v5748
      %5750 = vmatmul.bf16.gmra.mxu0 %v5562
      %v5751 = vpop.f32.mrf.mxu0
      %v5752 = vadd.f32 0.0, %v5751
      %v5753 = vpop.f32.mrf.mxu0
      %v5754 = vadd.f32 0.0, %v5753
      %5755 = vdwg.mxu0
      %v5756 = vadd.f32 %v4889, %v5574
      %v5757 = vadd.f32 %v4890, %v5576
      %v5758 = vadd.f32 %v4891, %v5579
      %v5759 = vadd.f32 %v4892, %v5581
      %v5760 = vadd.f32 %v4893, %v5584
      %v5761 = vadd.f32 %v4894, %v5586
      %v5762 = vadd.f32 %v4895, %v5589
      %v5763 = vadd.f32 %v4896, %v5591
      %v5764 = vadd.f32 %v4897, %v5594
      %v5765 = vadd.f32 %v4898, %v5596
      %v5766 = vadd.f32 %v4899, %v5599
      %v5767 = vadd.f32 %v4900, %v5601
      %v5768 = vadd.f32 %v4901, %v5604
      %v5769 = vadd.f32 %v4902, %v5606
      %v5770 = vadd.f32 %v4903, %v5609
      %v5771 = vadd.f32 %v4904, %v5611
      %v5772 = vadd.f32 %v4905, %v5614
      %v5773 = vadd.f32 %v4906, %v5616
      %v5774 = vadd.f32 %v4907, %v5619
      %v5775 = vadd.f32 %v4908, %v5621
      %v5776 = vadd.f32 %v4909, %v5624
      %v5777 = vadd.f32 %v4910, %v5626
      %v5778 = vadd.f32 %v4911, %v5629
      %v5779 = vadd.f32 %v4912, %v5631
      %v5780 = vadd.f32 %v4913, %v5634
      %v5781 = vadd.f32 %v4914, %v5636
      %v5782 = vadd.f32 %v4915, %v5639
      %v5783 = vadd.f32 %v4916, %v5641
      %v5784 = vadd.f32 %v4917, %v5644
      %v5785 = vadd.f32 %v4918, %v5646
      %v5786 = vadd.f32 %v4919, %v5649
      %v5787 = vadd.f32 %v4920, %v5651
      %5820 = vrot.lane.b32.xlu0 %v5579, 64
      %v5821 = vpop.permute.xlu0 %5820
      %5822 = vrot.lane.b32.xlu0 %v5581, 64
      %v5823 = vpop.permute.xlu0 %5822
      %5824 = vrot.lane.b32.xlu0 %v5584, 64
      %v5825 = vpop.permute.xlu0 %5824
      %5826 = vrot.lane.b32.xlu0 %v5586, 64
      %v5827 = vpop.permute.xlu0 %5826
      %5828 = vrot.lane.b32.xlu0 %v5589, 64
      %v5829 = vpop.permute.xlu0 %5828
      %5830 = vrot.lane.b32.xlu0 %v5591, 64
      %v5831 = vpop.permute.xlu0 %5830
      %5832 = vrot.lane.b32.xlu0 %v5594, 64
      %v5833 = vpop.permute.xlu0 %5832
      %5834 = vrot.lane.b32.xlu0 %v5596, 64
      %v5835 = vpop.permute.xlu0 %5834
      %5836 = vrot.lane.b32.xlu0 %v5599, 64
      %v5837 = vpop.permute.xlu0 %5836
      %5838 = vrot.lane.b32.xlu0 %v5601, 64
      %v5839 = vpop.permute.xlu0 %5838
      %5840 = vrot.lane.b32.xlu0 %v5604, 64
      %v5841 = vpop.permute.xlu0 %5840
      %5842 = vrot.lane.b32.xlu0 %v5606, 64
      %v5843 = vpop.permute.xlu0 %5842
      %5844 = vrot.lane.b32.xlu0 %v5609, 64
      %v5845 = vpop.permute.xlu0 %5844
      %5846 = vrot.lane.b32.xlu0 %v5611, 64
      %v5847 = vpop.permute.xlu0 %5846
      %5848 = vrot.lane.b32.xlu0 %v5614, 64
      %v5849 = vpop.permute.xlu0 %5848
      %5850 = vrot.lane.b32.xlu0 %v5616, 64
      %v5851 = vpop.permute.xlu0 %5850
      %5852 = vrot.lane.b32.xlu0 %v5619, 64
      %v5853 = vpop.permute.xlu0 %5852
      %5854 = vrot.lane.b32.xlu0 %v5621, 64
      %v5855 = vpop.permute.xlu0 %5854
      %5856 = vrot.lane.b32.xlu0 %v5624, 64
      %v5857 = vpop.permute.xlu0 %5856
      %5858 = vrot.lane.b32.xlu0 %v5626, 64
      %v5859 = vpop.permute.xlu0 %5858
      %5860 = vrot.lane.b32.xlu0 %v5629, 64
      %v5861 = vpop.permute.xlu0 %5860
      %5862 = vrot.lane.b32.xlu0 %v5631, 64
      %v5863 = vpop.permute.xlu0 %5862
      %5864 = vrot.lane.b32.xlu0 %v5634, 64
      %v5865 = vpop.permute.xlu0 %5864
      %5866 = vrot.lane.b32.xlu0 %v5636, 64
      %v5867 = vpop.permute.xlu0 %5866
      %5868 = vrot.lane.b32.xlu0 %v5639, 64
      %v5869 = vpop.permute.xlu0 %5868
      %5870 = vrot.lane.b32.xlu0 %v5641, 64
      %v5871 = vpop.permute.xlu0 %5870
      %5872 = vrot.lane.b32.xlu0 %v5644, 64
      %v5873 = vpop.permute.xlu0 %5872
      %5874 = vrot.lane.b32.xlu0 %v5646, 64
      %v5875 = vpop.permute.xlu0 %5874
      %5876 = vrot.lane.b32.xlu0 %v5649, 64
      %v5877 = vpop.permute.xlu0 %5876
      %5878 = vrot.lane.b32.xlu0 %v5651, 64
      %v5879 = vpop.permute.xlu0 %5878
      %5880 = vrot.lane.b32.xlu0 %v5654, 64
      %v5881 = vpop.permute.xlu0 %5880
      %5882 = vrot.lane.b32.xlu0 %v5656, 64
      %v5883 = vpop.permute.xlu0 %5882
      %v5916 = vadd.f32 %v5756, %v5821
      %v5917 = vadd.f32 %v5757, %v5823
      %v5918 = vadd.f32 %v5758, %v5825
      %v5919 = vadd.f32 %v5759, %v5827
      %v5920 = vadd.f32 %v5760, %v5829
      %v5921 = vadd.f32 %v5761, %v5831
      %v5922 = vadd.f32 %v5762, %v5833
      %v5923 = vadd.f32 %v5763, %v5835
      %v5924 = vadd.f32 %v5764, %v5837
      %v5925 = vadd.f32 %v5765, %v5839
      %v5926 = vadd.f32 %v5766, %v5841
      %v5927 = vadd.f32 %v5767, %v5843
      %v5928 = vadd.f32 %v5768, %v5845
      %v5929 = vadd.f32 %v5769, %v5847
      %v5930 = vadd.f32 %v5770, %v5849
      %v5931 = vadd.f32 %v5771, %v5851
      %v5932 = vadd.f32 %v5772, %v5853
      %v5933 = vadd.f32 %v5773, %v5855
      %v5934 = vadd.f32 %v5774, %v5857
      %v5935 = vadd.f32 %v5775, %v5859
      %v5936 = vadd.f32 %v5776, %v5861
      %v5937 = vadd.f32 %v5777, %v5863
      %v5938 = vadd.f32 %v5778, %v5865
      %v5939 = vadd.f32 %v5779, %v5867
      %v5940 = vadd.f32 %v5780, %v5869
      %v5941 = vadd.f32 %v5781, %v5871
      %v5942 = vadd.f32 %v5782, %v5873
      %v5943 = vadd.f32 %v5783, %v5875
      %v5944 = vadd.f32 %v5784, %v5877
      %v5945 = vadd.f32 %v5785, %v5879
      %v5946 = vadd.f32 %v5786, %v5881
      %v5947 = vadd.f32 %v5787, %v5883
      %v5948 = vadd.f32 %v5916, %v5677
      %v5949 = vadd.f32 %v5917, %v5679
      %v5950 = vadd.f32 %v5918, %v5682
      %v5951 = vadd.f32 %v5919, %v5684
      %v5952 = vadd.f32 %v5920, %v5687
      %v5953 = vadd.f32 %v5921, %v5689
      %v5954 = vadd.f32 %v5922, %v5692
      %v5955 = vadd.f32 %v5923, %v5694
      %v5956 = vadd.f32 %v5924, %v5697
      %v5957 = vadd.f32 %v5925, %v5699
      %v5958 = vadd.f32 %v5926, %v5702
      %v5959 = vadd.f32 %v5927, %v5704
      %v5960 = vadd.f32 %v5928, %v5707
      %v5961 = vadd.f32 %v5929, %v5709
      %v5962 = vadd.f32 %v5930, %v5712
      %v5963 = vadd.f32 %v5931, %v5714
      %v5964 = vadd.f32 %v5932, %v5717
      %v5965 = vadd.f32 %v5933, %v5719
      %v5966 = vadd.f32 %v5934, %v5722
      %v5967 = vadd.f32 %v5935, %v5724
      %v5968 = vadd.f32 %v5936, %v5727
      %v5969 = vadd.f32 %v5937, %v5729
      %v5970 = vadd.f32 %v5938, %v5732
      %v5971 = vadd.f32 %v5939, %v5734
      %v5972 = vadd.f32 %v5940, %v5737
      %v5973 = vadd.f32 %v5941, %v5739
      %v5974 = vadd.f32 %v5942, %v5742
      %v5975 = vadd.f32 %v5943, %v5744
      %v5976 = vadd.f32 %v5944, %v5747
      %v5977 = vadd.f32 %v5945, %v5749
      %v5978 = vadd.f32 %v5946, %v5752
      %v5979 = vadd.f32 %v5947, %v5754
      %v5980 = vld [vmem:[%s4] sm:$0x1]
      %v5982 = vperm.slane %v5980, 0
      %v5984 = vadd.f32 %v5948, %v5982
      %v5985 = vadd.f32 %v5949, %v5982
      %v5986 = vadd.f32 %v5950, %v5982
      %v5987 = vadd.f32 %v5951, %v5982
      %v5988 = vadd.f32 %v5952, %v5982
      %v5989 = vadd.f32 %v5953, %v5982
      %v5990 = vadd.f32 %v5954, %v5982
      %v5991 = vadd.f32 %v5955, %v5982
      %v5992 = vadd.f32 %v5956, %v5982
      %v5993 = vadd.f32 %v5957, %v5982
      %v5994 = vadd.f32 %v5958, %v5982
      %v5995 = vadd.f32 %v5959, %v5982
      %v5996 = vadd.f32 %v5960, %v5982
      %v5997 = vadd.f32 %v5961, %v5982
      %v5998 = vadd.f32 %v5962, %v5982
      %v5999 = vadd.f32 %v5963, %v5982
      %v6000 = vadd.f32 %v5964, %v5982
      %v6001 = vadd.f32 %v5965, %v5982
      %v6002 = vadd.f32 %v5966, %v5982
      %v6003 = vadd.f32 %v5967, %v5982
      %v6004 = vadd.f32 %v5968, %v5982
      %v6005 = vadd.f32 %v5969, %v5982
      %v6006 = vadd.f32 %v5970, %v5982
      %v6007 = vadd.f32 %v5971, %v5982
      %v6008 = vadd.f32 %v5972, %v5982
      %v6009 = vadd.f32 %v5973, %v5982
      %v6010 = vadd.f32 %v5974, %v5982
      %v6011 = vadd.f32 %v5975, %v5982
      %v6012 = vadd.f32 %v5976, %v5982
      %v6013 = vadd.f32 %v5977, %v5982
      %v6014 = vadd.f32 %v5978, %v5982
      %v6015 = vadd.f32 %v5979, %v5982
      %vm6016 = vcmp.ge.f32.partialorder %v5984, 0.0
      %vm6017 = vcmp.ge.f32.partialorder %v5985, 0.0
      %vm6018 = vcmp.ge.f32.partialorder %v5986, 0.0
      %vm6019 = vcmp.ge.f32.partialorder %v5987, 0.0
      %vm6020 = vcmp.ge.f32.partialorder %v5988, 0.0
      %vm6021 = vcmp.ge.f32.partialorder %v5989, 0.0
      %vm6022 = vcmp.ge.f32.partialorder %v5990, 0.0
      %vm6023 = vcmp.ge.f32.partialorder %v5991, 0.0
      %vm6024 = vcmp.ge.f32.partialorder %v5992, 0.0
      %vm6025 = vcmp.ge.f32.partialorder %v5993, 0.0
      %vm6026 = vcmp.ge.f32.partialorder %v5994, 0.0
      %vm6027 = vcmp.ge.f32.partialorder %v5995, 0.0
      %vm6028 = vcmp.ge.f32.partialorder %v5996, 0.0
      %vm6029 = vcmp.ge.f32.partialorder %v5997, 0.0
      %vm6030 = vcmp.ge.f32.partialorder %v5998, 0.0
      %vm6031 = vcmp.ge.f32.partialorder %v5999, 0.0
      %vm6032 = vcmp.ge.f32.partialorder %v6000, 0.0
      %vm6033 = vcmp.ge.f32.partialorder %v6001, 0.0
      %vm6034 = vcmp.ge.f32.partialorder %v6002, 0.0
      %vm6035 = vcmp.ge.f32.partialorder %v6003, 0.0
      %vm6036 = vcmp.ge.f32.partialorder %v6004, 0.0
      %vm6037 = vcmp.ge.f32.partialorder %v6005, 0.0
      %vm6038 = vcmp.ge.f32.partialorder %v6006, 0.0
      %vm6039 = vcmp.ge.f32.partialorder %v6007, 0.0
      %vm6040 = vcmp.ge.f32.partialorder %v6008, 0.0
      %vm6041 = vcmp.ge.f32.partialorder %v6009, 0.0
      %vm6042 = vcmp.ge.f32.partialorder %v6010, 0.0
      %vm6043 = vcmp.ge.f32.partialorder %v6011, 0.0
      %vm6044 = vcmp.ge.f32.partialorder %v6012, 0.0
      %vm6045 = vcmp.ge.f32.partialorder %v6013, 0.0
      %vm6046 = vcmp.ge.f32.partialorder %v6014, 0.0
      %vm6047 = vcmp.ge.f32.partialorder %v6015, 0.0
      %v6048 = vmul.f32 %v5984, 0.2
      %v6049 = vmul.f32 %v5985, 0.2
      %v6050 = vmul.f32 %v5986, 0.2
      %v6051 = vmul.f32 %v5987, 0.2
      %v6052 = vmul.f32 %v5988, 0.2
      %v6053 = vmul.f32 %v5989, 0.2
      %v6054 = vmul.f32 %v5990, 0.2
      %v6055 = vmul.f32 %v5991, 0.2
      %v6056 = vmul.f32 %v5992, 0.2
      %v6057 = vmul.f32 %v5993, 0.2
      %v6058 = vmul.f32 %v5994, 0.2
      %v6059 = vmul.f32 %v5995, 0.2
      %v6060 = vmul.f32 %v5996, 0.2
      %v6061 = vmul.f32 %v5997, 0.2
      %v6062 = vmul.f32 %v5998, 0.2
      %v6063 = vmul.f32 %v5999, 0.2
      %v6064 = vmul.f32 %v6000, 0.2
      %v6065 = vmul.f32 %v6001, 0.2
      %v6066 = vmul.f32 %v6002, 0.2
      %v6067 = vmul.f32 %v6003, 0.2
      %v6068 = vmul.f32 %v6004, 0.2
      %v6069 = vmul.f32 %v6005, 0.2
      %v6070 = vmul.f32 %v6006, 0.2
      %v6071 = vmul.f32 %v6007, 0.2
      %v6072 = vmul.f32 %v6008, 0.2
      %v6073 = vmul.f32 %v6009, 0.2
      %v6074 = vmul.f32 %v6010, 0.2
      %v6075 = vmul.f32 %v6011, 0.2
      %v6076 = vmul.f32 %v6012, 0.2
      %v6077 = vmul.f32 %v6013, 0.2
      %v6078 = vmul.f32 %v6014, 0.2
      %v6079 = vmul.f32 %v6015, 0.2
      %v6080 = vsel %vm6016, %v5984, %v6048
      %v6081 = vsel %vm6017, %v5985, %v6049
      %v6082 = vsel %vm6018, %v5986, %v6050
      %v6083 = vsel %vm6019, %v5987, %v6051
      %v6084 = vsel %vm6020, %v5988, %v6052
      %v6085 = vsel %vm6021, %v5989, %v6053
      %v6086 = vsel %vm6022, %v5990, %v6054
      %v6087 = vsel %vm6023, %v5991, %v6055
      %v6088 = vsel %vm6024, %v5992, %v6056
      %v6089 = vsel %vm6025, %v5993, %v6057
      %v6090 = vsel %vm6026, %v5994, %v6058
      %v6091 = vsel %vm6027, %v5995, %v6059
      %v6092 = vsel %vm6028, %v5996, %v6060
      %v6093 = vsel %vm6029, %v5997, %v6061
      %v6094 = vsel %vm6030, %v5998, %v6062
      %v6095 = vsel %vm6031, %v5999, %v6063
      %v6096 = vsel %vm6032, %v6000, %v6064
      %v6097 = vsel %vm6033, %v6001, %v6065
      %v6098 = vsel %vm6034, %v6002, %v6066
      %v6099 = vsel %vm6035, %v6003, %v6067
      %v6100 = vsel %vm6036, %v6004, %v6068
      %v6101 = vsel %vm6037, %v6005, %v6069
      %v6102 = vsel %vm6038, %v6006, %v6070
      %v6103 = vsel %vm6039, %v6007, %v6071
      %v6104 = vsel %vm6040, %v6008, %v6072
      %v6105 = vsel %vm6041, %v6009, %v6073
      %v6106 = vsel %vm6042, %v6010, %v6074
      %v6107 = vsel %vm6043, %v6011, %v6075
      %v6108 = vsel %vm6044, %v6012, %v6076
      %v6109 = vsel %vm6045, %v6013, %v6077
      %v6110 = vsel %vm6046, %v6014, %v6078
      %v6111 = vsel %vm6047, %v6015, %v6079
      %v6112 = vpack.c.bf16 %v6080, %v6080
      %v6113 = vpack.c.bf16 %v6081, %v6081
      %v6114 = vpack.c.bf16 %v6082, %v6082
      %v6115 = vpack.c.bf16 %v6083, %v6083
      %v6116 = vpack.c.bf16 %v6084, %v6084
      %v6117 = vpack.c.bf16 %v6085, %v6085
      %v6118 = vpack.c.bf16 %v6086, %v6086
      %v6119 = vpack.c.bf16 %v6087, %v6087
      %v6120 = vpack.c.bf16 %v6088, %v6088
      %v6121 = vpack.c.bf16 %v6089, %v6089
      %v6122 = vpack.c.bf16 %v6090, %v6090
      %v6123 = vpack.c.bf16 %v6091, %v6091
      %v6124 = vpack.c.bf16 %v6092, %v6092
      %v6125 = vpack.c.bf16 %v6093, %v6093
      %v6126 = vpack.c.bf16 %v6094, %v6094
      %v6127 = vpack.c.bf16 %v6095, %v6095
      %v6128 = vpack.c.bf16 %v6096, %v6096
      %v6129 = vpack.c.bf16 %v6097, %v6097
      %v6130 = vpack.c.bf16 %v6098, %v6098
      %v6131 = vpack.c.bf16 %v6099, %v6099
      %v6132 = vpack.c.bf16 %v6100, %v6100
      %v6133 = vpack.c.bf16 %v6101, %v6101
      %v6134 = vpack.c.bf16 %v6102, %v6102
      %v6135 = vpack.c.bf16 %v6103, %v6103
      %v6136 = vpack.c.bf16 %v6104, %v6104
      %v6137 = vpack.c.bf16 %v6105, %v6105
      %v6138 = vpack.c.bf16 %v6106, %v6106
      %v6139 = vpack.c.bf16 %v6107, %v6107
      %v6140 = vpack.c.bf16 %v6108, %v6108
      %v6141 = vpack.c.bf16 %v6109, %v6109
      %v6142 = vpack.c.bf16 %v6110, %v6110
      %v6143 = vpack.c.bf16 %v6111, %v6111
      %6144 = vst.msk [vmem:[%s364 + $0x8] sm:$0xf] %vm280, %v6112
      %6145 = vst.msk [vmem:[%s364 + $0xc] sm:$0xf] %vm280, %v6113
      %6146 = vst.msk [vmem:[%s364 + $0x20] sm:$0xf] %vm280, %v6114
      %6147 = vst.msk [vmem:[%s364 + $0x24] sm:$0xf] %vm280, %v6115
      %6148 = vst.msk [vmem:[%s364 + $0x38] sm:$0xf] %vm280, %v6116
      %6149 = vst.msk [vmem:[%s364 + $0x3c] sm:$0xf] %vm280, %v6117
      %6150 = vst.msk [vmem:[%s364 + $0x50] sm:$0xf] %vm280, %v6118
      %6151 = vst.msk [vmem:[%s364 + $0x54] sm:$0xf] %vm280, %v6119
      %6152 = vst.msk [vmem:[%s364 + $0x68] sm:$0xf] %vm280, %v6120
      %6153 = vst.msk [vmem:[%s364 + $0x6c] sm:$0xf] %vm280, %v6121
      %6154 = vst.msk [vmem:[%s364 + $0x80] sm:$0xf] %vm280, %v6122
      %6155 = vst.msk [vmem:[%s364 + $0x84] sm:$0xf] %vm280, %v6123
      %6156 = vst.msk [vmem:[%s364 + $0x98] sm:$0xf] %vm280, %v6124
      %6157 = vst.msk [vmem:[%s364 + $0x9c] sm:$0xf] %vm280, %v6125
      %6158 = vst.msk [vmem:[%s364 + $0xb0] sm:$0xf] %vm280, %v6126
      %6159 = vst.msk [vmem:[%s364 + $0xb4] sm:$0xf] %vm280, %v6127
      %6160 = vst.msk [vmem:[%s364 + $0xc8] sm:$0xf] %vm280, %v6128
      %6161 = vst.msk [vmem:[%s364 + $0xcc] sm:$0xf] %vm280, %v6129
      %6162 = vst.msk [vmem:[%s364 + $0xe0] sm:$0xf] %vm280, %v6130
      %6163 = vst.msk [vmem:[%s364 + $0xe4] sm:$0xf] %vm280, %v6131
      %6164 = vst.msk [vmem:[%s364 + $0xf8] sm:$0xf] %vm280, %v6132
      %6165 = vst.msk [vmem:[%s364 + $0xfc] sm:$0xf] %vm280, %v6133
      %6166 = vst.msk [vmem:[%s364 + $0x110] sm:$0xf] %vm280, %v6134
      %6167 = vst.msk [vmem:[%s364 + $0x114] sm:$0xf] %vm280, %v6135
      %6168 = vst.msk [vmem:[%s364 + $0x128] sm:$0xf] %vm280, %v6136
      %6169 = vst.msk [vmem:[%s364 + $0x12c] sm:$0xf] %vm280, %v6137
      %6170 = vst.msk [vmem:[%s364 + $0x140] sm:$0xf] %vm280, %v6138
      %6171 = vst.msk [vmem:[%s364 + $0x144] sm:$0xf] %vm280, %v6139
      %6172 = vst.msk [vmem:[%s364 + $0x158] sm:$0xf] %vm280, %v6140
      %6173 = vst.msk [vmem:[%s364 + $0x15c] sm:$0xf] %vm280, %v6141
      %6174 = vst.msk [vmem:[%s364 + $0x170] sm:$0xf] %vm280, %v6142
      %6175 = vst.msk [vmem:[%s364 + $0x174] sm:$0xf] %vm280, %v6143
      %v6176 = vld [vmem:[#allocation2 + $0x4] sm:$0x8]
      %v6177 = vld [vmem:[#allocation2 + $0x8] sm:$0xf]
      %v6178 = vld [vmem:[#allocation2 + $0xc] sm:$0xf]
      %v6179 = vld [vmem:[#allocation2 + $0x1c] sm:$0x8]
      %v6180 = vld [vmem:[#allocation2 + $0x20] sm:$0xf]
      %v6181 = vld [vmem:[#allocation2 + $0x24] sm:$0xf]
      %v6182 = vld [vmem:[#allocation2 + $0x34] sm:$0x8]
      %v6183 = vld [vmem:[#allocation2 + $0x38] sm:$0xf]
      %v6184 = vld [vmem:[#allocation2 + $0x3c] sm:$0xf]
      %v6185 = vld [vmem:[#allocation2 + $0x4c] sm:$0x8]
      %v6186 = vld [vmem:[#allocation2 + $0x50] sm:$0xf]
      %v6187 = vld [vmem:[#allocation2 + $0x54] sm:$0xf]
      %v6188 = vld [vmem:[#allocation2 + $0x64] sm:$0x8]
      %v6189 = vld [vmem:[#allocation2 + $0x68] sm:$0xf]
      %v6190 = vld [vmem:[#allocation2 + $0x6c] sm:$0xf]
      %v6191 = vld [vmem:[#allocation2 + $0x7c] sm:$0x8]
      %v6192 = vld [vmem:[#allocation2 + $0x80] sm:$0xf]
      %v6193 = vld [vmem:[#allocation2 + $0x84] sm:$0xf]
      %v6194 = vld [vmem:[#allocation2 + $0x94] sm:$0x8]
      %v6195 = vld [vmem:[#allocation2 + $0x98] sm:$0xf]
      %v6196 = vld [vmem:[#allocation2 + $0x9c] sm:$0xf]
      %v6197 = vld [vmem:[#allocation2 + $0xac] sm:$0x8]
      %v6198 = vld [vmem:[#allocation2 + $0xb0] sm:$0xf]
      %v6199 = vld [vmem:[#allocation2 + $0xb4] sm:$0xf]
      %v6200 = vld [vmem:[#allocation2 + $0xc4] sm:$0x8]
      %v6201 = vld [vmem:[#allocation2 + $0xc8] sm:$0xf]
      %v6202 = vld [vmem:[#allocation2 + $0xcc] sm:$0xf]
      %v6203 = vld [vmem:[#allocation2 + $0xdc] sm:$0x8]
      %v6204 = vld [vmem:[#allocation2 + $0xe0] sm:$0xf]
      %v6205 = vld [vmem:[#allocation2 + $0xe4] sm:$0xf]
      %v6206 = vld [vmem:[#allocation2 + $0xf4] sm:$0x8]
      %v6207 = vld [vmem:[#allocation2 + $0xf8] sm:$0xf]
      %v6208 = vld [vmem:[#allocation2 + $0xfc] sm:$0xf]
      %v6209 = vld [vmem:[#allocation2 + $0x10c] sm:$0x8]
      %v6210 = vld [vmem:[#allocation2 + $0x110] sm:$0xf]
      %v6211 = vld [vmem:[#allocation2 + $0x114] sm:$0xf]
      %v6212 = vld [vmem:[#allocation2 + $0x124] sm:$0x8]
      %v6213 = vld [vmem:[#allocation2 + $0x128] sm:$0xf]
      %v6214 = vld [vmem:[#allocation2 + $0x12c] sm:$0xf]
      %v6215 = vld [vmem:[#allocation2 + $0x13c] sm:$0x8]
      %v6216 = vld [vmem:[#allocation2 + $0x140] sm:$0xf]
      %v6217 = vld [vmem:[#allocation2 + $0x144] sm:$0xf]
      %v6218 = vld [vmem:[#allocation2 + $0x154] sm:$0x8]
      %v6219 = vld [vmem:[#allocation2 + $0x158] sm:$0xf]
      %v6220 = vld [vmem:[#allocation2 + $0x15c] sm:$0xf]
      %v6221 = vld [vmem:[#allocation2 + $0x16c] sm:$0x8]
      %v6222 = vld [vmem:[#allocation2 + $0x170] sm:$0xf]
      %v6223 = vld [vmem:[#allocation2 + $0x174] sm:$0xf]
      %v6224 = vld [vmem:[#allocation2 + $0x184] sm:$0x8]
      %v6225 = vld [vmem:[#allocation2 + $0x188] sm:$0xf]
      %v6226 = vld [vmem:[#allocation2 + $0x18c] sm:$0xf]
      %v6227 = vld [vmem:[#allocation2 + $0x19c] sm:$0x8]
      %v6228 = vld [vmem:[#allocation2 + $0x1a0] sm:$0xf]
      %v6229 = vld [vmem:[#allocation2 + $0x1a4] sm:$0xf]
      %v6231 = vshrl.u32 %v6176, 16
      %v6233 = vrot.slane %v6231, 7
      %v6234 = vrot.slane %v6233, 4
      %v6236 = vshrl.u32 %v6177, 16
      %v6238 = vrot.slane %v6236, 7
      %v6239 = vshll.u32 %v6177, 16
      %v6241 = vor.u32 %v6238, %v6239
      %v6242 = vsel %vm453, %v6234, %v6241
      %v6243 = vrot.slane %v6238, 4
      %v6245 = vshrl.u32 %v6178, 16
      %v6247 = vrot.slane %v6245, 7
      %v6248 = vshll.u32 %v6178, 16
      %v6250 = vor.u32 %v6247, %v6248
      %v6251 = vsel %vm453, %v6243, %v6250
      %v6253 = vshrl.u32 %v6179, 16
      %v6255 = vrot.slane %v6253, 7
      %v6256 = vrot.slane %v6255, 4
      %v6258 = vshrl.u32 %v6180, 16
      %v6260 = vrot.slane %v6258, 7
      %v6261 = vshll.u32 %v6180, 16
      %v6263 = vor.u32 %v6260, %v6261
      %v6264 = vsel %vm453, %v6256, %v6263
      %v6265 = vrot.slane %v6260, 4
      %v6267 = vshrl.u32 %v6181, 16
      %v6269 = vrot.slane %v6267, 7
      %v6270 = vshll.u32 %v6181, 16
      %v6272 = vor.u32 %v6269, %v6270
      %v6273 = vsel %vm453, %v6265, %v6272
      %v6275 = vshrl.u32 %v6182, 16
      %v6277 = vrot.slane %v6275, 7
      %v6278 = vrot.slane %v6277, 4
      %v6280 = vshrl.u32 %v6183, 16
      %v6282 = vrot.slane %v6280, 7
      %v6283 = vshll.u32 %v6183, 16
      %v6285 = vor.u32 %v6282, %v6283
      %v6286 = vsel %vm453, %v6278, %v6285
      %v6287 = vrot.slane %v6282, 4
      %v6289 = vshrl.u32 %v6184, 16
      %v6291 = vrot.slane %v6289, 7
      %v6292 = vshll.u32 %v6184, 16
      %v6294 = vor.u32 %v6291, %v6292
      %v6295 = vsel %vm453, %v6287, %v6294
      %v6297 = vshrl.u32 %v6185, 16
      %v6299 = vrot.slane %v6297, 7
      %v6300 = vrot.slane %v6299, 4
      %v6302 = vshrl.u32 %v6186, 16
      %v6304 = vrot.slane %v6302, 7
      %v6305 = vshll.u32 %v6186, 16
      %v6307 = vor.u32 %v6304, %v6305
      %v6308 = vsel %vm453, %v6300, %v6307
      %v6309 = vrot.slane %v6304, 4
      %v6311 = vshrl.u32 %v6187, 16
      %v6313 = vrot.slane %v6311, 7
      %v6314 = vshll.u32 %v6187, 16
      %v6316 = vor.u32 %v6313, %v6314
      %v6317 = vsel %vm453, %v6309, %v6316
      %v6319 = vshrl.u32 %v6188, 16
      %v6321 = vrot.slane %v6319, 7
      %v6322 = vrot.slane %v6321, 4
      %v6324 = vshrl.u32 %v6189, 16
      %v6326 = vrot.slane %v6324, 7
      %v6327 = vshll.u32 %v6189, 16
      %v6329 = vor.u32 %v6326, %v6327
      %v6330 = vsel %vm453, %v6322, %v6329
      %v6331 = vrot.slane %v6326, 4
      %v6333 = vshrl.u32 %v6190, 16
      %v6335 = vrot.slane %v6333, 7
      %v6336 = vshll.u32 %v6190, 16
      %v6338 = vor.u32 %v6335, %v6336
      %v6339 = vsel %vm453, %v6331, %v6338
      %v6341 = vshrl.u32 %v6191, 16
      %v6343 = vrot.slane %v6341, 7
      %v6344 = vrot.slane %v6343, 4
      %v6346 = vshrl.u32 %v6192, 16
      %v6348 = vrot.slane %v6346, 7
      %v6349 = vshll.u32 %v6192, 16
      %v6351 = vor.u32 %v6348, %v6349
      %v6352 = vsel %vm453, %v6344, %v6351
      %v6353 = vrot.slane %v6348, 4
      %v6355 = vshrl.u32 %v6193, 16
      %v6357 = vrot.slane %v6355, 7
      %v6358 = vshll.u32 %v6193, 16
      %v6360 = vor.u32 %v6357, %v6358
      %v6361 = vsel %vm453, %v6353, %v6360
      %v6363 = vshrl.u32 %v6194, 16
      %v6365 = vrot.slane %v6363, 7
      %v6366 = vrot.slane %v6365, 4
      %v6368 = vshrl.u32 %v6195, 16
      %v6370 = vrot.slane %v6368, 7
      %v6371 = vshll.u32 %v6195, 16
      %v6373 = vor.u32 %v6370, %v6371
      %v6374 = vsel %vm453, %v6366, %v6373
      %v6375 = vrot.slane %v6370, 4
      %v6377 = vshrl.u32 %v6196, 16
      %v6379 = vrot.slane %v6377, 7
      %v6380 = vshll.u32 %v6196, 16
      %v6382 = vor.u32 %v6379, %v6380
      %v6383 = vsel %vm453, %v6375, %v6382
      %v6385 = vshrl.u32 %v6197, 16
      %v6387 = vrot.slane %v6385, 7
      %v6388 = vrot.slane %v6387, 4
      %v6390 = vshrl.u32 %v6198, 16
      %v6392 = vrot.slane %v6390, 7
      %v6393 = vshll.u32 %v6198, 16
      %v6395 = vor.u32 %v6392, %v6393
      %v6396 = vsel %vm453, %v6388, %v6395
      %v6397 = vrot.slane %v6392, 4
      %v6399 = vshrl.u32 %v6199, 16
      %v6401 = vrot.slane %v6399, 7
      %v6402 = vshll.u32 %v6199, 16
      %v6404 = vor.u32 %v6401, %v6402
      %v6405 = vsel %vm453, %v6397, %v6404
      %v6407 = vshrl.u32 %v6200, 16
      %v6409 = vrot.slane %v6407, 7
      %v6410 = vrot.slane %v6409, 4
      %v6412 = vshrl.u32 %v6201, 16
      %v6414 = vrot.slane %v6412, 7
      %v6415 = vshll.u32 %v6201, 16
      %v6417 = vor.u32 %v6414, %v6415
      %v6418 = vsel %vm453, %v6410, %v6417
      %v6419 = vrot.slane %v6414, 4
      %v6421 = vshrl.u32 %v6202, 16
      %v6423 = vrot.slane %v6421, 7
      %v6424 = vshll.u32 %v6202, 16
      %v6426 = vor.u32 %v6423, %v6424
      %v6427 = vsel %vm453, %v6419, %v6426
      %v6429 = vshrl.u32 %v6203, 16
      %v6431 = vrot.slane %v6429, 7
      %v6432 = vrot.slane %v6431, 4
      %v6434 = vshrl.u32 %v6204, 16
      %v6436 = vrot.slane %v6434, 7
      %v6437 = vshll.u32 %v6204, 16
      %v6439 = vor.u32 %v6436, %v6437
      %v6440 = vsel %vm453, %v6432, %v6439
      %v6441 = vrot.slane %v6436, 4
      %v6443 = vshrl.u32 %v6205, 16
      %v6445 = vrot.slane %v6443, 7
      %v6446 = vshll.u32 %v6205, 16
      %v6448 = vor.u32 %v6445, %v6446
      %v6449 = vsel %vm453, %v6441, %v6448
      %v6451 = vshrl.u32 %v6206, 16
      %v6453 = vrot.slane %v6451, 7
      %v6454 = vrot.slane %v6453, 4
      %v6456 = vshrl.u32 %v6207, 16
      %v6458 = vrot.slane %v6456, 7
      %v6459 = vshll.u32 %v6207, 16
      %v6461 = vor.u32 %v6458, %v6459
      %v6462 = vsel %vm453, %v6454, %v6461
      %v6463 = vrot.slane %v6458, 4
      %v6465 = vshrl.u32 %v6208, 16
      %v6467 = vrot.slane %v6465, 7
      %v6468 = vshll.u32 %v6208, 16
      %v6470 = vor.u32 %v6467, %v6468
      %v6471 = vsel %vm453, %v6463, %v6470
      %v6473 = vshrl.u32 %v6209, 16
      %v6475 = vrot.slane %v6473, 7
      %v6476 = vrot.slane %v6475, 4
      %v6478 = vshrl.u32 %v6210, 16
      %v6480 = vrot.slane %v6478, 7
      %v6481 = vshll.u32 %v6210, 16
      %v6483 = vor.u32 %v6480, %v6481
      %v6484 = vsel %vm453, %v6476, %v6483
      %v6485 = vrot.slane %v6480, 4
      %v6487 = vshrl.u32 %v6211, 16
      %v6489 = vrot.slane %v6487, 7
      %v6490 = vshll.u32 %v6211, 16
      %v6492 = vor.u32 %v6489, %v6490
      %v6493 = vsel %vm453, %v6485, %v6492
      %v6495 = vshrl.u32 %v6212, 16
      %v6497 = vrot.slane %v6495, 7
      %v6498 = vrot.slane %v6497, 4
      %v6500 = vshrl.u32 %v6213, 16
      %v6502 = vrot.slane %v6500, 7
      %v6503 = vshll.u32 %v6213, 16
      %v6505 = vor.u32 %v6502, %v6503
      %v6506 = vsel %vm453, %v6498, %v6505
      %v6507 = vrot.slane %v6502, 4
      %v6509 = vshrl.u32 %v6214, 16
      %v6511 = vrot.slane %v6509, 7
      %v6512 = vshll.u32 %v6214, 16
      %v6514 = vor.u32 %v6511, %v6512
      %v6515 = vsel %vm453, %v6507, %v6514
      %v6517 = vshrl.u32 %v6215, 16
      %v6519 = vrot.slane %v6517, 7
      %v6520 = vrot.slane %v6519, 4
      %v6522 = vshrl.u32 %v6216, 16
      %v6524 = vrot.slane %v6522, 7
      %v6525 = vshll.u32 %v6216, 16
      %v6527 = vor.u32 %v6524, %v6525
      %v6528 = vsel %vm453, %v6520, %v6527
      %v6529 = vrot.slane %v6524, 4
      %v6531 = vshrl.u32 %v6217, 16
      %v6533 = vrot.slane %v6531, 7
      %v6534 = vshll.u32 %v6217, 16
      %v6536 = vor.u32 %v6533, %v6534
      %v6537 = vsel %vm453, %v6529, %v6536
      %v6539 = vshrl.u32 %v6218, 16
      %v6541 = vrot.slane %v6539, 7
      %v6542 = vrot.slane %v6541, 4
      %v6544 = vshrl.u32 %v6219, 16
      %v6546 = vrot.slane %v6544, 7
      %v6547 = vshll.u32 %v6219, 16
      %v6549 = vor.u32 %v6546, %v6547
      %v6550 = vsel %vm453, %v6542, %v6549
      %v6551 = vrot.slane %v6546, 4
      %v6553 = vshrl.u32 %v6220, 16
      %v6555 = vrot.slane %v6553, 7
      %v6556 = vshll.u32 %v6220, 16
      %v6558 = vor.u32 %v6555, %v6556
      %v6559 = vsel %vm453, %v6551, %v6558
      %v6561 = vshrl.u32 %v6221, 16
      %v6563 = vrot.slane %v6561, 7
      %v6564 = vrot.slane %v6563, 4
      %v6566 = vshrl.u32 %v6222, 16
      %v6568 = vrot.slane %v6566, 7
      %v6569 = vshll.u32 %v6222, 16
      %v6571 = vor.u32 %v6568, %v6569
      %v6572 = vsel %vm453, %v6564, %v6571
      %v6573 = vrot.slane %v6568, 4
      %v6575 = vshrl.u32 %v6223, 16
      %v6577 = vrot.slane %v6575, 7
      %v6578 = vshll.u32 %v6223, 16
      %v6580 = vor.u32 %v6577, %v6578
      %v6581 = vsel %vm453, %v6573, %v6580
      %v6583 = vshrl.u32 %v6224, 16
      %v6585 = vrot.slane %v6583, 7
      %v6586 = vrot.slane %v6585, 4
      %v6588 = vshrl.u32 %v6225, 16
      %v6590 = vrot.slane %v6588, 7
      %v6591 = vshll.u32 %v6225, 16
      %v6593 = vor.u32 %v6590, %v6591
      %v6594 = vsel %vm453, %v6586, %v6593
      %v6595 = vrot.slane %v6590, 4
      %v6597 = vshrl.u32 %v6226, 16
      %v6599 = vrot.slane %v6597, 7
      %v6600 = vshll.u32 %v6226, 16
      %v6602 = vor.u32 %v6599, %v6600
      %v6603 = vsel %vm453, %v6595, %v6602
      %v6605 = vshrl.u32 %v6227, 16
      %v6607 = vrot.slane %v6605, 7
      %v6608 = vrot.slane %v6607, 4
      %v6610 = vshrl.u32 %v6228, 16
      %v6612 = vrot.slane %v6610, 7
      %v6613 = vshll.u32 %v6228, 16
      %v6615 = vor.u32 %v6612, %v6613
      %v6616 = vsel %vm453, %v6608, %v6615
      %v6617 = vrot.slane %v6612, 4
      %v6619 = vshrl.u32 %v6229, 16
      %v6621 = vrot.slane %v6619, 7
      %v6622 = vshll.u32 %v6229, 16
      %v6624 = vor.u32 %v6621, %v6622
      %v6625 = vsel %vm453, %v6617, %v6624
      %v6626 = vld [vmem:[%s5] sm:$0xff]
      %v6627 = vld [vmem:[%s5 + $0x8] sm:$0xff]
      %v6628 = vld [vmem:[%s5 + $0x10] sm:$0xff]
      %v6629 = vld [vmem:[%s5 + $0x18] sm:$0xff]
      %v6630 = vld [vmem:[%s5 + $0x20] sm:$0xff]
      %v6631 = vld [vmem:[%s5 + $0x28] sm:$0xff]
      %v6632 = vld [vmem:[%s5 + $0x30] sm:$0xff]
      %v6633 = vld [vmem:[%s5 + $0x38] sm:$0xff]
      %v6634 = vunpack.c.l.b16 %v6242
      %v6635 = vunpack.c.l.b16 %v6251
      %v6636 = vunpack.c.l.b16 %v6264
      %v6637 = vunpack.c.l.b16 %v6273
      %v6638 = vunpack.c.l.b16 %v6286
      %v6639 = vunpack.c.l.b16 %v6295
      %v6640 = vunpack.c.l.b16 %v6308
      %v6641 = vunpack.c.l.b16 %v6317
      %v6642 = vunpack.c.l.b16 %v6330
      %v6643 = vunpack.c.l.b16 %v6339
      %v6644 = vunpack.c.l.b16 %v6352
      %v6645 = vunpack.c.l.b16 %v6361
      %v6646 = vunpack.c.l.b16 %v6374
      %v6647 = vunpack.c.l.b16 %v6383
      %v6648 = vunpack.c.l.b16 %v6396
      %v6649 = vunpack.c.l.b16 %v6405
      %v6650 = vunpack.c.l.b16 %v6418
      %v6651 = vunpack.c.l.b16 %v6427
      %v6652 = vunpack.c.l.b16 %v6440
      %v6653 = vunpack.c.l.b16 %v6449
      %v6654 = vunpack.c.l.b16 %v6462
      %v6655 = vunpack.c.l.b16 %v6471
      %v6656 = vunpack.c.l.b16 %v6484
      %v6657 = vunpack.c.l.b16 %v6493
      %v6658 = vunpack.c.l.b16 %v6506
      %v6659 = vunpack.c.l.b16 %v6515
      %v6660 = vunpack.c.l.b16 %v6528
      %v6661 = vunpack.c.l.b16 %v6537
      %v6662 = vunpack.c.l.b16 %v6550
      %v6663 = vunpack.c.l.b16 %v6559
      %v6664 = vunpack.c.l.b16 %v6572
      %v6665 = vunpack.c.l.b16 %v6581
      %v6666 = vunpack.c.l.b16 %v6594
      %v6667 = vunpack.c.l.b16 %v6603
      %v6668 = vunpack.c.l.b16 %v6616
      %v6669 = vunpack.c.l.b16 %v6625
      %v6670 = vpack.c.b16 %v6635, %v6634
      %v6671 = vpack.c.b16 %v6637, %v6636
      %v6672 = vpack.c.b16 %v6639, %v6638
      %v6673 = vpack.c.b16 %v6641, %v6640
      %v6674 = vpack.c.b16 %v6643, %v6642
      %v6675 = vpack.c.b16 %v6645, %v6644
      %v6676 = vpack.c.b16 %v6647, %v6646
      %v6677 = vpack.c.b16 %v6649, %v6648
      %v6678 = vpack.c.b16 %v6651, %v6650
      %v6679 = vpack.c.b16 %v6653, %v6652
      %v6680 = vpack.c.b16 %v6655, %v6654
      %v6681 = vpack.c.b16 %v6657, %v6656
      %v6682 = vpack.c.b16 %v6659, %v6658
      %v6683 = vpack.c.b16 %v6661, %v6660
      %v6684 = vpack.c.b16 %v6663, %v6662
      %v6685 = vpack.c.b16 %v6665, %v6664
      %v6686 = vpack.c.b16 %v6667, %v6666
      %v6687 = vpack.c.b16 %v6669, %v6668
      %v6696 = vunpack.c.l.b16 %v6626
      %v6697 = vunpack.c.h.b16 %v6626
      %v6698 = vunpack.c.l.b16 %v6627
      %v6699 = vunpack.c.h.b16 %v6627
      %v6700 = vunpack.c.l.b16 %v6628
      %v6701 = vunpack.c.h.b16 %v6628
      %v6702 = vunpack.c.l.b16 %v6629
      %v6703 = vunpack.c.h.b16 %v6629
      %v6704 = vunpack.c.l.b16 %v6630
      %v6705 = vunpack.c.h.b16 %v6630
      %v6706 = vunpack.c.l.b16 %v6631
      %v6707 = vunpack.c.h.b16 %v6631
      %v6708 = vunpack.c.l.b16 %v6632
      %v6709 = vunpack.c.h.b16 %v6632
      %v6710 = vunpack.c.l.b16 %v6633
      %v6711 = vunpack.c.h.b16 %v6633
      %v6712 = vpack.c.b16 %v6698, %v6696
      %v6713 = vpack.c.b16 %v6699, %v6697
      %v6714 = vpack.c.b16 %v6702, %v6700
      %v6715 = vpack.c.b16 %v6703, %v6701
      %v6716 = vpack.c.b16 %v6706, %v6704
      %v6717 = vpack.c.b16 %v6707, %v6705
      %v6718 = vpack.c.b16 %v6710, %v6708
      %v6719 = vpack.c.b16 %v6711, %v6709
      %v6729 = vsel %vm952, %v6670, 0
      %v6732 = vsel %vm952, %v6671, 0
      %v6735 = vsel %vm952, %v6672, 0
      %v6738 = vsel %vm952, %v6673, 0
      %v6741 = vsel %vm952, %v6674, 0
      %v6744 = vsel %vm952, %v6675, 0
      %v6747 = vsel %vm952, %v6676, 0
      %v6750 = vsel %vm952, %v6677, 0
      %v6753 = vsel %vm952, %v6678, 0
      %v6756 = vsel %vm952, %v6679, 0
      %v6759 = vsel %vm952, %v6680, 0
      %v6762 = vsel %vm952, %v6681, 0
      %v6765 = vsel %vm952, %v6682, 0
      %v6768 = vsel %vm952, %v6683, 0
      %v6771 = vsel %vm952, %v6684, 0
      %v6774 = vsel %vm952, %v6685, 0
      %v6777 = vsel %vm952, %v6686, 0
      %v6780 = vsel %vm952, %v6687, 0
      %6782 = vmatpush.bf16.msra.mxu0 0
      %6783 = vmatpush.bf16.msra.mxu0 0
      %6784 = vmatpush.bf16.msra.mxu0 0
      %6785 = vmatpush.bf16.msra.mxu0 0
      %6786 = vmatpush.bf16.msra.mxu0 %v6718
      %6787 = vmatpush.bf16.msra.mxu0 %v6716
      %6788 = vmatpush.bf16.msra.mxu0 %v6714
      %6789 = vmatpush.bf16.msra.mxu0 %v6712
      %6790 = vmatmul.bf16.gmra.mxu0 %v6729
      %v6791 = vpop.f32.mrf.mxu0
      %v6792 = vadd.f32 0.0, %v6791
      %v6793 = vpop.f32.mrf.mxu0
      %v6794 = vadd.f32 0.0, %v6793
      %6795 = vmatmul.bf16.gmra.mxu0 %v6732
      %v6796 = vpop.f32.mrf.mxu0
      %v6797 = vadd.f32 0.0, %v6796
      %v6798 = vpop.f32.mrf.mxu0
      %v6799 = vadd.f32 0.0, %v6798
      %6800 = vmatmul.bf16.gmra.mxu0 %v6735
      %v6801 = vpop.f32.mrf.mxu0
      %v6802 = vadd.f32 0.0, %v6801
      %v6803 = vpop.f32.mrf.mxu0
      %v6804 = vadd.f32 0.0, %v6803
      %6805 = vmatmul.bf16.gmra.mxu0 %v6738
      %v6806 = vpop.f32.mrf.mxu0
      %v6807 = vadd.f32 0.0, %v6806
      %v6808 = vpop.f32.mrf.mxu0
      %v6809 = vadd.f32 0.0, %v6808
      %6810 = vmatmul.bf16.gmra.mxu0 %v6741
      %v6811 = vpop.f32.mrf.mxu0
      %v6812 = vadd.f32 0.0, %v6811
      %v6813 = vpop.f32.mrf.mxu0
      %v6814 = vadd.f32 0.0, %v6813
      %6815 = vmatmul.bf16.gmra.mxu0 %v6744
      %v6816 = vpop.f32.mrf.mxu0
      %v6817 = vadd.f32 0.0, %v6816
      %v6818 = vpop.f32.mrf.mxu0
      %v6819 = vadd.f32 0.0, %v6818
      %6820 = vmatmul.bf16.gmra.mxu0 %v6747
      %v6821 = vpop.f32.mrf.mxu0
      %v6822 = vadd.f32 0.0, %v6821
      %v6823 = vpop.f32.mrf.mxu0
      %v6824 = vadd.f32 0.0, %v6823
      %6825 = vmatmul.bf16.gmra.mxu0 %v6750
      %v6826 = vpop.f32.mrf.mxu0
      %v6827 = vadd.f32 0.0, %v6826
      %v6828 = vpop.f32.mrf.mxu0
      %v6829 = vadd.f32 0.0, %v6828
      %6830 = vmatmul.bf16.gmra.mxu0 %v6753
      %v6831 = vpop.f32.mrf.mxu0
      %v6832 = vadd.f32 0.0, %v6831
      %v6833 = vpop.f32.mrf.mxu0
      %v6834 = vadd.f32 0.0, %v6833
      %6835 = vmatmul.bf16.gmra.mxu0 %v6756
      %v6836 = vpop.f32.mrf.mxu0
      %v6837 = vadd.f32 0.0, %v6836
      %v6838 = vpop.f32.mrf.mxu0
      %v6839 = vadd.f32 0.0, %v6838
      %6840 = vmatmul.bf16.gmra.mxu0 %v6759
      %v6841 = vpop.f32.mrf.mxu0
      %v6842 = vadd.f32 0.0, %v6841
      %v6843 = vpop.f32.mrf.mxu0
      %v6844 = vadd.f32 0.0, %v6843
      %6845 = vmatmul.bf16.gmra.mxu0 %v6762
      %v6846 = vpop.f32.mrf.mxu0
      %v6847 = vadd.f32 0.0, %v6846
      %v6848 = vpop.f32.mrf.mxu0
      %v6849 = vadd.f32 0.0, %v6848
      %6850 = vmatmul.bf16.gmra.mxu0 %v6765
      %v6851 = vpop.f32.mrf.mxu0
      %v6852 = vadd.f32 0.0, %v6851
      %v6853 = vpop.f32.mrf.mxu0
      %v6854 = vadd.f32 0.0, %v6853
      %6855 = vmatmul.bf16.gmra.mxu0 %v6768
      %v6856 = vpop.f32.mrf.mxu0
      %v6857 = vadd.f32 0.0, %v6856
      %v6858 = vpop.f32.mrf.mxu0
      %v6859 = vadd.f32 0.0, %v6858
      %6860 = vmatmul.bf16.gmra.mxu0 %v6771
      %v6861 = vpop.f32.mrf.mxu0
      %v6862 = vadd.f32 0.0, %v6861
      %v6863 = vpop.f32.mrf.mxu0
      %v6864 = vadd.f32 0.0, %v6863
      %6865 = vmatmul.bf16.gmra.mxu0 %v6774
      %v6866 = vpop.f32.mrf.mxu0
      %v6867 = vadd.f32 0.0, %v6866
      %v6868 = vpop.f32.mrf.mxu0
      %v6869 = vadd.f32 0.0, %v6868
      %6870 = vmatmul.bf16.gmra.mxu0 %v6777
      %v6871 = vpop.f32.mrf.mxu0
      %v6872 = vadd.f32 0.0, %v6871
      %v6873 = vpop.f32.mrf.mxu0
      %v6874 = vadd.f32 0.0, %v6873
      %6875 = vmatmul.bf16.gmra.mxu0 %v6780
      %v6876 = vpop.f32.mrf.mxu0
      %v6877 = vpop.f32.mrf.mxu0
      %6878 = vdwg.mxu0
      %6879 = vmatpush.bf16.msra.mxu0 0
      %6880 = vmatpush.bf16.msra.mxu0 0
      %6881 = vmatpush.bf16.msra.mxu0 0
      %6882 = vmatpush.bf16.msra.mxu0 0
      %6883 = vmatpush.bf16.msra.mxu0 %v6719
      %6884 = vmatpush.bf16.msra.mxu0 %v6717
      %6885 = vmatpush.bf16.msra.mxu0 %v6715
      %6886 = vmatpush.bf16.msra.mxu0 %v6713
      %6887 = vmatmul.bf16.gmra.mxu0 %v6729
      %v6888 = vpop.f32.mrf.mxu0
      %v6889 = vpop.f32.mrf.mxu0
      %6890 = vmatmul.bf16.gmra.mxu0 %v6732
      %v6891 = vpop.f32.mrf.mxu0
      %v6892 = vpop.f32.mrf.mxu0
      %6893 = vmatmul.bf16.gmra.mxu0 %v6735
      %v6894 = vpop.f32.mrf.mxu0
      %v6895 = vadd.f32 0.0, %v6894
      %v6896 = vpop.f32.mrf.mxu0
      %v6897 = vadd.f32 0.0, %v6896
      %6898 = vmatmul.bf16.gmra.mxu0 %v6738
      %v6899 = vpop.f32.mrf.mxu0
      %v6900 = vadd.f32 0.0, %v6899
      %v6901 = vpop.f32.mrf.mxu0
      %v6902 = vadd.f32 0.0, %v6901
      %6903 = vmatmul.bf16.gmra.mxu0 %v6741
      %v6904 = vpop.f32.mrf.mxu0
      %v6905 = vadd.f32 0.0, %v6904
      %v6906 = vpop.f32.mrf.mxu0
      %v6907 = vadd.f32 0.0, %v6906
      %6908 = vmatmul.bf16.gmra.mxu0 %v6744
      %v6909 = vpop.f32.mrf.mxu0
      %v6910 = vadd.f32 0.0, %v6909
      %v6911 = vpop.f32.mrf.mxu0
      %v6912 = vadd.f32 0.0, %v6911
      %6913 = vmatmul.bf16.gmra.mxu0 %v6747
      %v6914 = vpop.f32.mrf.mxu0
      %v6915 = vadd.f32 0.0, %v6914
      %v6916 = vpop.f32.mrf.mxu0
      %v6917 = vadd.f32 0.0, %v6916
      %6918 = vmatmul.bf16.gmra.mxu0 %v6750
      %v6919 = vpop.f32.mrf.mxu0
      %v6920 = vadd.f32 0.0, %v6919
      %v6921 = vpop.f32.mrf.mxu0
      %v6922 = vadd.f32 0.0, %v6921
      %6923 = vmatmul.bf16.gmra.mxu0 %v6753
      %v6924 = vpop.f32.mrf.mxu0
      %v6925 = vadd.f32 0.0, %v6924
      %v6926 = vpop.f32.mrf.mxu0
      %v6927 = vadd.f32 0.0, %v6926
      %6928 = vmatmul.bf16.gmra.mxu0 %v6756
      %v6929 = vpop.f32.mrf.mxu0
      %v6930 = vadd.f32 0.0, %v6929
      %v6931 = vpop.f32.mrf.mxu0
      %v6932 = vadd.f32 0.0, %v6931
      %6933 = vmatmul.bf16.gmra.mxu0 %v6759
      %v6934 = vpop.f32.mrf.mxu0
      %v6935 = vadd.f32 0.0, %v6934
      %v6936 = vpop.f32.mrf.mxu0
      %v6937 = vadd.f32 0.0, %v6936
      %6938 = vmatmul.bf16.gmra.mxu0 %v6762
      %v6939 = vpop.f32.mrf.mxu0
      %v6940 = vadd.f32 0.0, %v6939
      %v6941 = vpop.f32.mrf.mxu0
      %v6942 = vadd.f32 0.0, %v6941
      %6943 = vmatmul.bf16.gmra.mxu0 %v6765
      %v6944 = vpop.f32.mrf.mxu0
      %v6945 = vadd.f32 0.0, %v6944
      %v6946 = vpop.f32.mrf.mxu0
      %v6947 = vadd.f32 0.0, %v6946
      %6948 = vmatmul.bf16.gmra.mxu0 %v6768
      %v6949 = vpop.f32.mrf.mxu0
      %v6950 = vadd.f32 0.0, %v6949
      %v6951 = vpop.f32.mrf.mxu0
      %v6952 = vadd.f32 0.0, %v6951
      %6953 = vmatmul.bf16.gmra.mxu0 %v6771
      %v6954 = vpop.f32.mrf.mxu0
      %v6955 = vadd.f32 0.0, %v6954
      %v6956 = vpop.f32.mrf.mxu0
      %v6957 = vadd.f32 0.0, %v6956
      %6958 = vmatmul.bf16.gmra.mxu0 %v6774
      %v6959 = vpop.f32.mrf.mxu0
      %v6960 = vadd.f32 0.0, %v6959
      %v6961 = vpop.f32.mrf.mxu0
      %v6962 = vadd.f32 0.0, %v6961
      %6963 = vmatmul.bf16.gmra.mxu0 %v6777
      %v6964 = vpop.f32.mrf.mxu0
      %v6965 = vadd.f32 0.0, %v6964
      %v6966 = vpop.f32.mrf.mxu0
      %v6967 = vadd.f32 0.0, %v6966
      %6968 = vmatmul.bf16.gmra.mxu0 %v6780
      %v6969 = vpop.f32.mrf.mxu0
      %v6970 = vadd.f32 0.0, %v6969
      %v6971 = vpop.f32.mrf.mxu0
      %v6972 = vadd.f32 0.0, %v6971
      %6973 = vdwg.mxu0
      %v6974 = vadd.f32 %v6792, 0.0
      %v6975 = vadd.f32 %v6794, 0.0
      %v6976 = vadd.f32 %v6797, 0.0
      %v6977 = vadd.f32 %v6799, 0.0
      %v6978 = vadd.f32 %v6802, 0.0
      %v6979 = vadd.f32 %v6804, 0.0
      %v6980 = vadd.f32 %v6807, 0.0
      %v6981 = vadd.f32 %v6809, 0.0
      %v6982 = vadd.f32 %v6812, 0.0
      %v6983 = vadd.f32 %v6814, 0.0
      %v6984 = vadd.f32 %v6817, 0.0
      %v6985 = vadd.f32 %v6819, 0.0
      %v6986 = vadd.f32 %v6822, 0.0
      %v6987 = vadd.f32 %v6824, 0.0
      %v6988 = vadd.f32 %v6827, 0.0
      %v6989 = vadd.f32 %v6829, 0.0
      %v6990 = vadd.f32 %v6832, 0.0
      %v6991 = vadd.f32 %v6834, 0.0
      %v6992 = vadd.f32 %v6837, 0.0
      %v6993 = vadd.f32 %v6839, 0.0
      %v6994 = vadd.f32 %v6842, 0.0
      %v6995 = vadd.f32 %v6844, 0.0
      %v6996 = vadd.f32 %v6847, 0.0
      %v6997 = vadd.f32 %v6849, 0.0
      %v6998 = vadd.f32 %v6852, 0.0
      %v6999 = vadd.f32 %v6854, 0.0
      %v7000 = vadd.f32 %v6857, 0.0
      %v7001 = vadd.f32 %v6859, 0.0
      %v7002 = vadd.f32 %v6862, 0.0
      %v7003 = vadd.f32 %v6864, 0.0
      %v7004 = vadd.f32 %v6867, 0.0
      %v7005 = vadd.f32 %v6869, 0.0
      %7038 = vrot.lane.b32.xlu0 %v6797, 64
      %v7039 = vpop.permute.xlu0 %7038
      %7040 = vrot.lane.b32.xlu0 %v6799, 64
      %v7041 = vpop.permute.xlu0 %7040
      %7042 = vrot.lane.b32.xlu0 %v6802, 64
      %v7043 = vpop.permute.xlu0 %7042
      %7044 = vrot.lane.b32.xlu0 %v6804, 64
      %v7045 = vpop.permute.xlu0 %7044
      %7046 = vrot.lane.b32.xlu0 %v6807, 64
      %v7047 = vpop.permute.xlu0 %7046
      %7048 = vrot.lane.b32.xlu0 %v6809, 64
      %v7049 = vpop.permute.xlu0 %7048
      %7050 = vrot.lane.b32.xlu0 %v6812, 64
      %v7051 = vpop.permute.xlu0 %7050
      %7052 = vrot.lane.b32.xlu0 %v6814, 64
      %v7053 = vpop.permute.xlu0 %7052
      %7054 = vrot.lane.b32.xlu0 %v6817, 64
      %v7055 = vpop.permute.xlu0 %7054
      %7056 = vrot.lane.b32.xlu0 %v6819, 64
      %v7057 = vpop.permute.xlu0 %7056
      %7058 = vrot.lane.b32.xlu0 %v6822, 64
      %v7059 = vpop.permute.xlu0 %7058
      %7060 = vrot.lane.b32.xlu0 %v6824, 64
      %v7061 = vpop.permute.xlu0 %7060
      %7062 = vrot.lane.b32.xlu0 %v6827, 64
      %v7063 = vpop.permute.xlu0 %7062
      %7064 = vrot.lane.b32.xlu0 %v6829, 64
      %v7065 = vpop.permute.xlu0 %7064
      %7066 = vrot.lane.b32.xlu0 %v6832, 64
      %v7067 = vpop.permute.xlu0 %7066
      %7068 = vrot.lane.b32.xlu0 %v6834, 64
      %v7069 = vpop.permute.xlu0 %7068
      %7070 = vrot.lane.b32.xlu0 %v6837, 64
      %v7071 = vpop.permute.xlu0 %7070
      %7072 = vrot.lane.b32.xlu0 %v6839, 64
      %v7073 = vpop.permute.xlu0 %7072
      %7074 = vrot.lane.b32.xlu0 %v6842, 64
      %v7075 = vpop.permute.xlu0 %7074
      %7076 = vrot.lane.b32.xlu0 %v6844, 64
      %v7077 = vpop.permute.xlu0 %7076
      %7078 = vrot.lane.b32.xlu0 %v6847, 64
      %v7079 = vpop.permute.xlu0 %7078
      %7080 = vrot.lane.b32.xlu0 %v6849, 64
      %v7081 = vpop.permute.xlu0 %7080
      %7082 = vrot.lane.b32.xlu0 %v6852, 64
      %v7083 = vpop.permute.xlu0 %7082
      %7084 = vrot.lane.b32.xlu0 %v6854, 64
      %v7085 = vpop.permute.xlu0 %7084
      %7086 = vrot.lane.b32.xlu0 %v6857, 64
      %v7087 = vpop.permute.xlu0 %7086
      %7088 = vrot.lane.b32.xlu0 %v6859, 64
      %v7089 = vpop.permute.xlu0 %7088
      %7090 = vrot.lane.b32.xlu0 %v6862, 64
      %v7091 = vpop.permute.xlu0 %7090
      %7092 = vrot.lane.b32.xlu0 %v6864, 64
      %v7093 = vpop.permute.xlu0 %7092
      %7094 = vrot.lane.b32.xlu0 %v6867, 64
      %v7095 = vpop.permute.xlu0 %7094
      %7096 = vrot.lane.b32.xlu0 %v6869, 64
      %v7097 = vpop.permute.xlu0 %7096
      %7098 = vrot.lane.b32.xlu0 %v6872, 64
      %v7099 = vpop.permute.xlu0 %7098
      %7100 = vrot.lane.b32.xlu0 %v6874, 64
      %v7101 = vpop.permute.xlu0 %7100
      %v7134 = vadd.f32 %v6974, %v7039
      %v7135 = vadd.f32 %v6975, %v7041
      %v7136 = vadd.f32 %v6976, %v7043
      %v7137 = vadd.f32 %v6977, %v7045
      %v7138 = vadd.f32 %v6978, %v7047
      %v7139 = vadd.f32 %v6979, %v7049
      %v7140 = vadd.f32 %v6980, %v7051
      %v7141 = vadd.f32 %v6981, %v7053
      %v7142 = vadd.f32 %v6982, %v7055
      %v7143 = vadd.f32 %v6983, %v7057
      %v7144 = vadd.f32 %v6984, %v7059
      %v7145 = vadd.f32 %v6985, %v7061
      %v7146 = vadd.f32 %v6986, %v7063
      %v7147 = vadd.f32 %v6987, %v7065
      %v7148 = vadd.f32 %v6988, %v7067
      %v7149 = vadd.f32 %v6989, %v7069
      %v7150 = vadd.f32 %v6990, %v7071
      %v7151 = vadd.f32 %v6991, %v7073
      %v7152 = vadd.f32 %v6992, %v7075
      %v7153 = vadd.f32 %v6993, %v7077
      %v7154 = vadd.f32 %v6994, %v7079
      %v7155 = vadd.f32 %v6995, %v7081
      %v7156 = vadd.f32 %v6996, %v7083
      %v7157 = vadd.f32 %v6997, %v7085
      %v7158 = vadd.f32 %v6998, %v7087
      %v7159 = vadd.f32 %v6999, %v7089
      %v7160 = vadd.f32 %v7000, %v7091
      %v7161 = vadd.f32 %v7001, %v7093
      %v7162 = vadd.f32 %v7002, %v7095
      %v7163 = vadd.f32 %v7003, %v7097
      %v7164 = vadd.f32 %v7004, %v7099
      %v7165 = vadd.f32 %v7005, %v7101
      %v7166 = vadd.f32 %v7134, %v6895
      %v7167 = vadd.f32 %v7135, %v6897
      %v7168 = vadd.f32 %v7136, %v6900
      %v7169 = vadd.f32 %v7137, %v6902
      %v7170 = vadd.f32 %v7138, %v6905
      %v7171 = vadd.f32 %v7139, %v6907
      %v7172 = vadd.f32 %v7140, %v6910
      %v7173 = vadd.f32 %v7141, %v6912
      %v7174 = vadd.f32 %v7142, %v6915
      %v7175 = vadd.f32 %v7143, %v6917
      %v7176 = vadd.f32 %v7144, %v6920
      %v7177 = vadd.f32 %v7145, %v6922
      %v7178 = vadd.f32 %v7146, %v6925
      %v7179 = vadd.f32 %v7147, %v6927
      %v7180 = vadd.f32 %v7148, %v6930
      %v7181 = vadd.f32 %v7149, %v6932
      %v7182 = vadd.f32 %v7150, %v6935
      %v7183 = vadd.f32 %v7151, %v6937
      %v7184 = vadd.f32 %v7152, %v6940
      %v7185 = vadd.f32 %v7153, %v6942
      %v7186 = vadd.f32 %v7154, %v6945
      %v7187 = vadd.f32 %v7155, %v6947
      %v7188 = vadd.f32 %v7156, %v6950
      %v7189 = vadd.f32 %v7157, %v6952
      %v7190 = vadd.f32 %v7158, %v6955
      %v7191 = vadd.f32 %v7159, %v6957
      %v7192 = vadd.f32 %v7160, %v6960
      %v7193 = vadd.f32 %v7161, %v6962
      %v7194 = vadd.f32 %v7162, %v6965
      %v7195 = vadd.f32 %v7163, %v6967
      %v7196 = vadd.f32 %v7164, %v6970
      %v7197 = vadd.f32 %v7165, %v6972
      %s7198 = scalar_lea.vmem %s5, 64
      %v7199 = vld [vmem:[%s7198] sm:$0xff]
      %v7200 = vld [vmem:[%s7198 + $0x8] sm:$0xff]
      %v7201 = vld [vmem:[%s7198 + $0x10] sm:$0xff]
      %v7202 = vld [vmem:[%s7198 + $0x18] sm:$0xff]
      %v7203 = vld [vmem:[%s7198 + $0x20] sm:$0xff]
      %v7204 = vld [vmem:[%s7198 + $0x28] sm:$0xff]
      %v7205 = vld [vmem:[%s7198 + $0x30] sm:$0xff]
      %v7206 = vld [vmem:[%s7198 + $0x38] sm:$0xff]
      %v7243 = vunpack.c.l.b16 %v6177
      %v7244 = vunpack.c.l.b16 %v6178
      %v7245 = vunpack.c.l.b16 %v6180
      %v7246 = vunpack.c.l.b16 %v6181
      %v7247 = vunpack.c.l.b16 %v6183
      %v7248 = vunpack.c.l.b16 %v6184
      %v7249 = vunpack.c.l.b16 %v6186
      %v7250 = vunpack.c.l.b16 %v6187
      %v7251 = vunpack.c.l.b16 %v6189
      %v7252 = vunpack.c.l.b16 %v6190
      %v7253 = vunpack.c.l.b16 %v6192
      %v7254 = vunpack.c.l.b16 %v6193
      %v7255 = vunpack.c.l.b16 %v6195
      %v7256 = vunpack.c.l.b16 %v6196
      %v7257 = vunpack.c.l.b16 %v6198
      %v7258 = vunpack.c.l.b16 %v6199
      %v7259 = vunpack.c.l.b16 %v6201
      %v7260 = vunpack.c.l.b16 %v6202
      %v7261 = vunpack.c.l.b16 %v6204
      %v7262 = vunpack.c.l.b16 %v6205
      %v7263 = vunpack.c.l.b16 %v6207
      %v7264 = vunpack.c.l.b16 %v6208
      %v7265 = vunpack.c.l.b16 %v6210
      %v7266 = vunpack.c.l.b16 %v6211
      %v7267 = vunpack.c.l.b16 %v6213
      %v7268 = vunpack.c.l.b16 %v6214
      %v7269 = vunpack.c.l.b16 %v6216
      %v7270 = vunpack.c.l.b16 %v6217
      %v7271 = vunpack.c.l.b16 %v6219
      %v7272 = vunpack.c.l.b16 %v6220
      %v7273 = vunpack.c.l.b16 %v6222
      %v7274 = vunpack.c.l.b16 %v6223
      %v7275 = vunpack.c.l.b16 %v6225
      %v7276 = vunpack.c.l.b16 %v6226
      %v7277 = vunpack.c.l.b16 %v6228
      %v7278 = vunpack.c.l.b16 %v6229
      %v7279 = vpack.c.b16 %v7244, %v7243
      %v7280 = vpack.c.b16 %v7246, %v7245
      %v7281 = vpack.c.b16 %v7248, %v7247
      %v7282 = vpack.c.b16 %v7250, %v7249
      %v7283 = vpack.c.b16 %v7252, %v7251
      %v7284 = vpack.c.b16 %v7254, %v7253
      %v7285 = vpack.c.b16 %v7256, %v7255
      %v7286 = vpack.c.b16 %v7258, %v7257
      %v7287 = vpack.c.b16 %v7260, %v7259
      %v7288 = vpack.c.b16 %v7262, %v7261
      %v7289 = vpack.c.b16 %v7264, %v7263
      %v7290 = vpack.c.b16 %v7266, %v7265
      %v7291 = vpack.c.b16 %v7268, %v7267
      %v7292 = vpack.c.b16 %v7270, %v7269
      %v7293 = vpack.c.b16 %v7272, %v7271
      %v7294 = vpack.c.b16 %v7274, %v7273
      %v7295 = vpack.c.b16 %v7276, %v7275
      %v7296 = vpack.c.b16 %v7278, %v7277
      %v7305 = vunpack.c.l.b16 %v7199
      %v7306 = vunpack.c.h.b16 %v7199
      %v7307 = vunpack.c.l.b16 %v7200
      %v7308 = vunpack.c.h.b16 %v7200
      %v7309 = vunpack.c.l.b16 %v7201
      %v7310 = vunpack.c.h.b16 %v7201
      %v7311 = vunpack.c.l.b16 %v7202
      %v7312 = vunpack.c.h.b16 %v7202
      %v7313 = vunpack.c.l.b16 %v7203
      %v7314 = vunpack.c.h.b16 %v7203
      %v7315 = vunpack.c.l.b16 %v7204
      %v7316 = vunpack.c.h.b16 %v7204
      %v7317 = vunpack.c.l.b16 %v7205
      %v7318 = vunpack.c.h.b16 %v7205
      %v7319 = vunpack.c.l.b16 %v7206
      %v7320 = vunpack.c.h.b16 %v7206
      %v7321 = vpack.c.b16 %v7307, %v7305
      %v7322 = vpack.c.b16 %v7308, %v7306
      %v7323 = vpack.c.b16 %v7311, %v7309
      %v7324 = vpack.c.b16 %v7312, %v7310
      %v7325 = vpack.c.b16 %v7315, %v7313
      %v7326 = vpack.c.b16 %v7316, %v7314
      %v7327 = vpack.c.b16 %v7319, %v7317
      %v7328 = vpack.c.b16 %v7320, %v7318
      %v7338 = vsel %vm952, %v7279, 0
      %v7341 = vsel %vm952, %v7280, 0
      %v7344 = vsel %vm952, %v7281, 0
      %v7347 = vsel %vm952, %v7282, 0
      %v7350 = vsel %vm952, %v7283, 0
      %v7353 = vsel %vm952, %v7284, 0
      %v7356 = vsel %vm952, %v7285, 0
      %v7359 = vsel %vm952, %v7286, 0
      %v7362 = vsel %vm952, %v7287, 0
      %v7365 = vsel %vm952, %v7288, 0
      %v7368 = vsel %vm952, %v7289, 0
      %v7371 = vsel %vm952, %v7290, 0
      %v7374 = vsel %vm952, %v7291, 0
      %v7377 = vsel %vm952, %v7292, 0
      %v7380 = vsel %vm952, %v7293, 0
      %v7383 = vsel %vm952, %v7294, 0
      %v7386 = vsel %vm952, %v7295, 0
      %v7389 = vsel %vm952, %v7296, 0
      %7391 = vmatpush.bf16.msra.mxu0 0
      %7392 = vmatpush.bf16.msra.mxu0 0
      %7393 = vmatpush.bf16.msra.mxu0 0
      %7394 = vmatpush.bf16.msra.mxu0 0
      %7395 = vmatpush.bf16.msra.mxu0 %v7327
      %7396 = vmatpush.bf16.msra.mxu0 %v7325
      %7397 = vmatpush.bf16.msra.mxu0 %v7323
      %7398 = vmatpush.bf16.msra.mxu0 %v7321
      %7399 = vmatmul.bf16.gmra.mxu0 %v7338
      %v7400 = vpop.f32.mrf.mxu0
      %v7401 = vadd.f32 0.0, %v7400
      %v7402 = vpop.f32.mrf.mxu0
      %v7403 = vadd.f32 0.0, %v7402
      %7404 = vmatmul.bf16.gmra.mxu0 %v7341
      %v7405 = vpop.f32.mrf.mxu0
      %v7406 = vadd.f32 0.0, %v7405
      %v7407 = vpop.f32.mrf.mxu0
      %v7408 = vadd.f32 0.0, %v7407
      %7409 = vmatmul.bf16.gmra.mxu0 %v7344
      %v7410 = vpop.f32.mrf.mxu0
      %v7411 = vadd.f32 0.0, %v7410
      %v7412 = vpop.f32.mrf.mxu0
      %v7413 = vadd.f32 0.0, %v7412
      %7414 = vmatmul.bf16.gmra.mxu0 %v7347
      %v7415 = vpop.f32.mrf.mxu0
      %v7416 = vadd.f32 0.0, %v7415
      %v7417 = vpop.f32.mrf.mxu0
      %v7418 = vadd.f32 0.0, %v7417
      %7419 = vmatmul.bf16.gmra.mxu0 %v7350
      %v7420 = vpop.f32.mrf.mxu0
      %v7421 = vadd.f32 0.0, %v7420
      %v7422 = vpop.f32.mrf.mxu0
      %v7423 = vadd.f32 0.0, %v7422
      %7424 = vmatmul.bf16.gmra.mxu0 %v7353
      %v7425 = vpop.f32.mrf.mxu0
      %v7426 = vadd.f32 0.0, %v7425
      %v7427 = vpop.f32.mrf.mxu0
      %v7428 = vadd.f32 0.0, %v7427
      %7429 = vmatmul.bf16.gmra.mxu0 %v7356
      %v7430 = vpop.f32.mrf.mxu0
      %v7431 = vadd.f32 0.0, %v7430
      %v7432 = vpop.f32.mrf.mxu0
      %v7433 = vadd.f32 0.0, %v7432
      %7434 = vmatmul.bf16.gmra.mxu0 %v7359
      %v7435 = vpop.f32.mrf.mxu0
      %v7436 = vadd.f32 0.0, %v7435
      %v7437 = vpop.f32.mrf.mxu0
      %v7438 = vadd.f32 0.0, %v7437
      %7439 = vmatmul.bf16.gmra.mxu0 %v7362
      %v7440 = vpop.f32.mrf.mxu0
      %v7441 = vadd.f32 0.0, %v7440
      %v7442 = vpop.f32.mrf.mxu0
      %v7443 = vadd.f32 0.0, %v7442
      %7444 = vmatmul.bf16.gmra.mxu0 %v7365
      %v7445 = vpop.f32.mrf.mxu0
      %v7446 = vadd.f32 0.0, %v7445
      %v7447 = vpop.f32.mrf.mxu0
      %v7448 = vadd.f32 0.0, %v7447
      %7449 = vmatmul.bf16.gmra.mxu0 %v7368
      %v7450 = vpop.f32.mrf.mxu0
      %v7451 = vadd.f32 0.0, %v7450
      %v7452 = vpop.f32.mrf.mxu0
      %v7453 = vadd.f32 0.0, %v7452
      %7454 = vmatmul.bf16.gmra.mxu0 %v7371
      %v7455 = vpop.f32.mrf.mxu0
      %v7456 = vadd.f32 0.0, %v7455
      %v7457 = vpop.f32.mrf.mxu0
      %v7458 = vadd.f32 0.0, %v7457
      %7459 = vmatmul.bf16.gmra.mxu0 %v7374
      %v7460 = vpop.f32.mrf.mxu0
      %v7461 = vadd.f32 0.0, %v7460
      %v7462 = vpop.f32.mrf.mxu0
      %v7463 = vadd.f32 0.0, %v7462
      %7464 = vmatmul.bf16.gmra.mxu0 %v7377
      %v7465 = vpop.f32.mrf.mxu0
      %v7466 = vadd.f32 0.0, %v7465
      %v7467 = vpop.f32.mrf.mxu0
      %v7468 = vadd.f32 0.0, %v7467
      %7469 = vmatmul.bf16.gmra.mxu0 %v7380
      %v7470 = vpop.f32.mrf.mxu0
      %v7471 = vadd.f32 0.0, %v7470
      %v7472 = vpop.f32.mrf.mxu0
      %v7473 = vadd.f32 0.0, %v7472
      %7474 = vmatmul.bf16.gmra.mxu0 %v7383
      %v7475 = vpop.f32.mrf.mxu0
      %v7476 = vadd.f32 0.0, %v7475
      %v7477 = vpop.f32.mrf.mxu0
      %v7478 = vadd.f32 0.0, %v7477
      %7479 = vmatmul.bf16.gmra.mxu0 %v7386
      %v7480 = vpop.f32.mrf.mxu0
      %v7481 = vadd.f32 0.0, %v7480
      %v7482 = vpop.f32.mrf.mxu0
      %v7483 = vadd.f32 0.0, %v7482
      %7484 = vmatmul.bf16.gmra.mxu0 %v7389
      %v7485 = vpop.f32.mrf.mxu0
      %v7486 = vpop.f32.mrf.mxu0
      %7487 = vdwg.mxu0
      %7488 = vmatpush.bf16.msra.mxu0 0
      %7489 = vmatpush.bf16.msra.mxu0 0
      %7490 = vmatpush.bf16.msra.mxu0 0
      %7491 = vmatpush.bf16.msra.mxu0 0
      %7492 = vmatpush.bf16.msra.mxu0 %v7328
      %7493 = vmatpush.bf16.msra.mxu0 %v7326
      %7494 = vmatpush.bf16.msra.mxu0 %v7324
      %7495 = vmatpush.bf16.msra.mxu0 %v7322
      %7496 = vmatmul.bf16.gmra.mxu0 %v7338
      %v7497 = vpop.f32.mrf.mxu0
      %v7498 = vpop.f32.mrf.mxu0
      %7499 = vmatmul.bf16.gmra.mxu0 %v7341
      %v7500 = vpop.f32.mrf.mxu0
      %v7501 = vpop.f32.mrf.mxu0
      %7502 = vmatmul.bf16.gmra.mxu0 %v7344
      %v7503 = vpop.f32.mrf.mxu0
      %v7504 = vadd.f32 0.0, %v7503
      %v7505 = vpop.f32.mrf.mxu0
      %v7506 = vadd.f32 0.0, %v7505
      %7507 = vmatmul.bf16.gmra.mxu0 %v7347
      %v7508 = vpop.f32.mrf.mxu0
      %v7509 = vadd.f32 0.0, %v7508
      %v7510 = vpop.f32.mrf.mxu0
      %v7511 = vadd.f32 0.0, %v7510
      %7512 = vmatmul.bf16.gmra.mxu0 %v7350
      %v7513 = vpop.f32.mrf.mxu0
      %v7514 = vadd.f32 0.0, %v7513
      %v7515 = vpop.f32.mrf.mxu0
      %v7516 = vadd.f32 0.0, %v7515
      %7517 = vmatmul.bf16.gmra.mxu0 %v7353
      %v7518 = vpop.f32.mrf.mxu0
      %v7519 = vadd.f32 0.0, %v7518
      %v7520 = vpop.f32.mrf.mxu0
      %v7521 = vadd.f32 0.0, %v7520
      %7522 = vmatmul.bf16.gmra.mxu0 %v7356
      %v7523 = vpop.f32.mrf.mxu0
      %v7524 = vadd.f32 0.0, %v7523
      %v7525 = vpop.f32.mrf.mxu0
      %v7526 = vadd.f32 0.0, %v7525
      %7527 = vmatmul.bf16.gmra.mxu0 %v7359
      %v7528 = vpop.f32.mrf.mxu0
      %v7529 = vadd.f32 0.0, %v7528
      %v7530 = vpop.f32.mrf.mxu0
      %v7531 = vadd.f32 0.0, %v7530
      %7532 = vmatmul.bf16.gmra.mxu0 %v7362
      %v7533 = vpop.f32.mrf.mxu0
      %v7534 = vadd.f32 0.0, %v7533
      %v7535 = vpop.f32.mrf.mxu0
      %v7536 = vadd.f32 0.0, %v7535
      %7537 = vmatmul.bf16.gmra.mxu0 %v7365
      %v7538 = vpop.f32.mrf.mxu0
      %v7539 = vadd.f32 0.0, %v7538
      %v7540 = vpop.f32.mrf.mxu0
      %v7541 = vadd.f32 0.0, %v7540
      %7542 = vmatmul.bf16.gmra.mxu0 %v7368
      %v7543 = vpop.f32.mrf.mxu0
      %v7544 = vadd.f32 0.0, %v7543
      %v7545 = vpop.f32.mrf.mxu0
      %v7546 = vadd.f32 0.0, %v7545
      %7547 = vmatmul.bf16.gmra.mxu0 %v7371
      %v7548 = vpop.f32.mrf.mxu0
      %v7549 = vadd.f32 0.0, %v7548
      %v7550 = vpop.f32.mrf.mxu0
      %v7551 = vadd.f32 0.0, %v7550
      %7552 = vmatmul.bf16.gmra.mxu0 %v7374
      %v7553 = vpop.f32.mrf.mxu0
      %v7554 = vadd.f32 0.0, %v7553
      %v7555 = vpop.f32.mrf.mxu0
      %v7556 = vadd.f32 0.0, %v7555
      %7557 = vmatmul.bf16.gmra.mxu0 %v7377
      %v7558 = vpop.f32.mrf.mxu0
      %v7559 = vadd.f32 0.0, %v7558
      %v7560 = vpop.f32.mrf.mxu0
      %v7561 = vadd.f32 0.0, %v7560
      %7562 = vmatmul.bf16.gmra.mxu0 %v7380
      %v7563 = vpop.f32.mrf.mxu0
      %v7564 = vadd.f32 0.0, %v7563
      %v7565 = vpop.f32.mrf.mxu0
      %v7566 = vadd.f32 0.0, %v7565
      %7567 = vmatmul.bf16.gmra.mxu0 %v7383
      %v7568 = vpop.f32.mrf.mxu0
      %v7569 = vadd.f32 0.0, %v7568
      %v7570 = vpop.f32.mrf.mxu0
      %v7571 = vadd.f32 0.0, %v7570
      %7572 = vmatmul.bf16.gmra.mxu0 %v7386
      %v7573 = vpop.f32.mrf.mxu0
      %v7574 = vadd.f32 0.0, %v7573
      %v7575 = vpop.f32.mrf.mxu0
      %v7576 = vadd.f32 0.0, %v7575
      %7577 = vmatmul.bf16.gmra.mxu0 %v7389
      %v7578 = vpop.f32.mrf.mxu0
      %v7579 = vadd.f32 0.0, %v7578
      %v7580 = vpop.f32.mrf.mxu0
      %v7581 = vadd.f32 0.0, %v7580
      %7582 = vdwg.mxu0
      %v7583 = vadd.f32 %v7166, %v7401
      %v7584 = vadd.f32 %v7167, %v7403
      %v7585 = vadd.f32 %v7168, %v7406
      %v7586 = vadd.f32 %v7169, %v7408
      %v7587 = vadd.f32 %v7170, %v7411
      %v7588 = vadd.f32 %v7171, %v7413
      %v7589 = vadd.f32 %v7172, %v7416
      %v7590 = vadd.f32 %v7173, %v7418
      %v7591 = vadd.f32 %v7174, %v7421
      %v7592 = vadd.f32 %v7175, %v7423
      %v7593 = vadd.f32 %v7176, %v7426
      %v7594 = vadd.f32 %v7177, %v7428
      %v7595 = vadd.f32 %v7178, %v7431
      %v7596 = vadd.f32 %v7179, %v7433
      %v7597 = vadd.f32 %v7180, %v7436
      %v7598 = vadd.f32 %v7181, %v7438
      %v7599 = vadd.f32 %v7182, %v7441
      %v7600 = vadd.f32 %v7183, %v7443
      %v7601 = vadd.f32 %v7184, %v7446
      %v7602 = vadd.f32 %v7185, %v7448
      %v7603 = vadd.f32 %v7186, %v7451
      %v7604 = vadd.f32 %v7187, %v7453
      %v7605 = vadd.f32 %v7188, %v7456
      %v7606 = vadd.f32 %v7189, %v7458
      %v7607 = vadd.f32 %v7190, %v7461
      %v7608 = vadd.f32 %v7191, %v7463
      %v7609 = vadd.f32 %v7192, %v7466
      %v7610 = vadd.f32 %v7193, %v7468
      %v7611 = vadd.f32 %v7194, %v7471
      %v7612 = vadd.f32 %v7195, %v7473
      %v7613 = vadd.f32 %v7196, %v7476
      %v7614 = vadd.f32 %v7197, %v7478
      %7647 = vrot.lane.b32.xlu0 %v7406, 64
      %v7648 = vpop.permute.xlu0 %7647
      %7649 = vrot.lane.b32.xlu0 %v7408, 64
      %v7650 = vpop.permute.xlu0 %7649
      %7651 = vrot.lane.b32.xlu0 %v7411, 64
      %v7652 = vpop.permute.xlu0 %7651
      %7653 = vrot.lane.b32.xlu0 %v7413, 64
      %v7654 = vpop.permute.xlu0 %7653
      %7655 = vrot.lane.b32.xlu0 %v7416, 64
      %v7656 = vpop.permute.xlu0 %7655
      %7657 = vrot.lane.b32.xlu0 %v7418, 64
      %v7658 = vpop.permute.xlu0 %7657
      %7659 = vrot.lane.b32.xlu0 %v7421, 64
      %v7660 = vpop.permute.xlu0 %7659
      %7661 = vrot.lane.b32.xlu0 %v7423, 64
      %v7662 = vpop.permute.xlu0 %7661
      %7663 = vrot.lane.b32.xlu0 %v7426, 64
      %v7664 = vpop.permute.xlu0 %7663
      %7665 = vrot.lane.b32.xlu0 %v7428, 64
      %v7666 = vpop.permute.xlu0 %7665
      %7667 = vrot.lane.b32.xlu0 %v7431, 64
      %v7668 = vpop.permute.xlu0 %7667
      %7669 = vrot.lane.b32.xlu0 %v7433, 64
      %v7670 = vpop.permute.xlu0 %7669
      %7671 = vrot.lane.b32.xlu0 %v7436, 64
      %v7672 = vpop.permute.xlu0 %7671
      %7673 = vrot.lane.b32.xlu0 %v7438, 64
      %v7674 = vpop.permute.xlu0 %7673
      %7675 = vrot.lane.b32.xlu0 %v7441, 64
      %v7676 = vpop.permute.xlu0 %7675
      %7677 = vrot.lane.b32.xlu0 %v7443, 64
      %v7678 = vpop.permute.xlu0 %7677
      %7679 = vrot.lane.b32.xlu0 %v7446, 64
      %v7680 = vpop.permute.xlu0 %7679
      %7681 = vrot.lane.b32.xlu0 %v7448, 64
      %v7682 = vpop.permute.xlu0 %7681
      %7683 = vrot.lane.b32.xlu0 %v7451, 64
      %v7684 = vpop.permute.xlu0 %7683
      %7685 = vrot.lane.b32.xlu0 %v7453, 64
      %v7686 = vpop.permute.xlu0 %7685
      %7687 = vrot.lane.b32.xlu0 %v7456, 64
      %v7688 = vpop.permute.xlu0 %7687
      %7689 = vrot.lane.b32.xlu0 %v7458, 64
      %v7690 = vpop.permute.xlu0 %7689
      %7691 = vrot.lane.b32.xlu0 %v7461, 64
      %v7692 = vpop.permute.xlu0 %7691
      %7693 = vrot.lane.b32.xlu0 %v7463, 64
      %v7694 = vpop.permute.xlu0 %7693
      %7695 = vrot.lane.b32.xlu0 %v7466, 64
      %v7696 = vpop.permute.xlu0 %7695
      %7697 = vrot.lane.b32.xlu0 %v7468, 64
      %v7698 = vpop.permute.xlu0 %7697
      %7699 = vrot.lane.b32.xlu0 %v7471, 64
      %v7700 = vpop.permute.xlu0 %7699
      %7701 = vrot.lane.b32.xlu0 %v7473, 64
      %v7702 = vpop.permute.xlu0 %7701
      %7703 = vrot.lane.b32.xlu0 %v7476, 64
      %v7704 = vpop.permute.xlu0 %7703
      %7705 = vrot.lane.b32.xlu0 %v7478, 64
      %v7706 = vpop.permute.xlu0 %7705
      %7707 = vrot.lane.b32.xlu0 %v7481, 64
      %v7708 = vpop.permute.xlu0 %7707
      %7709 = vrot.lane.b32.xlu0 %v7483, 64
      %v7710 = vpop.permute.xlu0 %7709
      %v7743 = vadd.f32 %v7583, %v7648
      %v7744 = vadd.f32 %v7584, %v7650
      %v7745 = vadd.f32 %v7585, %v7652
      %v7746 = vadd.f32 %v7586, %v7654
      %v7747 = vadd.f32 %v7587, %v7656
      %v7748 = vadd.f32 %v7588, %v7658
      %v7749 = vadd.f32 %v7589, %v7660
      %v7750 = vadd.f32 %v7590, %v7662
      %v7751 = vadd.f32 %v7591, %v7664
      %v7752 = vadd.f32 %v7592, %v7666
      %v7753 = vadd.f32 %v7593, %v7668
      %v7754 = vadd.f32 %v7594, %v7670
      %v7755 = vadd.f32 %v7595, %v7672
      %v7756 = vadd.f32 %v7596, %v7674
      %v7757 = vadd.f32 %v7597, %v7676
      %v7758 = vadd.f32 %v7598, %v7678
      %v7759 = vadd.f32 %v7599, %v7680
      %v7760 = vadd.f32 %v7600, %v7682
      %v7761 = vadd.f32 %v7601, %v7684
      %v7762 = vadd.f32 %v7602, %v7686
      %v7763 = vadd.f32 %v7603, %v7688
      %v7764 = vadd.f32 %v7604, %v7690
      %v7765 = vadd.f32 %v7605, %v7692
      %v7766 = vadd.f32 %v7606, %v7694
      %v7767 = vadd.f32 %v7607, %v7696
      %v7768 = vadd.f32 %v7608, %v7698
      %v7769 = vadd.f32 %v7609, %v7700
      %v7770 = vadd.f32 %v7610, %v7702
      %v7771 = vadd.f32 %v7611, %v7704
      %v7772 = vadd.f32 %v7612, %v7706
      %v7773 = vadd.f32 %v7613, %v7708
      %v7774 = vadd.f32 %v7614, %v7710
      %v7775 = vadd.f32 %v7743, %v7504
      %v7776 = vadd.f32 %v7744, %v7506
      %v7777 = vadd.f32 %v7745, %v7509
      %v7778 = vadd.f32 %v7746, %v7511
      %v7779 = vadd.f32 %v7747, %v7514
      %v7780 = vadd.f32 %v7748, %v7516
      %v7781 = vadd.f32 %v7749, %v7519
      %v7782 = vadd.f32 %v7750, %v7521
      %v7783 = vadd.f32 %v7751, %v7524
      %v7784 = vadd.f32 %v7752, %v7526
      %v7785 = vadd.f32 %v7753, %v7529
      %v7786 = vadd.f32 %v7754, %v7531
      %v7787 = vadd.f32 %v7755, %v7534
      %v7788 = vadd.f32 %v7756, %v7536
      %v7789 = vadd.f32 %v7757, %v7539
      %v7790 = vadd.f32 %v7758, %v7541
      %v7791 = vadd.f32 %v7759, %v7544
      %v7792 = vadd.f32 %v7760, %v7546
      %v7793 = vadd.f32 %v7761, %v7549
      %v7794 = vadd.f32 %v7762, %v7551
      %v7795 = vadd.f32 %v7763, %v7554
      %v7796 = vadd.f32 %v7764, %v7556
      %v7797 = vadd.f32 %v7765, %v7559
      %v7798 = vadd.f32 %v7766, %v7561
      %v7799 = vadd.f32 %v7767, %v7564
      %v7800 = vadd.f32 %v7768, %v7566
      %v7801 = vadd.f32 %v7769, %v7569
      %v7802 = vadd.f32 %v7770, %v7571
      %v7803 = vadd.f32 %v7771, %v7574
      %v7804 = vadd.f32 %v7772, %v7576
      %v7805 = vadd.f32 %v7773, %v7579
      %v7806 = vadd.f32 %v7774, %v7581
      %v7807 = vld [vmem:[#allocation2 + $0x8] sm:$0xf]
      %v7808 = vld [vmem:[#allocation2 + $0xc] sm:$0xf]
      %v7809 = vld [vmem:[#allocation2 + $0x10] sm:$0x1]
      %v7810 = vld [vmem:[#allocation2 + $0x20] sm:$0xf]
      %v7811 = vld [vmem:[#allocation2 + $0x24] sm:$0xf]
      %v7812 = vld [vmem:[#allocation2 + $0x28] sm:$0x1]
      %v7813 = vld [vmem:[#allocation2 + $0x38] sm:$0xf]
      %v7814 = vld [vmem:[#allocation2 + $0x3c] sm:$0xf]
      %v7815 = vld [vmem:[#allocation2 + $0x40] sm:$0x1]
      %v7816 = vld [vmem:[#allocation2 + $0x50] sm:$0xf]
      %v7817 = vld [vmem:[#allocation2 + $0x54] sm:$0xf]
      %v7818 = vld [vmem:[#allocation2 + $0x58] sm:$0x1]
      %v7819 = vld [vmem:[#allocation2 + $0x68] sm:$0xf]
      %v7820 = vld [vmem:[#allocation2 + $0x6c] sm:$0xf]
      %v7821 = vld [vmem:[#allocation2 + $0x70] sm:$0x1]
      %v7822 = vld [vmem:[#allocation2 + $0x80] sm:$0xf]
      %v7823 = vld [vmem:[#allocation2 + $0x84] sm:$0xf]
      %v7824 = vld [vmem:[#allocation2 + $0x88] sm:$0x1]
      %v7825 = vld [vmem:[#allocation2 + $0x98] sm:$0xf]
      %v7826 = vld [vmem:[#allocation2 + $0x9c] sm:$0xf]
      %v7827 = vld [vmem:[#allocation2 + $0xa0] sm:$0x1]
      %v7828 = vld [vmem:[#allocation2 + $0xb0] sm:$0xf]
      %v7829 = vld [vmem:[#allocation2 + $0xb4] sm:$0xf]
      %v7830 = vld [vmem:[#allocation2 + $0xb8] sm:$0x1]
      %v7831 = vld [vmem:[#allocation2 + $0xc8] sm:$0xf]
      %v7832 = vld [vmem:[#allocation2 + $0xcc] sm:$0xf]
      %v7833 = vld [vmem:[#allocation2 + $0xd0] sm:$0x1]
      %v7834 = vld [vmem:[#allocation2 + $0xe0] sm:$0xf]
      %v7835 = vld [vmem:[#allocation2 + $0xe4] sm:$0xf]
      %v7836 = vld [vmem:[#allocation2 + $0xe8] sm:$0x1]
      %v7837 = vld [vmem:[#allocation2 + $0xf8] sm:$0xf]
      %v7838 = vld [vmem:[#allocation2 + $0xfc] sm:$0xf]
      %v7839 = vld [vmem:[#allocation2 + $0x100] sm:$0x1]
      %v7840 = vld [vmem:[#allocation2 + $0x110] sm:$0xf]
      %v7841 = vld [vmem:[#allocation2 + $0x114] sm:$0xf]
      %v7842 = vld [vmem:[#allocation2 + $0x118] sm:$0x1]
      %v7843 = vld [vmem:[#allocation2 + $0x128] sm:$0xf]
      %v7844 = vld [vmem:[#allocation2 + $0x12c] sm:$0xf]
      %v7845 = vld [vmem:[#allocation2 + $0x130] sm:$0x1]
      %v7846 = vld [vmem:[#allocation2 + $0x140] sm:$0xf]
      %v7847 = vld [vmem:[#allocation2 + $0x144] sm:$0xf]
      %v7848 = vld [vmem:[#allocation2 + $0x148] sm:$0x1]
      %v7849 = vld [vmem:[#allocation2 + $0x158] sm:$0xf]
      %v7850 = vld [vmem:[#allocation2 + $0x15c] sm:$0xf]
      %v7851 = vld [vmem:[#allocation2 + $0x160] sm:$0x1]
      %v7852 = vld [vmem:[#allocation2 + $0x170] sm:$0xf]
      %v7853 = vld [vmem:[#allocation2 + $0x174] sm:$0xf]
      %v7854 = vld [vmem:[#allocation2 + $0x178] sm:$0x1]
      %v7855 = vld [vmem:[#allocation2 + $0x188] sm:$0xf]
      %v7856 = vld [vmem:[#allocation2 + $0x18c] sm:$0xf]
      %v7857 = vld [vmem:[#allocation2 + $0x190] sm:$0x1]
      %v7858 = vld [vmem:[#allocation2 + $0x1a0] sm:$0xf]
      %v7859 = vld [vmem:[#allocation2 + $0x1a4] sm:$0xf]
      %v7860 = vld [vmem:[#allocation2 + $0x1a8] sm:$0x1]
      %v7862 = vshrl.u32 %v7807, 16
      %v7864 = vrot.slane %v7862, 4
      %v7865 = vshll.u32 %v7807, 16
      %v7867 = vrot.slane %v7865, 5
      %v7868 = vor.u32 %v7864, %v7867
      %v7869 = vrot.slane %v7868, 4
      %v7871 = vshll.u32 %v7808, 16
      %v7873 = vrot.slane %v7871, 5
      %v7874 = vsel %vm2088, %v7869, %v7873
      %v7875 = vshrl.u32 %v7808, 16
      %v7877 = vrot.slane %v7875, 4
      %v7878 = vor.u32 %v7877, %v7873
      %v7879 = vrot.slane %v7878, 4
      %v7881 = vshll.u32 %v7809, 16
      %v7883 = vrot.slane %v7881, 5
      %v7884 = vsel %vm2088, %v7879, %v7883
      %v7886 = vshrl.u32 %v7810, 16
      %v7888 = vrot.slane %v7886, 4
      %v7889 = vshll.u32 %v7810, 16
      %v7891 = vrot.slane %v7889, 5
      %v7892 = vor.u32 %v7888, %v7891
      %v7893 = vrot.slane %v7892, 4
      %v7895 = vshll.u32 %v7811, 16
      %v7897 = vrot.slane %v7895, 5
      %v7898 = vsel %vm2088, %v7893, %v7897
      %v7899 = vshrl.u32 %v7811, 16
      %v7901 = vrot.slane %v7899, 4
      %v7902 = vor.u32 %v7901, %v7897
      %v7903 = vrot.slane %v7902, 4
      %v7905 = vshll.u32 %v7812, 16
      %v7907 = vrot.slane %v7905, 5
      %v7908 = vsel %vm2088, %v7903, %v7907
      %v7910 = vshrl.u32 %v7813, 16
      %v7912 = vrot.slane %v7910, 4
      %v7913 = vshll.u32 %v7813, 16
      %v7915 = vrot.slane %v7913, 5
      %v7916 = vor.u32 %v7912, %v7915
      %v7917 = vrot.slane %v7916, 4
      %v7919 = vshll.u32 %v7814, 16
      %v7921 = vrot.slane %v7919, 5
      %v7922 = vsel %vm2088, %v7917, %v7921
      %v7923 = vshrl.u32 %v7814, 16
      %v7925 = vrot.slane %v7923, 4
      %v7926 = vor.u32 %v7925, %v7921
      %v7927 = vrot.slane %v7926, 4
      %v7929 = vshll.u32 %v7815, 16
      %v7931 = vrot.slane %v7929, 5
      %v7932 = vsel %vm2088, %v7927, %v7931
      %v7934 = vshrl.u32 %v7816, 16
      %v7936 = vrot.slane %v7934, 4
      %v7937 = vshll.u32 %v7816, 16
      %v7939 = vrot.slane %v7937, 5
      %v7940 = vor.u32 %v7936, %v7939
      %v7941 = vrot.slane %v7940, 4
      %v7943 = vshll.u32 %v7817, 16
      %v7945 = vrot.slane %v7943, 5
      %v7946 = vsel %vm2088, %v7941, %v7945
      %v7947 = vshrl.u32 %v7817, 16
      %v7949 = vrot.slane %v7947, 4
      %v7950 = vor.u32 %v7949, %v7945
      %v7951 = vrot.slane %v7950, 4
      %v7953 = vshll.u32 %v7818, 16
      %v7955 = vrot.slane %v7953, 5
      %v7956 = vsel %vm2088, %v7951, %v7955
      %v7958 = vshrl.u32 %v7819, 16
      %v7960 = vrot.slane %v7958, 4
      %v7961 = vshll.u32 %v7819, 16
      %v7963 = vrot.slane %v7961, 5
      %v7964 = vor.u32 %v7960, %v7963
      %v7965 = vrot.slane %v7964, 4
      %v7967 = vshll.u32 %v7820, 16
      %v7969 = vrot.slane %v7967, 5
      %v7970 = vsel %vm2088, %v7965, %v7969
      %v7971 = vshrl.u32 %v7820, 16
      %v7973 = vrot.slane %v7971, 4
      %v7974 = vor.u32 %v7973, %v7969
      %v7975 = vrot.slane %v7974, 4
      %v7977 = vshll.u32 %v7821, 16
      %v7979 = vrot.slane %v7977, 5
      %v7980 = vsel %vm2088, %v7975, %v7979
      %v7982 = vshrl.u32 %v7822, 16
      %v7984 = vrot.slane %v7982, 4
      %v7985 = vshll.u32 %v7822, 16
      %v7987 = vrot.slane %v7985, 5
      %v7988 = vor.u32 %v7984, %v7987
      %v7989 = vrot.slane %v7988, 4
      %v7991 = vshll.u32 %v7823, 16
      %v7993 = vrot.slane %v7991, 5
      %v7994 = vsel %vm2088, %v7989, %v7993
      %v7995 = vshrl.u32 %v7823, 16
      %v7997 = vrot.slane %v7995, 4
      %v7998 = vor.u32 %v7997, %v7993
      %v7999 = vrot.slane %v7998, 4
      %v8001 = vshll.u32 %v7824, 16
      %v8003 = vrot.slane %v8001, 5
      %v8004 = vsel %vm2088, %v7999, %v8003
      %v8006 = vshrl.u32 %v7825, 16
      %v8008 = vrot.slane %v8006, 4
      %v8009 = vshll.u32 %v7825, 16
      %v8011 = vrot.slane %v8009, 5
      %v8012 = vor.u32 %v8008, %v8011
      %v8013 = vrot.slane %v8012, 4
      %v8015 = vshll.u32 %v7826, 16
      %v8017 = vrot.slane %v8015, 5
      %v8018 = vsel %vm2088, %v8013, %v8017
      %v8019 = vshrl.u32 %v7826, 16
      %v8021 = vrot.slane %v8019, 4
      %v8022 = vor.u32 %v8021, %v8017
      %v8023 = vrot.slane %v8022, 4
      %v8025 = vshll.u32 %v7827, 16
      %v8027 = vrot.slane %v8025, 5
      %v8028 = vsel %vm2088, %v8023, %v8027
      %v8030 = vshrl.u32 %v7828, 16
      %v8032 = vrot.slane %v8030, 4
      %v8033 = vshll.u32 %v7828, 16
      %v8035 = vrot.slane %v8033, 5
      %v8036 = vor.u32 %v8032, %v8035
      %v8037 = vrot.slane %v8036, 4
      %v8039 = vshll.u32 %v7829, 16
      %v8041 = vrot.slane %v8039, 5
      %v8042 = vsel %vm2088, %v8037, %v8041
      %v8043 = vshrl.u32 %v7829, 16
      %v8045 = vrot.slane %v8043, 4
      %v8046 = vor.u32 %v8045, %v8041
      %v8047 = vrot.slane %v8046, 4
      %v8049 = vshll.u32 %v7830, 16
      %v8051 = vrot.slane %v8049, 5
      %v8052 = vsel %vm2088, %v8047, %v8051
      %v8054 = vshrl.u32 %v7831, 16
      %v8056 = vrot.slane %v8054, 4
      %v8057 = vshll.u32 %v7831, 16
      %v8059 = vrot.slane %v8057, 5
      %v8060 = vor.u32 %v8056, %v8059
      %v8061 = vrot.slane %v8060, 4
      %v8063 = vshll.u32 %v7832, 16
      %v8065 = vrot.slane %v8063, 5
      %v8066 = vsel %vm2088, %v8061, %v8065
      %v8067 = vshrl.u32 %v7832, 16
      %v8069 = vrot.slane %v8067, 4
      %v8070 = vor.u32 %v8069, %v8065
      %v8071 = vrot.slane %v8070, 4
      %v8073 = vshll.u32 %v7833, 16
      %v8075 = vrot.slane %v8073, 5
      %v8076 = vsel %vm2088, %v8071, %v8075
      %v8078 = vshrl.u32 %v7834, 16
      %v8080 = vrot.slane %v8078, 4
      %v8081 = vshll.u32 %v7834, 16
      %v8083 = vrot.slane %v8081, 5
      %v8084 = vor.u32 %v8080, %v8083
      %v8085 = vrot.slane %v8084, 4
      %v8087 = vshll.u32 %v7835, 16
      %v8089 = vrot.slane %v8087, 5
      %v8090 = vsel %vm2088, %v8085, %v8089
      %v8091 = vshrl.u32 %v7835, 16
      %v8093 = vrot.slane %v8091, 4
      %v8094 = vor.u32 %v8093, %v8089
      %v8095 = vrot.slane %v8094, 4
      %v8097 = vshll.u32 %v7836, 16
      %v8099 = vrot.slane %v8097, 5
      %v8100 = vsel %vm2088, %v8095, %v8099
      %v8102 = vshrl.u32 %v7837, 16
      %v8104 = vrot.slane %v8102, 4
      %v8105 = vshll.u32 %v7837, 16
      %v8107 = vrot.slane %v8105, 5
      %v8108 = vor.u32 %v8104, %v8107
      %v8109 = vrot.slane %v8108, 4
      %v8111 = vshll.u32 %v7838, 16
      %v8113 = vrot.slane %v8111, 5
      %v8114 = vsel %vm2088, %v8109, %v8113
      %v8115 = vshrl.u32 %v7838, 16
      %v8117 = vrot.slane %v8115, 4
      %v8118 = vor.u32 %v8117, %v8113
      %v8119 = vrot.slane %v8118, 4
      %v8121 = vshll.u32 %v7839, 16
      %v8123 = vrot.slane %v8121, 5
      %v8124 = vsel %vm2088, %v8119, %v8123
      %v8126 = vshrl.u32 %v7840, 16
      %v8128 = vrot.slane %v8126, 4
      %v8129 = vshll.u32 %v7840, 16
      %v8131 = vrot.slane %v8129, 5
      %v8132 = vor.u32 %v8128, %v8131
      %v8133 = vrot.slane %v8132, 4
      %v8135 = vshll.u32 %v7841, 16
      %v8137 = vrot.slane %v8135, 5
      %v8138 = vsel %vm2088, %v8133, %v8137
      %v8139 = vshrl.u32 %v7841, 16
      %v8141 = vrot.slane %v8139, 4
      %v8142 = vor.u32 %v8141, %v8137
      %v8143 = vrot.slane %v8142, 4
      %v8145 = vshll.u32 %v7842, 16
      %v8147 = vrot.slane %v8145, 5
      %v8148 = vsel %vm2088, %v8143, %v8147
      %v8150 = vshrl.u32 %v7843, 16
      %v8152 = vrot.slane %v8150, 4
      %v8153 = vshll.u32 %v7843, 16
      %v8155 = vrot.slane %v8153, 5
      %v8156 = vor.u32 %v8152, %v8155
      %v8157 = vrot.slane %v8156, 4
      %v8159 = vshll.u32 %v7844, 16
      %v8161 = vrot.slane %v8159, 5
      %v8162 = vsel %vm2088, %v8157, %v8161
      %v8163 = vshrl.u32 %v7844, 16
      %v8165 = vrot.slane %v8163, 4
      %v8166 = vor.u32 %v8165, %v8161
      %v8167 = vrot.slane %v8166, 4
      %v8169 = vshll.u32 %v7845, 16
      %v8171 = vrot.slane %v8169, 5
      %v8172 = vsel %vm2088, %v8167, %v8171
      %v8174 = vshrl.u32 %v7846, 16
      %v8176 = vrot.slane %v8174, 4
      %v8177 = vshll.u32 %v7846, 16
      %v8179 = vrot.slane %v8177, 5
      %v8180 = vor.u32 %v8176, %v8179
      %v8181 = vrot.slane %v8180, 4
      %v8183 = vshll.u32 %v7847, 16
      %v8185 = vrot.slane %v8183, 5
      %v8186 = vsel %vm2088, %v8181, %v8185
      %v8187 = vshrl.u32 %v7847, 16
      %v8189 = vrot.slane %v8187, 4
      %v8190 = vor.u32 %v8189, %v8185
      %v8191 = vrot.slane %v8190, 4
      %v8193 = vshll.u32 %v7848, 16
      %v8195 = vrot.slane %v8193, 5
      %v8196 = vsel %vm2088, %v8191, %v8195
      %v8198 = vshrl.u32 %v7849, 16
      %v8200 = vrot.slane %v8198, 4
      %v8201 = vshll.u32 %v7849, 16
      %v8203 = vrot.slane %v8201, 5
      %v8204 = vor.u32 %v8200, %v8203
      %v8205 = vrot.slane %v8204, 4
      %v8207 = vshll.u32 %v7850, 16
      %v8209 = vrot.slane %v8207, 5
      %v8210 = vsel %vm2088, %v8205, %v8209
      %v8211 = vshrl.u32 %v7850, 16
      %v8213 = vrot.slane %v8211, 4
      %v8214 = vor.u32 %v8213, %v8209
      %v8215 = vrot.slane %v8214, 4
      %v8217 = vshll.u32 %v7851, 16
      %v8219 = vrot.slane %v8217, 5
      %v8220 = vsel %vm2088, %v8215, %v8219
      %v8222 = vshrl.u32 %v7852, 16
      %v8224 = vrot.slane %v8222, 4
      %v8225 = vshll.u32 %v7852, 16
      %v8227 = vrot.slane %v8225, 5
      %v8228 = vor.u32 %v8224, %v8227
      %v8229 = vrot.slane %v8228, 4
      %v8231 = vshll.u32 %v7853, 16
      %v8233 = vrot.slane %v8231, 5
      %v8234 = vsel %vm2088, %v8229, %v8233
      %v8235 = vshrl.u32 %v7853, 16
      %v8237 = vrot.slane %v8235, 4
      %v8238 = vor.u32 %v8237, %v8233
      %v8239 = vrot.slane %v8238, 4
      %v8241 = vshll.u32 %v7854, 16
      %v8243 = vrot.slane %v8241, 5
      %v8244 = vsel %vm2088, %v8239, %v8243
      %v8246 = vshrl.u32 %v7855, 16
      %v8248 = vrot.slane %v8246, 4
      %v8249 = vshll.u32 %v7855, 16
      %v8251 = vrot.slane %v8249, 5
      %v8252 = vor.u32 %v8248, %v8251
      %v8253 = vrot.slane %v8252, 4
      %v8255 = vshll.u32 %v7856, 16
      %v8257 = vrot.slane %v8255, 5
      %v8258 = vsel %vm2088, %v8253, %v8257
      %v8259 = vshrl.u32 %v7856, 16
      %v8261 = vrot.slane %v8259, 4
      %v8262 = vor.u32 %v8261, %v8257
      %v8263 = vrot.slane %v8262, 4
      %v8265 = vshll.u32 %v7857, 16
      %v8267 = vrot.slane %v8265, 5
      %v8268 = vsel %vm2088, %v8263, %v8267
      %v8270 = vshrl.u32 %v7858, 16
      %v8272 = vrot.slane %v8270, 4
      %v8273 = vshll.u32 %v7858, 16
      %v8275 = vrot.slane %v8273, 5
      %v8276 = vor.u32 %v8272, %v8275
      %v8277 = vrot.slane %v8276, 4
      %v8279 = vshll.u32 %v7859, 16
      %v8281 = vrot.slane %v8279, 5
      %v8282 = vsel %vm2088, %v8277, %v8281
      %v8283 = vshrl.u32 %v7859, 16
      %v8285 = vrot.slane %v8283, 4
      %v8286 = vor.u32 %v8285, %v8281
      %v8287 = vrot.slane %v8286, 4
      %v8289 = vshll.u32 %v7860, 16
      %v8291 = vrot.slane %v8289, 5
      %v8292 = vsel %vm2088, %v8287, %v8291
      %s8293 = scalar_lea.vmem %s5, 128
      %v8294 = vld [vmem:[%s8293] sm:$0xff]
      %v8295 = vld [vmem:[%s8293 + $0x8] sm:$0xff]
      %v8296 = vld [vmem:[%s8293 + $0x10] sm:$0xff]
      %v8297 = vld [vmem:[%s8293 + $0x18] sm:$0xff]
      %v8298 = vld [vmem:[%s8293 + $0x20] sm:$0xff]
      %v8299 = vld [vmem:[%s8293 + $0x28] sm:$0xff]
      %v8300 = vld [vmem:[%s8293 + $0x30] sm:$0xff]
      %v8301 = vld [vmem:[%s8293 + $0x38] sm:$0xff]
      %v8302 = vunpack.c.l.b16 %v7874
      %v8303 = vunpack.c.l.b16 %v7884
      %v8304 = vunpack.c.l.b16 %v7898
      %v8305 = vunpack.c.l.b16 %v7908
      %v8306 = vunpack.c.l.b16 %v7922
      %v8307 = vunpack.c.l.b16 %v7932
      %v8308 = vunpack.c.l.b16 %v7946
      %v8309 = vunpack.c.l.b16 %v7956
      %v8310 = vunpack.c.l.b16 %v7970
      %v8311 = vunpack.c.l.b16 %v7980
      %v8312 = vunpack.c.l.b16 %v7994
      %v8313 = vunpack.c.l.b16 %v8004
      %v8314 = vunpack.c.l.b16 %v8018
      %v8315 = vunpack.c.l.b16 %v8028
      %v8316 = vunpack.c.l.b16 %v8042
      %v8317 = vunpack.c.l.b16 %v8052
      %v8318 = vunpack.c.l.b16 %v8066
      %v8319 = vunpack.c.l.b16 %v8076
      %v8320 = vunpack.c.l.b16 %v8090
      %v8321 = vunpack.c.l.b16 %v8100
      %v8322 = vunpack.c.l.b16 %v8114
      %v8323 = vunpack.c.l.b16 %v8124
      %v8324 = vunpack.c.l.b16 %v8138
      %v8325 = vunpack.c.l.b16 %v8148
      %v8326 = vunpack.c.l.b16 %v8162
      %v8327 = vunpack.c.l.b16 %v8172
      %v8328 = vunpack.c.l.b16 %v8186
      %v8329 = vunpack.c.l.b16 %v8196
      %v8330 = vunpack.c.l.b16 %v8210
      %v8331 = vunpack.c.l.b16 %v8220
      %v8332 = vunpack.c.l.b16 %v8234
      %v8333 = vunpack.c.l.b16 %v8244
      %v8334 = vunpack.c.l.b16 %v8258
      %v8335 = vunpack.c.l.b16 %v8268
      %v8336 = vunpack.c.l.b16 %v8282
      %v8337 = vunpack.c.l.b16 %v8292
      %v8338 = vpack.c.b16 %v8303, %v8302
      %v8339 = vpack.c.b16 %v8305, %v8304
      %v8340 = vpack.c.b16 %v8307, %v8306
      %v8341 = vpack.c.b16 %v8309, %v8308
      %v8342 = vpack.c.b16 %v8311, %v8310
      %v8343 = vpack.c.b16 %v8313, %v8312
      %v8344 = vpack.c.b16 %v8315, %v8314
      %v8345 = vpack.c.b16 %v8317, %v8316
      %v8346 = vpack.c.b16 %v8319, %v8318
      %v8347 = vpack.c.b16 %v8321, %v8320
      %v8348 = vpack.c.b16 %v8323, %v8322
      %v8349 = vpack.c.b16 %v8325, %v8324
      %v8350 = vpack.c.b16 %v8327, %v8326
      %v8351 = vpack.c.b16 %v8329, %v8328
      %v8352 = vpack.c.b16 %v8331, %v8330
      %v8353 = vpack.c.b16 %v8333, %v8332
      %v8354 = vpack.c.b16 %v8335, %v8334
      %v8355 = vpack.c.b16 %v8337, %v8336
      %v8364 = vunpack.c.l.b16 %v8294
      %v8365 = vunpack.c.h.b16 %v8294
      %v8366 = vunpack.c.l.b16 %v8295
      %v8367 = vunpack.c.h.b16 %v8295
      %v8368 = vunpack.c.l.b16 %v8296
      %v8369 = vunpack.c.h.b16 %v8296
      %v8370 = vunpack.c.l.b16 %v8297
      %v8371 = vunpack.c.h.b16 %v8297
      %v8372 = vunpack.c.l.b16 %v8298
      %v8373 = vunpack.c.h.b16 %v8298
      %v8374 = vunpack.c.l.b16 %v8299
      %v8375 = vunpack.c.h.b16 %v8299
      %v8376 = vunpack.c.l.b16 %v8300
      %v8377 = vunpack.c.h.b16 %v8300
      %v8378 = vunpack.c.l.b16 %v8301
      %v8379 = vunpack.c.h.b16 %v8301
      %v8380 = vpack.c.b16 %v8366, %v8364
      %v8381 = vpack.c.b16 %v8367, %v8365
      %v8382 = vpack.c.b16 %v8370, %v8368
      %v8383 = vpack.c.b16 %v8371, %v8369
      %v8384 = vpack.c.b16 %v8374, %v8372
      %v8385 = vpack.c.b16 %v8375, %v8373
      %v8386 = vpack.c.b16 %v8378, %v8376
      %v8387 = vpack.c.b16 %v8379, %v8377
      %v8397 = vsel %vm952, %v8338, 0
      %v8400 = vsel %vm952, %v8339, 0
      %v8403 = vsel %vm952, %v8340, 0
      %v8406 = vsel %vm952, %v8341, 0
      %v8409 = vsel %vm952, %v8342, 0
      %v8412 = vsel %vm952, %v8343, 0
      %v8415 = vsel %vm952, %v8344, 0
      %v8418 = vsel %vm952, %v8345, 0
      %v8421 = vsel %vm952, %v8346, 0
      %v8424 = vsel %vm952, %v8347, 0
      %v8427 = vsel %vm952, %v8348, 0
      %v8430 = vsel %vm952, %v8349, 0
      %v8433 = vsel %vm952, %v8350, 0
      %v8436 = vsel %vm952, %v8351, 0
      %v8439 = vsel %vm952, %v8352, 0
      %v8442 = vsel %vm952, %v8353, 0
      %v8445 = vsel %vm952, %v8354, 0
      %v8448 = vsel %vm952, %v8355, 0
      %8450 = vmatpush.bf16.msra.mxu0 0
      %8451 = vmatpush.bf16.msra.mxu0 0
      %8452 = vmatpush.bf16.msra.mxu0 0
      %8453 = vmatpush.bf16.msra.mxu0 0
      %8454 = vmatpush.bf16.msra.mxu0 %v8386
      %8455 = vmatpush.bf16.msra.mxu0 %v8384
      %8456 = vmatpush.bf16.msra.mxu0 %v8382
      %8457 = vmatpush.bf16.msra.mxu0 %v8380
      %8458 = vmatmul.bf16.gmra.mxu0 %v8397
      %v8459 = vpop.f32.mrf.mxu0
      %v8460 = vadd.f32 0.0, %v8459
      %v8461 = vpop.f32.mrf.mxu0
      %v8462 = vadd.f32 0.0, %v8461
      %8463 = vmatmul.bf16.gmra.mxu0 %v8400
      %v8464 = vpop.f32.mrf.mxu0
      %v8465 = vadd.f32 0.0, %v8464
      %v8466 = vpop.f32.mrf.mxu0
      %v8467 = vadd.f32 0.0, %v8466
      %8468 = vmatmul.bf16.gmra.mxu0 %v8403
      %v8469 = vpop.f32.mrf.mxu0
      %v8470 = vadd.f32 0.0, %v8469
      %v8471 = vpop.f32.mrf.mxu0
      %v8472 = vadd.f32 0.0, %v8471
      %8473 = vmatmul.bf16.gmra.mxu0 %v8406
      %v8474 = vpop.f32.mrf.mxu0
      %v8475 = vadd.f32 0.0, %v8474
      %v8476 = vpop.f32.mrf.mxu0
      %v8477 = vadd.f32 0.0, %v8476
      %8478 = vmatmul.bf16.gmra.mxu0 %v8409
      %v8479 = vpop.f32.mrf.mxu0
      %v8480 = vadd.f32 0.0, %v8479
      %v8481 = vpop.f32.mrf.mxu0
      %v8482 = vadd.f32 0.0, %v8481
      %8483 = vmatmul.bf16.gmra.mxu0 %v8412
      %v8484 = vpop.f32.mrf.mxu0
      %v8485 = vadd.f32 0.0, %v8484
      %v8486 = vpop.f32.mrf.mxu0
      %v8487 = vadd.f32 0.0, %v8486
      %8488 = vmatmul.bf16.gmra.mxu0 %v8415
      %v8489 = vpop.f32.mrf.mxu0
      %v8490 = vadd.f32 0.0, %v8489
      %v8491 = vpop.f32.mrf.mxu0
      %v8492 = vadd.f32 0.0, %v8491
      %8493 = vmatmul.bf16.gmra.mxu0 %v8418
      %v8494 = vpop.f32.mrf.mxu0
      %v8495 = vadd.f32 0.0, %v8494
      %v8496 = vpop.f32.mrf.mxu0
      %v8497 = vadd.f32 0.0, %v8496
      %8498 = vmatmul.bf16.gmra.mxu0 %v8421
      %v8499 = vpop.f32.mrf.mxu0
      %v8500 = vadd.f32 0.0, %v8499
      %v8501 = vpop.f32.mrf.mxu0
      %v8502 = vadd.f32 0.0, %v8501
      %8503 = vmatmul.bf16.gmra.mxu0 %v8424
      %v8504 = vpop.f32.mrf.mxu0
      %v8505 = vadd.f32 0.0, %v8504
      %v8506 = vpop.f32.mrf.mxu0
      %v8507 = vadd.f32 0.0, %v8506
      %8508 = vmatmul.bf16.gmra.mxu0 %v8427
      %v8509 = vpop.f32.mrf.mxu0
      %v8510 = vadd.f32 0.0, %v8509
      %v8511 = vpop.f32.mrf.mxu0
      %v8512 = vadd.f32 0.0, %v8511
      %8513 = vmatmul.bf16.gmra.mxu0 %v8430
      %v8514 = vpop.f32.mrf.mxu0
      %v8515 = vadd.f32 0.0, %v8514
      %v8516 = vpop.f32.mrf.mxu0
      %v8517 = vadd.f32 0.0, %v8516
      %8518 = vmatmul.bf16.gmra.mxu0 %v8433
      %v8519 = vpop.f32.mrf.mxu0
      %v8520 = vadd.f32 0.0, %v8519
      %v8521 = vpop.f32.mrf.mxu0
      %v8522 = vadd.f32 0.0, %v8521
      %8523 = vmatmul.bf16.gmra.mxu0 %v8436
      %v8524 = vpop.f32.mrf.mxu0
      %v8525 = vadd.f32 0.0, %v8524
      %v8526 = vpop.f32.mrf.mxu0
      %v8527 = vadd.f32 0.0, %v8526
      %8528 = vmatmul.bf16.gmra.mxu0 %v8439
      %v8529 = vpop.f32.mrf.mxu0
      %v8530 = vadd.f32 0.0, %v8529
      %v8531 = vpop.f32.mrf.mxu0
      %v8532 = vadd.f32 0.0, %v8531
      %8533 = vmatmul.bf16.gmra.mxu0 %v8442
      %v8534 = vpop.f32.mrf.mxu0
      %v8535 = vadd.f32 0.0, %v8534
      %v8536 = vpop.f32.mrf.mxu0
      %v8537 = vadd.f32 0.0, %v8536
      %8538 = vmatmul.bf16.gmra.mxu0 %v8445
      %v8539 = vpop.f32.mrf.mxu0
      %v8540 = vadd.f32 0.0, %v8539
      %v8541 = vpop.f32.mrf.mxu0
      %v8542 = vadd.f32 0.0, %v8541
      %8543 = vmatmul.bf16.gmra.mxu0 %v8448
      %v8544 = vpop.f32.mrf.mxu0
      %v8545 = vpop.f32.mrf.mxu0
      %8546 = vdwg.mxu0
      %8547 = vmatpush.bf16.msra.mxu0 0
      %8548 = vmatpush.bf16.msra.mxu0 0
      %8549 = vmatpush.bf16.msra.mxu0 0
      %8550 = vmatpush.bf16.msra.mxu0 0
      %8551 = vmatpush.bf16.msra.mxu0 %v8387
      %8552 = vmatpush.bf16.msra.mxu0 %v8385
      %8553 = vmatpush.bf16.msra.mxu0 %v8383
      %8554 = vmatpush.bf16.msra.mxu0 %v8381
      %8555 = vmatmul.bf16.gmra.mxu0 %v8397
      %v8556 = vpop.f32.mrf.mxu0
      %v8557 = vpop.f32.mrf.mxu0
      %8558 = vmatmul.bf16.gmra.mxu0 %v8400
      %v8559 = vpop.f32.mrf.mxu0
      %v8560 = vpop.f32.mrf.mxu0
      %8561 = vmatmul.bf16.gmra.mxu0 %v8403
      %v8562 = vpop.f32.mrf.mxu0
      %v8563 = vadd.f32 0.0, %v8562
      %v8564 = vpop.f32.mrf.mxu0
      %v8565 = vadd.f32 0.0, %v8564
      %8566 = vmatmul.bf16.gmra.mxu0 %v8406
      %v8567 = vpop.f32.mrf.mxu0
      %v8568 = vadd.f32 0.0, %v8567
      %v8569 = vpop.f32.mrf.mxu0
      %v8570 = vadd.f32 0.0, %v8569
      %8571 = vmatmul.bf16.gmra.mxu0 %v8409
      %v8572 = vpop.f32.mrf.mxu0
      %v8573 = vadd.f32 0.0, %v8572
      %v8574 = vpop.f32.mrf.mxu0
      %v8575 = vadd.f32 0.0, %v8574
      %8576 = vmatmul.bf16.gmra.mxu0 %v8412
      %v8577 = vpop.f32.mrf.mxu0
      %v8578 = vadd.f32 0.0, %v8577
      %v8579 = vpop.f32.mrf.mxu0
      %v8580 = vadd.f32 0.0, %v8579
      %8581 = vmatmul.bf16.gmra.mxu0 %v8415
      %v8582 = vpop.f32.mrf.mxu0
      %v8583 = vadd.f32 0.0, %v8582
      %v8584 = vpop.f32.mrf.mxu0
      %v8585 = vadd.f32 0.0, %v8584
      %8586 = vmatmul.bf16.gmra.mxu0 %v8418
      %v8587 = vpop.f32.mrf.mxu0
      %v8588 = vadd.f32 0.0, %v8587
      %v8589 = vpop.f32.mrf.mxu0
      %v8590 = vadd.f32 0.0, %v8589
      %8591 = vmatmul.bf16.gmra.mxu0 %v8421
      %v8592 = vpop.f32.mrf.mxu0
      %v8593 = vadd.f32 0.0, %v8592
      %v8594 = vpop.f32.mrf.mxu0
      %v8595 = vadd.f32 0.0, %v8594
      %8596 = vmatmul.bf16.gmra.mxu0 %v8424
      %v8597 = vpop.f32.mrf.mxu0
      %v8598 = vadd.f32 0.0, %v8597
      %v8599 = vpop.f32.mrf.mxu0
      %v8600 = vadd.f32 0.0, %v8599
      %8601 = vmatmul.bf16.gmra.mxu0 %v8427
      %v8602 = vpop.f32.mrf.mxu0
      %v8603 = vadd.f32 0.0, %v8602
      %v8604 = vpop.f32.mrf.mxu0
      %v8605 = vadd.f32 0.0, %v8604
      %8606 = vmatmul.bf16.gmra.mxu0 %v8430
      %v8607 = vpop.f32.mrf.mxu0
      %v8608 = vadd.f32 0.0, %v8607
      %v8609 = vpop.f32.mrf.mxu0
      %v8610 = vadd.f32 0.0, %v8609
      %8611 = vmatmul.bf16.gmra.mxu0 %v8433
      %v8612 = vpop.f32.mrf.mxu0
      %v8613 = vadd.f32 0.0, %v8612
      %v8614 = vpop.f32.mrf.mxu0
      %v8615 = vadd.f32 0.0, %v8614
      %8616 = vmatmul.bf16.gmra.mxu0 %v8436
      %v8617 = vpop.f32.mrf.mxu0
      %v8618 = vadd.f32 0.0, %v8617
      %v8619 = vpop.f32.mrf.mxu0
      %v8620 = vadd.f32 0.0, %v8619
      %8621 = vmatmul.bf16.gmra.mxu0 %v8439
      %v8622 = vpop.f32.mrf.mxu0
      %v8623 = vadd.f32 0.0, %v8622
      %v8624 = vpop.f32.mrf.mxu0
      %v8625 = vadd.f32 0.0, %v8624
      %8626 = vmatmul.bf16.gmra.mxu0 %v8442
      %v8627 = vpop.f32.mrf.mxu0
      %v8628 = vadd.f32 0.0, %v8627
      %v8629 = vpop.f32.mrf.mxu0
      %v8630 = vadd.f32 0.0, %v8629
      %8631 = vmatmul.bf16.gmra.mxu0 %v8445
      %v8632 = vpop.f32.mrf.mxu0
      %v8633 = vadd.f32 0.0, %v8632
      %v8634 = vpop.f32.mrf.mxu0
      %v8635 = vadd.f32 0.0, %v8634
      %8636 = vmatmul.bf16.gmra.mxu0 %v8448
      %v8637 = vpop.f32.mrf.mxu0
      %v8638 = vadd.f32 0.0, %v8637
      %v8639 = vpop.f32.mrf.mxu0
      %v8640 = vadd.f32 0.0, %v8639
      %8641 = vdwg.mxu0
      %v8642 = vadd.f32 %v7775, %v8460
      %v8643 = vadd.f32 %v7776, %v8462
      %v8644 = vadd.f32 %v7777, %v8465
      %v8645 = vadd.f32 %v7778, %v8467
      %v8646 = vadd.f32 %v7779, %v8470
      %v8647 = vadd.f32 %v7780, %v8472
      %v8648 = vadd.f32 %v7781, %v8475
      %v8649 = vadd.f32 %v7782, %v8477
      %v8650 = vadd.f32 %v7783, %v8480
      %v8651 = vadd.f32 %v7784, %v8482
      %v8652 = vadd.f32 %v7785, %v8485
      %v8653 = vadd.f32 %v7786, %v8487
      %v8654 = vadd.f32 %v7787, %v8490
      %v8655 = vadd.f32 %v7788, %v8492
      %v8656 = vadd.f32 %v7789, %v8495
      %v8657 = vadd.f32 %v7790, %v8497
      %v8658 = vadd.f32 %v7791, %v8500
      %v8659 = vadd.f32 %v7792, %v8502
      %v8660 = vadd.f32 %v7793, %v8505
      %v8661 = vadd.f32 %v7794, %v8507
      %v8662 = vadd.f32 %v7795, %v8510
      %v8663 = vadd.f32 %v7796, %v8512
      %v8664 = vadd.f32 %v7797, %v8515
      %v8665 = vadd.f32 %v7798, %v8517
      %v8666 = vadd.f32 %v7799, %v8520
      %v8667 = vadd.f32 %v7800, %v8522
      %v8668 = vadd.f32 %v7801, %v8525
      %v8669 = vadd.f32 %v7802, %v8527
      %v8670 = vadd.f32 %v7803, %v8530
      %v8671 = vadd.f32 %v7804, %v8532
      %v8672 = vadd.f32 %v7805, %v8535
      %v8673 = vadd.f32 %v7806, %v8537
      %8706 = vrot.lane.b32.xlu0 %v8465, 64
      %v8707 = vpop.permute.xlu0 %8706
      %8708 = vrot.lane.b32.xlu0 %v8467, 64
      %v8709 = vpop.permute.xlu0 %8708
      %8710 = vrot.lane.b32.xlu0 %v8470, 64
      %v8711 = vpop.permute.xlu0 %8710
      %8712 = vrot.lane.b32.xlu0 %v8472, 64
      %v8713 = vpop.permute.xlu0 %8712
      %8714 = vrot.lane.b32.xlu0 %v8475, 64
      %v8715 = vpop.permute.xlu0 %8714
      %8716 = vrot.lane.b32.xlu0 %v8477, 64
      %v8717 = vpop.permute.xlu0 %8716
      %8718 = vrot.lane.b32.xlu0 %v8480, 64
      %v8719 = vpop.permute.xlu0 %8718
      %8720 = vrot.lane.b32.xlu0 %v8482, 64
      %v8721 = vpop.permute.xlu0 %8720
      %8722 = vrot.lane.b32.xlu0 %v8485, 64
      %v8723 = vpop.permute.xlu0 %8722
      %8724 = vrot.lane.b32.xlu0 %v8487, 64
      %v8725 = vpop.permute.xlu0 %8724
      %8726 = vrot.lane.b32.xlu0 %v8490, 64
      %v8727 = vpop.permute.xlu0 %8726
      %8728 = vrot.lane.b32.xlu0 %v8492, 64
      %v8729 = vpop.permute.xlu0 %8728
      %8730 = vrot.lane.b32.xlu0 %v8495, 64
      %v8731 = vpop.permute.xlu0 %8730
      %8732 = vrot.lane.b32.xlu0 %v8497, 64
      %v8733 = vpop.permute.xlu0 %8732
      %8734 = vrot.lane.b32.xlu0 %v8500, 64
      %v8735 = vpop.permute.xlu0 %8734
      %8736 = vrot.lane.b32.xlu0 %v8502, 64
      %v8737 = vpop.permute.xlu0 %8736
      %8738 = vrot.lane.b32.xlu0 %v8505, 64
      %v8739 = vpop.permute.xlu0 %8738
      %8740 = vrot.lane.b32.xlu0 %v8507, 64
      %v8741 = vpop.permute.xlu0 %8740
      %8742 = vrot.lane.b32.xlu0 %v8510, 64
      %v8743 = vpop.permute.xlu0 %8742
      %8744 = vrot.lane.b32.xlu0 %v8512, 64
      %v8745 = vpop.permute.xlu0 %8744
      %8746 = vrot.lane.b32.xlu0 %v8515, 64
      %v8747 = vpop.permute.xlu0 %8746
      %8748 = vrot.lane.b32.xlu0 %v8517, 64
      %v8749 = vpop.permute.xlu0 %8748
      %8750 = vrot.lane.b32.xlu0 %v8520, 64
      %v8751 = vpop.permute.xlu0 %8750
      %8752 = vrot.lane.b32.xlu0 %v8522, 64
      %v8753 = vpop.permute.xlu0 %8752
      %8754 = vrot.lane.b32.xlu0 %v8525, 64
      %v8755 = vpop.permute.xlu0 %8754
      %8756 = vrot.lane.b32.xlu0 %v8527, 64
      %v8757 = vpop.permute.xlu0 %8756
      %8758 = vrot.lane.b32.xlu0 %v8530, 64
      %v8759 = vpop.permute.xlu0 %8758
      %8760 = vrot.lane.b32.xlu0 %v8532, 64
      %v8761 = vpop.permute.xlu0 %8760
      %8762 = vrot.lane.b32.xlu0 %v8535, 64
      %v8763 = vpop.permute.xlu0 %8762
      %8764 = vrot.lane.b32.xlu0 %v8537, 64
      %v8765 = vpop.permute.xlu0 %8764
      %8766 = vrot.lane.b32.xlu0 %v8540, 64
      %v8767 = vpop.permute.xlu0 %8766
      %8768 = vrot.lane.b32.xlu0 %v8542, 64
      %v8769 = vpop.permute.xlu0 %8768
      %v8802 = vadd.f32 %v8642, %v8707
      %v8803 = vadd.f32 %v8643, %v8709
      %v8804 = vadd.f32 %v8644, %v8711
      %v8805 = vadd.f32 %v8645, %v8713
      %v8806 = vadd.f32 %v8646, %v8715
      %v8807 = vadd.f32 %v8647, %v8717
      %v8808 = vadd.f32 %v8648, %v8719
      %v8809 = vadd.f32 %v8649, %v8721
      %v8810 = vadd.f32 %v8650, %v8723
      %v8811 = vadd.f32 %v8651, %v8725
      %v8812 = vadd.f32 %v8652, %v8727
      %v8813 = vadd.f32 %v8653, %v8729
      %v8814 = vadd.f32 %v8654, %v8731
      %v8815 = vadd.f32 %v8655, %v8733
      %v8816 = vadd.f32 %v8656, %v8735
      %v8817 = vadd.f32 %v8657, %v8737
      %v8818 = vadd.f32 %v8658, %v8739
      %v8819 = vadd.f32 %v8659, %v8741
      %v8820 = vadd.f32 %v8660, %v8743
      %v8821 = vadd.f32 %v8661, %v8745
      %v8822 = vadd.f32 %v8662, %v8747
      %v8823 = vadd.f32 %v8663, %v8749
      %v8824 = vadd.f32 %v8664, %v8751
      %v8825 = vadd.f32 %v8665, %v8753
      %v8826 = vadd.f32 %v8666, %v8755
      %v8827 = vadd.f32 %v8667, %v8757
      %v8828 = vadd.f32 %v8668, %v8759
      %v8829 = vadd.f32 %v8669, %v8761
      %v8830 = vadd.f32 %v8670, %v8763
      %v8831 = vadd.f32 %v8671, %v8765
      %v8832 = vadd.f32 %v8672, %v8767
      %v8833 = vadd.f32 %v8673, %v8769
      %v8834 = vadd.f32 %v8802, %v8563
      %v8835 = vadd.f32 %v8803, %v8565
      %v8836 = vadd.f32 %v8804, %v8568
      %v8837 = vadd.f32 %v8805, %v8570
      %v8838 = vadd.f32 %v8806, %v8573
      %v8839 = vadd.f32 %v8807, %v8575
      %v8840 = vadd.f32 %v8808, %v8578
      %v8841 = vadd.f32 %v8809, %v8580
      %v8842 = vadd.f32 %v8810, %v8583
      %v8843 = vadd.f32 %v8811, %v8585
      %v8844 = vadd.f32 %v8812, %v8588
      %v8845 = vadd.f32 %v8813, %v8590
      %v8846 = vadd.f32 %v8814, %v8593
      %v8847 = vadd.f32 %v8815, %v8595
      %v8848 = vadd.f32 %v8816, %v8598
      %v8849 = vadd.f32 %v8817, %v8600
      %v8850 = vadd.f32 %v8818, %v8603
      %v8851 = vadd.f32 %v8819, %v8605
      %v8852 = vadd.f32 %v8820, %v8608
      %v8853 = vadd.f32 %v8821, %v8610
      %v8854 = vadd.f32 %v8822, %v8613
      %v8855 = vadd.f32 %v8823, %v8615
      %v8856 = vadd.f32 %v8824, %v8618
      %v8857 = vadd.f32 %v8825, %v8620
      %v8858 = vadd.f32 %v8826, %v8623
      %v8859 = vadd.f32 %v8827, %v8625
      %v8860 = vadd.f32 %v8828, %v8628
      %v8861 = vadd.f32 %v8829, %v8630
      %v8862 = vadd.f32 %v8830, %v8633
      %v8863 = vadd.f32 %v8831, %v8635
      %v8864 = vadd.f32 %v8832, %v8638
      %v8865 = vadd.f32 %v8833, %v8640
      %v8866 = vld [vmem:[%s6] sm:$0x1]
      %v8868 = vperm.slane %v8866, 0
      %v8870 = vadd.f32 %v8834, %v8868
      %v8871 = vadd.f32 %v8835, %v8868
      %v8872 = vadd.f32 %v8836, %v8868
      %v8873 = vadd.f32 %v8837, %v8868
      %v8874 = vadd.f32 %v8838, %v8868
      %v8875 = vadd.f32 %v8839, %v8868
      %v8876 = vadd.f32 %v8840, %v8868
      %v8877 = vadd.f32 %v8841, %v8868
      %v8878 = vadd.f32 %v8842, %v8868
      %v8879 = vadd.f32 %v8843, %v8868
      %v8880 = vadd.f32 %v8844, %v8868
      %v8881 = vadd.f32 %v8845, %v8868
      %v8882 = vadd.f32 %v8846, %v8868
      %v8883 = vadd.f32 %v8847, %v8868
      %v8884 = vadd.f32 %v8848, %v8868
      %v8885 = vadd.f32 %v8849, %v8868
      %v8886 = vadd.f32 %v8850, %v8868
      %v8887 = vadd.f32 %v8851, %v8868
      %v8888 = vadd.f32 %v8852, %v8868
      %v8889 = vadd.f32 %v8853, %v8868
      %v8890 = vadd.f32 %v8854, %v8868
      %v8891 = vadd.f32 %v8855, %v8868
      %v8892 = vadd.f32 %v8856, %v8868
      %v8893 = vadd.f32 %v8857, %v8868
      %v8894 = vadd.f32 %v8858, %v8868
      %v8895 = vadd.f32 %v8859, %v8868
      %v8896 = vadd.f32 %v8860, %v8868
      %v8897 = vadd.f32 %v8861, %v8868
      %v8898 = vadd.f32 %v8862, %v8868
      %v8899 = vadd.f32 %v8863, %v8868
      %v8900 = vadd.f32 %v8864, %v8868
      %v8901 = vadd.f32 %v8865, %v8868
      %v8902 = vld [vmem:[%s273] sm:$0xf]
      %v8903 = vld [vmem:[%s273 + $0x4] sm:$0xf]
      %v8904 = vld [vmem:[%s273 + $0x8] sm:$0xf]
      %v8905 = vld [vmem:[%s273 + $0xc] sm:$0xf]
      %v8906 = vld [vmem:[%s273 + $0x10] sm:$0xf]
      %v8907 = vld [vmem:[%s273 + $0x14] sm:$0xf]
      %v8908 = vld [vmem:[%s273 + $0x18] sm:$0xf]
      %v8909 = vld [vmem:[%s273 + $0x1c] sm:$0xf]
      %v8910 = vld [vmem:[%s273 + $0x20] sm:$0xf]
      %v8911 = vld [vmem:[%s273 + $0x24] sm:$0xf]
      %v8912 = vld [vmem:[%s273 + $0x28] sm:$0xf]
      %v8913 = vld [vmem:[%s273 + $0x2c] sm:$0xf]
      %v8914 = vld [vmem:[%s273 + $0x30] sm:$0xf]
      %v8915 = vld [vmem:[%s273 + $0x34] sm:$0xf]
      %v8916 = vld [vmem:[%s273 + $0x38] sm:$0xf]
      %v8917 = vld [vmem:[%s273 + $0x3c] sm:$0xf]
      %v8918 = vld [vmem:[%s273 + $0x40] sm:$0xf]
      %v8919 = vld [vmem:[%s273 + $0x44] sm:$0xf]
      %v8920 = vld [vmem:[%s273 + $0x48] sm:$0xf]
      %v8921 = vld [vmem:[%s273 + $0x4c] sm:$0xf]
      %v8922 = vld [vmem:[%s273 + $0x50] sm:$0xf]
      %v8923 = vld [vmem:[%s273 + $0x54] sm:$0xf]
      %v8924 = vld [vmem:[%s273 + $0x58] sm:$0xf]
      %v8925 = vld [vmem:[%s273 + $0x5c] sm:$0xf]
      %v8926 = vld [vmem:[%s273 + $0x60] sm:$0xf]
      %v8927 = vld [vmem:[%s273 + $0x64] sm:$0xf]
      %v8928 = vld [vmem:[%s273 + $0x68] sm:$0xf]
      %v8929 = vld [vmem:[%s273 + $0x6c] sm:$0xf]
      %v8930 = vld [vmem:[%s273 + $0x70] sm:$0xf]
      %v8931 = vld [vmem:[%s273 + $0x74] sm:$0xf]
      %v8932 = vld [vmem:[%s273 + $0x78] sm:$0xf]
      %v8933 = vld [vmem:[%s273 + $0x7c] sm:$0xf]
      %v8934 = vunpack.c.l.bf16 %v8902
      %v8935 = vunpack.c.l.bf16 %v8903
      %v8936 = vunpack.c.l.bf16 %v8904
      %v8937 = vunpack.c.l.bf16 %v8905
      %v8938 = vunpack.c.l.bf16 %v8906
      %v8939 = vunpack.c.l.bf16 %v8907
      %v8940 = vunpack.c.l.bf16 %v8908
      %v8941 = vunpack.c.l.bf16 %v8909
      %v8942 = vunpack.c.l.bf16 %v8910
      %v8943 = vunpack.c.l.bf16 %v8911
      %v8944 = vunpack.c.l.bf16 %v8912
      %v8945 = vunpack.c.l.bf16 %v8913
      %v8946 = vunpack.c.l.bf16 %v8914
      %v8947 = vunpack.c.l.bf16 %v8915
      %v8948 = vunpack.c.l.bf16 %v8916
      %v8949 = vunpack.c.l.bf16 %v8917
      %v8950 = vunpack.c.l.bf16 %v8918
      %v8951 = vunpack.c.l.bf16 %v8919
      %v8952 = vunpack.c.l.bf16 %v8920
      %v8953 = vunpack.c.l.bf16 %v8921
      %v8954 = vunpack.c.l.bf16 %v8922
      %v8955 = vunpack.c.l.bf16 %v8923
      %v8956 = vunpack.c.l.bf16 %v8924
      %v8957 = vunpack.c.l.bf16 %v8925
      %v8958 = vunpack.c.l.bf16 %v8926
      %v8959 = vunpack.c.l.bf16 %v8927
      %v8960 = vunpack.c.l.bf16 %v8928
      %v8961 = vunpack.c.l.bf16 %v8929
      %v8962 = vunpack.c.l.bf16 %v8930
      %v8963 = vunpack.c.l.bf16 %v8931
      %v8964 = vunpack.c.l.bf16 %v8932
      %v8965 = vunpack.c.l.bf16 %v8933
      %v8966 = vadd.f32 %v8934, %v8870
      %v8967 = vadd.f32 %v8935, %v8871
      %v8968 = vadd.f32 %v8936, %v8872
      %v8969 = vadd.f32 %v8937, %v8873
      %v8970 = vadd.f32 %v8938, %v8874
      %v8971 = vadd.f32 %v8939, %v8875
      %v8972 = vadd.f32 %v8940, %v8876
      %v8973 = vadd.f32 %v8941, %v8877
      %v8974 = vadd.f32 %v8942, %v8878
      %v8975 = vadd.f32 %v8943, %v8879
      %v8976 = vadd.f32 %v8944, %v8880
      %v8977 = vadd.f32 %v8945, %v8881
      %v8978 = vadd.f32 %v8946, %v8882
      %v8979 = vadd.f32 %v8947, %v8883
      %v8980 = vadd.f32 %v8948, %v8884
      %v8981 = vadd.f32 %v8949, %v8885
      %v8982 = vadd.f32 %v8950, %v8886
      %v8983 = vadd.f32 %v8951, %v8887
      %v8984 = vadd.f32 %v8952, %v8888
      %v8985 = vadd.f32 %v8953, %v8889
      %v8986 = vadd.f32 %v8954, %v8890
      %v8987 = vadd.f32 %v8955, %v8891
      %v8988 = vadd.f32 %v8956, %v8892
      %v8989 = vadd.f32 %v8957, %v8893
      %v8990 = vadd.f32 %v8958, %v8894
      %v8991 = vadd.f32 %v8959, %v8895
      %v8992 = vadd.f32 %v8960, %v8896
      %v8993 = vadd.f32 %v8961, %v8897
      %v8994 = vadd.f32 %v8962, %v8898
      %v8995 = vadd.f32 %v8963, %v8899
      %v8996 = vadd.f32 %v8964, %v8900
      %v8997 = vadd.f32 %v8965, %v8901
      %v8998 = vpack.c.bf16 %v8966, %v8966
      %v8999 = vpack.c.bf16 %v8967, %v8967
      %v9000 = vpack.c.bf16 %v8968, %v8968
      %v9001 = vpack.c.bf16 %v8969, %v8969
      %v9002 = vpack.c.bf16 %v8970, %v8970
      %v9003 = vpack.c.bf16 %v8971, %v8971
      %v9004 = vpack.c.bf16 %v8972, %v8972
      %v9005 = vpack.c.bf16 %v8973, %v8973
      %v9006 = vpack.c.bf16 %v8974, %v8974
      %v9007 = vpack.c.bf16 %v8975, %v8975
      %v9008 = vpack.c.bf16 %v8976, %v8976
      %v9009 = vpack.c.bf16 %v8977, %v8977
      %v9010 = vpack.c.bf16 %v8978, %v8978
      %v9011 = vpack.c.bf16 %v8979, %v8979
      %v9012 = vpack.c.bf16 %v8980, %v8980
      %v9013 = vpack.c.bf16 %v8981, %v8981
      %v9014 = vpack.c.bf16 %v8982, %v8982
      %v9015 = vpack.c.bf16 %v8983, %v8983
      %v9016 = vpack.c.bf16 %v8984, %v8984
      %v9017 = vpack.c.bf16 %v8985, %v8985
      %v9018 = vpack.c.bf16 %v8986, %v8986
      %v9019 = vpack.c.bf16 %v8987, %v8987
      %v9020 = vpack.c.bf16 %v8988, %v8988
      %v9021 = vpack.c.bf16 %v8989, %v8989
      %v9022 = vpack.c.bf16 %v8990, %v8990
      %v9023 = vpack.c.bf16 %v8991, %v8991
      %v9024 = vpack.c.bf16 %v8992, %v8992
      %v9025 = vpack.c.bf16 %v8993, %v8993
      %v9026 = vpack.c.bf16 %v8994, %v8994
      %v9027 = vpack.c.bf16 %v8995, %v8995
      %v9028 = vpack.c.bf16 %v8996, %v8996
      %v9029 = vpack.c.bf16 %v8997, %v8997
      %9030 = vst.msk [vmem:[%s278] sm:$0xf] %vm280, %v8998
      %9031 = vst.msk [vmem:[%s278 + $0x4] sm:$0xf] %vm280, %v8999
      %9032 = vst.msk [vmem:[%s278 + $0x8] sm:$0xf] %vm280, %v9000
      %9033 = vst.msk [vmem:[%s278 + $0xc] sm:$0xf] %vm280, %v9001
      %9034 = vst.msk [vmem:[%s278 + $0x10] sm:$0xf] %vm280, %v9002
      %9035 = vst.msk [vmem:[%s278 + $0x14] sm:$0xf] %vm280, %v9003
      %9036 = vst.msk [vmem:[%s278 + $0x18] sm:$0xf] %vm280, %v9004
      %9037 = vst.msk [vmem:[%s278 + $0x1c] sm:$0xf] %vm280, %v9005
      %9038 = vst.msk [vmem:[%s278 + $0x20] sm:$0xf] %vm280, %v9006
      %9039 = vst.msk [vmem:[%s278 + $0x24] sm:$0xf] %vm280, %v9007
      %9040 = vst.msk [vmem:[%s278 + $0x28] sm:$0xf] %vm280, %v9008
      %9041 = vst.msk [vmem:[%s278 + $0x2c] sm:$0xf] %vm280, %v9009
      %9042 = vst.msk [vmem:[%s278 + $0x30] sm:$0xf] %vm280, %v9010
      %9043 = vst.msk [vmem:[%s278 + $0x34] sm:$0xf] %vm280, %v9011
      %9044 = vst.msk [vmem:[%s278 + $0x38] sm:$0xf] %vm280, %v9012
      %9045 = vst.msk [vmem:[%s278 + $0x3c] sm:$0xf] %vm280, %v9013
      %9046 = vst.msk [vmem:[%s278 + $0x40] sm:$0xf] %vm280, %v9014
      %9047 = vst.msk [vmem:[%s278 + $0x44] sm:$0xf] %vm280, %v9015
      %9048 = vst.msk [vmem:[%s278 + $0x48] sm:$0xf] %vm280, %v9016
      %9049 = vst.msk [vmem:[%s278 + $0x4c] sm:$0xf] %vm280, %v9017
      %9050 = vst.msk [vmem:[%s278 + $0x50] sm:$0xf] %vm280, %v9018
      %9051 = vst.msk [vmem:[%s278 + $0x54] sm:$0xf] %vm280, %v9019
      %9052 = vst.msk [vmem:[%s278 + $0x58] sm:$0xf] %vm280, %v9020
      %9053 = vst.msk [vmem:[%s278 + $0x5c] sm:$0xf] %vm280, %v9021
      %9054 = vst.msk [vmem:[%s278 + $0x60] sm:$0xf] %vm280, %v9022
      %9055 = vst.msk [vmem:[%s278 + $0x64] sm:$0xf] %vm280, %v9023
      %9056 = vst.msk [vmem:[%s278 + $0x68] sm:$0xf] %vm280, %v9024
      %9057 = vst.msk [vmem:[%s278 + $0x6c] sm:$0xf] %vm280, %v9025
      %9058 = vst.msk [vmem:[%s278 + $0x70] sm:$0xf] %vm280, %v9026
      %9059 = vst.msk [vmem:[%s278 + $0x74] sm:$0xf] %vm280, %v9027
      %9060 = vst.msk [vmem:[%s278 + $0x78] sm:$0xf] %vm280, %v9028
      %9061 = vst.msk [vmem:[%s278 + $0x7c] sm:$0xf] %vm280, %v9029
      %p9062 = scmp.lt.s32.totalorder %s18, 1
      %s9063 = scalar_select %p9062, %s18, 1
      %s9064 = smul.addr %s9063, 32
      %s9065 = smul.addr %s9064, 4
      %s9066 = scalar_lea.vmem %s7, %s9065
      // Predicated region
      $region49: #{generator_forward.5} parent=47 // pred_check
        %p9067 = pneg %p188
      $region50: #{generator_forward.5} parent=47 // pred_check_branch
        %9069 = sbr.rel (%p9067) target = $region52
      $region51: #{generator_forward.5} parent=47 // pred_region
        _
      $region52: #{generator_forward.5} parent=47 // pred_fallthru
        _
    $region48: #{generator_forward.5} parent=5 // pred_fallthru
      _
    %p9070 = scmp.le.s32.totalorder 2, %s13
    // Predicated region
    $region53: #{generator_forward.5} parent=5 // pred_check
      %p9071 = pneg %p9070
    $region54: #{generator_forward.5} parent=5 // pred_check_branch
      %9073 = sbr.rel (%p9071) target = $region56
    $region55: #{generator_forward.5} parent=5 // pred_region
      %s9074 = ssub.s32 %s13, 2
      // Predicated region
      $region57: #{generator_forward.5} parent=55 // pred_check
        %p9075 = pneg %p194
      $region58: #{generator_forward.5} parent=55 // pred_check_branch
        %9077 = sbr.rel (%p9075) target = $region60
      $region59: #{generator_forward.5} parent=55 // pred_region
        %p9078 = scmp.lt.s32.totalorder %s19, 1
        %s9079 = scalar_select %p9078, %s19, 1
        %s9080 = smul.addr %s9079, 32
        %s9081 = smul.addr %s9080, 4
        %s9082 = scalar_lea.vmem %s7, %s9081
      $region60: #{generator_forward.5} parent=55 // pred_fallthru
        _
    $region56: #{generator_forward.5} parent=5 // pred_fallthru
      _
  $region6: #{generator_forward.5} parent=0 // loop_footer
    %s17 = sadd.s32 1, %s13
  $region7: #{generator_forward.5} parent=0 // loop_footer_branch
    %12 = sbr.rel target = $region3
  $region8: #{generator_forward.5} parent=0 // loop_exit
    _

</llo_original>
